<compile_context>
chip_gen: v7x
topology: tpu7x:2x2x1
jax: 0.10.0
libtpu: 0.0.40
codegen_flags: <defaults>
</compile_context>

<pallas_src>
import functools

import jax
import jax.numpy as jnp
from jax import lax
from jax.experimental import pallas as pl
from jax.experimental.pallas import tpu as pltpu

EPS = 1e-5


def _convblock_kernel(xp_ref, w1_ref, p1_ref, w2_ref, p2_ref, o_ref, h1pad_ref, *,
                      N, KH, KW, pad, H1, W1, H2, W2):
    """Fused ConvBlock forward on VMEM-resident blocks.

    xp_ref    : (N, H+2p, W+2p, Cin)   spatially pre-padded NHWC input
    w1_ref    : (KH*KW*Cin,  Cout)     layer-1 weights, flattened HWIO
    p1_ref    : (3, Cout)              rows = [bias, gamma, beta] for layer 1
    w2_ref    : (KH*KW*Cout, Cout)     layer-2 weights, flattened HWIO
    p2_ref    : (3, Cout)              rows = [bias, gamma, beta] for layer 2
    o_ref     : (N, Cout, H2*W2)       NCHW output with lane-dense last dim
    h1pad_ref : (N, H1+2p, W1+2p, Cout) VMEM scratch holding the padded layer-1 activation
    """

    def conv_relu_bn(src_ref, w_ref, p_ref, hout, wout):
        cin = src_ref.shape[-1]
        m = N * hout * wout

        # Full im2col: concatenate the KH*KW shifted windows along the channel (lane) axis,
        # then a single (m, KH*KW*cin) @ (KH*KW*cin, Cout) MXU matmul.
        cols = []
        for kh in range(KH):
            for kw in range(KW):
                cols.append(src_ref[:, kh:kh + hout, kw:kw + wout, :])
        patches = jnp.concatenate(cols, axis=-1).reshape(m, KH * KW * cin)
        acc = jnp.dot(patches, w_ref[...], preferred_element_type=jnp.float32)

        # bias + ReLU
        h = jnp.maximum(acc + p_ref[0:1, :], 0.0)

        # BatchNorm2d (training-mode batch stats) via sum / sum-of-squares, folded into one
        # per-channel scale/shift -> single FMA-style tail over h.
        inv_m = 1.0 / m
        s = jnp.sum(h, axis=0, keepdims=True)
        ss = jnp.sum(h * h, axis=0, keepdims=True)
        mean = s * inv_m
        var = ss * inv_m - mean * mean
        scale = p_ref[1:2, :] * lax.rsqrt(var + EPS)    # gamma * rsqrt(var + eps)   (EUP)
        shift = p_ref[2:3, :] - mean * scale            # beta  - mean * scale
        return h * scale + shift

    # ---- layer 1: Conv -> ReLU -> BN; park the activation (pre-padded) in VMEM scratch.
    out1 = conv_relu_bn(xp_ref, w1_ref, p1_ref, H1, W1)
    h1pad_ref[...] = jnp.zeros(h1pad_ref.shape, jnp.float32)
    h1pad_ref[:, pad:pad + H1, pad:pad + W1, :] = out1.reshape(N, H1, W1, out1.shape[-1])

    # ---- layer 2: Conv -> ReLU -> BN, reading the VMEM-resident layer-1 activation.
    out2 = conv_relu_bn(h1pad_ref, w2_ref, p2_ref, H2, W2)

    # ---- lane-dense NCHW store: last dim = H2*W2 (multiple of 128), not Cout (= 8).
    hw = H2 * W2
    for n in range(N):
        o_ref[n] = out2[n * hw:(n + 1) * hw, :].T       # (Cout, H2*W2)


def conv_block(x_nchw, params, padding=1):
    """ConvBlock forward. Input/output NCHW, matching the PyTorch module."""
    N, Cin, H, W = x_nchw.shape
    KH, KW, _, Cout = params["w1"].shape
    H1 = H + 2 * padding - KH + 1
    W1 = W + 2 * padding - KW + 1
    H2 = H1 + 2 * padding - KH + 1
    W2 = W1 + 2 * padding - KW + 1

    # Input relayout (NCHW -> NHWC) fused with the zero-pad in one small XLA op; all conv/BN
    # math happens inside the kernel. The output side needs no XLA transpose at all.
    xp = jnp.pad(jnp.transpose(x_nchw, (0, 2, 3, 1)).astype(jnp.float32),
                 ((0, 0), (padding, padding), (padding, padding), (0, 0)))

    w1 = params["w1"].reshape(KH * KW * Cin, Cout).astype(jnp.float32)
    w2 = params["w2"].reshape(KH * KW * Cout, Cout).astype(jnp.float32)
    p1 = jnp.stack([params["b1"], params["g1"], params["beta1"]]).astype(jnp.float32)
    p2 = jnp.stack([params["b2"], params["g2"], params["beta2"]]).astype(jnp.float32)

    kernel = functools.partial(_convblock_kernel, N=N, KH=KH, KW=KW, pad=padding,
                               H1=H1, W1=W1, H2=H2, W2=W2)

    # Advisory cost estimate (MXU flops dominate; rsqrt per channel per layer).
    flops = (2 * N * H1 * W1 * (KH * KW * Cin) * Cout
             + 2 * N * H2 * W2 * (KH * KW * Cout) * Cout
             + 12 * N * (H1 * W1 + H2 * W2) * Cout)
    bytes_accessed = 4 * (xp.size + w1.size + w2.size + p1.size + p2.size + N * Cout * H2 * W2)

    # VMEM budget sized from the actual resident buffers (inputs, scratch, im2col patches,
    # activations, output), with generous headroom; stays far below 64 MiB (v7x) at these shapes.
    vmem_bytes = 4 * (xp.size + w1.size + w2.size + p1.size + p2.size
                      + N * (H1 + 2 * padding) * (W1 + 2 * padding) * Cout      # scratch
                      + N * H1 * W1 * (KH * KW * Cin + 2 * Cout)                # patches1 + h1
                      + N * H2 * W2 * (KH * KW * Cout + 2 * Cout)               # patches2 + h2
                      + N * Cout * H2 * W2)                                     # output
    vmem_limit = int(min(max(4 * vmem_bytes, 8 * 1024 * 1024), 100 * 1024 * 1024))

    out = pl.pallas_call(
        kernel,
        out_shape=jax.ShapeDtypeStruct((N, Cout, H2 * W2), jnp.float32),
        in_specs=[pl.BlockSpec(memory_space=pltpu.MemorySpace.VMEM)] * 5,
        out_specs=pl.BlockSpec(memory_space=pltpu.MemorySpace.VMEM),
        scratch_shapes=[pltpu.VMEM((N, H1 + 2 * padding, W1 + 2 * padding, Cout), jnp.float32)],
        compiler_params=pltpu.CompilerParams(vmem_limit_bytes=vmem_limit),
        cost_estimate=pl.CostEstimate(flops=flops, transcendentals=2 * Cout,
                                      bytes_accessed=bytes_accessed),
    )(xp, w1, p1, w2, p2)

    return out.reshape(N, Cout, H2, W2)   # free reshape: already channel-major (NCHW)


def init_params(key, in_channels, out_channels, kernel_size):
    """Deterministic synthetic init (Kaiming-uniform-like bounds, as in torch defaults)."""
    k1, k2, k3, k4 = jax.random.split(key, 4)
    fan1 = in_channels * kernel_size * kernel_size
    fan2 = out_channels * kernel_size * kernel_size
    bound1 = 1.0 / jnp.sqrt(fan1)
    bound2 = 1.0 / jnp.sqrt(fan2)
    return {
        "w1": jax.random.uniform(k1, (kernel_size, kernel_size, in_channels, out_channels),
                                 jnp.float32, -bound1, bound1),
        "b1": jax.random.uniform(k2, (out_channels,), jnp.float32, -bound1, bound1),
        "g1": jnp.ones((out_channels,), jnp.float32),
        "beta1": jnp.zeros((out_channels,), jnp.float32),
        "w2": jax.random.uniform(k3, (kernel_size, kernel_size, out_channels, out_channels),
                                 jnp.float32, -bound2, bound2),
        "b2": jax.random.uniform(k4, (out_channels,), jnp.float32, -bound2, bound2),
        "g2": jnp.ones((out_channels,), jnp.float32),
        "beta2": jnp.zeros((out_channels,), jnp.float32),
    }


def _ref_layer(x, w, b, gamma, beta, padding):
    y = jax.lax.conv_general_dilated(
        x, w, window_strides=(1, 1), padding=[(padding, padding)] * 2,
        dimension_numbers=("NHWC", "HWIO", "NHWC"))
    y = y + b
    y = jnp.maximum(y, 0.0)
    mean = jnp.mean(y, axis=(0, 1, 2), keepdims=True)
    var = jnp.mean((y - mean) ** 2, axis=(0, 1, 2), keepdims=True)
    return (y - mean) * jax.lax.rsqrt(var + EPS) * gamma + beta


def _ref_block(x_nchw, params, padding=1):
    x = jnp.transpose(x_nchw, (0, 2, 3, 1))
    y = _ref_layer(x, params["w1"], params["b1"], params["g1"], params["beta1"], padding)
    y = _ref_layer(y, params["w2"], params["b2"], params["g2"], params["beta2"], padding)
    return jnp.transpose(y, (0, 3, 1, 2))


if __name__ == "__main__":
    in_channels, out_channels, kernel_size, padding = 4, 8, 3, 1
    key = jax.random.PRNGKey(0)
    kp, kx = jax.random.split(key)
    params = init_params(kp, in_channels, out_channels, kernel_size)

    x = jax.random.normal(kx, (2, in_channels, 16, 16), jnp.float32)  # NCHW, like PyTorch

    y = conv_block(x, params, padding=padding)
    jax.block_until_ready(y)

    y_ref = _ref_block(x, params, padding=padding)
    assert y.shape == (2, out_channels, 16, 16), y.shape
    assert jnp.allclose(y, y_ref, atol=1e-4, rtol=1e-4), float(jnp.max(jnp.abs(y - y_ref)))

    print("KERNEL_OK")
</pallas_src>

<mosaic_0001>
module attributes {stable_mosaic.version = 11 : i64} {
  func.func @_convblock_kernel(%arg0: memref<2x18x18x4xf32, #tpu.memory_space<vmem>>, %arg1: memref<36x8xf32, #tpu.memory_space<vmem>>, %arg2: memref<3x8xf32, #tpu.memory_space<vmem>>, %arg3: memref<72x8xf32, #tpu.memory_space<vmem>>, %arg4: memref<3x8xf32, #tpu.memory_space<vmem>>, %arg5: memref<2x8x256xf32, #tpu.memory_space<vmem>>, %arg6: memref<2x18x18x8xf32, #tpu.memory_space<vmem>>) attributes {dimension_semantics = [], scalar_prefetch = 0 : i64, scratch_operands = 1 : i64, tpu.core_type = #tpu.core_type<tc>} {
    %c0 = arith.constant 0 : index
    %c0_0 = arith.constant 0 : index
    %c0_1 = arith.constant 0 : index
    %c0_2 = arith.constant 0 : index
    %0 = vector.load %arg0[%c0, %c0_0, %c0_1, %c0_2] : memref<2x18x18x4xf32, #tpu.memory_space<vmem>>, vector<2x16x16x4xf32>
    %c0_3 = arith.constant 0 : index
    %c0_4 = arith.constant 0 : index
    %c1 = arith.constant 1 : index
    %c0_5 = arith.constant 0 : index
    %1 = vector.load %arg0[%c0_3, %c0_4, %c1, %c0_5] : memref<2x18x18x4xf32, #tpu.memory_space<vmem>>, vector<2x16x16x4xf32>
    %c0_6 = arith.constant 0 : index
    %c0_7 = arith.constant 0 : index
    %c2 = arith.constant 2 : index
    %c0_8 = arith.constant 0 : index
    %2 = vector.load %arg0[%c0_6, %c0_7, %c2, %c0_8] : memref<2x18x18x4xf32, #tpu.memory_space<vmem>>, vector<2x16x16x4xf32>
    %c0_9 = arith.constant 0 : index
    %c1_10 = arith.constant 1 : index
    %c0_11 = arith.constant 0 : index
    %c0_12 = arith.constant 0 : index
    %3 = vector.load %arg0[%c0_9, %c1_10, %c0_11, %c0_12] : memref<2x18x18x4xf32, #tpu.memory_space<vmem>>, vector<2x16x16x4xf32>
    %c0_13 = arith.constant 0 : index
    %c1_14 = arith.constant 1 : index
    %c1_15 = arith.constant 1 : index
    %c0_16 = arith.constant 0 : index
    %4 = vector.load %arg0[%c0_13, %c1_14, %c1_15, %c0_16] : memref<2x18x18x4xf32, #tpu.memory_space<vmem>>, vector<2x16x16x4xf32>
    %c0_17 = arith.constant 0 : index
    %c1_18 = arith.constant 1 : index
    %c2_19 = arith.constant 2 : index
    %c0_20 = arith.constant 0 : index
    %5 = vector.load %arg0[%c0_17, %c1_18, %c2_19, %c0_20] : memref<2x18x18x4xf32, #tpu.memory_space<vmem>>, vector<2x16x16x4xf32>
    %c0_21 = arith.constant 0 : index
    %c2_22 = arith.constant 2 : index
    %c0_23 = arith.constant 0 : index
    %c0_24 = arith.constant 0 : index
    %6 = vector.load %arg0[%c0_21, %c2_22, %c0_23, %c0_24] : memref<2x18x18x4xf32, #tpu.memory_space<vmem>>, vector<2x16x16x4xf32>
    %c0_25 = arith.constant 0 : index
    %c2_26 = arith.constant 2 : index
    %c1_27 = arith.constant 1 : index
    %c0_28 = arith.constant 0 : index
    %7 = vector.load %arg0[%c0_25, %c2_26, %c1_27, %c0_28] : memref<2x18x18x4xf32, #tpu.memory_space<vmem>>, vector<2x16x16x4xf32>
    %c0_29 = arith.constant 0 : index
    %c2_30 = arith.constant 2 : index
    %c2_31 = arith.constant 2 : index
    %c0_32 = arith.constant 0 : index
    %8 = vector.load %arg0[%c0_29, %c2_30, %c2_31, %c0_32] : memref<2x18x18x4xf32, #tpu.memory_space<vmem>>, vector<2x16x16x4xf32>
    %9 = tpu.concatenate %0, %1, %2, %3, %4, %5, %6, %7, %8 in 3 : vector<2x16x16x4xf32>, vector<2x16x16x4xf32>, vector<2x16x16x4xf32>, vector<2x16x16x4xf32>, vector<2x16x16x4xf32>, vector<2x16x16x4xf32>, vector<2x16x16x4xf32>, vector<2x16x16x4xf32>, vector<2x16x16x4xf32> -> vector<2x16x16x36xf32>
    %10 = vector.shape_cast %9 : vector<2x16x16x36xf32> to vector<512x36xf32>
    %c0_33 = arith.constant 0 : index
    %c0_34 = arith.constant 0 : index
    %11 = vector.load %arg1[%c0_33, %c0_34] : memref<36x8xf32, #tpu.memory_space<vmem>>, vector<36x8xf32>
    %cst = arith.constant dense<0.000000e+00> : vector<512x8xf32>
    %12 = tpu.matmul %10, %11, %cst {dimension_numbers = #tpu.dot_dimension_numbers<[1], [0], [0], [1], [0, 0, 1, 1], [], []>} : vector<512x36xf32>, vector<36x8xf32>, vector<512x8xf32> -> vector<512x8xf32>
    %c0_35 = arith.constant 0 : index
    %c0_36 = arith.constant 0 : index
    %13 = vector.load %arg2[%c0_35, %c0_36] : memref<3x8xf32, #tpu.memory_space<vmem>>, vector<1x8xf32>
    %14 = vector.broadcast %13 : vector<1x8xf32> to vector<512x8xf32>
    %15 = arith.addf %12, %14 : vector<512x8xf32>
    %cst_37 = arith.constant 0.000000e+00 : f32
    %16 = vector.broadcast %cst_37 : f32 to vector<512x8xf32>
    %17 = arith.maximumf %15, %16 : vector<512x8xf32>
    %cst_38 = arith.constant dense<0.000000e+00> : vector<8xf32>
    %18 = vector.multi_reduction <add>, %17, %cst_38 [0] : vector<512x8xf32> to vector<8xf32>
    %19 = vector.shape_cast %18 : vector<8xf32> to vector<1x8xf32>
    %20 = arith.mulf %17, %17 : vector<512x8xf32>
    %cst_39 = arith.constant dense<0.000000e+00> : vector<8xf32>
    %21 = vector.multi_reduction <add>, %20, %cst_39 [0] : vector<512x8xf32> to vector<8xf32>
    %22 = vector.shape_cast %21 : vector<8xf32> to vector<1x8xf32>
    %cst_40 = arith.constant 0.001953125 : f32
    %23 = vector.broadcast %cst_40 : f32 to vector<1x8xf32>
    %24 = arith.mulf %19, %23 : vector<1x8xf32>
    %cst_41 = arith.constant 0.001953125 : f32
    %25 = vector.broadcast %cst_41 : f32 to vector<1x8xf32>
    %26 = arith.mulf %22, %25 : vector<1x8xf32>
    %27 = arith.mulf %24, %24 : vector<1x8xf32>
    %28 = arith.subf %26, %27 : vector<1x8xf32>
    %c1_42 = arith.constant 1 : index
    %c0_43 = arith.constant 0 : index
    %29 = vector.load %arg2[%c1_42, %c0_43] : memref<3x8xf32, #tpu.memory_space<vmem>>, vector<1x8xf32>
    %cst_44 = arith.constant 9.99999974E-6 : f32
    %30 = vector.broadcast %cst_44 : f32 to vector<1x8xf32>
    %31 = arith.addf %28, %30 : vector<1x8xf32>
    %32 = math.rsqrt %31 : vector<1x8xf32>
    %33 = arith.mulf %29, %32 : vector<1x8xf32>
    %c2_45 = arith.constant 2 : index
    %c0_46 = arith.constant 0 : index
    %34 = vector.load %arg2[%c2_45, %c0_46] : memref<3x8xf32, #tpu.memory_space<vmem>>, vector<1x8xf32>
    %35 = arith.mulf %24, %33 : vector<1x8xf32>
    %36 = arith.subf %34, %35 : vector<1x8xf32>
    %37 = vector.broadcast %33 : vector<1x8xf32> to vector<512x8xf32>
    %38 = arith.mulf %17, %37 : vector<512x8xf32>
    %39 = vector.broadcast %36 : vector<1x8xf32> to vector<512x8xf32>
    %40 = arith.addf %38, %39 : vector<512x8xf32>
    %cst_47 = arith.constant 0.000000e+00 : f32
    %41 = vector.broadcast %cst_47 : f32 to vector<2x18x18x8xf32>
    %c0_48 = arith.constant 0 : index
    %c0_49 = arith.constant 0 : index
    %c0_50 = arith.constant 0 : index
    %c0_51 = arith.constant 0 : index
    %42 = vector.load %arg6[%c0_48, %c0_49, %c0_50, %c0_51] : memref<2x18x18x8xf32, #tpu.memory_space<vmem>>, vector<2x18x18x8xf32>
    tpu.vector_store %arg6[%c0_48, %c0_49, %c0_50, %c0_51], %41 {strides = array<i32>} : memref<2x18x18x8xf32, #tpu.memory_space<vmem>>, vector<2x18x18x8xf32>,
    %43 = vector.shape_cast %40 : vector<512x8xf32> to vector<2x16x16x8xf32>
    %c0_52 = arith.constant 0 : index
    %c1_53 = arith.constant 1 : index
    %c1_54 = arith.constant 1 : index
    %c0_55 = arith.constant 0 : index
    %44 = vector.load %arg6[%c0_52, %c1_53, %c1_54, %c0_55] : memref<2x18x18x8xf32, #tpu.memory_space<vmem>>, vector<2x16x16x8xf32>
    tpu.vector_store %arg6[%c0_52, %c1_53, %c1_54, %c0_55], %43 {strides = array<i32>} : memref<2x18x18x8xf32, #tpu.memory_space<vmem>>, vector<2x16x16x8xf32>,
    %c0_56 = arith.constant 0 : index
    %c0_57 = arith.constant 0 : index
    %c0_58 = arith.constant 0 : index
    %c0_59 = arith.constant 0 : index
    %45 = vector.load %arg6[%c0_56, %c0_57, %c0_58, %c0_59] : memref<2x18x18x8xf32, #tpu.memory_space<vmem>>, vector<2x16x16x8xf32>
    %c0_60 = arith.constant 0 : index
    %c0_61 = arith.constant 0 : index
    %c1_62 = arith.constant 1 : index
    %c0_63 = arith.constant 0 : index
    %46 = vector.load %arg6[%c0_60, %c0_61, %c1_62, %c0_63] : memref<2x18x18x8xf32, #tpu.memory_space<vmem>>, vector<2x16x16x8xf32>
    %c0_64 = arith.constant 0 : index
    %c0_65 = arith.constant 0 : index
    %c2_66 = arith.constant 2 : index
    %c0_67 = arith.constant 0 : index
    %47 = vector.load %arg6[%c0_64, %c0_65, %c2_66, %c0_67] : memref<2x18x18x8xf32, #tpu.memory_space<vmem>>, vector<2x16x16x8xf32>
    %c0_68 = arith.constant 0 : index
    %c1_69 = arith.constant 1 : index
    %c0_70 = arith.constant 0 : index
    %c0_71 = arith.constant 0 : index
    %48 = vector.load %arg6[%c0_68, %c1_69, %c0_70, %c0_71] : memref<2x18x18x8xf32, #tpu.memory_space<vmem>>, vector<2x16x16x8xf32>
    %c0_72 = arith.constant 0 : index
    %c1_73 = arith.constant 1 : index
    %c1_74 = arith.constant 1 : index
    %c0_75 = arith.constant 0 : index
    %49 = vector.load %arg6[%c0_72, %c1_73, %c1_74, %c0_75] : memref<2x18x18x8xf32, #tpu.memory_space<vmem>>, vector<2x16x16x8xf32>
    %c0_76 = arith.constant 0 : index
    %c1_77 = arith.constant 1 : index
    %c2_78 = arith.constant 2 : index
    %c0_79 = arith.constant 0 : index
    %50 = vector.load %arg6[%c0_76, %c1_77, %c2_78, %c0_79] : memref<2x18x18x8xf32, #tpu.memory_space<vmem>>, vector<2x16x16x8xf32>
    %c0_80 = arith.constant 0 : index
    %c2_81 = arith.constant 2 : index
    %c0_82 = arith.constant 0 : index
    %c0_83 = arith.constant 0 : index
    %51 = vector.load %arg6[%c0_80, %c2_81, %c0_82, %c0_83] : memref<2x18x18x8xf32, #tpu.memory_space<vmem>>, vector<2x16x16x8xf32>
    %c0_84 = arith.constant 0 : index
    %c2_85 = arith.constant 2 : index
    %c1_86 = arith.constant 1 : index
    %c0_87 = arith.constant 0 : index
    %52 = vector.load %arg6[%c0_84, %c2_85, %c1_86, %c0_87] : memref<2x18x18x8xf32, #tpu.memory_space<vmem>>, vector<2x16x16x8xf32>
    %c0_88 = arith.constant 0 : index
    %c2_89 = arith.constant 2 : index
    %c2_90 = arith.constant 2 : index
    %c0_91 = arith.constant 0 : index
    %53 = vector.load %arg6[%c0_88, %c2_89, %c2_90, %c0_91] : memref<2x18x18x8xf32, #tpu.memory_space<vmem>>, vector<2x16x16x8xf32>
    %54 = tpu.concatenate %45, %46, %47, %48, %49, %50, %51, %52, %53 in 3 : vector<2x16x16x8xf32>, vector<2x16x16x8xf32>, vector<2x16x16x8xf32>, vector<2x16x16x8xf32>, vector<2x16x16x8xf32>, vector<2x16x16x8xf32>, vector<2x16x16x8xf32>, vector<2x16x16x8xf32>, vector<2x16x16x8xf32> -> vector<2x16x16x72xf32>
    %55 = vector.shape_cast %54 : vector<2x16x16x72xf32> to vector<512x72xf32>
    %c0_92 = arith.constant 0 : index
    %c0_93 = arith.constant 0 : index
    %56 = vector.load %arg3[%c0_92, %c0_93] : memref<72x8xf32, #tpu.memory_space<vmem>>, vector<72x8xf32>
    %cst_94 = arith.constant dense<0.000000e+00> : vector<512x8xf32>
    %57 = tpu.matmul %55, %56, %cst_94 {dimension_numbers = #tpu.dot_dimension_numbers<[1], [0], [0], [1], [0, 0, 1, 1], [], []>} : vector<512x72xf32>, vector<72x8xf32>, vector<512x8xf32> -> vector<512x8xf32>
    %c0_95 = arith.constant 0 : index
    %c0_96 = arith.constant 0 : index
    %58 = vector.load %arg4[%c0_95, %c0_96] : memref<3x8xf32, #tpu.memory_space<vmem>>, vector<1x8xf32>
    %59 = vector.broadcast %58 : vector<1x8xf32> to vector<512x8xf32>
    %60 = arith.addf %57, %59 : vector<512x8xf32>
    %cst_97 = arith.constant 0.000000e+00 : f32
    %61 = vector.broadcast %cst_97 : f32 to vector<512x8xf32>
    %62 = arith.maximumf %60, %61 : vector<512x8xf32>
    %cst_98 = arith.constant dense<0.000000e+00> : vector<8xf32>
    %63 = vector.multi_reduction <add>, %62, %cst_98 [0] : vector<512x8xf32> to vector<8xf32>
    %64 = vector.shape_cast %63 : vector<8xf32> to vector<1x8xf32>
    %65 = arith.mulf %62, %62 : vector<512x8xf32>
    %cst_99 = arith.constant dense<0.000000e+00> : vector<8xf32>
    %66 = vector.multi_reduction <add>, %65, %cst_99 [0] : vector<512x8xf32> to vector<8xf32>
    %67 = vector.shape_cast %66 : vector<8xf32> to vector<1x8xf32>
    %cst_100 = arith.constant 0.001953125 : f32
    %68 = vector.broadcast %cst_100 : f32 to vector<1x8xf32>
    %69 = arith.mulf %64, %68 : vector<1x8xf32>
    %cst_101 = arith.constant 0.001953125 : f32
    %70 = vector.broadcast %cst_101 : f32 to vector<1x8xf32>
    %71 = arith.mulf %67, %70 : vector<1x8xf32>
    %72 = arith.mulf %69, %69 : vector<1x8xf32>
    %73 = arith.subf %71, %72 : vector<1x8xf32>
    %c1_102 = arith.constant 1 : index
    %c0_103 = arith.constant 0 : index
    %74 = vector.load %arg4[%c1_102, %c0_103] : memref<3x8xf32, #tpu.memory_space<vmem>>, vector<1x8xf32>
    %cst_104 = arith.constant 9.99999974E-6 : f32
    %75 = vector.broadcast %cst_104 : f32 to vector<1x8xf32>
    %76 = arith.addf %73, %75 : vector<1x8xf32>
    %77 = math.rsqrt %76 : vector<1x8xf32>
    %78 = arith.mulf %74, %77 : vector<1x8xf32>
    %c2_105 = arith.constant 2 : index
    %c0_106 = arith.constant 0 : index
    %79 = vector.load %arg4[%c2_105, %c0_106] : memref<3x8xf32, #tpu.memory_space<vmem>>, vector<1x8xf32>
    %80 = arith.mulf %69, %78 : vector<1x8xf32>
    %81 = arith.subf %79, %80 : vector<1x8xf32>
    %82 = vector.broadcast %78 : vector<1x8xf32> to vector<512x8xf32>
    %83 = arith.mulf %62, %82 : vector<512x8xf32>
    %84 = vector.broadcast %81 : vector<1x8xf32> to vector<512x8xf32>
    %85 = arith.addf %83, %84 : vector<512x8xf32>
    %86 = vector.extract_strided_slice %85 {offsets = [0, 0], sizes = [256, 8], strides = [1, 1]} : vector<512x8xf32> to vector<256x8xf32>
    %87 = tpu.transpose %86, [1, 0] : vector<256x8xf32> -> vector<8x256xf32>
    %c0_107 = arith.constant 0 : index
    %c0_108 = arith.constant 0 : index
    %c0_109 = arith.constant 0 : index
    %88 = vector.load %arg5[%c0_107, %c0_108, %c0_109] : memref<2x8x256xf32, #tpu.memory_space<vmem>>, vector<1x8x256xf32>
    %89 = vector.shape_cast %88 : vector<1x8x256xf32> to vector<8x256xf32>
    %90 = vector.shape_cast %87 : vector<8x256xf32> to vector<1x8x256xf32>
    tpu.vector_store %arg5[%c0_107, %c0_108, %c0_109], %90 {strides = array<i32>} : memref<2x8x256xf32, #tpu.memory_space<vmem>>, vector<1x8x256xf32>,
    %91 = vector.extract_strided_slice %85 {offsets = [256, 0], sizes = [256, 8], strides = [1, 1]} : vector<512x8xf32> to vector<256x8xf32>
    %92 = tpu.transpose %91, [1, 0] : vector<256x8xf32> -> vector<8x256xf32>
    %c1_110 = arith.constant 1 : index
    %c0_111 = arith.constant 0 : index
    %c0_112 = arith.constant 0 : index
    %93 = vector.load %arg5[%c1_110, %c0_111, %c0_112] : memref<2x8x256xf32, #tpu.memory_space<vmem>>, vector<1x8x256xf32>
    %94 = vector.shape_cast %93 : vector<1x8x256xf32> to vector<8x256xf32>
    %95 = vector.shape_cast %92 : vector<8x256xf32> to vector<1x8x256xf32>
    tpu.vector_store %arg5[%c1_110, %c0_111, %c0_112], %95 {strides = array<i32>} : memref<2x8x256xf32, #tpu.memory_space<vmem>>, vector<1x8x256xf32>,
    return
  }
}

</mosaic_0001>

<llo_original>
// kernel: tpu_custom_call.1
$region0: #{tpu_custom_call.1}
  #allocation0 [shape = 'u32[]', space=smem, size = 0x4, offset = 0x4, fixed_abs, tag = 'smem constant byte address 0x4 - core index']
  #allocation1 [shape = 'u32[144,128]{1,0:T(1,128)}', space=vmem, size = 0x12000, scoped, tag = 'internal scratch']
  #allocation2 [shape = 'f32[2,18,18,8]{3,2,1,0:T(8,128)}', space=vmem, size = 0x6c000, scoped, tag = 'scratch operand']
  %s0 = inlined_call_operand.vmem [shape: f32[2,18,18,4], index: 0, kind: input, shape index: {}]
  %s1 = inlined_call_operand.vmem [shape: f32[36,8], index: 1, kind: input, shape index: {}]
  %s2 = inlined_call_operand.vmem [shape: f32[3,8], index: 2, kind: input, shape index: {}]
  %s3 = inlined_call_operand.vmem [shape: f32[72,8], index: 3, kind: input, shape index: {}]
  %s4 = inlined_call_operand.vmem [shape: f32[3,8], index: 4, kind: input, shape index: {}]
  %s5 = inlined_call_operand.hbm [shape: f32[2,8,256], index: 5, kind: output, shape index: {}]
  %s6 = sld [smem:[#allocation0]]
  $region30: #{tpu_custom_call.1} parent=0
    _
  %s8 = ssub.s32 1, %s6
  %s9 = scalar_select 0, %s8, %s6
  $region1: #{tpu_custom_call.1} parent=0
    #allocation3 [shape = 'u8[16384]{0}', space=vmem, size = 0x4000, scoped, tag = 'output window, operand 0, single buffered']
    #allocation4 [shape = 's32[1]{0}', space=sflag, size = 0x4, scoped, tag = 'scoped memory for tpu_custom_call.1']
    %10 = vsyncpa [#allocation4], 0
    // Predicated region
    $region2: #{tpu_custom_call.1} parent=1 // pred_check
      _
    $region3: #{tpu_custom_call.1} parent=1 // pred_check_branch
      %12 = sbr.rel (0) target = $region5
    $region4: #{tpu_custom_call.1} parent=1 // pred_region
      _
    $region5: #{tpu_custom_call.1} parent=1 // pred_fallthru
      _
    // Predicated region
    $region6: #{tpu_custom_call.1} parent=1 // pred_check
      _
    $region7: #{tpu_custom_call.1} parent=1 // pred_check_branch
      %14 = sbr.rel (0) target = $region9
    $region8: #{tpu_custom_call.1} parent=1 // pred_region
      _
    $region9: #{tpu_custom_call.1} parent=1 // pred_fallthru
      _
    // Predicated region
    $region10: #{tpu_custom_call.1} parent=1 // pred_check
      _
    $region11: #{tpu_custom_call.1} parent=1 // pred_check_branch
      %16 = sbr.rel (0) target = $region13
    $region12: #{tpu_custom_call.1} parent=1 // pred_region
      _
    $region13: #{tpu_custom_call.1} parent=1 // pred_fallthru
      _
    // Predicated region
    $region14: #{tpu_custom_call.1} parent=1 // pred_check
      _
    $region15: #{tpu_custom_call.1} parent=1 // pred_check_branch
      %18 = sbr.rel (0) target = $region17
    $region16: #{tpu_custom_call.1} parent=1 // pred_region
      _
    $region17: #{tpu_custom_call.1} parent=1 // pred_fallthru
      _
    // Predicated region
    $region18: #{tpu_custom_call.1} parent=1 // pred_check
      _
    $region19: #{tpu_custom_call.1} parent=1 // pred_check_branch
      %20 = sbr.rel (0) target = $region21
    $region20: #{tpu_custom_call.1} parent=1 // pred_region
      _
    $region21: #{tpu_custom_call.1} parent=1 // pred_fallthru
      _
    %v21 = vld [vmem:[%s0] sm:$0xff]
    %v22 = vld [vmem:[%s0 + $0x8] sm:$0xff]
    %v23 = vld [vmem:[%s0 + $0x18] sm:$0xff]
    %v24 = vld [vmem:[%s0 + $0x20] sm:$0xff]
    %v25 = vld [vmem:[%s0 + $0x30] sm:$0xff]
    %v26 = vld [vmem:[%s0 + $0x38] sm:$0xff]
    %v27 = vld [vmem:[%s0 + $0x48] sm:$0xff]
    %v28 = vld [vmem:[%s0 + $0x50] sm:$0xff]
    %v29 = vld [vmem:[%s0 + $0x60] sm:$0xff]
    %v30 = vld [vmem:[%s0 + $0x68] sm:$0xff]
    %v31 = vld [vmem:[%s0 + $0x78] sm:$0xff]
    %v32 = vld [vmem:[%s0 + $0x80] sm:$0xff]
    %v33 = vld [vmem:[%s0 + $0x90] sm:$0xff]
    %v34 = vld [vmem:[%s0 + $0x98] sm:$0xff]
    %v35 = vld [vmem:[%s0 + $0xa8] sm:$0xff]
    %v36 = vld [vmem:[%s0 + $0xb0] sm:$0xff]
    %v37 = vld [vmem:[%s0 + $0xc0] sm:$0xff]
    %v38 = vld [vmem:[%s0 + $0xc8] sm:$0xff]
    %v39 = vld [vmem:[%s0 + $0xd8] sm:$0xff]
    %v40 = vld [vmem:[%s0 + $0xe0] sm:$0xff]
    %v41 = vld [vmem:[%s0 + $0xf0] sm:$0xff]
    %v42 = vld [vmem:[%s0 + $0xf8] sm:$0xff]
    %v43 = vld [vmem:[%s0 + $0x108] sm:$0xff]
    %v44 = vld [vmem:[%s0 + $0x110] sm:$0xff]
    %v45 = vld [vmem:[%s0 + $0x120] sm:$0xff]
    %v46 = vld [vmem:[%s0 + $0x128] sm:$0xff]
    %v47 = vld [vmem:[%s0 + $0x138] sm:$0xff]
    %v48 = vld [vmem:[%s0 + $0x140] sm:$0xff]
    %v49 = vld [vmem:[%s0 + $0x150] sm:$0xff]
    %v50 = vld [vmem:[%s0 + $0x158] sm:$0xff]
    %v51 = vld [vmem:[%s0 + $0x168] sm:$0xff]
    %v52 = vld [vmem:[%s0 + $0x170] sm:$0xff]
    %v53 = vld [vmem:[%s0 + $0x1b0] sm:$0xff]
    %v54 = vld [vmem:[%s0 + $0x1b8] sm:$0xff]
    %v55 = vld [vmem:[%s0 + $0x1c8] sm:$0xff]
    %v56 = vld [vmem:[%s0 + $0x1d0] sm:$0xff]
    %v57 = vld [vmem:[%s0 + $0x1e0] sm:$0xff]
    %v58 = vld [vmem:[%s0 + $0x1e8] sm:$0xff]
    %v59 = vld [vmem:[%s0 + $0x1f8] sm:$0xff]
    %v60 = vld [vmem:[%s0 + $0x200] sm:$0xff]
    %v61 = vld [vmem:[%s0 + $0x210] sm:$0xff]
    %v62 = vld [vmem:[%s0 + $0x218] sm:$0xff]
    %v63 = vld [vmem:[%s0 + $0x228] sm:$0xff]
    %v64 = vld [vmem:[%s0 + $0x230] sm:$0xff]
    %v65 = vld [vmem:[%s0 + $0x240] sm:$0xff]
    %v66 = vld [vmem:[%s0 + $0x248] sm:$0xff]
    %v67 = vld [vmem:[%s0 + $0x258] sm:$0xff]
    %v68 = vld [vmem:[%s0 + $0x260] sm:$0xff]
    %v69 = vld [vmem:[%s0 + $0x270] sm:$0xff]
    %v70 = vld [vmem:[%s0 + $0x278] sm:$0xff]
    %v71 = vld [vmem:[%s0 + $0x288] sm:$0xff]
    %v72 = vld [vmem:[%s0 + $0x290] sm:$0xff]
    %v73 = vld [vmem:[%s0 + $0x2a0] sm:$0xff]
    %v74 = vld [vmem:[%s0 + $0x2a8] sm:$0xff]
    %v75 = vld [vmem:[%s0 + $0x2b8] sm:$0xff]
    %v76 = vld [vmem:[%s0 + $0x2c0] sm:$0xff]
    %v77 = vld [vmem:[%s0 + $0x2d0] sm:$0xff]
    %v78 = vld [vmem:[%s0 + $0x2d8] sm:$0xff]
    %v79 = vld [vmem:[%s0 + $0x2e8] sm:$0xff]
    %v80 = vld [vmem:[%s0 + $0x2f0] sm:$0xff]
    %v81 = vld [vmem:[%s0 + $0x300] sm:$0xff]
    %v82 = vld [vmem:[%s0 + $0x308] sm:$0xff]
    %v83 = vld [vmem:[%s0 + $0x318] sm:$0xff]
    %v84 = vld [vmem:[%s0 + $0x320] sm:$0xff]
    %v85 = vld [vmem:[%s0 + $0x1] sm:$0xff]
    %v86 = vld [vmem:[%s0 + $0x9] sm:$0xff]
    %v87 = vld [vmem:[%s0 + $0x19] sm:$0xff]
    %v88 = vld [vmem:[%s0 + $0x21] sm:$0xff]
    %v89 = vld [vmem:[%s0 + $0x31] sm:$0xff]
    %v90 = vld [vmem:[%s0 + $0x39] sm:$0xff]
    %v91 = vld [vmem:[%s0 + $0x49] sm:$0xff]
    %v92 = vld [vmem:[%s0 + $0x51] sm:$0xff]
    %v93 = vld [vmem:[%s0 + $0x61] sm:$0xff]
    %v94 = vld [vmem:[%s0 + $0x69] sm:$0xff]
    %v95 = vld [vmem:[%s0 + $0x79] sm:$0xff]
    %v96 = vld [vmem:[%s0 + $0x81] sm:$0xff]
    %v97 = vld [vmem:[%s0 + $0x91] sm:$0xff]
    %v98 = vld [vmem:[%s0 + $0x99] sm:$0xff]
    %v99 = vld [vmem:[%s0 + $0xa9] sm:$0xff]
    %v100 = vld [vmem:[%s0 + $0xb1] sm:$0xff]
    %v101 = vld [vmem:[%s0 + $0xc1] sm:$0xff]
    %v102 = vld [vmem:[%s0 + $0xc9] sm:$0xff]
    %v103 = vld [vmem:[%s0 + $0xd9] sm:$0xff]
    %v104 = vld [vmem:[%s0 + $0xe1] sm:$0xff]
    %v105 = vld [vmem:[%s0 + $0xf1] sm:$0xff]
    %v106 = vld [vmem:[%s0 + $0xf9] sm:$0xff]
    %v107 = vld [vmem:[%s0 + $0x109] sm:$0xff]
    %v108 = vld [vmem:[%s0 + $0x111] sm:$0xff]
    %v109 = vld [vmem:[%s0 + $0x121] sm:$0xff]
    %v110 = vld [vmem:[%s0 + $0x129] sm:$0xff]
    %v111 = vld [vmem:[%s0 + $0x139] sm:$0xff]
    %v112 = vld [vmem:[%s0 + $0x141] sm:$0xff]
    %v113 = vld [vmem:[%s0 + $0x151] sm:$0xff]
    %v114 = vld [vmem:[%s0 + $0x159] sm:$0xff]
    %v115 = vld [vmem:[%s0 + $0x169] sm:$0xff]
    %v116 = vld [vmem:[%s0 + $0x171] sm:$0xff]
    %v117 = vld [vmem:[%s0 + $0x1b1] sm:$0xff]
    %v118 = vld [vmem:[%s0 + $0x1b9] sm:$0xff]
    %v119 = vld [vmem:[%s0 + $0x1c9] sm:$0xff]
    %v120 = vld [vmem:[%s0 + $0x1d1] sm:$0xff]
    %v121 = vld [vmem:[%s0 + $0x1e1] sm:$0xff]
    %v122 = vld [vmem:[%s0 + $0x1e9] sm:$0xff]
    %v123 = vld [vmem:[%s0 + $0x1f9] sm:$0xff]
    %v124 = vld [vmem:[%s0 + $0x201] sm:$0xff]
    %v125 = vld [vmem:[%s0 + $0x211] sm:$0xff]
    %v126 = vld [vmem:[%s0 + $0x219] sm:$0xff]
    %v127 = vld [vmem:[%s0 + $0x229] sm:$0xff]
    %v128 = vld [vmem:[%s0 + $0x231] sm:$0xff]
    %v129 = vld [vmem:[%s0 + $0x241] sm:$0xff]
    %v130 = vld [vmem:[%s0 + $0x249] sm:$0xff]
    %v131 = vld [vmem:[%s0 + $0x259] sm:$0xff]
    %v132 = vld [vmem:[%s0 + $0x261] sm:$0xff]
    %v133 = vld [vmem:[%s0 + $0x271] sm:$0xff]
    %v134 = vld [vmem:[%s0 + $0x279] sm:$0xff]
    %v135 = vld [vmem:[%s0 + $0x289] sm:$0xff]
    %v136 = vld [vmem:[%s0 + $0x291] sm:$0xff]
    %v137 = vld [vmem:[%s0 + $0x2a1] sm:$0xff]
    %v138 = vld [vmem:[%s0 + $0x2a9] sm:$0xff]
    %v139 = vld [vmem:[%s0 + $0x2b9] sm:$0xff]
    %v140 = vld [vmem:[%s0 + $0x2c1] sm:$0xff]
    %v141 = vld [vmem:[%s0 + $0x2d1] sm:$0xff]
    %v142 = vld [vmem:[%s0 + $0x2d9] sm:$0xff]
    %v143 = vld [vmem:[%s0 + $0x2e9] sm:$0xff]
    %v144 = vld [vmem:[%s0 + $0x2f1] sm:$0xff]
    %v145 = vld [vmem:[%s0 + $0x301] sm:$0xff]
    %v146 = vld [vmem:[%s0 + $0x309] sm:$0xff]
    %v147 = vld [vmem:[%s0 + $0x319] sm:$0xff]
    %v148 = vld [vmem:[%s0 + $0x321] sm:$0xff]
    %v149 = vld [vmem:[%s0 + $0x2] sm:$0xff]
    %v150 = vld [vmem:[%s0 + $0xa] sm:$0xff]
    %v151 = vld [vmem:[%s0 + $0x1a] sm:$0xff]
    %v152 = vld [vmem:[%s0 + $0x22] sm:$0xff]
    %v153 = vld [vmem:[%s0 + $0x32] sm:$0xff]
    %v154 = vld [vmem:[%s0 + $0x3a] sm:$0xff]
    %v155 = vld [vmem:[%s0 + $0x4a] sm:$0xff]
    %v156 = vld [vmem:[%s0 + $0x52] sm:$0xff]
    %v157 = vld [vmem:[%s0 + $0x62] sm:$0xff]
    %v158 = vld [vmem:[%s0 + $0x6a] sm:$0xff]
    %v159 = vld [vmem:[%s0 + $0x7a] sm:$0xff]
    %v160 = vld [vmem:[%s0 + $0x82] sm:$0xff]
    %v161 = vld [vmem:[%s0 + $0x92] sm:$0xff]
    %v162 = vld [vmem:[%s0 + $0x9a] sm:$0xff]
    %v163 = vld [vmem:[%s0 + $0xaa] sm:$0xff]
    %v164 = vld [vmem:[%s0 + $0xb2] sm:$0xff]
    %v165 = vld [vmem:[%s0 + $0xc2] sm:$0xff]
    %v166 = vld [vmem:[%s0 + $0xca] sm:$0xff]
    %v167 = vld [vmem:[%s0 + $0xda] sm:$0xff]
    %v168 = vld [vmem:[%s0 + $0xe2] sm:$0xff]
    %v169 = vld [vmem:[%s0 + $0xf2] sm:$0xff]
    %v170 = vld [vmem:[%s0 + $0xfa] sm:$0xff]
    %v171 = vld [vmem:[%s0 + $0x10a] sm:$0xff]
    %v172 = vld [vmem:[%s0 + $0x112] sm:$0xff]
    %v173 = vld [vmem:[%s0 + $0x122] sm:$0xff]
    %v174 = vld [vmem:[%s0 + $0x12a] sm:$0xff]
    %v175 = vld [vmem:[%s0 + $0x13a] sm:$0xff]
    %v176 = vld [vmem:[%s0 + $0x142] sm:$0xff]
    %v177 = vld [vmem:[%s0 + $0x152] sm:$0xff]
    %v178 = vld [vmem:[%s0 + $0x15a] sm:$0xff]
    %v179 = vld [vmem:[%s0 + $0x16a] sm:$0xff]
    %v180 = vld [vmem:[%s0 + $0x172] sm:$0xff]
    %v181 = vld [vmem:[%s0 + $0x1b2] sm:$0xff]
    %v182 = vld [vmem:[%s0 + $0x1ba] sm:$0xff]
    %v183 = vld [vmem:[%s0 + $0x1ca] sm:$0xff]
    %v184 = vld [vmem:[%s0 + $0x1d2] sm:$0xff]
    %v185 = vld [vmem:[%s0 + $0x1e2] sm:$0xff]
    %v186 = vld [vmem:[%s0 + $0x1ea] sm:$0xff]
    %v187 = vld [vmem:[%s0 + $0x1fa] sm:$0xff]
    %v188 = vld [vmem:[%s0 + $0x202] sm:$0xff]
    %v189 = vld [vmem:[%s0 + $0x212] sm:$0xff]
    %v190 = vld [vmem:[%s0 + $0x21a] sm:$0xff]
    %v191 = vld [vmem:[%s0 + $0x22a] sm:$0xff]
    %v192 = vld [vmem:[%s0 + $0x232] sm:$0xff]
    %v193 = vld [vmem:[%s0 + $0x242] sm:$0xff]
    %v194 = vld [vmem:[%s0 + $0x24a] sm:$0xff]
    %v195 = vld [vmem:[%s0 + $0x25a] sm:$0xff]
    %v196 = vld [vmem:[%s0 + $0x262] sm:$0xff]
    %v197 = vld [vmem:[%s0 + $0x272] sm:$0xff]
    %v198 = vld [vmem:[%s0 + $0x27a] sm:$0xff]
    %v199 = vld [vmem:[%s0 + $0x28a] sm:$0xff]
    %v200 = vld [vmem:[%s0 + $0x292] sm:$0xff]
    %v201 = vld [vmem:[%s0 + $0x2a2] sm:$0xff]
    %v202 = vld [vmem:[%s0 + $0x2aa] sm:$0xff]
    %v203 = vld [vmem:[%s0 + $0x2ba] sm:$0xff]
    %v204 = vld [vmem:[%s0 + $0x2c2] sm:$0xff]
    %v205 = vld [vmem:[%s0 + $0x2d2] sm:$0xff]
    %v206 = vld [vmem:[%s0 + $0x2da] sm:$0xff]
    %v207 = vld [vmem:[%s0 + $0x2ea] sm:$0xff]
    %v208 = vld [vmem:[%s0 + $0x2f2] sm:$0xff]
    %v209 = vld [vmem:[%s0 + $0x302] sm:$0xff]
    %v210 = vld [vmem:[%s0 + $0x30a] sm:$0xff]
    %v211 = vld [vmem:[%s0 + $0x31a] sm:$0xff]
    %v212 = vld [vmem:[%s0 + $0x322] sm:$0xff]
    %s213 = scalar_lea.vmem %s0, 24
    %v214 = vld [vmem:[%s213] sm:$0xff]
    %v215 = vld [vmem:[%s213 + $0x8] sm:$0xff]
    %v216 = vld [vmem:[%s213 + $0x18] sm:$0xff]
    %v217 = vld [vmem:[%s213 + $0x20] sm:$0xff]
    %v218 = vld [vmem:[%s213 + $0x30] sm:$0xff]
    %v219 = vld [vmem:[%s213 + $0x38] sm:$0xff]
    %v220 = vld [vmem:[%s213 + $0x48] sm:$0xff]
    %v221 = vld [vmem:[%s213 + $0x50] sm:$0xff]
    %v222 = vld [vmem:[%s213 + $0x60] sm:$0xff]
    %v223 = vld [vmem:[%s213 + $0x68] sm:$0xff]
    %v224 = vld [vmem:[%s213 + $0x78] sm:$0xff]
    %v225 = vld [vmem:[%s213 + $0x80] sm:$0xff]
    %v226 = vld [vmem:[%s213 + $0x90] sm:$0xff]
    %v227 = vld [vmem:[%s213 + $0x98] sm:$0xff]
    %v228 = vld [vmem:[%s213 + $0xa8] sm:$0xff]
    %v229 = vld [vmem:[%s213 + $0xb0] sm:$0xff]
    %v230 = vld [vmem:[%s213 + $0xc0] sm:$0xff]
    %v231 = vld [vmem:[%s213 + $0xc8] sm:$0xff]
    %v232 = vld [vmem:[%s213 + $0xd8] sm:$0xff]
    %v233 = vld [vmem:[%s213 + $0xe0] sm:$0xff]
    %v234 = vld [vmem:[%s213 + $0xf0] sm:$0xff]
    %v235 = vld [vmem:[%s213 + $0xf8] sm:$0xff]
    %v236 = vld [vmem:[%s213 + $0x108] sm:$0xff]
    %v237 = vld [vmem:[%s213 + $0x110] sm:$0xff]
    %v238 = vld [vmem:[%s213 + $0x120] sm:$0xff]
    %v239 = vld [vmem:[%s213 + $0x128] sm:$0xff]
    %v240 = vld [vmem:[%s213 + $0x138] sm:$0xff]
    %v241 = vld [vmem:[%s213 + $0x140] sm:$0xff]
    %v242 = vld [vmem:[%s213 + $0x150] sm:$0xff]
    %v243 = vld [vmem:[%s213 + $0x158] sm:$0xff]
    %v244 = vld [vmem:[%s213 + $0x168] sm:$0xff]
    %v245 = vld [vmem:[%s213 + $0x170] sm:$0xff]
    %v246 = vld [vmem:[%s213 + $0x1b0] sm:$0xff]
    %v247 = vld [vmem:[%s213 + $0x1b8] sm:$0xff]
    %v248 = vld [vmem:[%s213 + $0x1c8] sm:$0xff]
    %v249 = vld [vmem:[%s213 + $0x1d0] sm:$0xff]
    %v250 = vld [vmem:[%s213 + $0x1e0] sm:$0xff]
    %v251 = vld [vmem:[%s213 + $0x1e8] sm:$0xff]
    %v252 = vld [vmem:[%s213 + $0x1f8] sm:$0xff]
    %v253 = vld [vmem:[%s213 + $0x200] sm:$0xff]
    %v254 = vld [vmem:[%s213 + $0x210] sm:$0xff]
    %v255 = vld [vmem:[%s213 + $0x218] sm:$0xff]
    %v256 = vld [vmem:[%s213 + $0x228] sm:$0xff]
    %v257 = vld [vmem:[%s213 + $0x230] sm:$0xff]
    %v258 = vld [vmem:[%s213 + $0x240] sm:$0xff]
    %v259 = vld [vmem:[%s213 + $0x248] sm:$0xff]
    %v260 = vld [vmem:[%s213 + $0x258] sm:$0xff]
    %v261 = vld [vmem:[%s213 + $0x260] sm:$0xff]
    %v262 = vld [vmem:[%s213 + $0x270] sm:$0xff]
    %v263 = vld [vmem:[%s213 + $0x278] sm:$0xff]
    %v264 = vld [vmem:[%s213 + $0x288] sm:$0xff]
    %v265 = vld [vmem:[%s213 + $0x290] sm:$0xff]
    %v266 = vld [vmem:[%s213 + $0x2a0] sm:$0xff]
    %v267 = vld [vmem:[%s213 + $0x2a8] sm:$0xff]
    %v268 = vld [vmem:[%s213 + $0x2b8] sm:$0xff]
    %v269 = vld [vmem:[%s213 + $0x2c0] sm:$0xff]
    %v270 = vld [vmem:[%s213 + $0x2d0] sm:$0xff]
    %v271 = vld [vmem:[%s213 + $0x2d8] sm:$0xff]
    %v272 = vld [vmem:[%s213 + $0x2e8] sm:$0xff]
    %v273 = vld [vmem:[%s213 + $0x2f0] sm:$0xff]
    %v274 = vld [vmem:[%s213 + $0x300] sm:$0xff]
    %v275 = vld [vmem:[%s213 + $0x308] sm:$0xff]
    %v276 = vld [vmem:[%s213 + $0x318] sm:$0xff]
    %v277 = vld [vmem:[%s213 + $0x320] sm:$0xff]
    %v278 = vld [vmem:[%s213 + $0x1] sm:$0xff]
    %v279 = vld [vmem:[%s213 + $0x9] sm:$0xff]
    %v280 = vld [vmem:[%s213 + $0x19] sm:$0xff]
    %v281 = vld [vmem:[%s213 + $0x21] sm:$0xff]
    %v282 = vld [vmem:[%s213 + $0x31] sm:$0xff]
    %v283 = vld [vmem:[%s213 + $0x39] sm:$0xff]
    %v284 = vld [vmem:[%s213 + $0x49] sm:$0xff]
    %v285 = vld [vmem:[%s213 + $0x51] sm:$0xff]
    %v286 = vld [vmem:[%s213 + $0x61] sm:$0xff]
    %v287 = vld [vmem:[%s213 + $0x69] sm:$0xff]
    %v288 = vld [vmem:[%s213 + $0x79] sm:$0xff]
    %v289 = vld [vmem:[%s213 + $0x81] sm:$0xff]
    %v290 = vld [vmem:[%s213 + $0x91] sm:$0xff]
    %v291 = vld [vmem:[%s213 + $0x99] sm:$0xff]
    %v292 = vld [vmem:[%s213 + $0xa9] sm:$0xff]
    %v293 = vld [vmem:[%s213 + $0xb1] sm:$0xff]
    %v294 = vld [vmem:[%s213 + $0xc1] sm:$0xff]
    %v295 = vld [vmem:[%s213 + $0xc9] sm:$0xff]
    %v296 = vld [vmem:[%s213 + $0xd9] sm:$0xff]
    %v297 = vld [vmem:[%s213 + $0xe1] sm:$0xff]
    %v298 = vld [vmem:[%s213 + $0xf1] sm:$0xff]
    %v299 = vld [vmem:[%s213 + $0xf9] sm:$0xff]
    %v300 = vld [vmem:[%s213 + $0x109] sm:$0xff]
    %v301 = vld [vmem:[%s213 + $0x111] sm:$0xff]
    %v302 = vld [vmem:[%s213 + $0x121] sm:$0xff]
    %v303 = vld [vmem:[%s213 + $0x129] sm:$0xff]
    %v304 = vld [vmem:[%s213 + $0x139] sm:$0xff]
    %v305 = vld [vmem:[%s213 + $0x141] sm:$0xff]
    %v306 = vld [vmem:[%s213 + $0x151] sm:$0xff]
    %v307 = vld [vmem:[%s213 + $0x159] sm:$0xff]
    %v308 = vld [vmem:[%s213 + $0x169] sm:$0xff]
    %v309 = vld [vmem:[%s213 + $0x171] sm:$0xff]
    %v310 = vld [vmem:[%s213 + $0x1b1] sm:$0xff]
    %v311 = vld [vmem:[%s213 + $0x1b9] sm:$0xff]
    %v312 = vld [vmem:[%s213 + $0x1c9] sm:$0xff]
    %v313 = vld [vmem:[%s213 + $0x1d1] sm:$0xff]
    %v314 = vld [vmem:[%s213 + $0x1e1] sm:$0xff]
    %v315 = vld [vmem:[%s213 + $0x1e9] sm:$0xff]
    %v316 = vld [vmem:[%s213 + $0x1f9] sm:$0xff]
    %v317 = vld [vmem:[%s213 + $0x201] sm:$0xff]
    %v318 = vld [vmem:[%s213 + $0x211] sm:$0xff]
    %v319 = vld [vmem:[%s213 + $0x219] sm:$0xff]
    %v320 = vld [vmem:[%s213 + $0x229] sm:$0xff]
    %v321 = vld [vmem:[%s213 + $0x231] sm:$0xff]
    %v322 = vld [vmem:[%s213 + $0x241] sm:$0xff]
    %v323 = vld [vmem:[%s213 + $0x249] sm:$0xff]
    %v324 = vld [vmem:[%s213 + $0x259] sm:$0xff]
    %v325 = vld [vmem:[%s213 + $0x261] sm:$0xff]
    %v326 = vld [vmem:[%s213 + $0x271] sm:$0xff]
    %v327 = vld [vmem:[%s213 + $0x279] sm:$0xff]
    %v328 = vld [vmem:[%s213 + $0x289] sm:$0xff]
    %v329 = vld [vmem:[%s213 + $0x291] sm:$0xff]
    %v330 = vld [vmem:[%s213 + $0x2a1] sm:$0xff]
    %v331 = vld [vmem:[%s213 + $0x2a9] sm:$0xff]
    %v332 = vld [vmem:[%s213 + $0x2b9] sm:$0xff]
    %v333 = vld [vmem:[%s213 + $0x2c1] sm:$0xff]
    %v334 = vld [vmem:[%s213 + $0x2d1] sm:$0xff]
    %v335 = vld [vmem:[%s213 + $0x2d9] sm:$0xff]
    %v336 = vld [vmem:[%s213 + $0x2e9] sm:$0xff]
    %v337 = vld [vmem:[%s213 + $0x2f1] sm:$0xff]
    %v338 = vld [vmem:[%s213 + $0x301] sm:$0xff]
    %v339 = vld [vmem:[%s213 + $0x309] sm:$0xff]
    %v340 = vld [vmem:[%s213 + $0x319] sm:$0xff]
    %v341 = vld [vmem:[%s213 + $0x321] sm:$0xff]
    %v342 = vld [vmem:[%s213 + $0x2] sm:$0xff]
    %v343 = vld [vmem:[%s213 + $0xa] sm:$0xff]
    %v344 = vld [vmem:[%s213 + $0x1a] sm:$0xff]
    %v345 = vld [vmem:[%s213 + $0x22] sm:$0xff]
    %v346 = vld [vmem:[%s213 + $0x32] sm:$0xff]
    %v347 = vld [vmem:[%s213 + $0x3a] sm:$0xff]
    %v348 = vld [vmem:[%s213 + $0x4a] sm:$0xff]
    %v349 = vld [vmem:[%s213 + $0x52] sm:$0xff]
    %v350 = vld [vmem:[%s213 + $0x62] sm:$0xff]
    %v351 = vld [vmem:[%s213 + $0x6a] sm:$0xff]
    %v352 = vld [vmem:[%s213 + $0x7a] sm:$0xff]
    %v353 = vld [vmem:[%s213 + $0x82] sm:$0xff]
    %v354 = vld [vmem:[%s213 + $0x92] sm:$0xff]
    %v355 = vld [vmem:[%s213 + $0x9a] sm:$0xff]
    %v356 = vld [vmem:[%s213 + $0xaa] sm:$0xff]
    %v357 = vld [vmem:[%s213 + $0xb2] sm:$0xff]
    %v358 = vld [vmem:[%s213 + $0xc2] sm:$0xff]
    %v359 = vld [vmem:[%s213 + $0xca] sm:$0xff]
    %v360 = vld [vmem:[%s213 + $0xda] sm:$0xff]
    %v361 = vld [vmem:[%s213 + $0xe2] sm:$0xff]
    %v362 = vld [vmem:[%s213 + $0xf2] sm:$0xff]
    %v363 = vld [vmem:[%s213 + $0xfa] sm:$0xff]
    %v364 = vld [vmem:[%s213 + $0x10a] sm:$0xff]
    %v365 = vld [vmem:[%s213 + $0x112] sm:$0xff]
    %v366 = vld [vmem:[%s213 + $0x122] sm:$0xff]
    %v367 = vld [vmem:[%s213 + $0x12a] sm:$0xff]
    %v368 = vld [vmem:[%s213 + $0x13a] sm:$0xff]
    %v369 = vld [vmem:[%s213 + $0x142] sm:$0xff]
    %v370 = vld [vmem:[%s213 + $0x152] sm:$0xff]
    %v371 = vld [vmem:[%s213 + $0x15a] sm:$0xff]
    %v372 = vld [vmem:[%s213 + $0x16a] sm:$0xff]
    %v373 = vld [vmem:[%s213 + $0x172] sm:$0xff]
    %v374 = vld [vmem:[%s213 + $0x1b2] sm:$0xff]
    %v375 = vld [vmem:[%s213 + $0x1ba] sm:$0xff]
    %v376 = vld [vmem:[%s213 + $0x1ca] sm:$0xff]
    %v377 = vld [vmem:[%s213 + $0x1d2] sm:$0xff]
    %v378 = vld [vmem:[%s213 + $0x1e2] sm:$0xff]
    %v379 = vld [vmem:[%s213 + $0x1ea] sm:$0xff]
    %v380 = vld [vmem:[%s213 + $0x1fa] sm:$0xff]
    %v381 = vld [vmem:[%s213 + $0x202] sm:$0xff]
    %v382 = vld [vmem:[%s213 + $0x212] sm:$0xff]
    %v383 = vld [vmem:[%s213 + $0x21a] sm:$0xff]
    %v384 = vld [vmem:[%s213 + $0x22a] sm:$0xff]
    %v385 = vld [vmem:[%s213 + $0x232] sm:$0xff]
    %v386 = vld [vmem:[%s213 + $0x242] sm:$0xff]
    %v387 = vld [vmem:[%s213 + $0x24a] sm:$0xff]
    %v388 = vld [vmem:[%s213 + $0x25a] sm:$0xff]
    %v389 = vld [vmem:[%s213 + $0x262] sm:$0xff]
    %v390 = vld [vmem:[%s213 + $0x272] sm:$0xff]
    %v391 = vld [vmem:[%s213 + $0x27a] sm:$0xff]
    %v392 = vld [vmem:[%s213 + $0x28a] sm:$0xff]
    %v393 = vld [vmem:[%s213 + $0x292] sm:$0xff]
    %v394 = vld [vmem:[%s213 + $0x2a2] sm:$0xff]
    %v395 = vld [vmem:[%s213 + $0x2aa] sm:$0xff]
    %v396 = vld [vmem:[%s213 + $0x2ba] sm:$0xff]
    %v397 = vld [vmem:[%s213 + $0x2c2] sm:$0xff]
    %v398 = vld [vmem:[%s213 + $0x2d2] sm:$0xff]
    %v399 = vld [vmem:[%s213 + $0x2da] sm:$0xff]
    %v400 = vld [vmem:[%s213 + $0x2ea] sm:$0xff]
    %v401 = vld [vmem:[%s213 + $0x2f2] sm:$0xff]
    %v402 = vld [vmem:[%s213 + $0x302] sm:$0xff]
    %v403 = vld [vmem:[%s213 + $0x30a] sm:$0xff]
    %v404 = vld [vmem:[%s213 + $0x31a] sm:$0xff]
    %v405 = vld [vmem:[%s213 + $0x322] sm:$0xff]
    %s406 = scalar_lea.vmem %s0, 48
    %v407 = vld [vmem:[%s406] sm:$0xff]
    %v408 = vld [vmem:[%s406 + $0x8] sm:$0xff]
    %v409 = vld [vmem:[%s406 + $0x18] sm:$0xff]
    %v410 = vld [vmem:[%s406 + $0x20] sm:$0xff]
    %v411 = vld [vmem:[%s406 + $0x30] sm:$0xff]
    %v412 = vld [vmem:[%s406 + $0x38] sm:$0xff]
    %v413 = vld [vmem:[%s406 + $0x48] sm:$0xff]
    %v414 = vld [vmem:[%s406 + $0x50] sm:$0xff]
    %v415 = vld [vmem:[%s406 + $0x60] sm:$0xff]
    %v416 = vld [vmem:[%s406 + $0x68] sm:$0xff]
    %v417 = vld [vmem:[%s406 + $0x78] sm:$0xff]
    %v418 = vld [vmem:[%s406 + $0x80] sm:$0xff]
    %v419 = vld [vmem:[%s406 + $0x90] sm:$0xff]
    %v420 = vld [vmem:[%s406 + $0x98] sm:$0xff]
    %v421 = vld [vmem:[%s406 + $0xa8] sm:$0xff]
    %v422 = vld [vmem:[%s406 + $0xb0] sm:$0xff]
    %v423 = vld [vmem:[%s406 + $0xc0] sm:$0xff]
    %v424 = vld [vmem:[%s406 + $0xc8] sm:$0xff]
    %v425 = vld [vmem:[%s406 + $0xd8] sm:$0xff]
    %v426 = vld [vmem:[%s406 + $0xe0] sm:$0xff]
    %v427 = vld [vmem:[%s406 + $0xf0] sm:$0xff]
    %v428 = vld [vmem:[%s406 + $0xf8] sm:$0xff]
    %v429 = vld [vmem:[%s406 + $0x108] sm:$0xff]
    %v430 = vld [vmem:[%s406 + $0x110] sm:$0xff]
    %v431 = vld [vmem:[%s406 + $0x120] sm:$0xff]
    %v432 = vld [vmem:[%s406 + $0x128] sm:$0xff]
    %v433 = vld [vmem:[%s406 + $0x138] sm:$0xff]
    %v434 = vld [vmem:[%s406 + $0x140] sm:$0xff]
    %v435 = vld [vmem:[%s406 + $0x150] sm:$0xff]
    %v436 = vld [vmem:[%s406 + $0x158] sm:$0xff]
    %v437 = vld [vmem:[%s406 + $0x168] sm:$0xff]
    %v438 = vld [vmem:[%s406 + $0x170] sm:$0xff]
    %v439 = vld [vmem:[%s406 + $0x1b0] sm:$0xff]
    %v440 = vld [vmem:[%s406 + $0x1b8] sm:$0xff]
    %v441 = vld [vmem:[%s406 + $0x1c8] sm:$0xff]
    %v442 = vld [vmem:[%s406 + $0x1d0] sm:$0xff]
    %v443 = vld [vmem:[%s406 + $0x1e0] sm:$0xff]
    %v444 = vld [vmem:[%s406 + $0x1e8] sm:$0xff]
    %v445 = vld [vmem:[%s406 + $0x1f8] sm:$0xff]
    %v446 = vld [vmem:[%s406 + $0x200] sm:$0xff]
    %v447 = vld [vmem:[%s406 + $0x210] sm:$0xff]
    %v448 = vld [vmem:[%s406 + $0x218] sm:$0xff]
    %v449 = vld [vmem:[%s406 + $0x228] sm:$0xff]
    %v450 = vld [vmem:[%s406 + $0x230] sm:$0xff]
    %v451 = vld [vmem:[%s406 + $0x240] sm:$0xff]
    %v452 = vld [vmem:[%s406 + $0x248] sm:$0xff]
    %v453 = vld [vmem:[%s406 + $0x258] sm:$0xff]
    %v454 = vld [vmem:[%s406 + $0x260] sm:$0xff]
    %v455 = vld [vmem:[%s406 + $0x270] sm:$0xff]
    %v456 = vld [vmem:[%s406 + $0x278] sm:$0xff]
    %v457 = vld [vmem:[%s406 + $0x288] sm:$0xff]
    %v458 = vld [vmem:[%s406 + $0x290] sm:$0xff]
    %v459 = vld [vmem:[%s406 + $0x2a0] sm:$0xff]
    %v460 = vld [vmem:[%s406 + $0x2a8] sm:$0xff]
    %v461 = vld [vmem:[%s406 + $0x2b8] sm:$0xff]
    %v462 = vld [vmem:[%s406 + $0x2c0] sm:$0xff]
    %v463 = vld [vmem:[%s406 + $0x2d0] sm:$0xff]
    %v464 = vld [vmem:[%s406 + $0x2d8] sm:$0xff]
    %v465 = vld [vmem:[%s406 + $0x2e8] sm:$0xff]
    %v466 = vld [vmem:[%s406 + $0x2f0] sm:$0xff]
    %v467 = vld [vmem:[%s406 + $0x300] sm:$0xff]
    %v468 = vld [vmem:[%s406 + $0x308] sm:$0xff]
    %v469 = vld [vmem:[%s406 + $0x318] sm:$0xff]
    %v470 = vld [vmem:[%s406 + $0x320] sm:$0xff]
    %v471 = vld [vmem:[%s406 + $0x1] sm:$0xff]
    %v472 = vld [vmem:[%s406 + $0x9] sm:$0xff]
    %v473 = vld [vmem:[%s406 + $0x19] sm:$0xff]
    %v474 = vld [vmem:[%s406 + $0x21] sm:$0xff]
    %v475 = vld [vmem:[%s406 + $0x31] sm:$0xff]
    %v476 = vld [vmem:[%s406 + $0x39] sm:$0xff]
    %v477 = vld [vmem:[%s406 + $0x49] sm:$0xff]
    %v478 = vld [vmem:[%s406 + $0x51] sm:$0xff]
    %v479 = vld [vmem:[%s406 + $0x61] sm:$0xff]
    %v480 = vld [vmem:[%s406 + $0x69] sm:$0xff]
    %v481 = vld [vmem:[%s406 + $0x79] sm:$0xff]
    %v482 = vld [vmem:[%s406 + $0x81] sm:$0xff]
    %v483 = vld [vmem:[%s406 + $0x91] sm:$0xff]
    %v484 = vld [vmem:[%s406 + $0x99] sm:$0xff]
    %v485 = vld [vmem:[%s406 + $0xa9] sm:$0xff]
    %v486 = vld [vmem:[%s406 + $0xb1] sm:$0xff]
    %v487 = vld [vmem:[%s406 + $0xc1] sm:$0xff]
    %v488 = vld [vmem:[%s406 + $0xc9] sm:$0xff]
    %v489 = vld [vmem:[%s406 + $0xd9] sm:$0xff]
    %v490 = vld [vmem:[%s406 + $0xe1] sm:$0xff]
    %v491 = vld [vmem:[%s406 + $0xf1] sm:$0xff]
    %v492 = vld [vmem:[%s406 + $0xf9] sm:$0xff]
    %v493 = vld [vmem:[%s406 + $0x109] sm:$0xff]
    %v494 = vld [vmem:[%s406 + $0x111] sm:$0xff]
    %v495 = vld [vmem:[%s406 + $0x121] sm:$0xff]
    %v496 = vld [vmem:[%s406 + $0x129] sm:$0xff]
    %v497 = vld [vmem:[%s406 + $0x139] sm:$0xff]
    %v498 = vld [vmem:[%s406 + $0x141] sm:$0xff]
    %v499 = vld [vmem:[%s406 + $0x151] sm:$0xff]
    %v500 = vld [vmem:[%s406 + $0x159] sm:$0xff]
    %v501 = vld [vmem:[%s406 + $0x169] sm:$0xff]
    %v502 = vld [vmem:[%s406 + $0x171] sm:$0xff]
    %v503 = vld [vmem:[%s406 + $0x1b1] sm:$0xff]
    %v504 = vld [vmem:[%s406 + $0x1b9] sm:$0xff]
    %v505 = vld [vmem:[%s406 + $0x1c9] sm:$0xff]
    %v506 = vld [vmem:[%s406 + $0x1d1] sm:$0xff]
    %v507 = vld [vmem:[%s406 + $0x1e1] sm:$0xff]
    %v508 = vld [vmem:[%s406 + $0x1e9] sm:$0xff]
    %v509 = vld [vmem:[%s406 + $0x1f9] sm:$0xff]
    %v510 = vld [vmem:[%s406 + $0x201] sm:$0xff]
    %v511 = vld [vmem:[%s406 + $0x211] sm:$0xff]
    %v512 = vld [vmem:[%s406 + $0x219] sm:$0xff]
    %v513 = vld [vmem:[%s406 + $0x229] sm:$0xff]
    %v514 = vld [vmem:[%s406 + $0x231] sm:$0xff]
    %v515 = vld [vmem:[%s406 + $0x241] sm:$0xff]
    %v516 = vld [vmem:[%s406 + $0x249] sm:$0xff]
    %v517 = vld [vmem:[%s406 + $0x259] sm:$0xff]
    %v518 = vld [vmem:[%s406 + $0x261] sm:$0xff]
    %v519 = vld [vmem:[%s406 + $0x271] sm:$0xff]
    %v520 = vld [vmem:[%s406 + $0x279] sm:$0xff]
    %v521 = vld [vmem:[%s406 + $0x289] sm:$0xff]
    %v522 = vld [vmem:[%s406 + $0x291] sm:$0xff]
    %v523 = vld [vmem:[%s406 + $0x2a1] sm:$0xff]
    %v524 = vld [vmem:[%s406 + $0x2a9] sm:$0xff]
    %v525 = vld [vmem:[%s406 + $0x2b9] sm:$0xff]
    %v526 = vld [vmem:[%s406 + $0x2c1] sm:$0xff]
    %v527 = vld [vmem:[%s406 + $0x2d1] sm:$0xff]
    %v528 = vld [vmem:[%s406 + $0x2d9] sm:$0xff]
    %v529 = vld [vmem:[%s406 + $0x2e9] sm:$0xff]
    %v530 = vld [vmem:[%s406 + $0x2f1] sm:$0xff]
    %v531 = vld [vmem:[%s406 + $0x301] sm:$0xff]
    %v532 = vld [vmem:[%s406 + $0x309] sm:$0xff]
    %v533 = vld [vmem:[%s406 + $0x319] sm:$0xff]
    %v534 = vld [vmem:[%s406 + $0x321] sm:$0xff]
    %v535 = vld [vmem:[%s406 + $0x2] sm:$0xff]
    %v536 = vld [vmem:[%s406 + $0xa] sm:$0xff]
    %v537 = vld [vmem:[%s406 + $0x1a] sm:$0xff]
    %v538 = vld [vmem:[%s406 + $0x22] sm:$0xff]
    %v539 = vld [vmem:[%s406 + $0x32] sm:$0xff]
    %v540 = vld [vmem:[%s406 + $0x3a] sm:$0xff]
    %v541 = vld [vmem:[%s406 + $0x4a] sm:$0xff]
    %v542 = vld [vmem:[%s406 + $0x52] sm:$0xff]
    %v543 = vld [vmem:[%s406 + $0x62] sm:$0xff]
    %v544 = vld [vmem:[%s406 + $0x6a] sm:$0xff]
    %v545 = vld [vmem:[%s406 + $0x7a] sm:$0xff]
    %v546 = vld [vmem:[%s406 + $0x82] sm:$0xff]
    %v547 = vld [vmem:[%s406 + $0x92] sm:$0xff]
    %v548 = vld [vmem:[%s406 + $0x9a] sm:$0xff]
    %v549 = vld [vmem:[%s406 + $0xaa] sm:$0xff]
    %v550 = vld [vmem:[%s406 + $0xb2] sm:$0xff]
    %v551 = vld [vmem:[%s406 + $0xc2] sm:$0xff]
    %v552 = vld [vmem:[%s406 + $0xca] sm:$0xff]
    %v553 = vld [vmem:[%s406 + $0xda] sm:$0xff]
    %v554 = vld [vmem:[%s406 + $0xe2] sm:$0xff]
    %v555 = vld [vmem:[%s406 + $0xf2] sm:$0xff]
    %v556 = vld [vmem:[%s406 + $0xfa] sm:$0xff]
    %v557 = vld [vmem:[%s406 + $0x10a] sm:$0xff]
    %v558 = vld [vmem:[%s406 + $0x112] sm:$0xff]
    %v559 = vld [vmem:[%s406 + $0x122] sm:$0xff]
    %v560 = vld [vmem:[%s406 + $0x12a] sm:$0xff]
    %v561 = vld [vmem:[%s406 + $0x13a] sm:$0xff]
    %v562 = vld [vmem:[%s406 + $0x142] sm:$0xff]
    %v563 = vld [vmem:[%s406 + $0x152] sm:$0xff]
    %v564 = vld [vmem:[%s406 + $0x15a] sm:$0xff]
    %v565 = vld [vmem:[%s406 + $0x16a] sm:$0xff]
    %v566 = vld [vmem:[%s406 + $0x172] sm:$0xff]
    %v567 = vld [vmem:[%s406 + $0x1b2] sm:$0xff]
    %v568 = vld [vmem:[%s406 + $0x1ba] sm:$0xff]
    %v569 = vld [vmem:[%s406 + $0x1ca] sm:$0xff]
    %v570 = vld [vmem:[%s406 + $0x1d2] sm:$0xff]
    %v571 = vld [vmem:[%s406 + $0x1e2] sm:$0xff]
    %v572 = vld [vmem:[%s406 + $0x1ea] sm:$0xff]
    %v573 = vld [vmem:[%s406 + $0x1fa] sm:$0xff]
    %v574 = vld [vmem:[%s406 + $0x202] sm:$0xff]
    %v575 = vld [vmem:[%s406 + $0x212] sm:$0xff]
    %v576 = vld [vmem:[%s406 + $0x21a] sm:$0xff]
    %v577 = vld [vmem:[%s406 + $0x22a] sm:$0xff]
    %v578 = vld [vmem:[%s406 + $0x232] sm:$0xff]
    %v579 = vld [vmem:[%s406 + $0x242] sm:$0xff]
    %v580 = vld [vmem:[%s406 + $0x24a] sm:$0xff]
    %v581 = vld [vmem:[%s406 + $0x25a] sm:$0xff]
    %v582 = vld [vmem:[%s406 + $0x262] sm:$0xff]
    %v583 = vld [vmem:[%s406 + $0x272] sm:$0xff]
    %v584 = vld [vmem:[%s406 + $0x27a] sm:$0xff]
    %v585 = vld [vmem:[%s406 + $0x28a] sm:$0xff]
    %v586 = vld [vmem:[%s406 + $0x292] sm:$0xff]
    %v587 = vld [vmem:[%s406 + $0x2a2] sm:$0xff]
    %v588 = vld [vmem:[%s406 + $0x2aa] sm:$0xff]
    %v589 = vld [vmem:[%s406 + $0x2ba] sm:$0xff]
    %v590 = vld [vmem:[%s406 + $0x2c2] sm:$0xff]
    %v591 = vld [vmem:[%s406 + $0x2d2] sm:$0xff]
    %v592 = vld [vmem:[%s406 + $0x2da] sm:$0xff]
    %v593 = vld [vmem:[%s406 + $0x2ea] sm:$0xff]
    %v594 = vld [vmem:[%s406 + $0x2f2] sm:$0xff]
    %v595 = vld [vmem:[%s406 + $0x302] sm:$0xff]
    %v596 = vld [vmem:[%s406 + $0x30a] sm:$0xff]
    %v597 = vld [vmem:[%s406 + $0x31a] sm:$0xff]
    %v598 = vld [vmem:[%s406 + $0x322] sm:$0xff]
    %663 = vrot.lane.b32.xlu0 %v85, 4
    %v664 = vpop.permute.xlu0 %663
    %665 = vrot.lane.b32.xlu0 %v86, 4
    %v666 = vpop.permute.xlu0 %665
    %667 = vrot.lane.b32.xlu0 %v87, 4
    %v668 = vpop.permute.xlu0 %667
    %669 = vrot.lane.b32.xlu0 %v88, 4
    %v670 = vpop.permute.xlu0 %669
    %671 = vrot.lane.b32.xlu0 %v89, 4
    %v672 = vpop.permute.xlu0 %671
    %673 = vrot.lane.b32.xlu0 %v90, 4
    %v674 = vpop.permute.xlu0 %673
    %675 = vrot.lane.b32.xlu0 %v91, 4
    %v676 = vpop.permute.xlu0 %675
    %677 = vrot.lane.b32.xlu0 %v92, 4
    %v678 = vpop.permute.xlu0 %677
    %679 = vrot.lane.b32.xlu0 %v93, 4
    %v680 = vpop.permute.xlu0 %679
    %681 = vrot.lane.b32.xlu0 %v94, 4
    %v682 = vpop.permute.xlu0 %681
    %683 = vrot.lane.b32.xlu0 %v95, 4
    %v684 = vpop.permute.xlu0 %683
    %685 = vrot.lane.b32.xlu0 %v96, 4
    %v686 = vpop.permute.xlu0 %685
    %687 = vrot.lane.b32.xlu0 %v97, 4
    %v688 = vpop.permute.xlu0 %687
    %689 = vrot.lane.b32.xlu0 %v98, 4
    %v690 = vpop.permute.xlu0 %689
    %691 = vrot.lane.b32.xlu0 %v99, 4
    %v692 = vpop.permute.xlu0 %691
    %693 = vrot.lane.b32.xlu0 %v100, 4
    %v694 = vpop.permute.xlu0 %693
    %695 = vrot.lane.b32.xlu0 %v101, 4
    %v696 = vpop.permute.xlu0 %695
    %697 = vrot.lane.b32.xlu0 %v102, 4
    %v698 = vpop.permute.xlu0 %697
    %699 = vrot.lane.b32.xlu0 %v103, 4
    %v700 = vpop.permute.xlu0 %699
    %701 = vrot.lane.b32.xlu0 %v104, 4
    %v702 = vpop.permute.xlu0 %701
    %703 = vrot.lane.b32.xlu0 %v105, 4
    %v704 = vpop.permute.xlu0 %703
    %705 = vrot.lane.b32.xlu0 %v106, 4
    %v706 = vpop.permute.xlu0 %705
    %707 = vrot.lane.b32.xlu0 %v107, 4
    %v708 = vpop.permute.xlu0 %707
    %709 = vrot.lane.b32.xlu0 %v108, 4
    %v710 = vpop.permute.xlu0 %709
    %711 = vrot.lane.b32.xlu0 %v109, 4
    %v712 = vpop.permute.xlu0 %711
    %713 = vrot.lane.b32.xlu0 %v110, 4
    %v714 = vpop.permute.xlu0 %713
    %715 = vrot.lane.b32.xlu0 %v111, 4
    %v716 = vpop.permute.xlu0 %715
    %717 = vrot.lane.b32.xlu0 %v112, 4
    %v718 = vpop.permute.xlu0 %717
    %719 = vrot.lane.b32.xlu0 %v113, 4
    %v720 = vpop.permute.xlu0 %719
    %721 = vrot.lane.b32.xlu0 %v114, 4
    %v722 = vpop.permute.xlu0 %721
    %723 = vrot.lane.b32.xlu0 %v115, 4
    %v724 = vpop.permute.xlu0 %723
    %725 = vrot.lane.b32.xlu0 %v116, 4
    %v726 = vpop.permute.xlu0 %725
    %727 = vrot.lane.b32.xlu0 %v117, 4
    %v728 = vpop.permute.xlu0 %727
    %729 = vrot.lane.b32.xlu0 %v118, 4
    %v730 = vpop.permute.xlu0 %729
    %731 = vrot.lane.b32.xlu0 %v119, 4
    %v732 = vpop.permute.xlu0 %731
    %733 = vrot.lane.b32.xlu0 %v120, 4
    %v734 = vpop.permute.xlu0 %733
    %735 = vrot.lane.b32.xlu0 %v121, 4
    %v736 = vpop.permute.xlu0 %735
    %737 = vrot.lane.b32.xlu0 %v122, 4
    %v738 = vpop.permute.xlu0 %737
    %739 = vrot.lane.b32.xlu0 %v123, 4
    %v740 = vpop.permute.xlu0 %739
    %741 = vrot.lane.b32.xlu0 %v124, 4
    %v742 = vpop.permute.xlu0 %741
    %743 = vrot.lane.b32.xlu0 %v125, 4
    %v744 = vpop.permute.xlu0 %743
    %745 = vrot.lane.b32.xlu0 %v126, 4
    %v746 = vpop.permute.xlu0 %745
    %747 = vrot.lane.b32.xlu0 %v127, 4
    %v748 = vpop.permute.xlu0 %747
    %749 = vrot.lane.b32.xlu0 %v128, 4
    %v750 = vpop.permute.xlu0 %749
    %751 = vrot.lane.b32.xlu0 %v129, 4
    %v752 = vpop.permute.xlu0 %751
    %753 = vrot.lane.b32.xlu0 %v130, 4
    %v754 = vpop.permute.xlu0 %753
    %755 = vrot.lane.b32.xlu0 %v131, 4
    %v756 = vpop.permute.xlu0 %755
    %757 = vrot.lane.b32.xlu0 %v132, 4
    %v758 = vpop.permute.xlu0 %757
    %759 = vrot.lane.b32.xlu0 %v133, 4
    %v760 = vpop.permute.xlu0 %759
    %761 = vrot.lane.b32.xlu0 %v134, 4
    %v762 = vpop.permute.xlu0 %761
    %763 = vrot.lane.b32.xlu0 %v135, 4
    %v764 = vpop.permute.xlu0 %763
    %765 = vrot.lane.b32.xlu0 %v136, 4
    %v766 = vpop.permute.xlu0 %765
    %767 = vrot.lane.b32.xlu0 %v137, 4
    %v768 = vpop.permute.xlu0 %767
    %769 = vrot.lane.b32.xlu0 %v138, 4
    %v770 = vpop.permute.xlu0 %769
    %771 = vrot.lane.b32.xlu0 %v139, 4
    %v772 = vpop.permute.xlu0 %771
    %773 = vrot.lane.b32.xlu0 %v140, 4
    %v774 = vpop.permute.xlu0 %773
    %775 = vrot.lane.b32.xlu0 %v141, 4
    %v776 = vpop.permute.xlu0 %775
    %777 = vrot.lane.b32.xlu0 %v142, 4
    %v778 = vpop.permute.xlu0 %777
    %779 = vrot.lane.b32.xlu0 %v143, 4
    %v780 = vpop.permute.xlu0 %779
    %781 = vrot.lane.b32.xlu0 %v144, 4
    %v782 = vpop.permute.xlu0 %781
    %783 = vrot.lane.b32.xlu0 %v145, 4
    %v784 = vpop.permute.xlu0 %783
    %785 = vrot.lane.b32.xlu0 %v146, 4
    %v786 = vpop.permute.xlu0 %785
    %787 = vrot.lane.b32.xlu0 %v147, 4
    %v788 = vpop.permute.xlu0 %787
    %789 = vrot.lane.b32.xlu0 %v148, 4
    %v790 = vpop.permute.xlu0 %789
    %919 = vrot.lane.b32.xlu0 %v149, 8
    %v920 = vpop.permute.xlu0 %919
    %921 = vrot.lane.b32.xlu0 %v150, 8
    %v922 = vpop.permute.xlu0 %921
    %923 = vrot.lane.b32.xlu0 %v151, 8
    %v924 = vpop.permute.xlu0 %923
    %925 = vrot.lane.b32.xlu0 %v152, 8
    %v926 = vpop.permute.xlu0 %925
    %927 = vrot.lane.b32.xlu0 %v153, 8
    %v928 = vpop.permute.xlu0 %927
    %929 = vrot.lane.b32.xlu0 %v154, 8
    %v930 = vpop.permute.xlu0 %929
    %931 = vrot.lane.b32.xlu0 %v155, 8
    %v932 = vpop.permute.xlu0 %931
    %933 = vrot.lane.b32.xlu0 %v156, 8
    %v934 = vpop.permute.xlu0 %933
    %935 = vrot.lane.b32.xlu0 %v157, 8
    %v936 = vpop.permute.xlu0 %935
    %937 = vrot.lane.b32.xlu0 %v158, 8
    %v938 = vpop.permute.xlu0 %937
    %939 = vrot.lane.b32.xlu0 %v159, 8
    %v940 = vpop.permute.xlu0 %939
    %941 = vrot.lane.b32.xlu0 %v160, 8
    %v942 = vpop.permute.xlu0 %941
    %943 = vrot.lane.b32.xlu0 %v161, 8
    %v944 = vpop.permute.xlu0 %943
    %945 = vrot.lane.b32.xlu0 %v162, 8
    %v946 = vpop.permute.xlu0 %945
    %947 = vrot.lane.b32.xlu0 %v163, 8
    %v948 = vpop.permute.xlu0 %947
    %949 = vrot.lane.b32.xlu0 %v164, 8
    %v950 = vpop.permute.xlu0 %949
    %951 = vrot.lane.b32.xlu0 %v165, 8
    %v952 = vpop.permute.xlu0 %951
    %953 = vrot.lane.b32.xlu0 %v166, 8
    %v954 = vpop.permute.xlu0 %953
    %955 = vrot.lane.b32.xlu0 %v167, 8
    %v956 = vpop.permute.xlu0 %955
    %957 = vrot.lane.b32.xlu0 %v168, 8
    %v958 = vpop.permute.xlu0 %957
    %959 = vrot.lane.b32.xlu0 %v169, 8
    %v960 = vpop.permute.xlu0 %959
    %961 = vrot.lane.b32.xlu0 %v170, 8
    %v962 = vpop.permute.xlu0 %961
    %963 = vrot.lane.b32.xlu0 %v171, 8
    %v964 = vpop.permute.xlu0 %963
    %965 = vrot.lane.b32.xlu0 %v172, 8
    %v966 = vpop.permute.xlu0 %965
    %967 = vrot.lane.b32.xlu0 %v173, 8
    %v968 = vpop.permute.xlu0 %967
    %969 = vrot.lane.b32.xlu0 %v174, 8
    %v970 = vpop.permute.xlu0 %969
    %971 = vrot.lane.b32.xlu0 %v175, 8
    %v972 = vpop.permute.xlu0 %971
    %973 = vrot.lane.b32.xlu0 %v176, 8
    %v974 = vpop.permute.xlu0 %973
    %975 = vrot.lane.b32.xlu0 %v177, 8
    %v976 = vpop.permute.xlu0 %975
    %977 = vrot.lane.b32.xlu0 %v178, 8
    %v978 = vpop.permute.xlu0 %977
    %979 = vrot.lane.b32.xlu0 %v179, 8
    %v980 = vpop.permute.xlu0 %979
    %981 = vrot.lane.b32.xlu0 %v180, 8
    %v982 = vpop.permute.xlu0 %981
    %983 = vrot.lane.b32.xlu0 %v181, 8
    %v984 = vpop.permute.xlu0 %983
    %985 = vrot.lane.b32.xlu0 %v182, 8
    %v986 = vpop.permute.xlu0 %985
    %987 = vrot.lane.b32.xlu0 %v183, 8
    %v988 = vpop.permute.xlu0 %987
    %989 = vrot.lane.b32.xlu0 %v184, 8
    %v990 = vpop.permute.xlu0 %989
    %991 = vrot.lane.b32.xlu0 %v185, 8
    %v992 = vpop.permute.xlu0 %991
    %993 = vrot.lane.b32.xlu0 %v186, 8
    %v994 = vpop.permute.xlu0 %993
    %995 = vrot.lane.b32.xlu0 %v187, 8
    %v996 = vpop.permute.xlu0 %995
    %997 = vrot.lane.b32.xlu0 %v188, 8
    %v998 = vpop.permute.xlu0 %997
    %999 = vrot.lane.b32.xlu0 %v189, 8
    %v1000 = vpop.permute.xlu0 %999
    %1001 = vrot.lane.b32.xlu0 %v190, 8
    %v1002 = vpop.permute.xlu0 %1001
    %1003 = vrot.lane.b32.xlu0 %v191, 8
    %v1004 = vpop.permute.xlu0 %1003
    %1005 = vrot.lane.b32.xlu0 %v192, 8
    %v1006 = vpop.permute.xlu0 %1005
    %1007 = vrot.lane.b32.xlu0 %v193, 8
    %v1008 = vpop.permute.xlu0 %1007
    %1009 = vrot.lane.b32.xlu0 %v194, 8
    %v1010 = vpop.permute.xlu0 %1009
    %1011 = vrot.lane.b32.xlu0 %v195, 8
    %v1012 = vpop.permute.xlu0 %1011
    %1013 = vrot.lane.b32.xlu0 %v196, 8
    %v1014 = vpop.permute.xlu0 %1013
    %1015 = vrot.lane.b32.xlu0 %v197, 8
    %v1016 = vpop.permute.xlu0 %1015
    %1017 = vrot.lane.b32.xlu0 %v198, 8
    %v1018 = vpop.permute.xlu0 %1017
    %1019 = vrot.lane.b32.xlu0 %v199, 8
    %v1020 = vpop.permute.xlu0 %1019
    %1021 = vrot.lane.b32.xlu0 %v200, 8
    %v1022 = vpop.permute.xlu0 %1021
    %1023 = vrot.lane.b32.xlu0 %v201, 8
    %v1024 = vpop.permute.xlu0 %1023
    %1025 = vrot.lane.b32.xlu0 %v202, 8
    %v1026 = vpop.permute.xlu0 %1025
    %1027 = vrot.lane.b32.xlu0 %v203, 8
    %v1028 = vpop.permute.xlu0 %1027
    %1029 = vrot.lane.b32.xlu0 %v204, 8
    %v1030 = vpop.permute.xlu0 %1029
    %1031 = vrot.lane.b32.xlu0 %v205, 8
    %v1032 = vpop.permute.xlu0 %1031
    %1033 = vrot.lane.b32.xlu0 %v206, 8
    %v1034 = vpop.permute.xlu0 %1033
    %1035 = vrot.lane.b32.xlu0 %v207, 8
    %v1036 = vpop.permute.xlu0 %1035
    %1037 = vrot.lane.b32.xlu0 %v208, 8
    %v1038 = vpop.permute.xlu0 %1037
    %1039 = vrot.lane.b32.xlu0 %v209, 8
    %v1040 = vpop.permute.xlu0 %1039
    %1041 = vrot.lane.b32.xlu0 %v210, 8
    %v1042 = vpop.permute.xlu0 %1041
    %1043 = vrot.lane.b32.xlu0 %v211, 8
    %v1044 = vpop.permute.xlu0 %1043
    %1045 = vrot.lane.b32.xlu0 %v212, 8
    %v1046 = vpop.permute.xlu0 %1045
    %1175 = vrot.lane.b32.xlu0 %v214, 12
    %v1176 = vpop.permute.xlu0 %1175
    %1177 = vrot.lane.b32.xlu0 %v215, 12
    %v1178 = vpop.permute.xlu0 %1177
    %1179 = vrot.lane.b32.xlu0 %v216, 12
    %v1180 = vpop.permute.xlu0 %1179
    %1181 = vrot.lane.b32.xlu0 %v217, 12
    %v1182 = vpop.permute.xlu0 %1181
    %1183 = vrot.lane.b32.xlu0 %v218, 12
    %v1184 = vpop.permute.xlu0 %1183
    %1185 = vrot.lane.b32.xlu0 %v219, 12
    %v1186 = vpop.permute.xlu0 %1185
    %1187 = vrot.lane.b32.xlu0 %v220, 12
    %v1188 = vpop.permute.xlu0 %1187
    %1189 = vrot.lane.b32.xlu0 %v221, 12
    %v1190 = vpop.permute.xlu0 %1189
    %1191 = vrot.lane.b32.xlu0 %v222, 12
    %v1192 = vpop.permute.xlu0 %1191
    %1193 = vrot.lane.b32.xlu0 %v223, 12
    %v1194 = vpop.permute.xlu0 %1193
    %1195 = vrot.lane.b32.xlu0 %v224, 12
    %v1196 = vpop.permute.xlu0 %1195
    %1197 = vrot.lane.b32.xlu0 %v225, 12
    %v1198 = vpop.permute.xlu0 %1197
    %1199 = vrot.lane.b32.xlu0 %v226, 12
    %v1200 = vpop.permute.xlu0 %1199
    %1201 = vrot.lane.b32.xlu0 %v227, 12
    %v1202 = vpop.permute.xlu0 %1201
    %1203 = vrot.lane.b32.xlu0 %v228, 12
    %v1204 = vpop.permute.xlu0 %1203
    %1205 = vrot.lane.b32.xlu0 %v229, 12
    %v1206 = vpop.permute.xlu0 %1205
    %1207 = vrot.lane.b32.xlu0 %v230, 12
    %v1208 = vpop.permute.xlu0 %1207
    %1209 = vrot.lane.b32.xlu0 %v231, 12
    %v1210 = vpop.permute.xlu0 %1209
    %1211 = vrot.lane.b32.xlu0 %v232, 12
    %v1212 = vpop.permute.xlu0 %1211
    %1213 = vrot.lane.b32.xlu0 %v233, 12
    %v1214 = vpop.permute.xlu0 %1213
    %1215 = vrot.lane.b32.xlu0 %v234, 12
    %v1216 = vpop.permute.xlu0 %1215
    %1217 = vrot.lane.b32.xlu0 %v235, 12
    %v1218 = vpop.permute.xlu0 %1217
    %1219 = vrot.lane.b32.xlu0 %v236, 12
    %v1220 = vpop.permute.xlu0 %1219
    %1221 = vrot.lane.b32.xlu0 %v237, 12
    %v1222 = vpop.permute.xlu0 %1221
    %1223 = vrot.lane.b32.xlu0 %v238, 12
    %v1224 = vpop.permute.xlu0 %1223
    %1225 = vrot.lane.b32.xlu0 %v239, 12
    %v1226 = vpop.permute.xlu0 %1225
    %1227 = vrot.lane.b32.xlu0 %v240, 12
    %v1228 = vpop.permute.xlu0 %1227
    %1229 = vrot.lane.b32.xlu0 %v241, 12
    %v1230 = vpop.permute.xlu0 %1229
    %1231 = vrot.lane.b32.xlu0 %v242, 12
    %v1232 = vpop.permute.xlu0 %1231
    %1233 = vrot.lane.b32.xlu0 %v243, 12
    %v1234 = vpop.permute.xlu0 %1233
    %1235 = vrot.lane.b32.xlu0 %v244, 12
    %v1236 = vpop.permute.xlu0 %1235
    %1237 = vrot.lane.b32.xlu0 %v245, 12
    %v1238 = vpop.permute.xlu0 %1237
    %1239 = vrot.lane.b32.xlu0 %v246, 12
    %v1240 = vpop.permute.xlu0 %1239
    %1241 = vrot.lane.b32.xlu0 %v247, 12
    %v1242 = vpop.permute.xlu0 %1241
    %1243 = vrot.lane.b32.xlu0 %v248, 12
    %v1244 = vpop.permute.xlu0 %1243
    %1245 = vrot.lane.b32.xlu0 %v249, 12
    %v1246 = vpop.permute.xlu0 %1245
    %1247 = vrot.lane.b32.xlu0 %v250, 12
    %v1248 = vpop.permute.xlu0 %1247
    %1249 = vrot.lane.b32.xlu0 %v251, 12
    %v1250 = vpop.permute.xlu0 %1249
    %1251 = vrot.lane.b32.xlu0 %v252, 12
    %v1252 = vpop.permute.xlu0 %1251
    %1253 = vrot.lane.b32.xlu0 %v253, 12
    %v1254 = vpop.permute.xlu0 %1253
    %1255 = vrot.lane.b32.xlu0 %v254, 12
    %v1256 = vpop.permute.xlu0 %1255
    %1257 = vrot.lane.b32.xlu0 %v255, 12
    %v1258 = vpop.permute.xlu0 %1257
    %1259 = vrot.lane.b32.xlu0 %v256, 12
    %v1260 = vpop.permute.xlu0 %1259
    %1261 = vrot.lane.b32.xlu0 %v257, 12
    %v1262 = vpop.permute.xlu0 %1261
    %1263 = vrot.lane.b32.xlu0 %v258, 12
    %v1264 = vpop.permute.xlu0 %1263
    %1265 = vrot.lane.b32.xlu0 %v259, 12
    %v1266 = vpop.permute.xlu0 %1265
    %1267 = vrot.lane.b32.xlu0 %v260, 12
    %v1268 = vpop.permute.xlu0 %1267
    %1269 = vrot.lane.b32.xlu0 %v261, 12
    %v1270 = vpop.permute.xlu0 %1269
    %1271 = vrot.lane.b32.xlu0 %v262, 12
    %v1272 = vpop.permute.xlu0 %1271
    %1273 = vrot.lane.b32.xlu0 %v263, 12
    %v1274 = vpop.permute.xlu0 %1273
    %1275 = vrot.lane.b32.xlu0 %v264, 12
    %v1276 = vpop.permute.xlu0 %1275
    %1277 = vrot.lane.b32.xlu0 %v265, 12
    %v1278 = vpop.permute.xlu0 %1277
    %1279 = vrot.lane.b32.xlu0 %v266, 12
    %v1280 = vpop.permute.xlu0 %1279
    %1281 = vrot.lane.b32.xlu0 %v267, 12
    %v1282 = vpop.permute.xlu0 %1281
    %1283 = vrot.lane.b32.xlu0 %v268, 12
    %v1284 = vpop.permute.xlu0 %1283
    %1285 = vrot.lane.b32.xlu0 %v269, 12
    %v1286 = vpop.permute.xlu0 %1285
    %1287 = vrot.lane.b32.xlu0 %v270, 12
    %v1288 = vpop.permute.xlu0 %1287
    %1289 = vrot.lane.b32.xlu0 %v271, 12
    %v1290 = vpop.permute.xlu0 %1289
    %1291 = vrot.lane.b32.xlu0 %v272, 12
    %v1292 = vpop.permute.xlu0 %1291
    %1293 = vrot.lane.b32.xlu0 %v273, 12
    %v1294 = vpop.permute.xlu0 %1293
    %1295 = vrot.lane.b32.xlu0 %v274, 12
    %v1296 = vpop.permute.xlu0 %1295
    %1297 = vrot.lane.b32.xlu0 %v275, 12
    %v1298 = vpop.permute.xlu0 %1297
    %1299 = vrot.lane.b32.xlu0 %v276, 12
    %v1300 = vpop.permute.xlu0 %1299
    %1301 = vrot.lane.b32.xlu0 %v277, 12
    %v1302 = vpop.permute.xlu0 %1301
    %1431 = vrot.lane.b32.xlu0 %v278, 16
    %v1432 = vpop.permute.xlu0 %1431
    %1433 = vrot.lane.b32.xlu0 %v279, 16
    %v1434 = vpop.permute.xlu0 %1433
    %1435 = vrot.lane.b32.xlu0 %v280, 16
    %v1436 = vpop.permute.xlu0 %1435
    %1437 = vrot.lane.b32.xlu0 %v281, 16
    %v1438 = vpop.permute.xlu0 %1437
    %1439 = vrot.lane.b32.xlu0 %v282, 16
    %v1440 = vpop.permute.xlu0 %1439
    %1441 = vrot.lane.b32.xlu0 %v283, 16
    %v1442 = vpop.permute.xlu0 %1441
    %1443 = vrot.lane.b32.xlu0 %v284, 16
    %v1444 = vpop.permute.xlu0 %1443
    %1445 = vrot.lane.b32.xlu0 %v285, 16
    %v1446 = vpop.permute.xlu0 %1445
    %1447 = vrot.lane.b32.xlu0 %v286, 16
    %v1448 = vpop.permute.xlu0 %1447
    %1449 = vrot.lane.b32.xlu0 %v287, 16
    %v1450 = vpop.permute.xlu0 %1449
    %1451 = vrot.lane.b32.xlu0 %v288, 16
    %v1452 = vpop.permute.xlu0 %1451
    %1453 = vrot.lane.b32.xlu0 %v289, 16
    %v1454 = vpop.permute.xlu0 %1453
    %1455 = vrot.lane.b32.xlu0 %v290, 16
    %v1456 = vpop.permute.xlu0 %1455
    %1457 = vrot.lane.b32.xlu0 %v291, 16
    %v1458 = vpop.permute.xlu0 %1457
    %1459 = vrot.lane.b32.xlu0 %v292, 16
    %v1460 = vpop.permute.xlu0 %1459
    %1461 = vrot.lane.b32.xlu0 %v293, 16
    %v1462 = vpop.permute.xlu0 %1461
    %1463 = vrot.lane.b32.xlu0 %v294, 16
    %v1464 = vpop.permute.xlu0 %1463
    %1465 = vrot.lane.b32.xlu0 %v295, 16
    %v1466 = vpop.permute.xlu0 %1465
    %1467 = vrot.lane.b32.xlu0 %v296, 16
    %v1468 = vpop.permute.xlu0 %1467
    %1469 = vrot.lane.b32.xlu0 %v297, 16
    %v1470 = vpop.permute.xlu0 %1469
    %1471 = vrot.lane.b32.xlu0 %v298, 16
    %v1472 = vpop.permute.xlu0 %1471
    %1473 = vrot.lane.b32.xlu0 %v299, 16
    %v1474 = vpop.permute.xlu0 %1473
    %1475 = vrot.lane.b32.xlu0 %v300, 16
    %v1476 = vpop.permute.xlu0 %1475
    %1477 = vrot.lane.b32.xlu0 %v301, 16
    %v1478 = vpop.permute.xlu0 %1477
    %1479 = vrot.lane.b32.xlu0 %v302, 16
    %v1480 = vpop.permute.xlu0 %1479
    %1481 = vrot.lane.b32.xlu0 %v303, 16
    %v1482 = vpop.permute.xlu0 %1481
    %1483 = vrot.lane.b32.xlu0 %v304, 16
    %v1484 = vpop.permute.xlu0 %1483
    %1485 = vrot.lane.b32.xlu0 %v305, 16
    %v1486 = vpop.permute.xlu0 %1485
    %1487 = vrot.lane.b32.xlu0 %v306, 16
    %v1488 = vpop.permute.xlu0 %1487
    %1489 = vrot.lane.b32.xlu0 %v307, 16
    %v1490 = vpop.permute.xlu0 %1489
    %1491 = vrot.lane.b32.xlu0 %v308, 16
    %v1492 = vpop.permute.xlu0 %1491
    %1493 = vrot.lane.b32.xlu0 %v309, 16
    %v1494 = vpop.permute.xlu0 %1493
    %1495 = vrot.lane.b32.xlu0 %v310, 16
    %v1496 = vpop.permute.xlu0 %1495
    %1497 = vrot.lane.b32.xlu0 %v311, 16
    %v1498 = vpop.permute.xlu0 %1497
    %1499 = vrot.lane.b32.xlu0 %v312, 16
    %v1500 = vpop.permute.xlu0 %1499
    %1501 = vrot.lane.b32.xlu0 %v313, 16
    %v1502 = vpop.permute.xlu0 %1501
    %1503 = vrot.lane.b32.xlu0 %v314, 16
    %v1504 = vpop.permute.xlu0 %1503
    %1505 = vrot.lane.b32.xlu0 %v315, 16
    %v1506 = vpop.permute.xlu0 %1505
    %1507 = vrot.lane.b32.xlu0 %v316, 16
    %v1508 = vpop.permute.xlu0 %1507
    %1509 = vrot.lane.b32.xlu0 %v317, 16
    %v1510 = vpop.permute.xlu0 %1509
    %1511 = vrot.lane.b32.xlu0 %v318, 16
    %v1512 = vpop.permute.xlu0 %1511
    %1513 = vrot.lane.b32.xlu0 %v319, 16
    %v1514 = vpop.permute.xlu0 %1513
    %1515 = vrot.lane.b32.xlu0 %v320, 16
    %v1516 = vpop.permute.xlu0 %1515
    %1517 = vrot.lane.b32.xlu0 %v321, 16
    %v1518 = vpop.permute.xlu0 %1517
    %1519 = vrot.lane.b32.xlu0 %v322, 16
    %v1520 = vpop.permute.xlu0 %1519
    %1521 = vrot.lane.b32.xlu0 %v323, 16
    %v1522 = vpop.permute.xlu0 %1521
    %1523 = vrot.lane.b32.xlu0 %v324, 16
    %v1524 = vpop.permute.xlu0 %1523
    %1525 = vrot.lane.b32.xlu0 %v325, 16
    %v1526 = vpop.permute.xlu0 %1525
    %1527 = vrot.lane.b32.xlu0 %v326, 16
    %v1528 = vpop.permute.xlu0 %1527
    %1529 = vrot.lane.b32.xlu0 %v327, 16
    %v1530 = vpop.permute.xlu0 %1529
    %1531 = vrot.lane.b32.xlu0 %v328, 16
    %v1532 = vpop.permute.xlu0 %1531
    %1533 = vrot.lane.b32.xlu0 %v329, 16
    %v1534 = vpop.permute.xlu0 %1533
    %1535 = vrot.lane.b32.xlu0 %v330, 16
    %v1536 = vpop.permute.xlu0 %1535
    %1537 = vrot.lane.b32.xlu0 %v331, 16
    %v1538 = vpop.permute.xlu0 %1537
    %1539 = vrot.lane.b32.xlu0 %v332, 16
    %v1540 = vpop.permute.xlu0 %1539
    %1541 = vrot.lane.b32.xlu0 %v333, 16
    %v1542 = vpop.permute.xlu0 %1541
    %1543 = vrot.lane.b32.xlu0 %v334, 16
    %v1544 = vpop.permute.xlu0 %1543
    %1545 = vrot.lane.b32.xlu0 %v335, 16
    %v1546 = vpop.permute.xlu0 %1545
    %1547 = vrot.lane.b32.xlu0 %v336, 16
    %v1548 = vpop.permute.xlu0 %1547
    %1549 = vrot.lane.b32.xlu0 %v337, 16
    %v1550 = vpop.permute.xlu0 %1549
    %1551 = vrot.lane.b32.xlu0 %v338, 16
    %v1552 = vpop.permute.xlu0 %1551
    %1553 = vrot.lane.b32.xlu0 %v339, 16
    %v1554 = vpop.permute.xlu0 %1553
    %1555 = vrot.lane.b32.xlu0 %v340, 16
    %v1556 = vpop.permute.xlu0 %1555
    %1557 = vrot.lane.b32.xlu0 %v341, 16
    %v1558 = vpop.permute.xlu0 %1557
    %1687 = vrot.lane.b32.xlu0 %v342, 20
    %v1688 = vpop.permute.xlu0 %1687
    %1689 = vrot.lane.b32.xlu0 %v343, 20
    %v1690 = vpop.permute.xlu0 %1689
    %1691 = vrot.lane.b32.xlu0 %v344, 20
    %v1692 = vpop.permute.xlu0 %1691
    %1693 = vrot.lane.b32.xlu0 %v345, 20
    %v1694 = vpop.permute.xlu0 %1693
    %1695 = vrot.lane.b32.xlu0 %v346, 20
    %v1696 = vpop.permute.xlu0 %1695
    %1697 = vrot.lane.b32.xlu0 %v347, 20
    %v1698 = vpop.permute.xlu0 %1697
    %1699 = vrot.lane.b32.xlu0 %v348, 20
    %v1700 = vpop.permute.xlu0 %1699
    %1701 = vrot.lane.b32.xlu0 %v349, 20
    %v1702 = vpop.permute.xlu0 %1701
    %1703 = vrot.lane.b32.xlu0 %v350, 20
    %v1704 = vpop.permute.xlu0 %1703
    %1705 = vrot.lane.b32.xlu0 %v351, 20
    %v1706 = vpop.permute.xlu0 %1705
    %1707 = vrot.lane.b32.xlu0 %v352, 20
    %v1708 = vpop.permute.xlu0 %1707
    %1709 = vrot.lane.b32.xlu0 %v353, 20
    %v1710 = vpop.permute.xlu0 %1709
    %1711 = vrot.lane.b32.xlu0 %v354, 20
    %v1712 = vpop.permute.xlu0 %1711
    %1713 = vrot.lane.b32.xlu0 %v355, 20
    %v1714 = vpop.permute.xlu0 %1713
    %1715 = vrot.lane.b32.xlu0 %v356, 20
    %v1716 = vpop.permute.xlu0 %1715
    %1717 = vrot.lane.b32.xlu0 %v357, 20
    %v1718 = vpop.permute.xlu0 %1717
    %1719 = vrot.lane.b32.xlu0 %v358, 20
    %v1720 = vpop.permute.xlu0 %1719
    %1721 = vrot.lane.b32.xlu0 %v359, 20
    %v1722 = vpop.permute.xlu0 %1721
    %1723 = vrot.lane.b32.xlu0 %v360, 20
    %v1724 = vpop.permute.xlu0 %1723
    %1725 = vrot.lane.b32.xlu0 %v361, 20
    %v1726 = vpop.permute.xlu0 %1725
    %1727 = vrot.lane.b32.xlu0 %v362, 20
    %v1728 = vpop.permute.xlu0 %1727
    %1729 = vrot.lane.b32.xlu0 %v363, 20
    %v1730 = vpop.permute.xlu0 %1729
    %1731 = vrot.lane.b32.xlu0 %v364, 20
    %v1732 = vpop.permute.xlu0 %1731
    %1733 = vrot.lane.b32.xlu0 %v365, 20
    %v1734 = vpop.permute.xlu0 %1733
    %1735 = vrot.lane.b32.xlu0 %v366, 20
    %v1736 = vpop.permute.xlu0 %1735
    %1737 = vrot.lane.b32.xlu0 %v367, 20
    %v1738 = vpop.permute.xlu0 %1737
    %1739 = vrot.lane.b32.xlu0 %v368, 20
    %v1740 = vpop.permute.xlu0 %1739
    %1741 = vrot.lane.b32.xlu0 %v369, 20
    %v1742 = vpop.permute.xlu0 %1741
    %1743 = vrot.lane.b32.xlu0 %v370, 20
    %v1744 = vpop.permute.xlu0 %1743
    %1745 = vrot.lane.b32.xlu0 %v371, 20
    %v1746 = vpop.permute.xlu0 %1745
    %1747 = vrot.lane.b32.xlu0 %v372, 20
    %v1748 = vpop.permute.xlu0 %1747
    %1749 = vrot.lane.b32.xlu0 %v373, 20
    %v1750 = vpop.permute.xlu0 %1749
    %1751 = vrot.lane.b32.xlu0 %v374, 20
    %v1752 = vpop.permute.xlu0 %1751
    %1753 = vrot.lane.b32.xlu0 %v375, 20
    %v1754 = vpop.permute.xlu0 %1753
    %1755 = vrot.lane.b32.xlu0 %v376, 20
    %v1756 = vpop.permute.xlu0 %1755
    %1757 = vrot.lane.b32.xlu0 %v377, 20
    %v1758 = vpop.permute.xlu0 %1757
    %1759 = vrot.lane.b32.xlu0 %v378, 20
    %v1760 = vpop.permute.xlu0 %1759
    %1761 = vrot.lane.b32.xlu0 %v379, 20
    %v1762 = vpop.permute.xlu0 %1761
    %1763 = vrot.lane.b32.xlu0 %v380, 20
    %v1764 = vpop.permute.xlu0 %1763
    %1765 = vrot.lane.b32.xlu0 %v381, 20
    %v1766 = vpop.permute.xlu0 %1765
    %1767 = vrot.lane.b32.xlu0 %v382, 20
    %v1768 = vpop.permute.xlu0 %1767
    %1769 = vrot.lane.b32.xlu0 %v383, 20
    %v1770 = vpop.permute.xlu0 %1769
    %1771 = vrot.lane.b32.xlu0 %v384, 20
    %v1772 = vpop.permute.xlu0 %1771
    %1773 = vrot.lane.b32.xlu0 %v385, 20
    %v1774 = vpop.permute.xlu0 %1773
    %1775 = vrot.lane.b32.xlu0 %v386, 20
    %v1776 = vpop.permute.xlu0 %1775
    %1777 = vrot.lane.b32.xlu0 %v387, 20
    %v1778 = vpop.permute.xlu0 %1777
    %1779 = vrot.lane.b32.xlu0 %v388, 20
    %v1780 = vpop.permute.xlu0 %1779
    %1781 = vrot.lane.b32.xlu0 %v389, 20
    %v1782 = vpop.permute.xlu0 %1781
    %1783 = vrot.lane.b32.xlu0 %v390, 20
    %v1784 = vpop.permute.xlu0 %1783
    %1785 = vrot.lane.b32.xlu0 %v391, 20
    %v1786 = vpop.permute.xlu0 %1785
    %1787 = vrot.lane.b32.xlu0 %v392, 20
    %v1788 = vpop.permute.xlu0 %1787
    %1789 = vrot.lane.b32.xlu0 %v393, 20
    %v1790 = vpop.permute.xlu0 %1789
    %1791 = vrot.lane.b32.xlu0 %v394, 20
    %v1792 = vpop.permute.xlu0 %1791
    %1793 = vrot.lane.b32.xlu0 %v395, 20
    %v1794 = vpop.permute.xlu0 %1793
    %1795 = vrot.lane.b32.xlu0 %v396, 20
    %v1796 = vpop.permute.xlu0 %1795
    %1797 = vrot.lane.b32.xlu0 %v397, 20
    %v1798 = vpop.permute.xlu0 %1797
    %1799 = vrot.lane.b32.xlu0 %v398, 20
    %v1800 = vpop.permute.xlu0 %1799
    %1801 = vrot.lane.b32.xlu0 %v399, 20
    %v1802 = vpop.permute.xlu0 %1801
    %1803 = vrot.lane.b32.xlu0 %v400, 20
    %v1804 = vpop.permute.xlu0 %1803
    %1805 = vrot.lane.b32.xlu0 %v401, 20
    %v1806 = vpop.permute.xlu0 %1805
    %1807 = vrot.lane.b32.xlu0 %v402, 20
    %v1808 = vpop.permute.xlu0 %1807
    %1809 = vrot.lane.b32.xlu0 %v403, 20
    %v1810 = vpop.permute.xlu0 %1809
    %1811 = vrot.lane.b32.xlu0 %v404, 20
    %v1812 = vpop.permute.xlu0 %1811
    %1813 = vrot.lane.b32.xlu0 %v405, 20
    %v1814 = vpop.permute.xlu0 %1813
    %1943 = vrot.lane.b32.xlu0 %v407, 24
    %v1944 = vpop.permute.xlu0 %1943
    %1945 = vrot.lane.b32.xlu0 %v408, 24
    %v1946 = vpop.permute.xlu0 %1945
    %1947 = vrot.lane.b32.xlu0 %v409, 24
    %v1948 = vpop.permute.xlu0 %1947
    %1949 = vrot.lane.b32.xlu0 %v410, 24
    %v1950 = vpop.permute.xlu0 %1949
    %1951 = vrot.lane.b32.xlu0 %v411, 24
    %v1952 = vpop.permute.xlu0 %1951
    %1953 = vrot.lane.b32.xlu0 %v412, 24
    %v1954 = vpop.permute.xlu0 %1953
    %1955 = vrot.lane.b32.xlu0 %v413, 24
    %v1956 = vpop.permute.xlu0 %1955
    %1957 = vrot.lane.b32.xlu0 %v414, 24
    %v1958 = vpop.permute.xlu0 %1957
    %1959 = vrot.lane.b32.xlu0 %v415, 24
    %v1960 = vpop.permute.xlu0 %1959
    %1961 = vrot.lane.b32.xlu0 %v416, 24
    %v1962 = vpop.permute.xlu0 %1961
    %1963 = vrot.lane.b32.xlu0 %v417, 24
    %v1964 = vpop.permute.xlu0 %1963
    %1965 = vrot.lane.b32.xlu0 %v418, 24
    %v1966 = vpop.permute.xlu0 %1965
    %1967 = vrot.lane.b32.xlu0 %v419, 24
    %v1968 = vpop.permute.xlu0 %1967
    %1969 = vrot.lane.b32.xlu0 %v420, 24
    %v1970 = vpop.permute.xlu0 %1969
    %1971 = vrot.lane.b32.xlu0 %v421, 24
    %v1972 = vpop.permute.xlu0 %1971
    %1973 = vrot.lane.b32.xlu0 %v422, 24
    %v1974 = vpop.permute.xlu0 %1973
    %1975 = vrot.lane.b32.xlu0 %v423, 24
    %v1976 = vpop.permute.xlu0 %1975
    %1977 = vrot.lane.b32.xlu0 %v424, 24
    %v1978 = vpop.permute.xlu0 %1977
    %1979 = vrot.lane.b32.xlu0 %v425, 24
    %v1980 = vpop.permute.xlu0 %1979
    %1981 = vrot.lane.b32.xlu0 %v426, 24
    %v1982 = vpop.permute.xlu0 %1981
    %1983 = vrot.lane.b32.xlu0 %v427, 24
    %v1984 = vpop.permute.xlu0 %1983
    %1985 = vrot.lane.b32.xlu0 %v428, 24
    %v1986 = vpop.permute.xlu0 %1985
    %1987 = vrot.lane.b32.xlu0 %v429, 24
    %v1988 = vpop.permute.xlu0 %1987
    %1989 = vrot.lane.b32.xlu0 %v430, 24
    %v1990 = vpop.permute.xlu0 %1989
    %1991 = vrot.lane.b32.xlu0 %v431, 24
    %v1992 = vpop.permute.xlu0 %1991
    %1993 = vrot.lane.b32.xlu0 %v432, 24
    %v1994 = vpop.permute.xlu0 %1993
    %1995 = vrot.lane.b32.xlu0 %v433, 24
    %v1996 = vpop.permute.xlu0 %1995
    %1997 = vrot.lane.b32.xlu0 %v434, 24
    %v1998 = vpop.permute.xlu0 %1997
    %1999 = vrot.lane.b32.xlu0 %v435, 24
    %v2000 = vpop.permute.xlu0 %1999
    %2001 = vrot.lane.b32.xlu0 %v436, 24
    %v2002 = vpop.permute.xlu0 %2001
    %2003 = vrot.lane.b32.xlu0 %v437, 24
    %v2004 = vpop.permute.xlu0 %2003
    %2005 = vrot.lane.b32.xlu0 %v438, 24
    %v2006 = vpop.permute.xlu0 %2005
    %2007 = vrot.lane.b32.xlu0 %v439, 24
    %v2008 = vpop.permute.xlu0 %2007
    %2009 = vrot.lane.b32.xlu0 %v440, 24
    %v2010 = vpop.permute.xlu0 %2009
    %2011 = vrot.lane.b32.xlu0 %v441, 24
    %v2012 = vpop.permute.xlu0 %2011
    %2013 = vrot.lane.b32.xlu0 %v442, 24
    %v2014 = vpop.permute.xlu0 %2013
    %2015 = vrot.lane.b32.xlu0 %v443, 24
    %v2016 = vpop.permute.xlu0 %2015
    %2017 = vrot.lane.b32.xlu0 %v444, 24
    %v2018 = vpop.permute.xlu0 %2017
    %2019 = vrot.lane.b32.xlu0 %v445, 24
    %v2020 = vpop.permute.xlu0 %2019
    %2021 = vrot.lane.b32.xlu0 %v446, 24
    %v2022 = vpop.permute.xlu0 %2021
    %2023 = vrot.lane.b32.xlu0 %v447, 24
    %v2024 = vpop.permute.xlu0 %2023
    %2025 = vrot.lane.b32.xlu0 %v448, 24
    %v2026 = vpop.permute.xlu0 %2025
    %2027 = vrot.lane.b32.xlu0 %v449, 24
    %v2028 = vpop.permute.xlu0 %2027
    %2029 = vrot.lane.b32.xlu0 %v450, 24
    %v2030 = vpop.permute.xlu0 %2029
    %2031 = vrot.lane.b32.xlu0 %v451, 24
    %v2032 = vpop.permute.xlu0 %2031
    %2033 = vrot.lane.b32.xlu0 %v452, 24
    %v2034 = vpop.permute.xlu0 %2033
    %2035 = vrot.lane.b32.xlu0 %v453, 24
    %v2036 = vpop.permute.xlu0 %2035
    %2037 = vrot.lane.b32.xlu0 %v454, 24
    %v2038 = vpop.permute.xlu0 %2037
    %2039 = vrot.lane.b32.xlu0 %v455, 24
    %v2040 = vpop.permute.xlu0 %2039
    %2041 = vrot.lane.b32.xlu0 %v456, 24
    %v2042 = vpop.permute.xlu0 %2041
    %2043 = vrot.lane.b32.xlu0 %v457, 24
    %v2044 = vpop.permute.xlu0 %2043
    %2045 = vrot.lane.b32.xlu0 %v458, 24
    %v2046 = vpop.permute.xlu0 %2045
    %2047 = vrot.lane.b32.xlu0 %v459, 24
    %v2048 = vpop.permute.xlu0 %2047
    %2049 = vrot.lane.b32.xlu0 %v460, 24
    %v2050 = vpop.permute.xlu0 %2049
    %2051 = vrot.lane.b32.xlu0 %v461, 24
    %v2052 = vpop.permute.xlu0 %2051
    %2053 = vrot.lane.b32.xlu0 %v462, 24
    %v2054 = vpop.permute.xlu0 %2053
    %2055 = vrot.lane.b32.xlu0 %v463, 24
    %v2056 = vpop.permute.xlu0 %2055
    %2057 = vrot.lane.b32.xlu0 %v464, 24
    %v2058 = vpop.permute.xlu0 %2057
    %2059 = vrot.lane.b32.xlu0 %v465, 24
    %v2060 = vpop.permute.xlu0 %2059
    %2061 = vrot.lane.b32.xlu0 %v466, 24
    %v2062 = vpop.permute.xlu0 %2061
    %2063 = vrot.lane.b32.xlu0 %v467, 24
    %v2064 = vpop.permute.xlu0 %2063
    %2065 = vrot.lane.b32.xlu0 %v468, 24
    %v2066 = vpop.permute.xlu0 %2065
    %2067 = vrot.lane.b32.xlu0 %v469, 24
    %v2068 = vpop.permute.xlu0 %2067
    %2069 = vrot.lane.b32.xlu0 %v470, 24
    %v2070 = vpop.permute.xlu0 %2069
    %2199 = vrot.lane.b32.xlu0 %v471, 28
    %v2200 = vpop.permute.xlu0 %2199
    %2201 = vrot.lane.b32.xlu0 %v472, 28
    %v2202 = vpop.permute.xlu0 %2201
    %2203 = vrot.lane.b32.xlu0 %v473, 28
    %v2204 = vpop.permute.xlu0 %2203
    %2205 = vrot.lane.b32.xlu0 %v474, 28
    %v2206 = vpop.permute.xlu0 %2205
    %2207 = vrot.lane.b32.xlu0 %v475, 28
    %v2208 = vpop.permute.xlu0 %2207
    %2209 = vrot.lane.b32.xlu0 %v476, 28
    %v2210 = vpop.permute.xlu0 %2209
    %2211 = vrot.lane.b32.xlu0 %v477, 28
    %v2212 = vpop.permute.xlu0 %2211
    %2213 = vrot.lane.b32.xlu0 %v478, 28
    %v2214 = vpop.permute.xlu0 %2213
    %2215 = vrot.lane.b32.xlu0 %v479, 28
    %v2216 = vpop.permute.xlu0 %2215
    %2217 = vrot.lane.b32.xlu0 %v480, 28
    %v2218 = vpop.permute.xlu0 %2217
    %2219 = vrot.lane.b32.xlu0 %v481, 28
    %v2220 = vpop.permute.xlu0 %2219
    %2221 = vrot.lane.b32.xlu0 %v482, 28
    %v2222 = vpop.permute.xlu0 %2221
    %2223 = vrot.lane.b32.xlu0 %v483, 28
    %v2224 = vpop.permute.xlu0 %2223
    %2225 = vrot.lane.b32.xlu0 %v484, 28
    %v2226 = vpop.permute.xlu0 %2225
    %2227 = vrot.lane.b32.xlu0 %v485, 28
    %v2228 = vpop.permute.xlu0 %2227
    %2229 = vrot.lane.b32.xlu0 %v486, 28
    %v2230 = vpop.permute.xlu0 %2229
    %2231 = vrot.lane.b32.xlu0 %v487, 28
    %v2232 = vpop.permute.xlu0 %2231
    %2233 = vrot.lane.b32.xlu0 %v488, 28
    %v2234 = vpop.permute.xlu0 %2233
    %2235 = vrot.lane.b32.xlu0 %v489, 28
    %v2236 = vpop.permute.xlu0 %2235
    %2237 = vrot.lane.b32.xlu0 %v490, 28
    %v2238 = vpop.permute.xlu0 %2237
    %2239 = vrot.lane.b32.xlu0 %v491, 28
    %v2240 = vpop.permute.xlu0 %2239
    %2241 = vrot.lane.b32.xlu0 %v492, 28
    %v2242 = vpop.permute.xlu0 %2241
    %2243 = vrot.lane.b32.xlu0 %v493, 28
    %v2244 = vpop.permute.xlu0 %2243
    %2245 = vrot.lane.b32.xlu0 %v494, 28
    %v2246 = vpop.permute.xlu0 %2245
    %2247 = vrot.lane.b32.xlu0 %v495, 28
    %v2248 = vpop.permute.xlu0 %2247
    %2249 = vrot.lane.b32.xlu0 %v496, 28
    %v2250 = vpop.permute.xlu0 %2249
    %2251 = vrot.lane.b32.xlu0 %v497, 28
    %v2252 = vpop.permute.xlu0 %2251
    %2253 = vrot.lane.b32.xlu0 %v498, 28
    %v2254 = vpop.permute.xlu0 %2253
    %2255 = vrot.lane.b32.xlu0 %v499, 28
    %v2256 = vpop.permute.xlu0 %2255
    %2257 = vrot.lane.b32.xlu0 %v500, 28
    %v2258 = vpop.permute.xlu0 %2257
    %2259 = vrot.lane.b32.xlu0 %v501, 28
    %v2260 = vpop.permute.xlu0 %2259
    %2261 = vrot.lane.b32.xlu0 %v502, 28
    %v2262 = vpop.permute.xlu0 %2261
    %2263 = vrot.lane.b32.xlu0 %v503, 28
    %v2264 = vpop.permute.xlu0 %2263
    %2265 = vrot.lane.b32.xlu0 %v504, 28
    %v2266 = vpop.permute.xlu0 %2265
    %2267 = vrot.lane.b32.xlu0 %v505, 28
    %v2268 = vpop.permute.xlu0 %2267
    %2269 = vrot.lane.b32.xlu0 %v506, 28
    %v2270 = vpop.permute.xlu0 %2269
    %2271 = vrot.lane.b32.xlu0 %v507, 28
    %v2272 = vpop.permute.xlu0 %2271
    %2273 = vrot.lane.b32.xlu0 %v508, 28
    %v2274 = vpop.permute.xlu0 %2273
    %2275 = vrot.lane.b32.xlu0 %v509, 28
    %v2276 = vpop.permute.xlu0 %2275
    %2277 = vrot.lane.b32.xlu0 %v510, 28
    %v2278 = vpop.permute.xlu0 %2277
    %2279 = vrot.lane.b32.xlu0 %v511, 28
    %v2280 = vpop.permute.xlu0 %2279
    %2281 = vrot.lane.b32.xlu0 %v512, 28
    %v2282 = vpop.permute.xlu0 %2281
    %2283 = vrot.lane.b32.xlu0 %v513, 28
    %v2284 = vpop.permute.xlu0 %2283
    %2285 = vrot.lane.b32.xlu0 %v514, 28
    %v2286 = vpop.permute.xlu0 %2285
    %2287 = vrot.lane.b32.xlu0 %v515, 28
    %v2288 = vpop.permute.xlu0 %2287
    %2289 = vrot.lane.b32.xlu0 %v516, 28
    %v2290 = vpop.permute.xlu0 %2289
    %2291 = vrot.lane.b32.xlu0 %v517, 28
    %v2292 = vpop.permute.xlu0 %2291
    %2293 = vrot.lane.b32.xlu0 %v518, 28
    %v2294 = vpop.permute.xlu0 %2293
    %2295 = vrot.lane.b32.xlu0 %v519, 28
    %v2296 = vpop.permute.xlu0 %2295
    %2297 = vrot.lane.b32.xlu0 %v520, 28
    %v2298 = vpop.permute.xlu0 %2297
    %2299 = vrot.lane.b32.xlu0 %v521, 28
    %v2300 = vpop.permute.xlu0 %2299
    %2301 = vrot.lane.b32.xlu0 %v522, 28
    %v2302 = vpop.permute.xlu0 %2301
    %2303 = vrot.lane.b32.xlu0 %v523, 28
    %v2304 = vpop.permute.xlu0 %2303
    %2305 = vrot.lane.b32.xlu0 %v524, 28
    %v2306 = vpop.permute.xlu0 %2305
    %2307 = vrot.lane.b32.xlu0 %v525, 28
    %v2308 = vpop.permute.xlu0 %2307
    %2309 = vrot.lane.b32.xlu0 %v526, 28
    %v2310 = vpop.permute.xlu0 %2309
    %2311 = vrot.lane.b32.xlu0 %v527, 28
    %v2312 = vpop.permute.xlu0 %2311
    %2313 = vrot.lane.b32.xlu0 %v528, 28
    %v2314 = vpop.permute.xlu0 %2313
    %2315 = vrot.lane.b32.xlu0 %v529, 28
    %v2316 = vpop.permute.xlu0 %2315
    %2317 = vrot.lane.b32.xlu0 %v530, 28
    %v2318 = vpop.permute.xlu0 %2317
    %2319 = vrot.lane.b32.xlu0 %v531, 28
    %v2320 = vpop.permute.xlu0 %2319
    %2321 = vrot.lane.b32.xlu0 %v532, 28
    %v2322 = vpop.permute.xlu0 %2321
    %2323 = vrot.lane.b32.xlu0 %v533, 28
    %v2324 = vpop.permute.xlu0 %2323
    %2325 = vrot.lane.b32.xlu0 %v534, 28
    %v2326 = vpop.permute.xlu0 %2325
    %2455 = vrot.lane.b32.xlu0 %v535, 32
    %v2456 = vpop.permute.xlu0 %2455
    %2457 = vrot.lane.b32.xlu0 %v536, 32
    %v2458 = vpop.permute.xlu0 %2457
    %2459 = vrot.lane.b32.xlu0 %v537, 32
    %v2460 = vpop.permute.xlu0 %2459
    %2461 = vrot.lane.b32.xlu0 %v538, 32
    %v2462 = vpop.permute.xlu0 %2461
    %2463 = vrot.lane.b32.xlu0 %v539, 32
    %v2464 = vpop.permute.xlu0 %2463
    %2465 = vrot.lane.b32.xlu0 %v540, 32
    %v2466 = vpop.permute.xlu0 %2465
    %2467 = vrot.lane.b32.xlu0 %v541, 32
    %v2468 = vpop.permute.xlu0 %2467
    %2469 = vrot.lane.b32.xlu0 %v542, 32
    %v2470 = vpop.permute.xlu0 %2469
    %2471 = vrot.lane.b32.xlu0 %v543, 32
    %v2472 = vpop.permute.xlu0 %2471
    %2473 = vrot.lane.b32.xlu0 %v544, 32
    %v2474 = vpop.permute.xlu0 %2473
    %2475 = vrot.lane.b32.xlu0 %v545, 32
    %v2476 = vpop.permute.xlu0 %2475
    %2477 = vrot.lane.b32.xlu0 %v546, 32
    %v2478 = vpop.permute.xlu0 %2477
    %2479 = vrot.lane.b32.xlu0 %v547, 32
    %v2480 = vpop.permute.xlu0 %2479
    %2481 = vrot.lane.b32.xlu0 %v548, 32
    %v2482 = vpop.permute.xlu0 %2481
    %2483 = vrot.lane.b32.xlu0 %v549, 32
    %v2484 = vpop.permute.xlu0 %2483
    %2485 = vrot.lane.b32.xlu0 %v550, 32
    %v2486 = vpop.permute.xlu0 %2485
    %2487 = vrot.lane.b32.xlu0 %v551, 32
    %v2488 = vpop.permute.xlu0 %2487
    %2489 = vrot.lane.b32.xlu0 %v552, 32
    %v2490 = vpop.permute.xlu0 %2489
    %2491 = vrot.lane.b32.xlu0 %v553, 32
    %v2492 = vpop.permute.xlu0 %2491
    %2493 = vrot.lane.b32.xlu0 %v554, 32
    %v2494 = vpop.permute.xlu0 %2493
    %2495 = vrot.lane.b32.xlu0 %v555, 32
    %v2496 = vpop.permute.xlu0 %2495
    %2497 = vrot.lane.b32.xlu0 %v556, 32
    %v2498 = vpop.permute.xlu0 %2497
    %2499 = vrot.lane.b32.xlu0 %v557, 32
    %v2500 = vpop.permute.xlu0 %2499
    %2501 = vrot.lane.b32.xlu0 %v558, 32
    %v2502 = vpop.permute.xlu0 %2501
    %2503 = vrot.lane.b32.xlu0 %v559, 32
    %v2504 = vpop.permute.xlu0 %2503
    %2505 = vrot.lane.b32.xlu0 %v560, 32
    %v2506 = vpop.permute.xlu0 %2505
    %2507 = vrot.lane.b32.xlu0 %v561, 32
    %v2508 = vpop.permute.xlu0 %2507
    %2509 = vrot.lane.b32.xlu0 %v562, 32
    %v2510 = vpop.permute.xlu0 %2509
    %2511 = vrot.lane.b32.xlu0 %v563, 32
    %v2512 = vpop.permute.xlu0 %2511
    %2513 = vrot.lane.b32.xlu0 %v564, 32
    %v2514 = vpop.permute.xlu0 %2513
    %2515 = vrot.lane.b32.xlu0 %v565, 32
    %v2516 = vpop.permute.xlu0 %2515
    %2517 = vrot.lane.b32.xlu0 %v566, 32
    %v2518 = vpop.permute.xlu0 %2517
    %2519 = vrot.lane.b32.xlu0 %v567, 32
    %v2520 = vpop.permute.xlu0 %2519
    %2521 = vrot.lane.b32.xlu0 %v568, 32
    %v2522 = vpop.permute.xlu0 %2521
    %2523 = vrot.lane.b32.xlu0 %v569, 32
    %v2524 = vpop.permute.xlu0 %2523
    %2525 = vrot.lane.b32.xlu0 %v570, 32
    %v2526 = vpop.permute.xlu0 %2525
    %2527 = vrot.lane.b32.xlu0 %v571, 32
    %v2528 = vpop.permute.xlu0 %2527
    %2529 = vrot.lane.b32.xlu0 %v572, 32
    %v2530 = vpop.permute.xlu0 %2529
    %2531 = vrot.lane.b32.xlu0 %v573, 32
    %v2532 = vpop.permute.xlu0 %2531
    %2533 = vrot.lane.b32.xlu0 %v574, 32
    %v2534 = vpop.permute.xlu0 %2533
    %2535 = vrot.lane.b32.xlu0 %v575, 32
    %v2536 = vpop.permute.xlu0 %2535
    %2537 = vrot.lane.b32.xlu0 %v576, 32
    %v2538 = vpop.permute.xlu0 %2537
    %2539 = vrot.lane.b32.xlu0 %v577, 32
    %v2540 = vpop.permute.xlu0 %2539
    %2541 = vrot.lane.b32.xlu0 %v578, 32
    %v2542 = vpop.permute.xlu0 %2541
    %2543 = vrot.lane.b32.xlu0 %v579, 32
    %v2544 = vpop.permute.xlu0 %2543
    %2545 = vrot.lane.b32.xlu0 %v580, 32
    %v2546 = vpop.permute.xlu0 %2545
    %2547 = vrot.lane.b32.xlu0 %v581, 32
    %v2548 = vpop.permute.xlu0 %2547
    %2549 = vrot.lane.b32.xlu0 %v582, 32
    %v2550 = vpop.permute.xlu0 %2549
    %2551 = vrot.lane.b32.xlu0 %v583, 32
    %v2552 = vpop.permute.xlu0 %2551
    %2553 = vrot.lane.b32.xlu0 %v584, 32
    %v2554 = vpop.permute.xlu0 %2553
    %2555 = vrot.lane.b32.xlu0 %v585, 32
    %v2556 = vpop.permute.xlu0 %2555
    %2557 = vrot.lane.b32.xlu0 %v586, 32
    %v2558 = vpop.permute.xlu0 %2557
    %2559 = vrot.lane.b32.xlu0 %v587, 32
    %v2560 = vpop.permute.xlu0 %2559
    %2561 = vrot.lane.b32.xlu0 %v588, 32
    %v2562 = vpop.permute.xlu0 %2561
    %2563 = vrot.lane.b32.xlu0 %v589, 32
    %v2564 = vpop.permute.xlu0 %2563
    %2565 = vrot.lane.b32.xlu0 %v590, 32
    %v2566 = vpop.permute.xlu0 %2565
    %2567 = vrot.lane.b32.xlu0 %v591, 32
    %v2568 = vpop.permute.xlu0 %2567
    %2569 = vrot.lane.b32.xlu0 %v592, 32
    %v2570 = vpop.permute.xlu0 %2569
    %2571 = vrot.lane.b32.xlu0 %v593, 32
    %v2572 = vpop.permute.xlu0 %2571
    %2573 = vrot.lane.b32.xlu0 %v594, 32
    %v2574 = vpop.permute.xlu0 %2573
    %2575 = vrot.lane.b32.xlu0 %v595, 32
    %v2576 = vpop.permute.xlu0 %2575
    %2577 = vrot.lane.b32.xlu0 %v596, 32
    %v2578 = vpop.permute.xlu0 %2577
    %2579 = vrot.lane.b32.xlu0 %v597, 32
    %v2580 = vpop.permute.xlu0 %2579
    %2581 = vrot.lane.b32.xlu0 %v598, 32
    %v2582 = vpop.permute.xlu0 %2581
    %vm2647 = vcmask 31744
    %v2648 = vsel %vm2647, %v21, %v664
    %v2649 = vsel %vm2647, %v22, %v666
    %v2650 = vsel %vm2647, %v23, %v668
    %v2651 = vsel %vm2647, %v24, %v670
    %v2652 = vsel %vm2647, %v25, %v672
    %v2653 = vsel %vm2647, %v26, %v674
    %v2654 = vsel %vm2647, %v27, %v676
    %v2655 = vsel %vm2647, %v28, %v678
    %v2656 = vsel %vm2647, %v29, %v680
    %v2657 = vsel %vm2647, %v30, %v682
    %v2658 = vsel %vm2647, %v31, %v684
    %v2659 = vsel %vm2647, %v32, %v686
    %v2660 = vsel %vm2647, %v33, %v688
    %v2661 = vsel %vm2647, %v34, %v690
    %v2662 = vsel %vm2647, %v35, %v692
    %v2663 = vsel %vm2647, %v36, %v694
    %v2664 = vsel %vm2647, %v37, %v696
    %v2665 = vsel %vm2647, %v38, %v698
    %v2666 = vsel %vm2647, %v39, %v700
    %v2667 = vsel %vm2647, %v40, %v702
    %v2668 = vsel %vm2647, %v41, %v704
    %v2669 = vsel %vm2647, %v42, %v706
    %v2670 = vsel %vm2647, %v43, %v708
    %v2671 = vsel %vm2647, %v44, %v710
    %v2672 = vsel %vm2647, %v45, %v712
    %v2673 = vsel %vm2647, %v46, %v714
    %v2674 = vsel %vm2647, %v47, %v716
    %v2675 = vsel %vm2647, %v48, %v718
    %v2676 = vsel %vm2647, %v49, %v720
    %v2677 = vsel %vm2647, %v50, %v722
    %v2678 = vsel %vm2647, %v51, %v724
    %v2679 = vsel %vm2647, %v52, %v726
    %v2680 = vsel %vm2647, %v53, %v728
    %v2681 = vsel %vm2647, %v54, %v730
    %v2682 = vsel %vm2647, %v55, %v732
    %v2683 = vsel %vm2647, %v56, %v734
    %v2684 = vsel %vm2647, %v57, %v736
    %v2685 = vsel %vm2647, %v58, %v738
    %v2686 = vsel %vm2647, %v59, %v740
    %v2687 = vsel %vm2647, %v60, %v742
    %v2688 = vsel %vm2647, %v61, %v744
    %v2689 = vsel %vm2647, %v62, %v746
    %v2690 = vsel %vm2647, %v63, %v748
    %v2691 = vsel %vm2647, %v64, %v750
    %v2692 = vsel %vm2647, %v65, %v752
    %v2693 = vsel %vm2647, %v66, %v754
    %v2694 = vsel %vm2647, %v67, %v756
    %v2695 = vsel %vm2647, %v68, %v758
    %v2696 = vsel %vm2647, %v69, %v760
    %v2697 = vsel %vm2647, %v70, %v762
    %v2698 = vsel %vm2647, %v71, %v764
    %v2699 = vsel %vm2647, %v72, %v766
    %v2700 = vsel %vm2647, %v73, %v768
    %v2701 = vsel %vm2647, %v74, %v770
    %v2702 = vsel %vm2647, %v75, %v772
    %v2703 = vsel %vm2647, %v76, %v774
    %v2704 = vsel %vm2647, %v77, %v776
    %v2705 = vsel %vm2647, %v78, %v778
    %v2706 = vsel %vm2647, %v79, %v780
    %v2707 = vsel %vm2647, %v80, %v782
    %v2708 = vsel %vm2647, %v81, %v784
    %v2709 = vsel %vm2647, %v82, %v786
    %v2710 = vsel %vm2647, %v83, %v788
    %v2711 = vsel %vm2647, %v84, %v790
    %vm2712 = vcmask 64512
    %v2713 = vsel %vm2712, %v2648, %v920
    %v2714 = vsel %vm2712, %v2649, %v922
    %v2715 = vsel %vm2712, %v2650, %v924
    %v2716 = vsel %vm2712, %v2651, %v926
    %v2717 = vsel %vm2712, %v2652, %v928
    %v2718 = vsel %vm2712, %v2653, %v930
    %v2719 = vsel %vm2712, %v2654, %v932
    %v2720 = vsel %vm2712, %v2655, %v934
    %v2721 = vsel %vm2712, %v2656, %v936
    %v2722 = vsel %vm2712, %v2657, %v938
    %v2723 = vsel %vm2712, %v2658, %v940
    %v2724 = vsel %vm2712, %v2659, %v942
    %v2725 = vsel %vm2712, %v2660, %v944
    %v2726 = vsel %vm2712, %v2661, %v946
    %v2727 = vsel %vm2712, %v2662, %v948
    %v2728 = vsel %vm2712, %v2663, %v950
    %v2729 = vsel %vm2712, %v2664, %v952
    %v2730 = vsel %vm2712, %v2665, %v954
    %v2731 = vsel %vm2712, %v2666, %v956
    %v2732 = vsel %vm2712, %v2667, %v958
    %v2733 = vsel %vm2712, %v2668, %v960
    %v2734 = vsel %vm2712, %v2669, %v962
    %v2735 = vsel %vm2712, %v2670, %v964
    %v2736 = vsel %vm2712, %v2671, %v966
    %v2737 = vsel %vm2712, %v2672, %v968
    %v2738 = vsel %vm2712, %v2673, %v970
    %v2739 = vsel %vm2712, %v2674, %v972
    %v2740 = vsel %vm2712, %v2675, %v974
    %v2741 = vsel %vm2712, %v2676, %v976
    %v2742 = vsel %vm2712, %v2677, %v978
    %v2743 = vsel %vm2712, %v2678, %v980
    %v2744 = vsel %vm2712, %v2679, %v982
    %v2745 = vsel %vm2712, %v2680, %v984
    %v2746 = vsel %vm2712, %v2681, %v986
    %v2747 = vsel %vm2712, %v2682, %v988
    %v2748 = vsel %vm2712, %v2683, %v990
    %v2749 = vsel %vm2712, %v2684, %v992
    %v2750 = vsel %vm2712, %v2685, %v994
    %v2751 = vsel %vm2712, %v2686, %v996
    %v2752 = vsel %vm2712, %v2687, %v998
    %v2753 = vsel %vm2712, %v2688, %v1000
    %v2754 = vsel %vm2712, %v2689, %v1002
    %v2755 = vsel %vm2712, %v2690, %v1004
    %v2756 = vsel %vm2712, %v2691, %v1006
    %v2757 = vsel %vm2712, %v2692, %v1008
    %v2758 = vsel %vm2712, %v2693, %v1010
    %v2759 = vsel %vm2712, %v2694, %v1012
    %v2760 = vsel %vm2712, %v2695, %v1014
    %v2761 = vsel %vm2712, %v2696, %v1016
    %v2762 = vsel %vm2712, %v2697, %v1018
    %v2763 = vsel %vm2712, %v2698, %v1020
    %v2764 = vsel %vm2712, %v2699, %v1022
    %v2765 = vsel %vm2712, %v2700, %v1024
    %v2766 = vsel %vm2712, %v2701, %v1026
    %v2767 = vsel %vm2712, %v2702, %v1028
    %v2768 = vsel %vm2712, %v2703, %v1030
    %v2769 = vsel %vm2712, %v2704, %v1032
    %v2770 = vsel %vm2712, %v2705, %v1034
    %v2771 = vsel %vm2712, %v2706, %v1036
    %v2772 = vsel %vm2712, %v2707, %v1038
    %v2773 = vsel %vm2712, %v2708, %v1040
    %v2774 = vsel %vm2712, %v2709, %v1042
    %v2775 = vsel %vm2712, %v2710, %v1044
    %v2776 = vsel %vm2712, %v2711, %v1046
    %vm2777 = vcmask 97280
    %v2778 = vsel %vm2777, %v2713, %v1176
    %v2779 = vsel %vm2777, %v2714, %v1178
    %v2780 = vsel %vm2777, %v2715, %v1180
    %v2781 = vsel %vm2777, %v2716, %v1182
    %v2782 = vsel %vm2777, %v2717, %v1184
    %v2783 = vsel %vm2777, %v2718, %v1186
    %v2784 = vsel %vm2777, %v2719, %v1188
    %v2785 = vsel %vm2777, %v2720, %v1190
    %v2786 = vsel %vm2777, %v2721, %v1192
    %v2787 = vsel %vm2777, %v2722, %v1194
    %v2788 = vsel %vm2777, %v2723, %v1196
    %v2789 = vsel %vm2777, %v2724, %v1198
    %v2790 = vsel %vm2777, %v2725, %v1200
    %v2791 = vsel %vm2777, %v2726, %v1202
    %v2792 = vsel %vm2777, %v2727, %v1204
    %v2793 = vsel %vm2777, %v2728, %v1206
    %v2794 = vsel %vm2777, %v2729, %v1208
    %v2795 = vsel %vm2777, %v2730, %v1210
    %v2796 = vsel %vm2777, %v2731, %v1212
    %v2797 = vsel %vm2777, %v2732, %v1214
    %v2798 = vsel %vm2777, %v2733, %v1216
    %v2799 = vsel %vm2777, %v2734, %v1218
    %v2800 = vsel %vm2777, %v2735, %v1220
    %v2801 = vsel %vm2777, %v2736, %v1222
    %v2802 = vsel %vm2777, %v2737, %v1224
    %v2803 = vsel %vm2777, %v2738, %v1226
    %v2804 = vsel %vm2777, %v2739, %v1228
    %v2805 = vsel %vm2777, %v2740, %v1230
    %v2806 = vsel %vm2777, %v2741, %v1232
    %v2807 = vsel %vm2777, %v2742, %v1234
    %v2808 = vsel %vm2777, %v2743, %v1236
    %v2809 = vsel %vm2777, %v2744, %v1238
    %v2810 = vsel %vm2777, %v2745, %v1240
    %v2811 = vsel %vm2777, %v2746, %v1242
    %v2812 = vsel %vm2777, %v2747, %v1244
    %v2813 = vsel %vm2777, %v2748, %v1246
    %v2814 = vsel %vm2777, %v2749, %v1248
    %v2815 = vsel %vm2777, %v2750, %v1250
    %v2816 = vsel %vm2777, %v2751, %v1252
    %v2817 = vsel %vm2777, %v2752, %v1254
    %v2818 = vsel %vm2777, %v2753, %v1256
    %v2819 = vsel %vm2777, %v2754, %v1258
    %v2820 = vsel %vm2777, %v2755, %v1260
    %v2821 = vsel %vm2777, %v2756, %v1262
    %v2822 = vsel %vm2777, %v2757, %v1264
    %v2823 = vsel %vm2777, %v2758, %v1266
    %v2824 = vsel %vm2777, %v2759, %v1268
    %v2825 = vsel %vm2777, %v2760, %v1270
    %v2826 = vsel %vm2777, %v2761, %v1272
    %v2827 = vsel %vm2777, %v2762, %v1274
    %v2828 = vsel %vm2777, %v2763, %v1276
    %v2829 = vsel %vm2777, %v2764, %v1278
    %v2830 = vsel %vm2777, %v2765, %v1280
    %v2831 = vsel %vm2777, %v2766, %v1282
    %v2832 = vsel %vm2777, %v2767, %v1284
    %v2833 = vsel %vm2777, %v2768, %v1286
    %v2834 = vsel %vm2777, %v2769, %v1288
    %v2835 = vsel %vm2777, %v2770, %v1290
    %v2836 = vsel %vm2777, %v2771, %v1292
    %v2837 = vsel %vm2777, %v2772, %v1294
    %v2838 = vsel %vm2777, %v2773, %v1296
    %v2839 = vsel %vm2777, %v2774, %v1298
    %v2840 = vsel %vm2777, %v2775, %v1300
    %v2841 = vsel %vm2777, %v2776, %v1302
    %vm2842 = vcmask 130048
    %v2843 = vsel %vm2842, %v2778, %v1432
    %v2844 = vsel %vm2842, %v2779, %v1434
    %v2845 = vsel %vm2842, %v2780, %v1436
    %v2846 = vsel %vm2842, %v2781, %v1438
    %v2847 = vsel %vm2842, %v2782, %v1440
    %v2848 = vsel %vm2842, %v2783, %v1442
    %v2849 = vsel %vm2842, %v2784, %v1444
    %v2850 = vsel %vm2842, %v2785, %v1446
    %v2851 = vsel %vm2842, %v2786, %v1448
    %v2852 = vsel %vm2842, %v2787, %v1450
    %v2853 = vsel %vm2842, %v2788, %v1452
    %v2854 = vsel %vm2842, %v2789, %v1454
    %v2855 = vsel %vm2842, %v2790, %v1456
    %v2856 = vsel %vm2842, %v2791, %v1458
    %v2857 = vsel %vm2842, %v2792, %v1460
    %v2858 = vsel %vm2842, %v2793, %v1462
    %v2859 = vsel %vm2842, %v2794, %v1464
    %v2860 = vsel %vm2842, %v2795, %v1466
    %v2861 = vsel %vm2842, %v2796, %v1468
    %v2862 = vsel %vm2842, %v2797, %v1470
    %v2863 = vsel %vm2842, %v2798, %v1472
    %v2864 = vsel %vm2842, %v2799, %v1474
    %v2865 = vsel %vm2842, %v2800, %v1476
    %v2866 = vsel %vm2842, %v2801, %v1478
    %v2867 = vsel %vm2842, %v2802, %v1480
    %v2868 = vsel %vm2842, %v2803, %v1482
    %v2869 = vsel %vm2842, %v2804, %v1484
    %v2870 = vsel %vm2842, %v2805, %v1486
    %v2871 = vsel %vm2842, %v2806, %v1488
    %v2872 = vsel %vm2842, %v2807, %v1490
    %v2873 = vsel %vm2842, %v2808, %v1492
    %v2874 = vsel %vm2842, %v2809, %v1494
    %v2875 = vsel %vm2842, %v2810, %v1496
    %v2876 = vsel %vm2842, %v2811, %v1498
    %v2877 = vsel %vm2842, %v2812, %v1500
    %v2878 = vsel %vm2842, %v2813, %v1502
    %v2879 = vsel %vm2842, %v2814, %v1504
    %v2880 = vsel %vm2842, %v2815, %v1506
    %v2881 = vsel %vm2842, %v2816, %v1508
    %v2882 = vsel %vm2842, %v2817, %v1510
    %v2883 = vsel %vm2842, %v2818, %v1512
    %v2884 = vsel %vm2842, %v2819, %v1514
    %v2885 = vsel %vm2842, %v2820, %v1516
    %v2886 = vsel %vm2842, %v2821, %v1518
    %v2887 = vsel %vm2842, %v2822, %v1520
    %v2888 = vsel %vm2842, %v2823, %v1522
    %v2889 = vsel %vm2842, %v2824, %v1524
    %v2890 = vsel %vm2842, %v2825, %v1526
    %v2891 = vsel %vm2842, %v2826, %v1528
    %v2892 = vsel %vm2842, %v2827, %v1530
    %v2893 = vsel %vm2842, %v2828, %v1532
    %v2894 = vsel %vm2842, %v2829, %v1534
    %v2895 = vsel %vm2842, %v2830, %v1536
    %v2896 = vsel %vm2842, %v2831, %v1538
    %v2897 = vsel %vm2842, %v2832, %v1540
    %v2898 = vsel %vm2842, %v2833, %v1542
    %v2899 = vsel %vm2842, %v2834, %v1544
    %v2900 = vsel %vm2842, %v2835, %v1546
    %v2901 = vsel %vm2842, %v2836, %v1548
    %v2902 = vsel %vm2842, %v2837, %v1550
    %v2903 = vsel %vm2842, %v2838, %v1552
    %v2904 = vsel %vm2842, %v2839, %v1554
    %v2905 = vsel %vm2842, %v2840, %v1556
    %v2906 = vsel %vm2842, %v2841, %v1558
    %vm2907 = vcmask 162816
    %v2908 = vsel %vm2907, %v2843, %v1688
    %v2909 = vsel %vm2907, %v2844, %v1690
    %v2910 = vsel %vm2907, %v2845, %v1692
    %v2911 = vsel %vm2907, %v2846, %v1694
    %v2912 = vsel %vm2907, %v2847, %v1696
    %v2913 = vsel %vm2907, %v2848, %v1698
    %v2914 = vsel %vm2907, %v2849, %v1700
    %v2915 = vsel %vm2907, %v2850, %v1702
    %v2916 = vsel %vm2907, %v2851, %v1704
    %v2917 = vsel %vm2907, %v2852, %v1706
    %v2918 = vsel %vm2907, %v2853, %v1708
    %v2919 = vsel %vm2907, %v2854, %v1710
    %v2920 = vsel %vm2907, %v2855, %v1712
    %v2921 = vsel %vm2907, %v2856, %v1714
    %v2922 = vsel %vm2907, %v2857, %v1716
    %v2923 = vsel %vm2907, %v2858, %v1718
    %v2924 = vsel %vm2907, %v2859, %v1720
    %v2925 = vsel %vm2907, %v2860, %v1722
    %v2926 = vsel %vm2907, %v2861, %v1724
    %v2927 = vsel %vm2907, %v2862, %v1726
    %v2928 = vsel %vm2907, %v2863, %v1728
    %v2929 = vsel %vm2907, %v2864, %v1730
    %v2930 = vsel %vm2907, %v2865, %v1732
    %v2931 = vsel %vm2907, %v2866, %v1734
    %v2932 = vsel %vm2907, %v2867, %v1736
    %v2933 = vsel %vm2907, %v2868, %v1738
    %v2934 = vsel %vm2907, %v2869, %v1740
    %v2935 = vsel %vm2907, %v2870, %v1742
    %v2936 = vsel %vm2907, %v2871, %v1744
    %v2937 = vsel %vm2907, %v2872, %v1746
    %v2938 = vsel %vm2907, %v2873, %v1748
    %v2939 = vsel %vm2907, %v2874, %v1750
    %v2940 = vsel %vm2907, %v2875, %v1752
    %v2941 = vsel %vm2907, %v2876, %v1754
    %v2942 = vsel %vm2907, %v2877, %v1756
    %v2943 = vsel %vm2907, %v2878, %v1758
    %v2944 = vsel %vm2907, %v2879, %v1760
    %v2945 = vsel %vm2907, %v2880, %v1762
    %v2946 = vsel %vm2907, %v2881, %v1764
    %v2947 = vsel %vm2907, %v2882, %v1766
    %v2948 = vsel %vm2907, %v2883, %v1768
    %v2949 = vsel %vm2907, %v2884, %v1770
    %v2950 = vsel %vm2907, %v2885, %v1772
    %v2951 = vsel %vm2907, %v2886, %v1774
    %v2952 = vsel %vm2907, %v2887, %v1776
    %v2953 = vsel %vm2907, %v2888, %v1778
    %v2954 = vsel %vm2907, %v2889, %v1780
    %v2955 = vsel %vm2907, %v2890, %v1782
    %v2956 = vsel %vm2907, %v2891, %v1784
    %v2957 = vsel %vm2907, %v2892, %v1786
    %v2958 = vsel %vm2907, %v2893, %v1788
    %v2959 = vsel %vm2907, %v2894, %v1790
    %v2960 = vsel %vm2907, %v2895, %v1792
    %v2961 = vsel %vm2907, %v2896, %v1794
    %v2962 = vsel %vm2907, %v2897, %v1796
    %v2963 = vsel %vm2907, %v2898, %v1798
    %v2964 = vsel %vm2907, %v2899, %v1800
    %v2965 = vsel %vm2907, %v2900, %v1802
    %v2966 = vsel %vm2907, %v2901, %v1804
    %v2967 = vsel %vm2907, %v2902, %v1806
    %v2968 = vsel %vm2907, %v2903, %v1808
    %v2969 = vsel %vm2907, %v2904, %v1810
    %v2970 = vsel %vm2907, %v2905, %v1812
    %v2971 = vsel %vm2907, %v2906, %v1814
    %vm2972 = vcmask 195584
    %v2973 = vsel %vm2972, %v2908, %v1944
    %v2974 = vsel %vm2972, %v2909, %v1946
    %v2975 = vsel %vm2972, %v2910, %v1948
    %v2976 = vsel %vm2972, %v2911, %v1950
    %v2977 = vsel %vm2972, %v2912, %v1952
    %v2978 = vsel %vm2972, %v2913, %v1954
    %v2979 = vsel %vm2972, %v2914, %v1956
    %v2980 = vsel %vm2972, %v2915, %v1958
    %v2981 = vsel %vm2972, %v2916, %v1960
    %v2982 = vsel %vm2972, %v2917, %v1962
    %v2983 = vsel %vm2972, %v2918, %v1964
    %v2984 = vsel %vm2972, %v2919, %v1966
    %v2985 = vsel %vm2972, %v2920, %v1968
    %v2986 = vsel %vm2972, %v2921, %v1970
    %v2987 = vsel %vm2972, %v2922, %v1972
    %v2988 = vsel %vm2972, %v2923, %v1974
    %v2989 = vsel %vm2972, %v2924, %v1976
    %v2990 = vsel %vm2972, %v2925, %v1978
    %v2991 = vsel %vm2972, %v2926, %v1980
    %v2992 = vsel %vm2972, %v2927, %v1982
    %v2993 = vsel %vm2972, %v2928, %v1984
    %v2994 = vsel %vm2972, %v2929, %v1986
    %v2995 = vsel %vm2972, %v2930, %v1988
    %v2996 = vsel %vm2972, %v2931, %v1990
    %v2997 = vsel %vm2972, %v2932, %v1992
    %v2998 = vsel %vm2972, %v2933, %v1994
    %v2999 = vsel %vm2972, %v2934, %v1996
    %v3000 = vsel %vm2972, %v2935, %v1998
    %v3001 = vsel %vm2972, %v2936, %v2000
    %v3002 = vsel %vm2972, %v2937, %v2002
    %v3003 = vsel %vm2972, %v2938, %v2004
    %v3004 = vsel %vm2972, %v2939, %v2006
    %v3005 = vsel %vm2972, %v2940, %v2008
    %v3006 = vsel %vm2972, %v2941, %v2010
    %v3007 = vsel %vm2972, %v2942, %v2012
    %v3008 = vsel %vm2972, %v2943, %v2014
    %v3009 = vsel %vm2972, %v2944, %v2016
    %v3010 = vsel %vm2972, %v2945, %v2018
    %v3011 = vsel %vm2972, %v2946, %v2020
    %v3012 = vsel %vm2972, %v2947, %v2022
    %v3013 = vsel %vm2972, %v2948, %v2024
    %v3014 = vsel %vm2972, %v2949, %v2026
    %v3015 = vsel %vm2972, %v2950, %v2028
    %v3016 = vsel %vm2972, %v2951, %v2030
    %v3017 = vsel %vm2972, %v2952, %v2032
    %v3018 = vsel %vm2972, %v2953, %v2034
    %v3019 = vsel %vm2972, %v2954, %v2036
    %v3020 = vsel %vm2972, %v2955, %v2038
    %v3021 = vsel %vm2972, %v2956, %v2040
    %v3022 = vsel %vm2972, %v2957, %v2042
    %v3023 = vsel %vm2972, %v2958, %v2044
    %v3024 = vsel %vm2972, %v2959, %v2046
    %v3025 = vsel %vm2972, %v2960, %v2048
    %v3026 = vsel %vm2972, %v2961, %v2050
    %v3027 = vsel %vm2972, %v2962, %v2052
    %v3028 = vsel %vm2972, %v2963, %v2054
    %v3029 = vsel %vm2972, %v2964, %v2056
    %v3030 = vsel %vm2972, %v2965, %v2058
    %v3031 = vsel %vm2972, %v2966, %v2060
    %v3032 = vsel %vm2972, %v2967, %v2062
    %v3033 = vsel %vm2972, %v2968, %v2064
    %v3034 = vsel %vm2972, %v2969, %v2066
    %v3035 = vsel %vm2972, %v2970, %v2068
    %v3036 = vsel %vm2972, %v2971, %v2070
    %vm3037 = vcmask 228352
    %v3038 = vsel %vm3037, %v2973, %v2200
    %v3039 = vsel %vm3037, %v2974, %v2202
    %v3040 = vsel %vm3037, %v2975, %v2204
    %v3041 = vsel %vm3037, %v2976, %v2206
    %v3042 = vsel %vm3037, %v2977, %v2208
    %v3043 = vsel %vm3037, %v2978, %v2210
    %v3044 = vsel %vm3037, %v2979, %v2212
    %v3045 = vsel %vm3037, %v2980, %v2214
    %v3046 = vsel %vm3037, %v2981, %v2216
    %v3047 = vsel %vm3037, %v2982, %v2218
    %v3048 = vsel %vm3037, %v2983, %v2220
    %v3049 = vsel %vm3037, %v2984, %v2222
    %v3050 = vsel %vm3037, %v2985, %v2224
    %v3051 = vsel %vm3037, %v2986, %v2226
    %v3052 = vsel %vm3037, %v2987, %v2228
    %v3053 = vsel %vm3037, %v2988, %v2230
    %v3054 = vsel %vm3037, %v2989, %v2232
    %v3055 = vsel %vm3037, %v2990, %v2234
    %v3056 = vsel %vm3037, %v2991, %v2236
    %v3057 = vsel %vm3037, %v2992, %v2238
    %v3058 = vsel %vm3037, %v2993, %v2240
    %v3059 = vsel %vm3037, %v2994, %v2242
    %v3060 = vsel %vm3037, %v2995, %v2244
    %v3061 = vsel %vm3037, %v2996, %v2246
    %v3062 = vsel %vm3037, %v2997, %v2248
    %v3063 = vsel %vm3037, %v2998, %v2250
    %v3064 = vsel %vm3037, %v2999, %v2252
    %v3065 = vsel %vm3037, %v3000, %v2254
    %v3066 = vsel %vm3037, %v3001, %v2256
    %v3067 = vsel %vm3037, %v3002, %v2258
    %v3068 = vsel %vm3037, %v3003, %v2260
    %v3069 = vsel %vm3037, %v3004, %v2262
    %v3070 = vsel %vm3037, %v3005, %v2264
    %v3071 = vsel %vm3037, %v3006, %v2266
    %v3072 = vsel %vm3037, %v3007, %v2268
    %v3073 = vsel %vm3037, %v3008, %v2270
    %v3074 = vsel %vm3037, %v3009, %v2272
    %v3075 = vsel %vm3037, %v3010, %v2274
    %v3076 = vsel %vm3037, %v3011, %v2276
    %v3077 = vsel %vm3037, %v3012, %v2278
    %v3078 = vsel %vm3037, %v3013, %v2280
    %v3079 = vsel %vm3037, %v3014, %v2282
    %v3080 = vsel %vm3037, %v3015, %v2284
    %v3081 = vsel %vm3037, %v3016, %v2286
    %v3082 = vsel %vm3037, %v3017, %v2288
    %v3083 = vsel %vm3037, %v3018, %v2290
    %v3084 = vsel %vm3037, %v3019, %v2292
    %v3085 = vsel %vm3037, %v3020, %v2294
    %v3086 = vsel %vm3037, %v3021, %v2296
    %v3087 = vsel %vm3037, %v3022, %v2298
    %v3088 = vsel %vm3037, %v3023, %v2300
    %v3089 = vsel %vm3037, %v3024, %v2302
    %v3090 = vsel %vm3037, %v3025, %v2304
    %v3091 = vsel %vm3037, %v3026, %v2306
    %v3092 = vsel %vm3037, %v3027, %v2308
    %v3093 = vsel %vm3037, %v3028, %v2310
    %v3094 = vsel %vm3037, %v3029, %v2312
    %v3095 = vsel %vm3037, %v3030, %v2314
    %v3096 = vsel %vm3037, %v3031, %v2316
    %v3097 = vsel %vm3037, %v3032, %v2318
    %v3098 = vsel %vm3037, %v3033, %v2320
    %v3099 = vsel %vm3037, %v3034, %v2322
    %v3100 = vsel %vm3037, %v3035, %v2324
    %v3101 = vsel %vm3037, %v3036, %v2326
    %vm3102 = vcmask 261120
    %v3103 = vsel %vm3102, %v3038, %v2456
    %v3104 = vsel %vm3102, %v3039, %v2458
    %v3105 = vsel %vm3102, %v3040, %v2460
    %v3106 = vsel %vm3102, %v3041, %v2462
    %v3107 = vsel %vm3102, %v3042, %v2464
    %v3108 = vsel %vm3102, %v3043, %v2466
    %v3109 = vsel %vm3102, %v3044, %v2468
    %v3110 = vsel %vm3102, %v3045, %v2470
    %v3111 = vsel %vm3102, %v3046, %v2472
    %v3112 = vsel %vm3102, %v3047, %v2474
    %v3113 = vsel %vm3102, %v3048, %v2476
    %v3114 = vsel %vm3102, %v3049, %v2478
    %v3115 = vsel %vm3102, %v3050, %v2480
    %v3116 = vsel %vm3102, %v3051, %v2482
    %v3117 = vsel %vm3102, %v3052, %v2484
    %v3118 = vsel %vm3102, %v3053, %v2486
    %v3119 = vsel %vm3102, %v3054, %v2488
    %v3120 = vsel %vm3102, %v3055, %v2490
    %v3121 = vsel %vm3102, %v3056, %v2492
    %v3122 = vsel %vm3102, %v3057, %v2494
    %v3123 = vsel %vm3102, %v3058, %v2496
    %v3124 = vsel %vm3102, %v3059, %v2498
    %v3125 = vsel %vm3102, %v3060, %v2500
    %v3126 = vsel %vm3102, %v3061, %v2502
    %v3127 = vsel %vm3102, %v3062, %v2504
    %v3128 = vsel %vm3102, %v3063, %v2506
    %v3129 = vsel %vm3102, %v3064, %v2508
    %v3130 = vsel %vm3102, %v3065, %v2510
    %v3131 = vsel %vm3102, %v3066, %v2512
    %v3132 = vsel %vm3102, %v3067, %v2514
    %v3133 = vsel %vm3102, %v3068, %v2516
    %v3134 = vsel %vm3102, %v3069, %v2518
    %v3135 = vsel %vm3102, %v3070, %v2520
    %v3136 = vsel %vm3102, %v3071, %v2522
    %v3137 = vsel %vm3102, %v3072, %v2524
    %v3138 = vsel %vm3102, %v3073, %v2526
    %v3139 = vsel %vm3102, %v3074, %v2528
    %v3140 = vsel %vm3102, %v3075, %v2530
    %v3141 = vsel %vm3102, %v3076, %v2532
    %v3142 = vsel %vm3102, %v3077, %v2534
    %v3143 = vsel %vm3102, %v3078, %v2536
    %v3144 = vsel %vm3102, %v3079, %v2538
    %v3145 = vsel %vm3102, %v3080, %v2540
    %v3146 = vsel %vm3102, %v3081, %v2542
    %v3147 = vsel %vm3102, %v3082, %v2544
    %v3148 = vsel %vm3102, %v3083, %v2546
    %v3149 = vsel %vm3102, %v3084, %v2548
    %v3150 = vsel %vm3102, %v3085, %v2550
    %v3151 = vsel %vm3102, %v3086, %v2552
    %v3152 = vsel %vm3102, %v3087, %v2554
    %v3153 = vsel %vm3102, %v3088, %v2556
    %v3154 = vsel %vm3102, %v3089, %v2558
    %v3155 = vsel %vm3102, %v3090, %v2560
    %v3156 = vsel %vm3102, %v3091, %v2562
    %v3157 = vsel %vm3102, %v3092, %v2564
    %v3158 = vsel %vm3102, %v3093, %v2566
    %v3159 = vsel %vm3102, %v3094, %v2568
    %v3160 = vsel %vm3102, %v3095, %v2570
    %v3161 = vsel %vm3102, %v3096, %v2572
    %v3162 = vsel %vm3102, %v3097, %v2574
    %v3163 = vsel %vm3102, %v3098, %v2576
    %v3164 = vsel %vm3102, %v3099, %v2578
    %v3165 = vsel %vm3102, %v3100, %v2580
    %v3166 = vsel %vm3102, %v3101, %v2582
    %v3167 = vld [vmem:[%s1] sm:$0xff]
    %v3168 = vld [vmem:[%s1 + $0x8] sm:$0xff]
    %v3169 = vld [vmem:[%s1 + $0x10] sm:$0xff]
    %v3170 = vld [vmem:[%s1 + $0x18] sm:$0xff]
    %v3171 = vld [vmem:[%s1 + $0x20] sm:$0xf]
    %v3172 = vld [vmem:[%s2] sm:$0x1]
    %v3173 = vlaneseq
    %v3174 = vshrl.u32 %v3173, 7
    %v3175 = vsub.s32 0, %v3174
    %v3176 = vrot.slane %v3172, %v3175
    %vm3177 = vcmask 293888
    %v3179 = vsel %vm3177, %v3103, 0
    %v3182 = vsel %vm3177, %v3104, 0
    %v3185 = vsel %vm3177, %v3105, 0
    %v3188 = vsel %vm3177, %v3106, 0
    %v3191 = vsel %vm3177, %v3107, 0
    %v3194 = vsel %vm3177, %v3108, 0
    %v3197 = vsel %vm3177, %v3109, 0
    %v3200 = vsel %vm3177, %v3110, 0
    %v3203 = vsel %vm3177, %v3111, 0
    %v3206 = vsel %vm3177, %v3112, 0
    %v3209 = vsel %vm3177, %v3113, 0
    %v3212 = vsel %vm3177, %v3114, 0
    %v3215 = vsel %vm3177, %v3115, 0
    %v3218 = vsel %vm3177, %v3116, 0
    %v3221 = vsel %vm3177, %v3117, 0
    %v3224 = vsel %vm3177, %v3118, 0
    %v3227 = vsel %vm3177, %v3119, 0
    %v3230 = vsel %vm3177, %v3120, 0
    %v3233 = vsel %vm3177, %v3121, 0
    %v3236 = vsel %vm3177, %v3122, 0
    %v3239 = vsel %vm3177, %v3123, 0
    %v3242 = vsel %vm3177, %v3124, 0
    %v3245 = vsel %vm3177, %v3125, 0
    %v3248 = vsel %vm3177, %v3126, 0
    %v3251 = vsel %vm3177, %v3127, 0
    %v3254 = vsel %vm3177, %v3128, 0
    %v3257 = vsel %vm3177, %v3129, 0
    %v3260 = vsel %vm3177, %v3130, 0
    %v3263 = vsel %vm3177, %v3131, 0
    %v3266 = vsel %vm3177, %v3132, 0
    %v3269 = vsel %vm3177, %v3133, 0
    %v3272 = vsel %vm3177, %v3134, 0
    %v3275 = vsel %vm3177, %v3135, 0
    %v3278 = vsel %vm3177, %v3136, 0
    %v3281 = vsel %vm3177, %v3137, 0
    %v3284 = vsel %vm3177, %v3138, 0
    %v3287 = vsel %vm3177, %v3139, 0
    %v3290 = vsel %vm3177, %v3140, 0
    %v3293 = vsel %vm3177, %v3141, 0
    %v3296 = vsel %vm3177, %v3142, 0
    %v3299 = vsel %vm3177, %v3143, 0
    %v3302 = vsel %vm3177, %v3144, 0
    %v3305 = vsel %vm3177, %v3145, 0
    %v3308 = vsel %vm3177, %v3146, 0
    %v3311 = vsel %vm3177, %v3147, 0
    %v3314 = vsel %vm3177, %v3148, 0
    %v3317 = vsel %vm3177, %v3149, 0
    %v3320 = vsel %vm3177, %v3150, 0
    %v3323 = vsel %vm3177, %v3151, 0
    %v3326 = vsel %vm3177, %v3152, 0
    %v3329 = vsel %vm3177, %v3153, 0
    %v3332 = vsel %vm3177, %v3154, 0
    %v3335 = vsel %vm3177, %v3155, 0
    %v3338 = vsel %vm3177, %v3156, 0
    %v3341 = vsel %vm3177, %v3157, 0
    %v3344 = vsel %vm3177, %v3158, 0
    %v3347 = vsel %vm3177, %v3159, 0
    %v3350 = vsel %vm3177, %v3160, 0
    %v3353 = vsel %vm3177, %v3161, 0
    %v3356 = vsel %vm3177, %v3162, 0
    %v3359 = vsel %vm3177, %v3163, 0
    %v3362 = vsel %vm3177, %v3164, 0
    %v3365 = vsel %vm3177, %v3165, 0
    %v3368 = vsel %vm3177, %v3166, 0
    %vm3370 = vcmask 1043456
    %v3372 = vsel %vm3370, %v3171, 0
    %3374 = vmatprep.subr.mxu0 0.0
    %3375 = vmatpush1.msra.mxu0 %v3167
    %3376 = vmatprep.subr.mxu0 0.0
    %3377 = vmatpush1.msra.mxu0 %v3168
    %3378 = vmatprep.subr.mxu0 0.0
    %3379 = vmatpush1.msra.mxu0 %v3169
    %3380 = vmatprep.subr.mxu0 0.0
    %3381 = vmatpush1.msra.mxu0 %v3170
    %3382 = vmatprep.subr.mxu0 0.0
    %3383 = vmatpush1.msra.mxu0 %v3372
    %3384 = vmatprep.subr.mxu0 0.0
    %3385 = vmatpush1.msra.mxu0 0.0
    %3386 = vmatprep.subr.mxu0 0.0
    %3387 = vmatpush1.msra.mxu0 0.0
    %3388 = vmatprep.subr.mxu0 0.0
    %3389 = vmatpush1.msra.mxu0 0.0
    %3390 = vmatprep.subr.mxu0 0.0
    %3391 = vmatpush1.msra.mxu0 0.0
    %3392 = vmatprep.subr.mxu0 0.0
    %3393 = vmatpush1.msra.mxu0 0.0
    %3394 = vmatprep.subr.mxu0 0.0
    %3395 = vmatpush1.msra.mxu0 0.0
    %3396 = vmatprep.subr.mxu0 0.0
    %3397 = vmatpush1.msra.mxu0 0.0
    %3398 = vmatprep.subr.mxu0 0.0
    %3399 = vmatpush1.msra.mxu0 0.0
    %3400 = vmatprep.subr.mxu0 0.0
    %3401 = vmatpush1.msra.mxu0 0.0
    %3402 = vmatprep.subr.mxu0 0.0
    %3403 = vmatpush1.msra.mxu0 0.0
    %3404 = vmatprep.subr.mxu0 0.0
    %3405 = vmatpush1.msra.mxu0 0.0
    %3406 = vmatprep.subr.mxu0 0.0
    %3407 = vmatpush1.msra.mxu0 0.0
    %3408 = vmatprep.subr.mxu0 0.0
    %3409 = vmatpush1.msra.mxu0 0.0
    %3410 = vmatprep.subr.mxu0 0.0
    %3411 = vmatpush1.msra.mxu0 0.0
    %3412 = vmatprep.subr.mxu0 0.0
    %3413 = vmatpush1.msra.mxu0 0.0
    %3414 = vmatprep.subr.mxu0 0.0
    %3415 = vmatpush1.msra.mxu0 0.0
    %3416 = vmatprep.subr.mxu0 0.0
    %3417 = vmatpush1.msra.mxu0 0.0
    %3418 = vmatprep.subr.mxu0 0.0
    %3419 = vmatpush1.msra.mxu0 0.0
    %3420 = vmatprep.subr.mxu0 0.0
    %3421 = vmatpush1.msra.mxu0 0.0
    %3422 = vmatprep.subr.mxu0 0.0
    %3423 = vmatpush1.msra.mxu0 0.0
    %3424 = vmatprep.subr.mxu0 0.0
    %3425 = vmatpush1.msra.mxu0 0.0
    %3426 = vmatprep.subr.mxu0 0.0
    %3427 = vmatpush1.msra.mxu0 0.0
    %3428 = vmatprep.subr.mxu0 0.0
    %3429 = vmatpush1.msra.mxu0 0.0
    %3430 = vmatprep.subr.mxu0 0.0
    %3431 = vmatpush1.msra.mxu0 0.0
    %3432 = vmatprep.subr.mxu0 0.0
    %3433 = vmatpush1.msra.mxu0 0.0
    %3434 = vmatprep.subr.mxu0 0.0
    %3435 = vmatpush1.msra.mxu0 0.0
    %3436 = vmatprep.subr.mxu0 0.0
    %3437 = vmatpush1.msra.mxu0 0.0
    %3438 = vmatprep.mubr.f32.mxu0 0.0
    %3439 = vmatmul.mubr.f32.gmra.mrb[0].mxu0 %v3179
    %v3440 = vpop.f32.mrb[0].mxu0
    %v3441 = vadd.f32 %v3176, %v3440
    %v3442 = vpop.f32.mrb[0].mxu0
    %3443 = vmatprep.mubr.f32.mxu0 0.0
    %3444 = vmatmul.mubr.f32.gmra.mrb[0].mxu0 %v3182
    %v3445 = vpop.f32.mrb[0].mxu0
    %v3446 = vadd.f32 %v3176, %v3445
    %v3447 = vpop.f32.mrb[0].mxu0
    %3448 = vmatprep.mubr.f32.mxu0 0.0
    %3449 = vmatmul.mubr.f32.gmra.mrb[0].mxu0 %v3185
    %v3450 = vpop.f32.mrb[0].mxu0
    %v3451 = vadd.f32 %v3176, %v3450
    %v3452 = vpop.f32.mrb[0].mxu0
    %3453 = vmatprep.mubr.f32.mxu0 0.0
    %3454 = vmatmul.mubr.f32.gmra.mrb[0].mxu0 %v3188
    %v3455 = vpop.f32.mrb[0].mxu0
    %v3456 = vadd.f32 %v3176, %v3455
    %v3457 = vpop.f32.mrb[0].mxu0
    %3458 = vmatprep.mubr.f32.mxu0 0.0
    %3459 = vmatmul.mubr.f32.gmra.mrb[0].mxu0 %v3191
    %v3460 = vpop.f32.mrb[0].mxu0
    %v3461 = vadd.f32 %v3176, %v3460
    %v3462 = vpop.f32.mrb[0].mxu0
    %3463 = vmatprep.mubr.f32.mxu0 0.0
    %3464 = vmatmul.mubr.f32.gmra.mrb[0].mxu0 %v3194
    %v3465 = vpop.f32.mrb[0].mxu0
    %v3466 = vadd.f32 %v3176, %v3465
    %v3467 = vpop.f32.mrb[0].mxu0
    %3468 = vmatprep.mubr.f32.mxu0 0.0
    %3469 = vmatmul.mubr.f32.gmra.mrb[0].mxu0 %v3197
    %v3470 = vpop.f32.mrb[0].mxu0
    %v3471 = vadd.f32 %v3176, %v3470
    %v3472 = vpop.f32.mrb[0].mxu0
    %3473 = vmatprep.mubr.f32.mxu0 0.0
    %3474 = vmatmul.mubr.f32.gmra.mrb[0].mxu0 %v3200
    %v3475 = vpop.f32.mrb[0].mxu0
    %v3476 = vadd.f32 %v3176, %v3475
    %v3477 = vpop.f32.mrb[0].mxu0
    %3478 = vmatprep.mubr.f32.mxu0 0.0
    %3479 = vmatmul.mubr.f32.gmra.mrb[0].mxu0 %v3203
    %v3480 = vpop.f32.mrb[0].mxu0
    %v3481 = vadd.f32 %v3176, %v3480
    %v3482 = vpop.f32.mrb[0].mxu0
    %3483 = vmatprep.mubr.f32.mxu0 0.0
    %3484 = vmatmul.mubr.f32.gmra.mrb[0].mxu0 %v3206
    %v3485 = vpop.f32.mrb[0].mxu0
    %v3486 = vadd.f32 %v3176, %v3485
    %v3487 = vpop.f32.mrb[0].mxu0
    %3488 = vmatprep.mubr.f32.mxu0 0.0
    %3489 = vmatmul.mubr.f32.gmra.mrb[0].mxu0 %v3209
    %v3490 = vpop.f32.mrb[0].mxu0
    %v3491 = vadd.f32 %v3176, %v3490
    %v3492 = vpop.f32.mrb[0].mxu0
    %3493 = vmatprep.mubr.f32.mxu0 0.0
    %3494 = vmatmul.mubr.f32.gmra.mrb[0].mxu0 %v3212
    %v3495 = vpop.f32.mrb[0].mxu0
    %v3496 = vadd.f32 %v3176, %v3495
    %v3497 = vpop.f32.mrb[0].mxu0
    %3498 = vmatprep.mubr.f32.mxu0 0.0
    %3499 = vmatmul.mubr.f32.gmra.mrb[0].mxu0 %v3215
    %v3500 = vpop.f32.mrb[0].mxu0
    %v3501 = vadd.f32 %v3176, %v3500
    %v3502 = vpop.f32.mrb[0].mxu0
    %3503 = vmatprep.mubr.f32.mxu0 0.0
    %3504 = vmatmul.mubr.f32.gmra.mrb[0].mxu0 %v3218
    %v3505 = vpop.f32.mrb[0].mxu0
    %v3506 = vadd.f32 %v3176, %v3505
    %v3507 = vpop.f32.mrb[0].mxu0
    %3508 = vmatprep.mubr.f32.mxu0 0.0
    %3509 = vmatmul.mubr.f32.gmra.mrb[0].mxu0 %v3221
    %v3510 = vpop.f32.mrb[0].mxu0
    %v3511 = vadd.f32 %v3176, %v3510
    %v3512 = vpop.f32.mrb[0].mxu0
    %3513 = vmatprep.mubr.f32.mxu0 0.0
    %3514 = vmatmul.mubr.f32.gmra.mrb[0].mxu0 %v3224
    %v3515 = vpop.f32.mrb[0].mxu0
    %v3516 = vadd.f32 %v3176, %v3515
    %v3517 = vpop.f32.mrb[0].mxu0
    %3518 = vmatprep.mubr.f32.mxu0 0.0
    %3519 = vmatmul.mubr.f32.gmra.mrb[0].mxu0 %v3227
    %v3520 = vpop.f32.mrb[0].mxu0
    %v3521 = vadd.f32 %v3176, %v3520
    %v3522 = vpop.f32.mrb[0].mxu0
    %3523 = vmatprep.mubr.f32.mxu0 0.0
    %3524 = vmatmul.mubr.f32.gmra.mrb[0].mxu0 %v3230
    %v3525 = vpop.f32.mrb[0].mxu0
    %v3526 = vadd.f32 %v3176, %v3525
    %v3527 = vpop.f32.mrb[0].mxu0
    %3528 = vmatprep.mubr.f32.mxu0 0.0
    %3529 = vmatmul.mubr.f32.gmra.mrb[0].mxu0 %v3233
    %v3530 = vpop.f32.mrb[0].mxu0
    %v3531 = vadd.f32 %v3176, %v3530
    %v3532 = vpop.f32.mrb[0].mxu0
    %3533 = vmatprep.mubr.f32.mxu0 0.0
    %3534 = vmatmul.mubr.f32.gmra.mrb[0].mxu0 %v3236
    %v3535 = vpop.f32.mrb[0].mxu0
    %v3536 = vadd.f32 %v3176, %v3535
    %v3537 = vpop.f32.mrb[0].mxu0
    %3538 = vmatprep.mubr.f32.mxu0 0.0
    %3539 = vmatmul.mubr.f32.gmra.mrb[0].mxu0 %v3239
    %v3540 = vpop.f32.mrb[0].mxu0
    %v3541 = vadd.f32 %v3176, %v3540
    %v3542 = vpop.f32.mrb[0].mxu0
    %3543 = vmatprep.mubr.f32.mxu0 0.0
    %3544 = vmatmul.mubr.f32.gmra.mrb[0].mxu0 %v3242
    %v3545 = vpop.f32.mrb[0].mxu0
    %v3546 = vadd.f32 %v3176, %v3545
    %v3547 = vpop.f32.mrb[0].mxu0
    %3548 = vmatprep.mubr.f32.mxu0 0.0
    %3549 = vmatmul.mubr.f32.gmra.mrb[0].mxu0 %v3245
    %v3550 = vpop.f32.mrb[0].mxu0
    %v3551 = vadd.f32 %v3176, %v3550
    %v3552 = vpop.f32.mrb[0].mxu0
    %3553 = vmatprep.mubr.f32.mxu0 0.0
    %3554 = vmatmul.mubr.f32.gmra.mrb[0].mxu0 %v3248
    %v3555 = vpop.f32.mrb[0].mxu0
    %v3556 = vadd.f32 %v3176, %v3555
    %v3557 = vpop.f32.mrb[0].mxu0
    %3558 = vmatprep.mubr.f32.mxu0 0.0
    %3559 = vmatmul.mubr.f32.gmra.mrb[0].mxu0 %v3251
    %v3560 = vpop.f32.mrb[0].mxu0
    %v3561 = vadd.f32 %v3176, %v3560
    %v3562 = vpop.f32.mrb[0].mxu0
    %3563 = vmatprep.mubr.f32.mxu0 0.0
    %3564 = vmatmul.mubr.f32.gmra.mrb[0].mxu0 %v3254
    %v3565 = vpop.f32.mrb[0].mxu0
    %v3566 = vadd.f32 %v3176, %v3565
    %v3567 = vpop.f32.mrb[0].mxu0
    %3568 = vmatprep.mubr.f32.mxu0 0.0
    %3569 = vmatmul.mubr.f32.gmra.mrb[0].mxu0 %v3257
    %v3570 = vpop.f32.mrb[0].mxu0
    %v3571 = vadd.f32 %v3176, %v3570
    %v3572 = vpop.f32.mrb[0].mxu0
    %3573 = vmatprep.mubr.f32.mxu0 0.0
    %3574 = vmatmul.mubr.f32.gmra.mrb[0].mxu0 %v3260
    %v3575 = vpop.f32.mrb[0].mxu0
    %v3576 = vadd.f32 %v3176, %v3575
    %v3577 = vpop.f32.mrb[0].mxu0
    %3578 = vmatprep.mubr.f32.mxu0 0.0
    %3579 = vmatmul.mubr.f32.gmra.mrb[0].mxu0 %v3263
    %v3580 = vpop.f32.mrb[0].mxu0
    %v3581 = vadd.f32 %v3176, %v3580
    %v3582 = vpop.f32.mrb[0].mxu0
    %3583 = vmatprep.mubr.f32.mxu0 0.0
    %3584 = vmatmul.mubr.f32.gmra.mrb[0].mxu0 %v3266
    %v3585 = vpop.f32.mrb[0].mxu0
    %v3586 = vadd.f32 %v3176, %v3585
    %v3587 = vpop.f32.mrb[0].mxu0
    %3588 = vmatprep.mubr.f32.mxu0 0.0
    %3589 = vmatmul.mubr.f32.gmra.mrb[0].mxu0 %v3269
    %v3590 = vpop.f32.mrb[0].mxu0
    %v3591 = vadd.f32 %v3176, %v3590
    %v3592 = vpop.f32.mrb[0].mxu0
    %3593 = vmatprep.mubr.f32.mxu0 0.0
    %3594 = vmatmul.mubr.f32.gmra.mrb[0].mxu0 %v3272
    %v3595 = vpop.f32.mrb[0].mxu0
    %v3596 = vadd.f32 %v3176, %v3595
    %v3597 = vpop.f32.mrb[0].mxu0
    %3598 = vmatprep.mubr.f32.mxu0 0.0
    %3599 = vmatmul.mubr.f32.gmra.mrb[0].mxu0 %v3275
    %v3600 = vpop.f32.mrb[0].mxu0
    %v3601 = vadd.f32 %v3176, %v3600
    %v3602 = vpop.f32.mrb[0].mxu0
    %3603 = vmatprep.mubr.f32.mxu0 0.0
    %3604 = vmatmul.mubr.f32.gmra.mrb[0].mxu0 %v3278
    %v3605 = vpop.f32.mrb[0].mxu0
    %v3606 = vadd.f32 %v3176, %v3605
    %v3607 = vpop.f32.mrb[0].mxu0
    %3608 = vmatprep.mubr.f32.mxu0 0.0
    %3609 = vmatmul.mubr.f32.gmra.mrb[0].mxu0 %v3281
    %v3610 = vpop.f32.mrb[0].mxu0
    %v3611 = vadd.f32 %v3176, %v3610
    %v3612 = vpop.f32.mrb[0].mxu0
    %3613 = vmatprep.mubr.f32.mxu0 0.0
    %3614 = vmatmul.mubr.f32.gmra.mrb[0].mxu0 %v3284
    %v3615 = vpop.f32.mrb[0].mxu0
    %v3616 = vadd.f32 %v3176, %v3615
    %v3617 = vpop.f32.mrb[0].mxu0
    %3618 = vmatprep.mubr.f32.mxu0 0.0
    %3619 = vmatmul.mubr.f32.gmra.mrb[0].mxu0 %v3287
    %v3620 = vpop.f32.mrb[0].mxu0
    %v3621 = vadd.f32 %v3176, %v3620
    %v3622 = vpop.f32.mrb[0].mxu0
    %3623 = vmatprep.mubr.f32.mxu0 0.0
    %3624 = vmatmul.mubr.f32.gmra.mrb[0].mxu0 %v3290
    %v3625 = vpop.f32.mrb[0].mxu0
    %v3626 = vadd.f32 %v3176, %v3625
    %v3627 = vpop.f32.mrb[0].mxu0
    %3628 = vmatprep.mubr.f32.mxu0 0.0
    %3629 = vmatmul.mubr.f32.gmra.mrb[0].mxu0 %v3293
    %v3630 = vpop.f32.mrb[0].mxu0
    %v3631 = vadd.f32 %v3176, %v3630
    %v3632 = vpop.f32.mrb[0].mxu0
    %3633 = vmatprep.mubr.f32.mxu0 0.0
    %3634 = vmatmul.mubr.f32.gmra.mrb[0].mxu0 %v3296
    %v3635 = vpop.f32.mrb[0].mxu0
    %v3636 = vadd.f32 %v3176, %v3635
    %v3637 = vpop.f32.mrb[0].mxu0
    %3638 = vmatprep.mubr.f32.mxu0 0.0
    %3639 = vmatmul.mubr.f32.gmra.mrb[0].mxu0 %v3299
    %v3640 = vpop.f32.mrb[0].mxu0
    %v3641 = vadd.f32 %v3176, %v3640
    %v3642 = vpop.f32.mrb[0].mxu0
    %3643 = vmatprep.mubr.f32.mxu0 0.0
    %3644 = vmatmul.mubr.f32.gmra.mrb[0].mxu0 %v3302
    %v3645 = vpop.f32.mrb[0].mxu0
    %v3646 = vadd.f32 %v3176, %v3645
    %v3647 = vpop.f32.mrb[0].mxu0
    %3648 = vmatprep.mubr.f32.mxu0 0.0
    %3649 = vmatmul.mubr.f32.gmra.mrb[0].mxu0 %v3305
    %v3650 = vpop.f32.mrb[0].mxu0
    %v3651 = vadd.f32 %v3176, %v3650
    %v3652 = vpop.f32.mrb[0].mxu0
    %3653 = vmatprep.mubr.f32.mxu0 0.0
    %3654 = vmatmul.mubr.f32.gmra.mrb[0].mxu0 %v3308
    %v3655 = vpop.f32.mrb[0].mxu0
    %v3656 = vadd.f32 %v3176, %v3655
    %v3657 = vpop.f32.mrb[0].mxu0
    %3658 = vmatprep.mubr.f32.mxu0 0.0
    %3659 = vmatmul.mubr.f32.gmra.mrb[0].mxu0 %v3311
    %v3660 = vpop.f32.mrb[0].mxu0
    %v3661 = vadd.f32 %v3176, %v3660
    %v3662 = vpop.f32.mrb[0].mxu0
    %3663 = vmatprep.mubr.f32.mxu0 0.0
    %3664 = vmatmul.mubr.f32.gmra.mrb[0].mxu0 %v3314
    %v3665 = vpop.f32.mrb[0].mxu0
    %v3666 = vadd.f32 %v3176, %v3665
    %v3667 = vpop.f32.mrb[0].mxu0
    %3668 = vmatprep.mubr.f32.mxu0 0.0
    %3669 = vmatmul.mubr.f32.gmra.mrb[0].mxu0 %v3317
    %v3670 = vpop.f32.mrb[0].mxu0
    %v3671 = vadd.f32 %v3176, %v3670
    %v3672 = vpop.f32.mrb[0].mxu0
    %3673 = vmatprep.mubr.f32.mxu0 0.0
    %3674 = vmatmul.mubr.f32.gmra.mrb[0].mxu0 %v3320
    %v3675 = vpop.f32.mrb[0].mxu0
    %v3676 = vadd.f32 %v3176, %v3675
    %v3677 = vpop.f32.mrb[0].mxu0
    %3678 = vmatprep.mubr.f32.mxu0 0.0
    %3679 = vmatmul.mubr.f32.gmra.mrb[0].mxu0 %v3323
    %v3680 = vpop.f32.mrb[0].mxu0
    %v3681 = vadd.f32 %v3176, %v3680
    %v3682 = vpop.f32.mrb[0].mxu0
    %3683 = vmatprep.mubr.f32.mxu0 0.0
    %3684 = vmatmul.mubr.f32.gmra.mrb[0].mxu0 %v3326
    %v3685 = vpop.f32.mrb[0].mxu0
    %v3686 = vadd.f32 %v3176, %v3685
    %v3687 = vpop.f32.mrb[0].mxu0
    %3688 = vmatprep.mubr.f32.mxu0 0.0
    %3689 = vmatmul.mubr.f32.gmra.mrb[0].mxu0 %v3329
    %v3690 = vpop.f32.mrb[0].mxu0
    %v3691 = vadd.f32 %v3176, %v3690
    %v3692 = vpop.f32.mrb[0].mxu0
    %3693 = vmatprep.mubr.f32.mxu0 0.0
    %3694 = vmatmul.mubr.f32.gmra.mrb[0].mxu0 %v3332
    %v3695 = vpop.f32.mrb[0].mxu0
    %v3696 = vadd.f32 %v3176, %v3695
    %v3697 = vpop.f32.mrb[0].mxu0
    %3698 = vmatprep.mubr.f32.mxu0 0.0
    %3699 = vmatmul.mubr.f32.gmra.mrb[0].mxu0 %v3335
    %v3700 = vpop.f32.mrb[0].mxu0
    %v3701 = vadd.f32 %v3176, %v3700
    %v3702 = vpop.f32.mrb[0].mxu0
    %3703 = vmatprep.mubr.f32.mxu0 0.0
    %3704 = vmatmul.mubr.f32.gmra.mrb[0].mxu0 %v3338
    %v3705 = vpop.f32.mrb[0].mxu0
    %v3706 = vadd.f32 %v3176, %v3705
    %v3707 = vpop.f32.mrb[0].mxu0
    %3708 = vmatprep.mubr.f32.mxu0 0.0
    %3709 = vmatmul.mubr.f32.gmra.mrb[0].mxu0 %v3341
    %v3710 = vpop.f32.mrb[0].mxu0
    %v3711 = vadd.f32 %v3176, %v3710
    %v3712 = vpop.f32.mrb[0].mxu0
    %3713 = vmatprep.mubr.f32.mxu0 0.0
    %3714 = vmatmul.mubr.f32.gmra.mrb[0].mxu0 %v3344
    %v3715 = vpop.f32.mrb[0].mxu0
    %v3716 = vadd.f32 %v3176, %v3715
    %v3717 = vpop.f32.mrb[0].mxu0
    %3718 = vmatprep.mubr.f32.mxu0 0.0
    %3719 = vmatmul.mubr.f32.gmra.mrb[0].mxu0 %v3347
    %v3720 = vpop.f32.mrb[0].mxu0
    %v3721 = vadd.f32 %v3176, %v3720
    %v3722 = vpop.f32.mrb[0].mxu0
    %3723 = vmatprep.mubr.f32.mxu0 0.0
    %3724 = vmatmul.mubr.f32.gmra.mrb[0].mxu0 %v3350
    %v3725 = vpop.f32.mrb[0].mxu0
    %v3726 = vadd.f32 %v3176, %v3725
    %v3727 = vpop.f32.mrb[0].mxu0
    %3728 = vmatprep.mubr.f32.mxu0 0.0
    %3729 = vmatmul.mubr.f32.gmra.mrb[0].mxu0 %v3353
    %v3730 = vpop.f32.mrb[0].mxu0
    %v3731 = vadd.f32 %v3176, %v3730
    %v3732 = vpop.f32.mrb[0].mxu0
    %3733 = vmatprep.mubr.f32.mxu0 0.0
    %3734 = vmatmul.mubr.f32.gmra.mrb[0].mxu0 %v3356
    %v3735 = vpop.f32.mrb[0].mxu0
    %v3736 = vadd.f32 %v3176, %v3735
    %v3737 = vpop.f32.mrb[0].mxu0
    %3738 = vmatprep.mubr.f32.mxu0 0.0
    %3739 = vmatmul.mubr.f32.gmra.mrb[0].mxu0 %v3359
    %v3740 = vpop.f32.mrb[0].mxu0
    %v3741 = vadd.f32 %v3176, %v3740
    %v3742 = vpop.f32.mrb[0].mxu0
    %3743 = vmatprep.mubr.f32.mxu0 0.0
    %3744 = vmatmul.mubr.f32.gmra.mrb[0].mxu0 %v3362
    %v3745 = vpop.f32.mrb[0].mxu0
    %v3746 = vadd.f32 %v3176, %v3745
    %v3747 = vpop.f32.mrb[0].mxu0
    %3748 = vmatprep.mubr.f32.mxu0 0.0
    %3749 = vmatmul.mubr.f32.gmra.mrb[0].mxu0 %v3365
    %v3750 = vpop.f32.mrb[0].mxu0
    %v3751 = vadd.f32 %v3176, %v3750
    %v3752 = vpop.f32.mrb[0].mxu0
    %3753 = vmatprep.mubr.f32.mxu0 0.0
    %3754 = vmatmul.mubr.f32.gmra.mrb[0].mxu0 %v3368
    %v3755 = vpop.f32.mrb[0].mxu0
    %v3756 = vadd.f32 %v3176, %v3755
    %v3757 = vpop.f32.mrb[0].mxu0
    %3758 = vdwg.mxu0
    %v3759 = vmax.f32 %v3441, 0.0
    %v3760 = vmax.f32 %v3446, 0.0
    %v3761 = vmax.f32 %v3451, 0.0
    %v3762 = vmax.f32 %v3456, 0.0
    %v3763 = vmax.f32 %v3461, 0.0
    %v3764 = vmax.f32 %v3466, 0.0
    %v3765 = vmax.f32 %v3471, 0.0
    %v3766 = vmax.f32 %v3476, 0.0
    %v3767 = vmax.f32 %v3481, 0.0
    %v3768 = vmax.f32 %v3486, 0.0
    %v3769 = vmax.f32 %v3491, 0.0
    %v3770 = vmax.f32 %v3496, 0.0
    %v3771 = vmax.f32 %v3501, 0.0
    %v3772 = vmax.f32 %v3506, 0.0
    %v3773 = vmax.f32 %v3511, 0.0
    %v3774 = vmax.f32 %v3516, 0.0
    %v3775 = vmax.f32 %v3521, 0.0
    %v3776 = vmax.f32 %v3526, 0.0
    %v3777 = vmax.f32 %v3531, 0.0
    %v3778 = vmax.f32 %v3536, 0.0
    %v3779 = vmax.f32 %v3541, 0.0
    %v3780 = vmax.f32 %v3546, 0.0
    %v3781 = vmax.f32 %v3551, 0.0
    %v3782 = vmax.f32 %v3556, 0.0
    %v3783 = vmax.f32 %v3561, 0.0
    %v3784 = vmax.f32 %v3566, 0.0
    %v3785 = vmax.f32 %v3571, 0.0
    %v3786 = vmax.f32 %v3576, 0.0
    %v3787 = vmax.f32 %v3581, 0.0
    %v3788 = vmax.f32 %v3586, 0.0
    %v3789 = vmax.f32 %v3591, 0.0
    %v3790 = vmax.f32 %v3596, 0.0
    %v3791 = vmax.f32 %v3601, 0.0
    %v3792 = vmax.f32 %v3606, 0.0
    %v3793 = vmax.f32 %v3611, 0.0
    %v3794 = vmax.f32 %v3616, 0.0
    %v3795 = vmax.f32 %v3621, 0.0
    %v3796 = vmax.f32 %v3626, 0.0
    %v3797 = vmax.f32 %v3631, 0.0
    %v3798 = vmax.f32 %v3636, 0.0
    %v3799 = vmax.f32 %v3641, 0.0
    %v3800 = vmax.f32 %v3646, 0.0
    %v3801 = vmax.f32 %v3651, 0.0
    %v3802 = vmax.f32 %v3656, 0.0
    %v3803 = vmax.f32 %v3661, 0.0
    %v3804 = vmax.f32 %v3666, 0.0
    %v3805 = vmax.f32 %v3671, 0.0
    %v3806 = vmax.f32 %v3676, 0.0
    %v3807 = vmax.f32 %v3681, 0.0
    %v3808 = vmax.f32 %v3686, 0.0
    %v3809 = vmax.f32 %v3691, 0.0
    %v3810 = vmax.f32 %v3696, 0.0
    %v3811 = vmax.f32 %v3701, 0.0
    %v3812 = vmax.f32 %v3706, 0.0
    %v3813 = vmax.f32 %v3711, 0.0
    %v3814 = vmax.f32 %v3716, 0.0
    %v3815 = vmax.f32 %v3721, 0.0
    %v3816 = vmax.f32 %v3726, 0.0
    %v3817 = vmax.f32 %v3731, 0.0
    %v3818 = vmax.f32 %v3736, 0.0
    %v3819 = vmax.f32 %v3741, 0.0
    %v3820 = vmax.f32 %v3746, 0.0
    %v3821 = vmax.f32 %v3751, 0.0
    %v3822 = vmax.f32 %v3756, 0.0
    %v3823 = vsel %vm2712, %v3759, 0.0
    %v3824 = vsel %vm2712, %v3760, 0.0
    %v3825 = vadd.f32 %v3823, %v3824
    %v3826 = vsel %vm2712, %v3761, 0.0
    %v3827 = vadd.f32 %v3825, %v3826
    %v3828 = vsel %vm2712, %v3762, 0.0
    %v3829 = vadd.f32 %v3827, %v3828
    %v3830 = vsel %vm2712, %v3763, 0.0
    %v3831 = vadd.f32 %v3829, %v3830
    %v3832 = vsel %vm2712, %v3764, 0.0
    %v3833 = vadd.f32 %v3831, %v3832
    %v3834 = vsel %vm2712, %v3765, 0.0
    %v3835 = vadd.f32 %v3833, %v3834
    %v3836 = vsel %vm2712, %v3766, 0.0
    %v3837 = vadd.f32 %v3835, %v3836
    %v3838 = vsel %vm2712, %v3767, 0.0
    %v3839 = vadd.f32 %v3837, %v3838
    %v3840 = vsel %vm2712, %v3768, 0.0
    %v3841 = vadd.f32 %v3839, %v3840
    %v3842 = vsel %vm2712, %v3769, 0.0
    %v3843 = vadd.f32 %v3841, %v3842
    %v3844 = vsel %vm2712, %v3770, 0.0
    %v3845 = vadd.f32 %v3843, %v3844
    %v3846 = vsel %vm2712, %v3771, 0.0
    %v3847 = vadd.f32 %v3845, %v3846
    %v3848 = vsel %vm2712, %v3772, 0.0
    %v3849 = vadd.f32 %v3847, %v3848
    %v3850 = vsel %vm2712, %v3773, 0.0
    %v3851 = vadd.f32 %v3849, %v3850
    %v3852 = vsel %vm2712, %v3774, 0.0
    %v3853 = vadd.f32 %v3851, %v3852
    %v3854 = vsel %vm2712, %v3775, 0.0
    %v3855 = vadd.f32 %v3853, %v3854
    %v3856 = vsel %vm2712, %v3776, 0.0
    %v3857 = vadd.f32 %v3855, %v3856
    %v3858 = vsel %vm2712, %v3777, 0.0
    %v3859 = vadd.f32 %v3857, %v3858
    %v3860 = vsel %vm2712, %v3778, 0.0
    %v3861 = vadd.f32 %v3859, %v3860
    %v3862 = vsel %vm2712, %v3779, 0.0
    %v3863 = vadd.f32 %v3861, %v3862
    %v3864 = vsel %vm2712, %v3780, 0.0
    %v3865 = vadd.f32 %v3863, %v3864
    %v3866 = vsel %vm2712, %v3781, 0.0
    %v3867 = vadd.f32 %v3865, %v3866
    %v3868 = vsel %vm2712, %v3782, 0.0
    %v3869 = vadd.f32 %v3867, %v3868
    %v3870 = vsel %vm2712, %v3783, 0.0
    %v3871 = vadd.f32 %v3869, %v3870
    %v3872 = vsel %vm2712, %v3784, 0.0
    %v3873 = vadd.f32 %v3871, %v3872
    %v3874 = vsel %vm2712, %v3785, 0.0
    %v3875 = vadd.f32 %v3873, %v3874
    %v3876 = vsel %vm2712, %v3786, 0.0
    %v3877 = vadd.f32 %v3875, %v3876
    %v3878 = vsel %vm2712, %v3787, 0.0
    %v3879 = vadd.f32 %v3877, %v3878
    %v3880 = vsel %vm2712, %v3788, 0.0
    %v3881 = vadd.f32 %v3879, %v3880
    %v3882 = vsel %vm2712, %v3789, 0.0
    %v3883 = vadd.f32 %v3881, %v3882
    %v3884 = vsel %vm2712, %v3790, 0.0
    %v3885 = vadd.f32 %v3883, %v3884
    %v3886 = vsel %vm2712, %v3791, 0.0
    %v3887 = vadd.f32 %v3885, %v3886
    %v3888 = vsel %vm2712, %v3792, 0.0
    %v3889 = vadd.f32 %v3887, %v3888
    %v3890 = vsel %vm2712, %v3793, 0.0
    %v3891 = vadd.f32 %v3889, %v3890
    %v3892 = vsel %vm2712, %v3794, 0.0
    %v3893 = vadd.f32 %v3891, %v3892
    %v3894 = vsel %vm2712, %v3795, 0.0
    %v3895 = vadd.f32 %v3893, %v3894
    %v3896 = vsel %vm2712, %v3796, 0.0
    %v3897 = vadd.f32 %v3895, %v3896
    %v3898 = vsel %vm2712, %v3797, 0.0
    %v3899 = vadd.f32 %v3897, %v3898
    %v3900 = vsel %vm2712, %v3798, 0.0
    %v3901 = vadd.f32 %v3899, %v3900
    %v3902 = vsel %vm2712, %v3799, 0.0
    %v3903 = vadd.f32 %v3901, %v3902
    %v3904 = vsel %vm2712, %v3800, 0.0
    %v3905 = vadd.f32 %v3903, %v3904
    %v3906 = vsel %vm2712, %v3801, 0.0
    %v3907 = vadd.f32 %v3905, %v3906
    %v3908 = vsel %vm2712, %v3802, 0.0
    %v3909 = vadd.f32 %v3907, %v3908
    %v3910 = vsel %vm2712, %v3803, 0.0
    %v3911 = vadd.f32 %v3909, %v3910
    %v3912 = vsel %vm2712, %v3804, 0.0
    %v3913 = vadd.f32 %v3911, %v3912
    %v3914 = vsel %vm2712, %v3805, 0.0
    %v3915 = vadd.f32 %v3913, %v3914
    %v3916 = vsel %vm2712, %v3806, 0.0
    %v3917 = vadd.f32 %v3915, %v3916
    %v3918 = vsel %vm2712, %v3807, 0.0
    %v3919 = vadd.f32 %v3917, %v3918
    %v3920 = vsel %vm2712, %v3808, 0.0
    %v3921 = vadd.f32 %v3919, %v3920
    %v3922 = vsel %vm2712, %v3809, 0.0
    %v3923 = vadd.f32 %v3921, %v3922
    %v3924 = vsel %vm2712, %v3810, 0.0
    %v3925 = vadd.f32 %v3923, %v3924
    %v3926 = vsel %vm2712, %v3811, 0.0
    %v3927 = vadd.f32 %v3925, %v3926
    %v3928 = vsel %vm2712, %v3812, 0.0
    %v3929 = vadd.f32 %v3927, %v3928
    %v3930 = vsel %vm2712, %v3813, 0.0
    %v3931 = vadd.f32 %v3929, %v3930
    %v3932 = vsel %vm2712, %v3814, 0.0
    %v3933 = vadd.f32 %v3931, %v3932
    %v3934 = vsel %vm2712, %v3815, 0.0
    %v3935 = vadd.f32 %v3933, %v3934
    %v3936 = vsel %vm2712, %v3816, 0.0
    %v3937 = vadd.f32 %v3935, %v3936
    %v3938 = vsel %vm2712, %v3817, 0.0
    %v3939 = vadd.f32 %v3937, %v3938
    %v3940 = vsel %vm2712, %v3818, 0.0
    %v3941 = vadd.f32 %v3939, %v3940
    %v3942 = vsel %vm2712, %v3819, 0.0
    %v3943 = vadd.f32 %v3941, %v3942
    %v3944 = vsel %vm2712, %v3820, 0.0
    %v3945 = vadd.f32 %v3943, %v3944
    %v3946 = vsel %vm2712, %v3821, 0.0
    %v3947 = vadd.f32 %v3945, %v3946
    %v3948 = vsel %vm2712, %v3822, 0.0
    %v3949 = vadd.f32 %v3947, %v3948
    %v3950 = vrot.slane %v3949, 4
    %v3951 = vadd.f32 %v3949, %v3950
    %v3952 = vrot.slane %v3951, 2
    %v3953 = vadd.f32 %v3951, %v3952
    %v3954 = vrot.slane %v3953, 1
    %v3955 = vadd.f32 %v3953, %v3954
    %v3956 = vmul.f32 %v3759, %v3759
    %v3957 = vmul.f32 %v3760, %v3760
    %v3958 = vmul.f32 %v3761, %v3761
    %v3959 = vmul.f32 %v3762, %v3762
    %v3960 = vmul.f32 %v3763, %v3763
    %v3961 = vmul.f32 %v3764, %v3764
    %v3962 = vmul.f32 %v3765, %v3765
    %v3963 = vmul.f32 %v3766, %v3766
    %v3964 = vmul.f32 %v3767, %v3767
    %v3965 = vmul.f32 %v3768, %v3768
    %v3966 = vmul.f32 %v3769, %v3769
    %v3967 = vmul.f32 %v3770, %v3770
    %v3968 = vmul.f32 %v3771, %v3771
    %v3969 = vmul.f32 %v3772, %v3772
    %v3970 = vmul.f32 %v3773, %v3773
    %v3971 = vmul.f32 %v3774, %v3774
    %v3972 = vmul.f32 %v3775, %v3775
    %v3973 = vmul.f32 %v3776, %v3776
    %v3974 = vmul.f32 %v3777, %v3777
    %v3975 = vmul.f32 %v3778, %v3778
    %v3976 = vmul.f32 %v3779, %v3779
    %v3977 = vmul.f32 %v3780, %v3780
    %v3978 = vmul.f32 %v3781, %v3781
    %v3979 = vmul.f32 %v3782, %v3782
    %v3980 = vmul.f32 %v3783, %v3783
    %v3981 = vmul.f32 %v3784, %v3784
    %v3982 = vmul.f32 %v3785, %v3785
    %v3983 = vmul.f32 %v3786, %v3786
    %v3984 = vmul.f32 %v3787, %v3787
    %v3985 = vmul.f32 %v3788, %v3788
    %v3986 = vmul.f32 %v3789, %v3789
    %v3987 = vmul.f32 %v3790, %v3790
    %v3988 = vmul.f32 %v3791, %v3791
    %v3989 = vmul.f32 %v3792, %v3792
    %v3990 = vmul.f32 %v3793, %v3793
    %v3991 = vmul.f32 %v3794, %v3794
    %v3992 = vmul.f32 %v3795, %v3795
    %v3993 = vmul.f32 %v3796, %v3796
    %v3994 = vmul.f32 %v3797, %v3797
    %v3995 = vmul.f32 %v3798, %v3798
    %v3996 = vmul.f32 %v3799, %v3799
    %v3997 = vmul.f32 %v3800, %v3800
    %v3998 = vmul.f32 %v3801, %v3801
    %v3999 = vmul.f32 %v3802, %v3802
    %v4000 = vmul.f32 %v3803, %v3803
    %v4001 = vmul.f32 %v3804, %v3804
    %v4002 = vmul.f32 %v3805, %v3805
    %v4003 = vmul.f32 %v3806, %v3806
    %v4004 = vmul.f32 %v3807, %v3807
    %v4005 = vmul.f32 %v3808, %v3808
    %v4006 = vmul.f32 %v3809, %v3809
    %v4007 = vmul.f32 %v3810, %v3810
    %v4008 = vmul.f32 %v3811, %v3811
    %v4009 = vmul.f32 %v3812, %v3812
    %v4010 = vmul.f32 %v3813, %v3813
    %v4011 = vmul.f32 %v3814, %v3814
    %v4012 = vmul.f32 %v3815, %v3815
    %v4013 = vmul.f32 %v3816, %v3816
    %v4014 = vmul.f32 %v3817, %v3817
    %v4015 = vmul.f32 %v3818, %v3818
    %v4016 = vmul.f32 %v3819, %v3819
    %v4017 = vmul.f32 %v3820, %v3820
    %v4018 = vmul.f32 %v3821, %v3821
    %v4019 = vmul.f32 %v3822, %v3822
    %v4020 = vsel %vm2712, %v3956, 0.0
    %v4021 = vsel %vm2712, %v3957, 0.0
    %v4022 = vadd.f32 %v4020, %v4021
    %v4023 = vsel %vm2712, %v3958, 0.0
    %v4024 = vadd.f32 %v4022, %v4023
    %v4025 = vsel %vm2712, %v3959, 0.0
    %v4026 = vadd.f32 %v4024, %v4025
    %v4027 = vsel %vm2712, %v3960, 0.0
    %v4028 = vadd.f32 %v4026, %v4027
    %v4029 = vsel %vm2712, %v3961, 0.0
    %v4030 = vadd.f32 %v4028, %v4029
    %v4031 = vsel %vm2712, %v3962, 0.0
    %v4032 = vadd.f32 %v4030, %v4031
    %v4033 = vsel %vm2712, %v3963, 0.0
    %v4034 = vadd.f32 %v4032, %v4033
    %v4035 = vsel %vm2712, %v3964, 0.0
    %v4036 = vadd.f32 %v4034, %v4035
    %v4037 = vsel %vm2712, %v3965, 0.0
    %v4038 = vadd.f32 %v4036, %v4037
    %v4039 = vsel %vm2712, %v3966, 0.0
    %v4040 = vadd.f32 %v4038, %v4039
    %v4041 = vsel %vm2712, %v3967, 0.0
    %v4042 = vadd.f32 %v4040, %v4041
    %v4043 = vsel %vm2712, %v3968, 0.0
    %v4044 = vadd.f32 %v4042, %v4043
    %v4045 = vsel %vm2712, %v3969, 0.0
    %v4046 = vadd.f32 %v4044, %v4045
    %v4047 = vsel %vm2712, %v3970, 0.0
    %v4048 = vadd.f32 %v4046, %v4047
    %v4049 = vsel %vm2712, %v3971, 0.0
    %v4050 = vadd.f32 %v4048, %v4049
    %v4051 = vsel %vm2712, %v3972, 0.0
    %v4052 = vadd.f32 %v4050, %v4051
    %v4053 = vsel %vm2712, %v3973, 0.0
    %v4054 = vadd.f32 %v4052, %v4053
    %v4055 = vsel %vm2712, %v3974, 0.0
    %v4056 = vadd.f32 %v4054, %v4055
    %v4057 = vsel %vm2712, %v3975, 0.0
    %v4058 = vadd.f32 %v4056, %v4057
    %v4059 = vsel %vm2712, %v3976, 0.0
    %v4060 = vadd.f32 %v4058, %v4059
    %v4061 = vsel %vm2712, %v3977, 0.0
    %v4062 = vadd.f32 %v4060, %v4061
    %v4063 = vsel %vm2712, %v3978, 0.0
    %v4064 = vadd.f32 %v4062, %v4063
    %v4065 = vsel %vm2712, %v3979, 0.0
    %v4066 = vadd.f32 %v4064, %v4065
    %v4067 = vsel %vm2712, %v3980, 0.0
    %v4068 = vadd.f32 %v4066, %v4067
    %v4069 = vsel %vm2712, %v3981, 0.0
    %v4070 = vadd.f32 %v4068, %v4069
    %v4071 = vsel %vm2712, %v3982, 0.0
    %v4072 = vadd.f32 %v4070, %v4071
    %v4073 = vsel %vm2712, %v3983, 0.0
    %v4074 = vadd.f32 %v4072, %v4073
    %v4075 = vsel %vm2712, %v3984, 0.0
    %v4076 = vadd.f32 %v4074, %v4075
    %v4077 = vsel %vm2712, %v3985, 0.0
    %v4078 = vadd.f32 %v4076, %v4077
    %v4079 = vsel %vm2712, %v3986, 0.0
    %v4080 = vadd.f32 %v4078, %v4079
    %v4081 = vsel %vm2712, %v3987, 0.0
    %v4082 = vadd.f32 %v4080, %v4081
    %v4083 = vsel %vm2712, %v3988, 0.0
    %v4084 = vadd.f32 %v4082, %v4083
    %v4085 = vsel %vm2712, %v3989, 0.0
    %v4086 = vadd.f32 %v4084, %v4085
    %v4087 = vsel %vm2712, %v3990, 0.0
    %v4088 = vadd.f32 %v4086, %v4087
    %v4089 = vsel %vm2712, %v3991, 0.0
    %v4090 = vadd.f32 %v4088, %v4089
    %v4091 = vsel %vm2712, %v3992, 0.0
    %v4092 = vadd.f32 %v4090, %v4091
    %v4093 = vsel %vm2712, %v3993, 0.0
    %v4094 = vadd.f32 %v4092, %v4093
    %v4095 = vsel %vm2712, %v3994, 0.0
    %v4096 = vadd.f32 %v4094, %v4095
    %v4097 = vsel %vm2712, %v3995, 0.0
    %v4098 = vadd.f32 %v4096, %v4097
    %v4099 = vsel %vm2712, %v3996, 0.0
    %v4100 = vadd.f32 %v4098, %v4099
    %v4101 = vsel %vm2712, %v3997, 0.0
    %v4102 = vadd.f32 %v4100, %v4101
    %v4103 = vsel %vm2712, %v3998, 0.0
    %v4104 = vadd.f32 %v4102, %v4103
    %v4105 = vsel %vm2712, %v3999, 0.0
    %v4106 = vadd.f32 %v4104, %v4105
    %v4107 = vsel %vm2712, %v4000, 0.0
    %v4108 = vadd.f32 %v4106, %v4107
    %v4109 = vsel %vm2712, %v4001, 0.0
    %v4110 = vadd.f32 %v4108, %v4109
    %v4111 = vsel %vm2712, %v4002, 0.0
    %v4112 = vadd.f32 %v4110, %v4111
    %v4113 = vsel %vm2712, %v4003, 0.0
    %v4114 = vadd.f32 %v4112, %v4113
    %v4115 = vsel %vm2712, %v4004, 0.0
    %v4116 = vadd.f32 %v4114, %v4115
    %v4117 = vsel %vm2712, %v4005, 0.0
    %v4118 = vadd.f32 %v4116, %v4117
    %v4119 = vsel %vm2712, %v4006, 0.0
    %v4120 = vadd.f32 %v4118, %v4119
    %v4121 = vsel %vm2712, %v4007, 0.0
    %v4122 = vadd.f32 %v4120, %v4121
    %v4123 = vsel %vm2712, %v4008, 0.0
    %v4124 = vadd.f32 %v4122, %v4123
    %v4125 = vsel %vm2712, %v4009, 0.0
    %v4126 = vadd.f32 %v4124, %v4125
    %v4127 = vsel %vm2712, %v4010, 0.0
    %v4128 = vadd.f32 %v4126, %v4127
    %v4129 = vsel %vm2712, %v4011, 0.0
    %v4130 = vadd.f32 %v4128, %v4129
    %v4131 = vsel %vm2712, %v4012, 0.0
    %v4132 = vadd.f32 %v4130, %v4131
    %v4133 = vsel %vm2712, %v4013, 0.0
    %v4134 = vadd.f32 %v4132, %v4133
    %v4135 = vsel %vm2712, %v4014, 0.0
    %v4136 = vadd.f32 %v4134, %v4135
    %v4137 = vsel %vm2712, %v4015, 0.0
    %v4138 = vadd.f32 %v4136, %v4137
    %v4139 = vsel %vm2712, %v4016, 0.0
    %v4140 = vadd.f32 %v4138, %v4139
    %v4141 = vsel %vm2712, %v4017, 0.0
    %v4142 = vadd.f32 %v4140, %v4141
    %v4143 = vsel %vm2712, %v4018, 0.0
    %v4144 = vadd.f32 %v4142, %v4143
    %v4145 = vsel %vm2712, %v4019, 0.0
    %v4146 = vadd.f32 %v4144, %v4145
    %v4147 = vrot.slane %v4146, 4
    %v4148 = vadd.f32 %v4146, %v4147
    %v4149 = vrot.slane %v4148, 2
    %v4150 = vadd.f32 %v4148, %v4149
    %v4151 = vrot.slane %v4150, 1
    %v4152 = vadd.f32 %v4150, %v4151
    %v4153 = vmul.f32 %v3955, 0.001953125
    %v4154 = vmul.f32 %v4152, 0.001953125
    %v4155 = vmul.f32 %v4153, %v4153
    %v4156 = vsub.f32 %v4154, %v4155
    %v4157 = vld [vmem:[%s2 + $0x1] sm:$0x1]
    %v4158 = vadd.f32 %v4156, 1e-05
    %v4159 = vrsqrt.pop %v4158
    %v4160 = vmul.f32 %v4157, %v4159
    %v4161 = vld [vmem:[%s2 + $0x2] sm:$0x1]
    %v4162 = vmul.f32 %v4153, %v4160
    %v4163 = vsub.f32 %v4161, %v4162
    %v4164 = vlaneseq
    %v4165 = vshrl.u32 %v4164, 7
    %v4166 = vsub.s32 0, %v4165
    %v4167 = vrot.slane %v4160, %v4166
    %v4168 = vmul.f32 %v3759, %v4167
    %v4169 = vmul.f32 %v3760, %v4167
    %v4170 = vmul.f32 %v3761, %v4167
    %v4171 = vmul.f32 %v3762, %v4167
    %v4172 = vmul.f32 %v3763, %v4167
    %v4173 = vmul.f32 %v3764, %v4167
    %v4174 = vmul.f32 %v3765, %v4167
    %v4175 = vmul.f32 %v3766, %v4167
    %v4176 = vmul.f32 %v3767, %v4167
    %v4177 = vmul.f32 %v3768, %v4167
    %v4178 = vmul.f32 %v3769, %v4167
    %v4179 = vmul.f32 %v3770, %v4167
    %v4180 = vmul.f32 %v3771, %v4167
    %v4181 = vmul.f32 %v3772, %v4167
    %v4182 = vmul.f32 %v3773, %v4167
    %v4183 = vmul.f32 %v3774, %v4167
    %v4184 = vmul.f32 %v3775, %v4167
    %v4185 = vmul.f32 %v3776, %v4167
    %v4186 = vmul.f32 %v3777, %v4167
    %v4187 = vmul.f32 %v3778, %v4167
    %v4188 = vmul.f32 %v3779, %v4167
    %v4189 = vmul.f32 %v3780, %v4167
    %v4190 = vmul.f32 %v3781, %v4167
    %v4191 = vmul.f32 %v3782, %v4167
    %v4192 = vmul.f32 %v3783, %v4167
    %v4193 = vmul.f32 %v3784, %v4167
    %v4194 = vmul.f32 %v3785, %v4167
    %v4195 = vmul.f32 %v3786, %v4167
    %v4196 = vmul.f32 %v3787, %v4167
    %v4197 = vmul.f32 %v3788, %v4167
    %v4198 = vmul.f32 %v3789, %v4167
    %v4199 = vmul.f32 %v3790, %v4167
    %v4200 = vmul.f32 %v3791, %v4167
    %v4201 = vmul.f32 %v3792, %v4167
    %v4202 = vmul.f32 %v3793, %v4167
    %v4203 = vmul.f32 %v3794, %v4167
    %v4204 = vmul.f32 %v3795, %v4167
    %v4205 = vmul.f32 %v3796, %v4167
    %v4206 = vmul.f32 %v3797, %v4167
    %v4207 = vmul.f32 %v3798, %v4167
    %v4208 = vmul.f32 %v3799, %v4167
    %v4209 = vmul.f32 %v3800, %v4167
    %v4210 = vmul.f32 %v3801, %v4167
    %v4211 = vmul.f32 %v3802, %v4167
    %v4212 = vmul.f32 %v3803, %v4167
    %v4213 = vmul.f32 %v3804, %v4167
    %v4214 = vmul.f32 %v3805, %v4167
    %v4215 = vmul.f32 %v3806, %v4167
    %v4216 = vmul.f32 %v3807, %v4167
    %v4217 = vmul.f32 %v3808, %v4167
    %v4218 = vmul.f32 %v3809, %v4167
    %v4219 = vmul.f32 %v3810, %v4167
    %v4220 = vmul.f32 %v3811, %v4167
    %v4221 = vmul.f32 %v3812, %v4167
    %v4222 = vmul.f32 %v3813, %v4167
    %v4223 = vmul.f32 %v3814, %v4167
    %v4224 = vmul.f32 %v3815, %v4167
    %v4225 = vmul.f32 %v3816, %v4167
    %v4226 = vmul.f32 %v3817, %v4167
    %v4227 = vmul.f32 %v3818, %v4167
    %v4228 = vmul.f32 %v3819, %v4167
    %v4229 = vmul.f32 %v3820, %v4167
    %v4230 = vmul.f32 %v3821, %v4167
    %v4231 = vmul.f32 %v3822, %v4167
    %v4232 = vlaneseq
    %v4233 = vshrl.u32 %v4232, 7
    %v4234 = vsub.s32 0, %v4233
    %v4235 = vrot.slane %v4163, %v4234
    %v4236 = vadd.f32 %v4168, %v4235
    %v4237 = vadd.f32 %v4169, %v4235
    %v4238 = vadd.f32 %v4170, %v4235
    %v4239 = vadd.f32 %v4171, %v4235
    %v4240 = vadd.f32 %v4172, %v4235
    %v4241 = vadd.f32 %v4173, %v4235
    %v4242 = vadd.f32 %v4174, %v4235
    %v4243 = vadd.f32 %v4175, %v4235
    %v4244 = vadd.f32 %v4176, %v4235
    %v4245 = vadd.f32 %v4177, %v4235
    %v4246 = vadd.f32 %v4178, %v4235
    %v4247 = vadd.f32 %v4179, %v4235
    %v4248 = vadd.f32 %v4180, %v4235
    %v4249 = vadd.f32 %v4181, %v4235
    %v4250 = vadd.f32 %v4182, %v4235
    %v4251 = vadd.f32 %v4183, %v4235
    %v4252 = vadd.f32 %v4184, %v4235
    %v4253 = vadd.f32 %v4185, %v4235
    %v4254 = vadd.f32 %v4186, %v4235
    %v4255 = vadd.f32 %v4187, %v4235
    %v4256 = vadd.f32 %v4188, %v4235
    %v4257 = vadd.f32 %v4189, %v4235
    %v4258 = vadd.f32 %v4190, %v4235
    %v4259 = vadd.f32 %v4191, %v4235
    %v4260 = vadd.f32 %v4192, %v4235
    %v4261 = vadd.f32 %v4193, %v4235
    %v4262 = vadd.f32 %v4194, %v4235
    %v4263 = vadd.f32 %v4195, %v4235
    %v4264 = vadd.f32 %v4196, %v4235
    %v4265 = vadd.f32 %v4197, %v4235
    %v4266 = vadd.f32 %v4198, %v4235
    %v4267 = vadd.f32 %v4199, %v4235
    %v4268 = vadd.f32 %v4200, %v4235
    %v4269 = vadd.f32 %v4201, %v4235
    %v4270 = vadd.f32 %v4202, %v4235
    %v4271 = vadd.f32 %v4203, %v4235
    %v4272 = vadd.f32 %v4204, %v4235
    %v4273 = vadd.f32 %v4205, %v4235
    %v4274 = vadd.f32 %v4206, %v4235
    %v4275 = vadd.f32 %v4207, %v4235
    %v4276 = vadd.f32 %v4208, %v4235
    %v4277 = vadd.f32 %v4209, %v4235
    %v4278 = vadd.f32 %v4210, %v4235
    %v4279 = vadd.f32 %v4211, %v4235
    %v4280 = vadd.f32 %v4212, %v4235
    %v4281 = vadd.f32 %v4213, %v4235
    %v4282 = vadd.f32 %v4214, %v4235
    %v4283 = vadd.f32 %v4215, %v4235
    %v4284 = vadd.f32 %v4216, %v4235
    %v4285 = vadd.f32 %v4217, %v4235
    %v4286 = vadd.f32 %v4218, %v4235
    %v4287 = vadd.f32 %v4219, %v4235
    %v4288 = vadd.f32 %v4220, %v4235
    %v4289 = vadd.f32 %v4221, %v4235
    %v4290 = vadd.f32 %v4222, %v4235
    %v4291 = vadd.f32 %v4223, %v4235
    %v4292 = vadd.f32 %v4224, %v4235
    %v4293 = vadd.f32 %v4225, %v4235
    %v4294 = vadd.f32 %v4226, %v4235
    %v4295 = vadd.f32 %v4227, %v4235
    %v4296 = vadd.f32 %v4228, %v4235
    %v4297 = vadd.f32 %v4229, %v4235
    %v4298 = vadd.f32 %v4230, %v4235
    %v4299 = vadd.f32 %v4231, %v4235
    %4300 = vst.msk [vmem:[#allocation2] sm:$0xff] %vm2712, 0.0
    %4301 = vst.msk [vmem:[#allocation2 + $0x8] sm:$0xff] %vm2712, 0.0
    %vm4302 = vcmask 58368
    %4303 = vst.msk [vmem:[#allocation2 + $0x10] sm:$0x3] %vm4302, 0.0
    %4304 = vst.msk [vmem:[#allocation2 + $0x18] sm:$0xff] %vm2712, 0.0
    %4305 = vst.msk [vmem:[#allocation2 + $0x20] sm:$0xff] %vm2712, 0.0
    %4306 = vst.msk [vmem:[#allocation2 + $0x28] sm:$0x3] %vm4302, 0.0
    %4307 = vst.msk [vmem:[#allocation2 + $0x30] sm:$0xff] %vm2712, 0.0
    %4308 = vst.msk [vmem:[#allocation2 + $0x38] sm:$0xff] %vm2712, 0.0
    %4309 = vst.msk [vmem:[#allocation2 + $0x40] sm:$0x3] %vm4302, 0.0
    %4310 = vst.msk [vmem:[#allocation2 + $0x48] sm:$0xff] %vm2712, 0.0
    %4311 = vst.msk [vmem:[#allocation2 + $0x50] sm:$0xff] %vm2712, 0.0
    %4312 = vst.msk [vmem:[#allocation2 + $0x58] sm:$0x3] %vm4302, 0.0
    %4313 = vst.msk [vmem:[#allocation2 + $0x60] sm:$0xff] %vm2712, 0.0
    %4314 = vst.msk [vmem:[#allocation2 + $0x68] sm:$0xff] %vm2712, 0.0
    %4315 = vst.msk [vmem:[#allocation2 + $0x70] sm:$0x3] %vm4302, 0.0
    %4316 = vst.msk [vmem:[#allocation2 + $0x78] sm:$0xff] %vm2712, 0.0
    %4317 = vst.msk [vmem:[#allocation2 + $0x80] sm:$0xff] %vm2712, 0.0
    %4318 = vst.msk [vmem:[#allocation2 + $0x88] sm:$0x3] %vm4302, 0.0
    %4319 = vst.msk [vmem:[#allocation2 + $0x90] sm:$0xff] %vm2712, 0.0
    %4320 = vst.msk [vmem:[#allocation2 + $0x98] sm:$0xff] %vm2712, 0.0
    %4321 = vst.msk [vmem:[#allocation2 + $0xa0] sm:$0x3] %vm4302, 0.0
    %4322 = vst.msk [vmem:[#allocation2 + $0xa8] sm:$0xff] %vm2712, 0.0
    %4323 = vst.msk [vmem:[#allocation2 + $0xb0] sm:$0xff] %vm2712, 0.0
    %4324 = vst.msk [vmem:[#allocation2 + $0xb8] sm:$0x3] %vm4302, 0.0
    %4325 = vst.msk [vmem:[#allocation2 + $0xc0] sm:$0xff] %vm2712, 0.0
    %4326 = vst.msk [vmem:[#allocation2 + $0xc8] sm:$0xff] %vm2712, 0.0
    %4327 = vst.msk [vmem:[#allocation2 + $0xd0] sm:$0x3] %vm4302, 0.0
    %4328 = vst.msk [vmem:[#allocation2 + $0xd8] sm:$0xff] %vm2712, 0.0
    %4329 = vst.msk [vmem:[#allocation2 + $0xe0] sm:$0xff] %vm2712, 0.0
    %4330 = vst.msk [vmem:[#allocation2 + $0xe8] sm:$0x3] %vm4302, 0.0
    %4331 = vst.msk [vmem:[#allocation2 + $0xf0] sm:$0xff] %vm2712, 0.0
    %4332 = vst.msk [vmem:[#allocation2 + $0xf8] sm:$0xff] %vm2712, 0.0
    %4333 = vst.msk [vmem:[#allocation2 + $0x100] sm:$0x3] %vm4302, 0.0
    %4334 = vst.msk [vmem:[#allocation2 + $0x108] sm:$0xff] %vm2712, 0.0
    %4335 = vst.msk [vmem:[#allocation2 + $0x110] sm:$0xff] %vm2712, 0.0
    %4336 = vst.msk [vmem:[#allocation2 + $0x118] sm:$0x3] %vm4302, 0.0
    %4337 = vst.msk [vmem:[#allocation2 + $0x120] sm:$0xff] %vm2712, 0.0
    %4338 = vst.msk [vmem:[#allocation2 + $0x128] sm:$0xff] %vm2712, 0.0
    %4339 = vst.msk [vmem:[#allocation2 + $0x130] sm:$0x3] %vm4302, 0.0
    %4340 = vst.msk [vmem:[#allocation2 + $0x138] sm:$0xff] %vm2712, 0.0
    %4341 = vst.msk [vmem:[#allocation2 + $0x140] sm:$0xff] %vm2712, 0.0
    %4342 = vst.msk [vmem:[#allocation2 + $0x148] sm:$0x3] %vm4302, 0.0
    %4343 = vst.msk [vmem:[#allocation2 + $0x150] sm:$0xff] %vm2712, 0.0
    %4344 = vst.msk [vmem:[#allocation2 + $0x158] sm:$0xff] %vm2712, 0.0
    %4345 = vst.msk [vmem:[#allocation2 + $0x160] sm:$0x3] %vm4302, 0.0
    %4346 = vst.msk [vmem:[#allocation2 + $0x168] sm:$0xff] %vm2712, 0.0
    %4347 = vst.msk [vmem:[#allocation2 + $0x170] sm:$0xff] %vm2712, 0.0
    %4348 = vst.msk [vmem:[#allocation2 + $0x178] sm:$0x3] %vm4302, 0.0
    %4349 = vst.msk [vmem:[#allocation2 + $0x180] sm:$0xff] %vm2712, 0.0
    %4350 = vst.msk [vmem:[#allocation2 + $0x188] sm:$0xff] %vm2712, 0.0
    %4351 = vst.msk [vmem:[#allocation2 + $0x190] sm:$0x3] %vm4302, 0.0
    %4352 = vst.msk [vmem:[#allocation2 + $0x198] sm:$0xff] %vm2712, 0.0
    %4353 = vst.msk [vmem:[#allocation2 + $0x1a0] sm:$0xff] %vm2712, 0.0
    %4354 = vst.msk [vmem:[#allocation2 + $0x1a8] sm:$0x3] %vm4302, 0.0
    %4355 = vst.msk [vmem:[#allocation2 + $0x1b0] sm:$0xff] %vm2712, 0.0
    %4356 = vst.msk [vmem:[#allocation2 + $0x1b8] sm:$0xff] %vm2712, 0.0
    %4357 = vst.msk [vmem:[#allocation2 + $0x1c0] sm:$0x3] %vm4302, 0.0
    %4358 = vst.msk [vmem:[#allocation2 + $0x1c8] sm:$0xff] %vm2712, 0.0
    %4359 = vst.msk [vmem:[#allocation2 + $0x1d0] sm:$0xff] %vm2712, 0.0
    %4360 = vst.msk [vmem:[#allocation2 + $0x1d8] sm:$0x3] %vm4302, 0.0
    %4361 = vst.msk [vmem:[#allocation2 + $0x1e0] sm:$0xff] %vm2712, 0.0
    %4362 = vst.msk [vmem:[#allocation2 + $0x1e8] sm:$0xff] %vm2712, 0.0
    %4363 = vst.msk [vmem:[#allocation2 + $0x1f0] sm:$0x3] %vm4302, 0.0
    %4364 = vst.msk [vmem:[#allocation2 + $0x1f8] sm:$0xff] %vm2712, 0.0
    %4365 = vst.msk [vmem:[#allocation2 + $0x200] sm:$0xff] %vm2712, 0.0
    %4366 = vst.msk [vmem:[#allocation2 + $0x208] sm:$0x3] %vm4302, 0.0
    %4367 = vst.msk [vmem:[#allocation2 + $0x210] sm:$0xff] %vm2712, 0.0
    %4368 = vst.msk [vmem:[#allocation2 + $0x218] sm:$0xff] %vm2712, 0.0
    %4369 = vst.msk [vmem:[#allocation2 + $0x220] sm:$0x3] %vm4302, 0.0
    %4370 = vst.msk [vmem:[#allocation2 + $0x228] sm:$0xff] %vm2712, 0.0
    %4371 = vst.msk [vmem:[#allocation2 + $0x230] sm:$0xff] %vm2712, 0.0
    %4372 = vst.msk [vmem:[#allocation2 + $0x238] sm:$0x3] %vm4302, 0.0
    %4373 = vst.msk [vmem:[#allocation2 + $0x240] sm:$0xff] %vm2712, 0.0
    %4374 = vst.msk [vmem:[#allocation2 + $0x248] sm:$0xff] %vm2712, 0.0
    %4375 = vst.msk [vmem:[#allocation2 + $0x250] sm:$0x3] %vm4302, 0.0
    %4376 = vst.msk [vmem:[#allocation2 + $0x258] sm:$0xff] %vm2712, 0.0
    %4377 = vst.msk [vmem:[#allocation2 + $0x260] sm:$0xff] %vm2712, 0.0
    %4378 = vst.msk [vmem:[#allocation2 + $0x268] sm:$0x3] %vm4302, 0.0
    %4379 = vst.msk [vmem:[#allocation2 + $0x270] sm:$0xff] %vm2712, 0.0
    %4380 = vst.msk [vmem:[#allocation2 + $0x278] sm:$0xff] %vm2712, 0.0
    %4381 = vst.msk [vmem:[#allocation2 + $0x280] sm:$0x3] %vm4302, 0.0
    %4382 = vst.msk [vmem:[#allocation2 + $0x288] sm:$0xff] %vm2712, 0.0
    %4383 = vst.msk [vmem:[#allocation2 + $0x290] sm:$0xff] %vm2712, 0.0
    %4384 = vst.msk [vmem:[#allocation2 + $0x298] sm:$0x3] %vm4302, 0.0
    %4385 = vst.msk [vmem:[#allocation2 + $0x2a0] sm:$0xff] %vm2712, 0.0
    %4386 = vst.msk [vmem:[#allocation2 + $0x2a8] sm:$0xff] %vm2712, 0.0
    %4387 = vst.msk [vmem:[#allocation2 + $0x2b0] sm:$0x3] %vm4302, 0.0
    %4388 = vst.msk [vmem:[#allocation2 + $0x2b8] sm:$0xff] %vm2712, 0.0
    %4389 = vst.msk [vmem:[#allocation2 + $0x2c0] sm:$0xff] %vm2712, 0.0
    %4390 = vst.msk [vmem:[#allocation2 + $0x2c8] sm:$0x3] %vm4302, 0.0
    %4391 = vst.msk [vmem:[#allocation2 + $0x2d0] sm:$0xff] %vm2712, 0.0
    %4392 = vst.msk [vmem:[#allocation2 + $0x2d8] sm:$0xff] %vm2712, 0.0
    %4393 = vst.msk [vmem:[#allocation2 + $0x2e0] sm:$0x3] %vm4302, 0.0
    %4394 = vst.msk [vmem:[#allocation2 + $0x2e8] sm:$0xff] %vm2712, 0.0
    %4395 = vst.msk [vmem:[#allocation2 + $0x2f0] sm:$0xff] %vm2712, 0.0
    %4396 = vst.msk [vmem:[#allocation2 + $0x2f8] sm:$0x3] %vm4302, 0.0
    %4397 = vst.msk [vmem:[#allocation2 + $0x300] sm:$0xff] %vm2712, 0.0
    %4398 = vst.msk [vmem:[#allocation2 + $0x308] sm:$0xff] %vm2712, 0.0
    %4399 = vst.msk [vmem:[#allocation2 + $0x310] sm:$0x3] %vm4302, 0.0
    %4400 = vst.msk [vmem:[#allocation2 + $0x318] sm:$0xff] %vm2712, 0.0
    %4401 = vst.msk [vmem:[#allocation2 + $0x320] sm:$0xff] %vm2712, 0.0
    %4402 = vst.msk [vmem:[#allocation2 + $0x328] sm:$0x3] %vm4302, 0.0
    %4403 = vst.msk [vmem:[#allocation2 + $0x330] sm:$0xff] %vm2712, 0.0
    %4404 = vst.msk [vmem:[#allocation2 + $0x338] sm:$0xff] %vm2712, 0.0
    %4405 = vst.msk [vmem:[#allocation2 + $0x340] sm:$0x3] %vm4302, 0.0
    %4406 = vst.msk [vmem:[#allocation2 + $0x348] sm:$0xff] %vm2712, 0.0
    %4407 = vst.msk [vmem:[#allocation2 + $0x350] sm:$0xff] %vm2712, 0.0
    %4408 = vst.msk [vmem:[#allocation2 + $0x358] sm:$0x3] %vm4302, 0.0
    %s4409 = scalar_lea.vmem [#allocation2], 24
    %4410 = vst.msk [vmem:[%s4409 + $0x1] sm:$0xff] %vm2712, %v4236
    %4411 = vst.msk [vmem:[%s4409 + $0x9] sm:$0xff] %vm2712, %v4237
    %4412 = vst.msk [vmem:[%s4409 + $0x19] sm:$0xff] %vm2712, %v4238
    %4413 = vst.msk [vmem:[%s4409 + $0x21] sm:$0xff] %vm2712, %v4239
    %4414 = vst.msk [vmem:[%s4409 + $0x31] sm:$0xff] %vm2712, %v4240
    %4415 = vst.msk [vmem:[%s4409 + $0x39] sm:$0xff] %vm2712, %v4241
    %4416 = vst.msk [vmem:[%s4409 + $0x49] sm:$0xff] %vm2712, %v4242
    %4417 = vst.msk [vmem:[%s4409 + $0x51] sm:$0xff] %vm2712, %v4243
    %4418 = vst.msk [vmem:[%s4409 + $0x61] sm:$0xff] %vm2712, %v4244
    %4419 = vst.msk [vmem:[%s4409 + $0x69] sm:$0xff] %vm2712, %v4245
    %4420 = vst.msk [vmem:[%s4409 + $0x79] sm:$0xff] %vm2712, %v4246
    %4421 = vst.msk [vmem:[%s4409 + $0x81] sm:$0xff] %vm2712, %v4247
    %4422 = vst.msk [vmem:[%s4409 + $0x91] sm:$0xff] %vm2712, %v4248
    %4423 = vst.msk [vmem:[%s4409 + $0x99] sm:$0xff] %vm2712, %v4249
    %4424 = vst.msk [vmem:[%s4409 + $0xa9] sm:$0xff] %vm2712, %v4250
    %4425 = vst.msk [vmem:[%s4409 + $0xb1] sm:$0xff] %vm2712, %v4251
    %4426 = vst.msk [vmem:[%s4409 + $0xc1] sm:$0xff] %vm2712, %v4252
    %4427 = vst.msk [vmem:[%s4409 + $0xc9] sm:$0xff] %vm2712, %v4253
    %4428 = vst.msk [vmem:[%s4409 + $0xd9] sm:$0xff] %vm2712, %v4254
    %4429 = vst.msk [vmem:[%s4409 + $0xe1] sm:$0xff] %vm2712, %v4255
    %4430 = vst.msk [vmem:[%s4409 + $0xf1] sm:$0xff] %vm2712, %v4256
    %4431 = vst.msk [vmem:[%s4409 + $0xf9] sm:$0xff] %vm2712, %v4257
    %4432 = vst.msk [vmem:[%s4409 + $0x109] sm:$0xff] %vm2712, %v4258
    %4433 = vst.msk [vmem:[%s4409 + $0x111] sm:$0xff] %vm2712, %v4259
    %4434 = vst.msk [vmem:[%s4409 + $0x121] sm:$0xff] %vm2712, %v4260
    %4435 = vst.msk [vmem:[%s4409 + $0x129] sm:$0xff] %vm2712, %v4261
    %4436 = vst.msk [vmem:[%s4409 + $0x139] sm:$0xff] %vm2712, %v4262
    %4437 = vst.msk [vmem:[%s4409 + $0x141] sm:$0xff] %vm2712, %v4263
    %4438 = vst.msk [vmem:[%s4409 + $0x151] sm:$0xff] %vm2712, %v4264
    %4439 = vst.msk [vmem:[%s4409 + $0x159] sm:$0xff] %vm2712, %v4265
    %4440 = vst.msk [vmem:[%s4409 + $0x169] sm:$0xff] %vm2712, %v4266
    %4441 = vst.msk [vmem:[%s4409 + $0x171] sm:$0xff] %vm2712, %v4267
    %4442 = vst.msk [vmem:[%s4409 + $0x1b1] sm:$0xff] %vm2712, %v4268
    %4443 = vst.msk [vmem:[%s4409 + $0x1b9] sm:$0xff] %vm2712, %v4269
    %4444 = vst.msk [vmem:[%s4409 + $0x1c9] sm:$0xff] %vm2712, %v4270
    %4445 = vst.msk [vmem:[%s4409 + $0x1d1] sm:$0xff] %vm2712, %v4271
    %4446 = vst.msk [vmem:[%s4409 + $0x1e1] sm:$0xff] %vm2712, %v4272
    %4447 = vst.msk [vmem:[%s4409 + $0x1e9] sm:$0xff] %vm2712, %v4273
    %4448 = vst.msk [vmem:[%s4409 + $0x1f9] sm:$0xff] %vm2712, %v4274
    %4449 = vst.msk [vmem:[%s4409 + $0x201] sm:$0xff] %vm2712, %v4275
    %4450 = vst.msk [vmem:[%s4409 + $0x211] sm:$0xff] %vm2712, %v4276
    %4451 = vst.msk [vmem:[%s4409 + $0x219] sm:$0xff] %vm2712, %v4277
    %4452 = vst.msk [vmem:[%s4409 + $0x229] sm:$0xff] %vm2712, %v4278
    %4453 = vst.msk [vmem:[%s4409 + $0x231] sm:$0xff] %vm2712, %v4279
    %4454 = vst.msk [vmem:[%s4409 + $0x241] sm:$0xff] %vm2712, %v4280
    %4455 = vst.msk [vmem:[%s4409 + $0x249] sm:$0xff] %vm2712, %v4281
    %4456 = vst.msk [vmem:[%s4409 + $0x259] sm:$0xff] %vm2712, %v4282
    %4457 = vst.msk [vmem:[%s4409 + $0x261] sm:$0xff] %vm2712, %v4283
    %4458 = vst.msk [vmem:[%s4409 + $0x271] sm:$0xff] %vm2712, %v4284
    %4459 = vst.msk [vmem:[%s4409 + $0x279] sm:$0xff] %vm2712, %v4285
    %4460 = vst.msk [vmem:[%s4409 + $0x289] sm:$0xff] %vm2712, %v4286
    %4461 = vst.msk [vmem:[%s4409 + $0x291] sm:$0xff] %vm2712, %v4287
    %4462 = vst.msk [vmem:[%s4409 + $0x2a1] sm:$0xff] %vm2712, %v4288
    %4463 = vst.msk [vmem:[%s4409 + $0x2a9] sm:$0xff] %vm2712, %v4289
    %4464 = vst.msk [vmem:[%s4409 + $0x2b9] sm:$0xff] %vm2712, %v4290
    %4465 = vst.msk [vmem:[%s4409 + $0x2c1] sm:$0xff] %vm2712, %v4291
    %4466 = vst.msk [vmem:[%s4409 + $0x2d1] sm:$0xff] %vm2712, %v4292
    %4467 = vst.msk [vmem:[%s4409 + $0x2d9] sm:$0xff] %vm2712, %v4293
    %4468 = vst.msk [vmem:[%s4409 + $0x2e9] sm:$0xff] %vm2712, %v4294
    %4469 = vst.msk [vmem:[%s4409 + $0x2f1] sm:$0xff] %vm2712, %v4295
    %4470 = vst.msk [vmem:[%s4409 + $0x301] sm:$0xff] %vm2712, %v4296
    %4471 = vst.msk [vmem:[%s4409 + $0x309] sm:$0xff] %vm2712, %v4297
    %4472 = vst.msk [vmem:[%s4409 + $0x319] sm:$0xff] %vm2712, %v4298
    %4473 = vst.msk [vmem:[%s4409 + $0x321] sm:$0xff] %vm2712, %v4299
    %v4474 = vld [vmem:[#allocation2] sm:$0xff]
    %v4475 = vld [vmem:[#allocation2 + $0x8] sm:$0xff]
    %v4476 = vld [vmem:[#allocation2 + $0x18] sm:$0xff]
    %v4477 = vld [vmem:[#allocation2 + $0x20] sm:$0xff]
    %v4478 = vld [vmem:[#allocation2 + $0x30] sm:$0xff]
    %v4479 = vld [vmem:[#allocation2 + $0x38] sm:$0xff]
    %v4480 = vld [vmem:[#allocation2 + $0x48] sm:$0xff]
    %v4481 = vld [vmem:[#allocation2 + $0x50] sm:$0xff]
    %v4482 = vld [vmem:[#allocation2 + $0x60] sm:$0xff]
    %v4483 = vld [vmem:[#allocation2 + $0x68] sm:$0xff]
    %v4484 = vld [vmem:[#allocation2 + $0x78] sm:$0xff]
    %v4485 = vld [vmem:[#allocation2 + $0x80] sm:$0xff]
    %v4486 = vld [vmem:[#allocation2 + $0x90] sm:$0xff]
    %v4487 = vld [vmem:[#allocation2 + $0x98] sm:$0xff]
    %v4488 = vld [vmem:[#allocation2 + $0xa8] sm:$0xff]
    %v4489 = vld [vmem:[#allocation2 + $0xb0] sm:$0xff]
    %v4490 = vld [vmem:[#allocation2 + $0xc0] sm:$0xff]
    %v4491 = vld [vmem:[#allocation2 + $0xc8] sm:$0xff]
    %v4492 = vld [vmem:[#allocation2 + $0xd8] sm:$0xff]
    %v4493 = vld [vmem:[#allocation2 + $0xe0] sm:$0xff]
    %v4494 = vld [vmem:[#allocation2 + $0xf0] sm:$0xff]
    %v4495 = vld [vmem:[#allocation2 + $0xf8] sm:$0xff]
    %v4496 = vld [vmem:[#allocation2 + $0x108] sm:$0xff]
    %v4497 = vld [vmem:[#allocation2 + $0x110] sm:$0xff]
    %v4498 = vld [vmem:[#allocation2 + $0x120] sm:$0xff]
    %v4499 = vld [vmem:[#allocation2 + $0x128] sm:$0xff]
    %v4500 = vld [vmem:[#allocation2 + $0x138] sm:$0xff]
    %v4501 = vld [vmem:[#allocation2 + $0x140] sm:$0xff]
    %v4502 = vld [vmem:[#allocation2 + $0x150] sm:$0xff]
    %v4503 = vld [vmem:[#allocation2 + $0x158] sm:$0xff]
    %v4504 = vld [vmem:[#allocation2 + $0x168] sm:$0xff]
    %v4505 = vld [vmem:[#allocation2 + $0x170] sm:$0xff]
    %v4506 = vld [vmem:[#allocation2 + $0x1b0] sm:$0xff]
    %v4507 = vld [vmem:[#allocation2 + $0x1b8] sm:$0xff]
    %v4508 = vld [vmem:[#allocation2 + $0x1c8] sm:$0xff]
    %v4509 = vld [vmem:[#allocation2 + $0x1d0] sm:$0xff]
    %v4510 = vld [vmem:[#allocation2 + $0x1e0] sm:$0xff]
    %v4511 = vld [vmem:[#allocation2 + $0x1e8] sm:$0xff]
    %v4512 = vld [vmem:[#allocation2 + $0x1f8] sm:$0xff]
    %v4513 = vld [vmem:[#allocation2 + $0x200] sm:$0xff]
    %v4514 = vld [vmem:[#allocation2 + $0x210] sm:$0xff]
    %v4515 = vld [vmem:[#allocation2 + $0x218] sm:$0xff]
    %v4516 = vld [vmem:[#allocation2 + $0x228] sm:$0xff]
    %v4517 = vld [vmem:[#allocation2 + $0x230] sm:$0xff]
    %v4518 = vld [vmem:[#allocation2 + $0x240] sm:$0xff]
    %v4519 = vld [vmem:[#allocation2 + $0x248] sm:$0xff]
    %v4520 = vld [vmem:[#allocation2 + $0x258] sm:$0xff]
    %v4521 = vld [vmem:[#allocation2 + $0x260] sm:$0xff]
    %v4522 = vld [vmem:[#allocation2 + $0x270] sm:$0xff]
    %v4523 = vld [vmem:[#allocation2 + $0x278] sm:$0xff]
    %v4524 = vld [vmem:[#allocation2 + $0x288] sm:$0xff]
    %v4525 = vld [vmem:[#allocation2 + $0x290] sm:$0xff]
    %v4526 = vld [vmem:[#allocation2 + $0x2a0] sm:$0xff]
    %v4527 = vld [vmem:[#allocation2 + $0x2a8] sm:$0xff]
    %v4528 = vld [vmem:[#allocation2 + $0x2b8] sm:$0xff]
    %v4529 = vld [vmem:[#allocation2 + $0x2c0] sm:$0xff]
    %v4530 = vld [vmem:[#allocation2 + $0x2d0] sm:$0xff]
    %v4531 = vld [vmem:[#allocation2 + $0x2d8] sm:$0xff]
    %v4532 = vld [vmem:[#allocation2 + $0x2e8] sm:$0xff]
    %v4533 = vld [vmem:[#allocation2 + $0x2f0] sm:$0xff]
    %v4534 = vld [vmem:[#allocation2 + $0x300] sm:$0xff]
    %v4535 = vld [vmem:[#allocation2 + $0x308] sm:$0xff]
    %v4536 = vld [vmem:[#allocation2 + $0x318] sm:$0xff]
    %v4537 = vld [vmem:[#allocation2 + $0x320] sm:$0xff]
    %v4538 = vld [vmem:[#allocation2 + $0x1] sm:$0xff]
    %v4539 = vld [vmem:[#allocation2 + $0x9] sm:$0xff]
    %v4540 = vld [vmem:[#allocation2 + $0x19] sm:$0xff]
    %v4541 = vld [vmem:[#allocation2 + $0x21] sm:$0xff]
    %v4542 = vld [vmem:[#allocation2 + $0x31] sm:$0xff]
    %v4543 = vld [vmem:[#allocation2 + $0x39] sm:$0xff]
    %v4544 = vld [vmem:[#allocation2 + $0x49] sm:$0xff]
    %v4545 = vld [vmem:[#allocation2 + $0x51] sm:$0xff]
    %v4546 = vld [vmem:[#allocation2 + $0x61] sm:$0xff]
    %v4547 = vld [vmem:[#allocation2 + $0x69] sm:$0xff]
    %v4548 = vld [vmem:[#allocation2 + $0x79] sm:$0xff]
    %v4549 = vld [vmem:[#allocation2 + $0x81] sm:$0xff]
    %v4550 = vld [vmem:[#allocation2 + $0x91] sm:$0xff]
    %v4551 = vld [vmem:[#allocation2 + $0x99] sm:$0xff]
    %v4552 = vld [vmem:[#allocation2 + $0xa9] sm:$0xff]
    %v4553 = vld [vmem:[#allocation2 + $0xb1] sm:$0xff]
    %v4554 = vld [vmem:[#allocation2 + $0xc1] sm:$0xff]
    %v4555 = vld [vmem:[#allocation2 + $0xc9] sm:$0xff]
    %v4556 = vld [vmem:[#allocation2 + $0xd9] sm:$0xff]
    %v4557 = vld [vmem:[#allocation2 + $0xe1] sm:$0xff]
    %v4558 = vld [vmem:[#allocation2 + $0xf1] sm:$0xff]
    %v4559 = vld [vmem:[#allocation2 + $0xf9] sm:$0xff]
    %v4560 = vld [vmem:[#allocation2 + $0x109] sm:$0xff]
    %v4561 = vld [vmem:[#allocation2 + $0x111] sm:$0xff]
    %v4562 = vld [vmem:[#allocation2 + $0x121] sm:$0xff]
    %v4563 = vld [vmem:[#allocation2 + $0x129] sm:$0xff]
    %v4564 = vld [vmem:[#allocation2 + $0x139] sm:$0xff]
    %v4565 = vld [vmem:[#allocation2 + $0x141] sm:$0xff]
    %v4566 = vld [vmem:[#allocation2 + $0x151] sm:$0xff]
    %v4567 = vld [vmem:[#allocation2 + $0x159] sm:$0xff]
    %v4568 = vld [vmem:[#allocation2 + $0x169] sm:$0xff]
    %v4569 = vld [vmem:[#allocation2 + $0x171] sm:$0xff]
    %v4570 = vld [vmem:[#allocation2 + $0x1b1] sm:$0xff]
    %v4571 = vld [vmem:[#allocation2 + $0x1b9] sm:$0xff]
    %v4572 = vld [vmem:[#allocation2 + $0x1c9] sm:$0xff]
    %v4573 = vld [vmem:[#allocation2 + $0x1d1] sm:$0xff]
    %v4574 = vld [vmem:[#allocation2 + $0x1e1] sm:$0xff]
    %v4575 = vld [vmem:[#allocation2 + $0x1e9] sm:$0xff]
    %v4576 = vld [vmem:[#allocation2 + $0x1f9] sm:$0xff]
    %v4577 = vld [vmem:[#allocation2 + $0x201] sm:$0xff]
    %v4578 = vld [vmem:[#allocation2 + $0x211] sm:$0xff]
    %v4579 = vld [vmem:[#allocation2 + $0x219] sm:$0xff]
    %v4580 = vld [vmem:[#allocation2 + $0x229] sm:$0xff]
    %v4581 = vld [vmem:[#allocation2 + $0x231] sm:$0xff]
    %v4582 = vld [vmem:[#allocation2 + $0x241] sm:$0xff]
    %v4583 = vld [vmem:[#allocation2 + $0x249] sm:$0xff]
    %v4584 = vld [vmem:[#allocation2 + $0x259] sm:$0xff]
    %v4585 = vld [vmem:[#allocation2 + $0x261] sm:$0xff]
    %v4586 = vld [vmem:[#allocation2 + $0x271] sm:$0xff]
    %v4587 = vld [vmem:[#allocation2 + $0x279] sm:$0xff]
    %v4588 = vld [vmem:[#allocation2 + $0x289] sm:$0xff]
    %v4589 = vld [vmem:[#allocation2 + $0x291] sm:$0xff]
    %v4590 = vld [vmem:[#allocation2 + $0x2a1] sm:$0xff]
    %v4591 = vld [vmem:[#allocation2 + $0x2a9] sm:$0xff]
    %v4592 = vld [vmem:[#allocation2 + $0x2b9] sm:$0xff]
    %v4593 = vld [vmem:[#allocation2 + $0x2c1] sm:$0xff]
    %v4594 = vld [vmem:[#allocation2 + $0x2d1] sm:$0xff]
    %v4595 = vld [vmem:[#allocation2 + $0x2d9] sm:$0xff]
    %v4596 = vld [vmem:[#allocation2 + $0x2e9] sm:$0xff]
    %v4597 = vld [vmem:[#allocation2 + $0x2f1] sm:$0xff]
    %v4598 = vld [vmem:[#allocation2 + $0x301] sm:$0xff]
    %v4599 = vld [vmem:[#allocation2 + $0x309] sm:$0xff]
    %v4600 = vld [vmem:[#allocation2 + $0x319] sm:$0xff]
    %v4601 = vld [vmem:[#allocation2 + $0x321] sm:$0xff]
    %v4602 = vld [vmem:[#allocation2 + $0x2] sm:$0xff]
    %v4603 = vld [vmem:[#allocation2 + $0xa] sm:$0xff]
    %v4604 = vld [vmem:[#allocation2 + $0x1a] sm:$0xff]
    %v4605 = vld [vmem:[#allocation2 + $0x22] sm:$0xff]
    %v4606 = vld [vmem:[#allocation2 + $0x32] sm:$0xff]
    %v4607 = vld [vmem:[#allocation2 + $0x3a] sm:$0xff]
    %v4608 = vld [vmem:[#allocation2 + $0x4a] sm:$0xff]
    %v4609 = vld [vmem:[#allocation2 + $0x52] sm:$0xff]
    %v4610 = vld [vmem:[#allocation2 + $0x62] sm:$0xff]
    %v4611 = vld [vmem:[#allocation2 + $0x6a] sm:$0xff]
    %v4612 = vld [vmem:[#allocation2 + $0x7a] sm:$0xff]
    %v4613 = vld [vmem:[#allocation2 + $0x82] sm:$0xff]
    %v4614 = vld [vmem:[#allocation2 + $0x92] sm:$0xff]
    %v4615 = vld [vmem:[#allocation2 + $0x9a] sm:$0xff]
    %v4616 = vld [vmem:[#allocation2 + $0xaa] sm:$0xff]
    %v4617 = vld [vmem:[#allocation2 + $0xb2] sm:$0xff]
    %v4618 = vld [vmem:[#allocation2 + $0xc2] sm:$0xff]
    %v4619 = vld [vmem:[#allocation2 + $0xca] sm:$0xff]
    %v4620 = vld [vmem:[#allocation2 + $0xda] sm:$0xff]
    %v4621 = vld [vmem:[#allocation2 + $0xe2] sm:$0xff]
    %v4622 = vld [vmem:[#allocation2 + $0xf2] sm:$0xff]
    %v4623 = vld [vmem:[#allocation2 + $0xfa] sm:$0xff]
    %v4624 = vld [vmem:[#allocation2 + $0x10a] sm:$0xff]
    %v4625 = vld [vmem:[#allocation2 + $0x112] sm:$0xff]
    %v4626 = vld [vmem:[#allocation2 + $0x122] sm:$0xff]
    %v4627 = vld [vmem:[#allocation2 + $0x12a] sm:$0xff]
    %v4628 = vld [vmem:[#allocation2 + $0x13a] sm:$0xff]
    %v4629 = vld [vmem:[#allocation2 + $0x142] sm:$0xff]
    %v4630 = vld [vmem:[#allocation2 + $0x152] sm:$0xff]
    %v4631 = vld [vmem:[#allocation2 + $0x15a] sm:$0xff]
    %v4632 = vld [vmem:[#allocation2 + $0x16a] sm:$0xff]
    %v4633 = vld [vmem:[#allocation2 + $0x172] sm:$0xff]
    %v4634 = vld [vmem:[#allocation2 + $0x1b2] sm:$0xff]
    %v4635 = vld [vmem:[#allocation2 + $0x1ba] sm:$0xff]
    %v4636 = vld [vmem:[#allocation2 + $0x1ca] sm:$0xff]
    %v4637 = vld [vmem:[#allocation2 + $0x1d2] sm:$0xff]
    %v4638 = vld [vmem:[#allocation2 + $0x1e2] sm:$0xff]
    %v4639 = vld [vmem:[#allocation2 + $0x1ea] sm:$0xff]
    %v4640 = vld [vmem:[#allocation2 + $0x1fa] sm:$0xff]
    %v4641 = vld [vmem:[#allocation2 + $0x202] sm:$0xff]
    %v4642 = vld [vmem:[#allocation2 + $0x212] sm:$0xff]
    %v4643 = vld [vmem:[#allocation2 + $0x21a] sm:$0xff]
    %v4644 = vld [vmem:[#allocation2 + $0x22a] sm:$0xff]
    %v4645 = vld [vmem:[#allocation2 + $0x232] sm:$0xff]
    %v4646 = vld [vmem:[#allocation2 + $0x242] sm:$0xff]
    %v4647 = vld [vmem:[#allocation2 + $0x24a] sm:$0xff]
    %v4648 = vld [vmem:[#allocation2 + $0x25a] sm:$0xff]
    %v4649 = vld [vmem:[#allocation2 + $0x262] sm:$0xff]
    %v4650 = vld [vmem:[#allocation2 + $0x272] sm:$0xff]
    %v4651 = vld [vmem:[#allocation2 + $0x27a] sm:$0xff]
    %v4652 = vld [vmem:[#allocation2 + $0x28a] sm:$0xff]
    %v4653 = vld [vmem:[#allocation2 + $0x292] sm:$0xff]
    %v4654 = vld [vmem:[#allocation2 + $0x2a2] sm:$0xff]
    %v4655 = vld [vmem:[#allocation2 + $0x2aa] sm:$0xff]
    %v4656 = vld [vmem:[#allocation2 + $0x2ba] sm:$0xff]
    %v4657 = vld [vmem:[#allocation2 + $0x2c2] sm:$0xff]
    %v4658 = vld [vmem:[#allocation2 + $0x2d2] sm:$0xff]
    %v4659 = vld [vmem:[#allocation2 + $0x2da] sm:$0xff]
    %v4660 = vld [vmem:[#allocation2 + $0x2ea] sm:$0xff]
    %v4661 = vld [vmem:[#allocation2 + $0x2f2] sm:$0xff]
    %v4662 = vld [vmem:[#allocation2 + $0x302] sm:$0xff]
    %v4663 = vld [vmem:[#allocation2 + $0x30a] sm:$0xff]
    %v4664 = vld [vmem:[#allocation2 + $0x31a] sm:$0xff]
    %v4665 = vld [vmem:[#allocation2 + $0x322] sm:$0xff]
    %v4666 = vld [vmem:[%s4409] sm:$0xff]
    %v4667 = vld [vmem:[%s4409 + $0x8] sm:$0xff]
    %v4668 = vld [vmem:[%s4409 + $0x18] sm:$0xff]
    %v4669 = vld [vmem:[%s4409 + $0x20] sm:$0xff]
    %v4670 = vld [vmem:[%s4409 + $0x30] sm:$0xff]
    %v4671 = vld [vmem:[%s4409 + $0x38] sm:$0xff]
    %v4672 = vld [vmem:[%s4409 + $0x48] sm:$0xff]
    %v4673 = vld [vmem:[%s4409 + $0x50] sm:$0xff]
    %v4674 = vld [vmem:[%s4409 + $0x60] sm:$0xff]
    %v4675 = vld [vmem:[%s4409 + $0x68] sm:$0xff]
    %v4676 = vld [vmem:[%s4409 + $0x78] sm:$0xff]
    %v4677 = vld [vmem:[%s4409 + $0x80] sm:$0xff]
    %v4678 = vld [vmem:[%s4409 + $0x90] sm:$0xff]
    %v4679 = vld [vmem:[%s4409 + $0x98] sm:$0xff]
    %v4680 = vld [vmem:[%s4409 + $0xa8] sm:$0xff]
    %v4681 = vld [vmem:[%s4409 + $0xb0] sm:$0xff]
    %v4682 = vld [vmem:[%s4409 + $0xc0] sm:$0xff]
    %v4683 = vld [vmem:[%s4409 + $0xc8] sm:$0xff]
    %v4684 = vld [vmem:[%s4409 + $0xd8] sm:$0xff]
    %v4685 = vld [vmem:[%s4409 + $0xe0] sm:$0xff]
    %v4686 = vld [vmem:[%s4409 + $0xf0] sm:$0xff]
    %v4687 = vld [vmem:[%s4409 + $0xf8] sm:$0xff]
    %v4688 = vld [vmem:[%s4409 + $0x108] sm:$0xff]
    %v4689 = vld [vmem:[%s4409 + $0x110] sm:$0xff]
    %v4690 = vld [vmem:[%s4409 + $0x120] sm:$0xff]
    %v4691 = vld [vmem:[%s4409 + $0x128] sm:$0xff]
    %v4692 = vld [vmem:[%s4409 + $0x138] sm:$0xff]
    %v4693 = vld [vmem:[%s4409 + $0x140] sm:$0xff]
    %v4694 = vld [vmem:[%s4409 + $0x150] sm:$0xff]
    %v4695 = vld [vmem:[%s4409 + $0x158] sm:$0xff]
    %v4696 = vld [vmem:[%s4409 + $0x168] sm:$0xff]
    %v4697 = vld [vmem:[%s4409 + $0x170] sm:$0xff]
    %v4698 = vld [vmem:[%s4409 + $0x1b0] sm:$0xff]
    %v4699 = vld [vmem:[%s4409 + $0x1b8] sm:$0xff]
    %v4700 = vld [vmem:[%s4409 + $0x1c8] sm:$0xff]
    %v4701 = vld [vmem:[%s4409 + $0x1d0] sm:$0xff]
    %v4702 = vld [vmem:[%s4409 + $0x1e0] sm:$0xff]
    %v4703 = vld [vmem:[%s4409 + $0x1e8] sm:$0xff]
    %v4704 = vld [vmem:[%s4409 + $0x1f8] sm:$0xff]
    %v4705 = vld [vmem:[%s4409 + $0x200] sm:$0xff]
    %v4706 = vld [vmem:[%s4409 + $0x210] sm:$0xff]
    %v4707 = vld [vmem:[%s4409 + $0x218] sm:$0xff]
    %v4708 = vld [vmem:[%s4409 + $0x228] sm:$0xff]
    %v4709 = vld [vmem:[%s4409 + $0x230] sm:$0xff]
    %v4710 = vld [vmem:[%s4409 + $0x240] sm:$0xff]
    %v4711 = vld [vmem:[%s4409 + $0x248] sm:$0xff]
    %v4712 = vld [vmem:[%s4409 + $0x258] sm:$0xff]
    %v4713 = vld [vmem:[%s4409 + $0x260] sm:$0xff]
    %v4714 = vld [vmem:[%s4409 + $0x270] sm:$0xff]
    %v4715 = vld [vmem:[%s4409 + $0x278] sm:$0xff]
    %v4716 = vld [vmem:[%s4409 + $0x288] sm:$0xff]
    %v4717 = vld [vmem:[%s4409 + $0x290] sm:$0xff]
    %v4718 = vld [vmem:[%s4409 + $0x2a0] sm:$0xff]
    %v4719 = vld [vmem:[%s4409 + $0x2a8] sm:$0xff]
    %v4720 = vld [vmem:[%s4409 + $0x2b8] sm:$0xff]
    %v4721 = vld [vmem:[%s4409 + $0x2c0] sm:$0xff]
    %v4722 = vld [vmem:[%s4409 + $0x2d0] sm:$0xff]
    %v4723 = vld [vmem:[%s4409 + $0x2d8] sm:$0xff]
    %v4724 = vld [vmem:[%s4409 + $0x2e8] sm:$0xff]
    %v4725 = vld [vmem:[%s4409 + $0x2f0] sm:$0xff]
    %v4726 = vld [vmem:[%s4409 + $0x300] sm:$0xff]
    %v4727 = vld [vmem:[%s4409 + $0x308] sm:$0xff]
    %v4728 = vld [vmem:[%s4409 + $0x318] sm:$0xff]
    %v4729 = vld [vmem:[%s4409 + $0x320] sm:$0xff]
    %v4730 = vld [vmem:[%s4409 + $0x1] sm:$0xff]
    %v4731 = vld [vmem:[%s4409 + $0x9] sm:$0xff]
    %v4732 = vld [vmem:[%s4409 + $0x19] sm:$0xff]
    %v4733 = vld [vmem:[%s4409 + $0x21] sm:$0xff]
    %v4734 = vld [vmem:[%s4409 + $0x31] sm:$0xff]
    %v4735 = vld [vmem:[%s4409 + $0x39] sm:$0xff]
    %v4736 = vld [vmem:[%s4409 + $0x49] sm:$0xff]
    %v4737 = vld [vmem:[%s4409 + $0x51] sm:$0xff]
    %v4738 = vld [vmem:[%s4409 + $0x61] sm:$0xff]
    %v4739 = vld [vmem:[%s4409 + $0x69] sm:$0xff]
    %v4740 = vld [vmem:[%s4409 + $0x79] sm:$0xff]
    %v4741 = vld [vmem:[%s4409 + $0x81] sm:$0xff]
    %v4742 = vld [vmem:[%s4409 + $0x91] sm:$0xff]
    %v4743 = vld [vmem:[%s4409 + $0x99] sm:$0xff]
    %v4744 = vld [vmem:[%s4409 + $0xa9] sm:$0xff]
    %v4745 = vld [vmem:[%s4409 + $0xb1] sm:$0xff]
    %v4746 = vld [vmem:[%s4409 + $0xc1] sm:$0xff]
    %v4747 = vld [vmem:[%s4409 + $0xc9] sm:$0xff]
    %v4748 = vld [vmem:[%s4409 + $0xd9] sm:$0xff]
    %v4749 = vld [vmem:[%s4409 + $0xe1] sm:$0xff]
    %v4750 = vld [vmem:[%s4409 + $0xf1] sm:$0xff]
    %v4751 = vld [vmem:[%s4409 + $0xf9] sm:$0xff]
    %v4752 = vld [vmem:[%s4409 + $0x109] sm:$0xff]
    %v4753 = vld [vmem:[%s4409 + $0x111] sm:$0xff]
    %v4754 = vld [vmem:[%s4409 + $0x121] sm:$0xff]
    %v4755 = vld [vmem:[%s4409 + $0x129] sm:$0xff]
    %v4756 = vld [vmem:[%s4409 + $0x139] sm:$0xff]
    %v4757 = vld [vmem:[%s4409 + $0x141] sm:$0xff]
    %v4758 = vld [vmem:[%s4409 + $0x151] sm:$0xff]
    %v4759 = vld [vmem:[%s4409 + $0x159] sm:$0xff]
    %v4760 = vld [vmem:[%s4409 + $0x169] sm:$0xff]
    %v4761 = vld [vmem:[%s4409 + $0x171] sm:$0xff]
    %v4762 = vld [vmem:[%s4409 + $0x1b1] sm:$0xff]
    %v4763 = vld [vmem:[%s4409 + $0x1b9] sm:$0xff]
    %v4764 = vld [vmem:[%s4409 + $0x1c9] sm:$0xff]
    %v4765 = vld [vmem:[%s4409 + $0x1d1] sm:$0xff]
    %v4766 = vld [vmem:[%s4409 + $0x1e1] sm:$0xff]
    %v4767 = vld [vmem:[%s4409 + $0x1e9] sm:$0xff]
    %v4768 = vld [vmem:[%s4409 + $0x1f9] sm:$0xff]
    %v4769 = vld [vmem:[%s4409 + $0x201] sm:$0xff]
    %v4770 = vld [vmem:[%s4409 + $0x211] sm:$0xff]
    %v4771 = vld [vmem:[%s4409 + $0x219] sm:$0xff]
    %v4772 = vld [vmem:[%s4409 + $0x229] sm:$0xff]
    %v4773 = vld [vmem:[%s4409 + $0x231] sm:$0xff]
    %v4774 = vld [vmem:[%s4409 + $0x241] sm:$0xff]
    %v4775 = vld [vmem:[%s4409 + $0x249] sm:$0xff]
    %v4776 = vld [vmem:[%s4409 + $0x259] sm:$0xff]
    %v4777 = vld [vmem:[%s4409 + $0x261] sm:$0xff]
    %v4778 = vld [vmem:[%s4409 + $0x271] sm:$0xff]
    %v4779 = vld [vmem:[%s4409 + $0x279] sm:$0xff]
    %v4780 = vld [vmem:[%s4409 + $0x289] sm:$0xff]
    %v4781 = vld [vmem:[%s4409 + $0x291] sm:$0xff]
    %v4782 = vld [vmem:[%s4409 + $0x2a1] sm:$0xff]
    %v4783 = vld [vmem:[%s4409 + $0x2a9] sm:$0xff]
    %v4784 = vld [vmem:[%s4409 + $0x2b9] sm:$0xff]
    %v4785 = vld [vmem:[%s4409 + $0x2c1] sm:$0xff]
    %v4786 = vld [vmem:[%s4409 + $0x2d1] sm:$0xff]
    %v4787 = vld [vmem:[%s4409 + $0x2d9] sm:$0xff]
    %v4788 = vld [vmem:[%s4409 + $0x2e9] sm:$0xff]
    %v4789 = vld [vmem:[%s4409 + $0x2f1] sm:$0xff]
    %v4790 = vld [vmem:[%s4409 + $0x301] sm:$0xff]
    %v4791 = vld [vmem:[%s4409 + $0x309] sm:$0xff]
    %v4792 = vld [vmem:[%s4409 + $0x319] sm:$0xff]
    %v4793 = vld [vmem:[%s4409 + $0x321] sm:$0xff]
    %v4794 = vld [vmem:[%s4409 + $0x2] sm:$0xff]
    %v4795 = vld [vmem:[%s4409 + $0xa] sm:$0xff]
    %v4796 = vld [vmem:[%s4409 + $0x1a] sm:$0xff]
    %v4797 = vld [vmem:[%s4409 + $0x22] sm:$0xff]
    %v4798 = vld [vmem:[%s4409 + $0x32] sm:$0xff]
    %v4799 = vld [vmem:[%s4409 + $0x3a] sm:$0xff]
    %v4800 = vld [vmem:[%s4409 + $0x4a] sm:$0xff]
    %v4801 = vld [vmem:[%s4409 + $0x52] sm:$0xff]
    %v4802 = vld [vmem:[%s4409 + $0x62] sm:$0xff]
    %v4803 = vld [vmem:[%s4409 + $0x6a] sm:$0xff]
    %v4804 = vld [vmem:[%s4409 + $0x7a] sm:$0xff]
    %v4805 = vld [vmem:[%s4409 + $0x82] sm:$0xff]
    %v4806 = vld [vmem:[%s4409 + $0x92] sm:$0xff]
    %v4807 = vld [vmem:[%s4409 + $0x9a] sm:$0xff]
    %v4808 = vld [vmem:[%s4409 + $0xaa] sm:$0xff]
    %v4809 = vld [vmem:[%s4409 + $0xb2] sm:$0xff]
    %v4810 = vld [vmem:[%s4409 + $0xc2] sm:$0xff]
    %v4811 = vld [vmem:[%s4409 + $0xca] sm:$0xff]
    %v4812 = vld [vmem:[%s4409 + $0xda] sm:$0xff]
    %v4813 = vld [vmem:[%s4409 + $0xe2] sm:$0xff]
    %v4814 = vld [vmem:[%s4409 + $0xf2] sm:$0xff]
    %v4815 = vld [vmem:[%s4409 + $0xfa] sm:$0xff]
    %v4816 = vld [vmem:[%s4409 + $0x10a] sm:$0xff]
    %v4817 = vld [vmem:[%s4409 + $0x112] sm:$0xff]
    %v4818 = vld [vmem:[%s4409 + $0x122] sm:$0xff]
    %v4819 = vld [vmem:[%s4409 + $0x12a] sm:$0xff]
    %v4820 = vld [vmem:[%s4409 + $0x13a] sm:$0xff]
    %v4821 = vld [vmem:[%s4409 + $0x142] sm:$0xff]
    %v4822 = vld [vmem:[%s4409 + $0x152] sm:$0xff]
    %v4823 = vld [vmem:[%s4409 + $0x15a] sm:$0xff]
    %v4824 = vld [vmem:[%s4409 + $0x16a] sm:$0xff]
    %v4825 = vld [vmem:[%s4409 + $0x172] sm:$0xff]
    %v4826 = vld [vmem:[%s4409 + $0x1b2] sm:$0xff]
    %v4827 = vld [vmem:[%s4409 + $0x1ba] sm:$0xff]
    %v4828 = vld [vmem:[%s4409 + $0x1ca] sm:$0xff]
    %v4829 = vld [vmem:[%s4409 + $0x1d2] sm:$0xff]
    %v4830 = vld [vmem:[%s4409 + $0x1e2] sm:$0xff]
    %v4831 = vld [vmem:[%s4409 + $0x1ea] sm:$0xff]
    %v4832 = vld [vmem:[%s4409 + $0x1fa] sm:$0xff]
    %v4833 = vld [vmem:[%s4409 + $0x202] sm:$0xff]
    %v4834 = vld [vmem:[%s4409 + $0x212] sm:$0xff]
    %v4835 = vld [vmem:[%s4409 + $0x21a] sm:$0xff]
    %v4836 = vld [vmem:[%s4409 + $0x22a] sm:$0xff]
    %v4837 = vld [vmem:[%s4409 + $0x232] sm:$0xff]
    %v4838 = vld [vmem:[%s4409 + $0x242] sm:$0xff]
    %v4839 = vld [vmem:[%s4409 + $0x24a] sm:$0xff]
    %v4840 = vld [vmem:[%s4409 + $0x25a] sm:$0xff]
    %v4841 = vld [vmem:[%s4409 + $0x262] sm:$0xff]
    %v4842 = vld [vmem:[%s4409 + $0x272] sm:$0xff]
    %v4843 = vld [vmem:[%s4409 + $0x27a] sm:$0xff]
    %v4844 = vld [vmem:[%s4409 + $0x28a] sm:$0xff]
    %v4845 = vld [vmem:[%s4409 + $0x292] sm:$0xff]
    %v4846 = vld [vmem:[%s4409 + $0x2a2] sm:$0xff]
    %v4847 = vld [vmem:[%s4409 + $0x2aa] sm:$0xff]
    %v4848 = vld [vmem:[%s4409 + $0x2ba] sm:$0xff]
    %v4849 = vld [vmem:[%s4409 + $0x2c2] sm:$0xff]
    %v4850 = vld [vmem:[%s4409 + $0x2d2] sm:$0xff]
    %v4851 = vld [vmem:[%s4409 + $0x2da] sm:$0xff]
    %v4852 = vld [vmem:[%s4409 + $0x2ea] sm:$0xff]
    %v4853 = vld [vmem:[%s4409 + $0x2f2] sm:$0xff]
    %v4854 = vld [vmem:[%s4409 + $0x302] sm:$0xff]
    %v4855 = vld [vmem:[%s4409 + $0x30a] sm:$0xff]
    %v4856 = vld [vmem:[%s4409 + $0x31a] sm:$0xff]
    %v4857 = vld [vmem:[%s4409 + $0x322] sm:$0xff]
    %s4858 = scalar_lea.vmem [#allocation2], 48
    %v4859 = vld [vmem:[%s4858] sm:$0xff]
    %v4860 = vld [vmem:[%s4858 + $0x8] sm:$0xff]
    %v4861 = vld [vmem:[%s4858 + $0x18] sm:$0xff]
    %v4862 = vld [vmem:[%s4858 + $0x20] sm:$0xff]
    %v4863 = vld [vmem:[%s4858 + $0x30] sm:$0xff]
    %v4864 = vld [vmem:[%s4858 + $0x38] sm:$0xff]
    %v4865 = vld [vmem:[%s4858 + $0x48] sm:$0xff]
    %v4866 = vld [vmem:[%s4858 + $0x50] sm:$0xff]
    %v4867 = vld [vmem:[%s4858 + $0x60] sm:$0xff]
    %v4868 = vld [vmem:[%s4858 + $0x68] sm:$0xff]
    %v4869 = vld [vmem:[%s4858 + $0x78] sm:$0xff]
    %v4870 = vld [vmem:[%s4858 + $0x80] sm:$0xff]
    %v4871 = vld [vmem:[%s4858 + $0x90] sm:$0xff]
    %v4872 = vld [vmem:[%s4858 + $0x98] sm:$0xff]
    %v4873 = vld [vmem:[%s4858 + $0xa8] sm:$0xff]
    %v4874 = vld [vmem:[%s4858 + $0xb0] sm:$0xff]
    %v4875 = vld [vmem:[%s4858 + $0xc0] sm:$0xff]
    %v4876 = vld [vmem:[%s4858 + $0xc8] sm:$0xff]
    %v4877 = vld [vmem:[%s4858 + $0xd8] sm:$0xff]
    %v4878 = vld [vmem:[%s4858 + $0xe0] sm:$0xff]
    %v4879 = vld [vmem:[%s4858 + $0xf0] sm:$0xff]
    %v4880 = vld [vmem:[%s4858 + $0xf8] sm:$0xff]
    %v4881 = vld [vmem:[%s4858 + $0x108] sm:$0xff]
    %v4882 = vld [vmem:[%s4858 + $0x110] sm:$0xff]
    %v4883 = vld [vmem:[%s4858 + $0x120] sm:$0xff]
    %v4884 = vld [vmem:[%s4858 + $0x128] sm:$0xff]
    %v4885 = vld [vmem:[%s4858 + $0x138] sm:$0xff]
    %v4886 = vld [vmem:[%s4858 + $0x140] sm:$0xff]
    %v4887 = vld [vmem:[%s4858 + $0x150] sm:$0xff]
    %v4888 = vld [vmem:[%s4858 + $0x158] sm:$0xff]
    %v4889 = vld [vmem:[%s4858 + $0x168] sm:$0xff]
    %v4890 = vld [vmem:[%s4858 + $0x170] sm:$0xff]
    %v4891 = vld [vmem:[%s4858 + $0x1b0] sm:$0xff]
    %v4892 = vld [vmem:[%s4858 + $0x1b8] sm:$0xff]
    %v4893 = vld [vmem:[%s4858 + $0x1c8] sm:$0xff]
    %v4894 = vld [vmem:[%s4858 + $0x1d0] sm:$0xff]
    %v4895 = vld [vmem:[%s4858 + $0x1e0] sm:$0xff]
    %v4896 = vld [vmem:[%s4858 + $0x1e8] sm:$0xff]
    %v4897 = vld [vmem:[%s4858 + $0x1f8] sm:$0xff]
    %v4898 = vld [vmem:[%s4858 + $0x200] sm:$0xff]
    %v4899 = vld [vmem:[%s4858 + $0x210] sm:$0xff]
    %v4900 = vld [vmem:[%s4858 + $0x218] sm:$0xff]
    %v4901 = vld [vmem:[%s4858 + $0x228] sm:$0xff]
    %v4902 = vld [vmem:[%s4858 + $0x230] sm:$0xff]
    %v4903 = vld [vmem:[%s4858 + $0x240] sm:$0xff]
    %v4904 = vld [vmem:[%s4858 + $0x248] sm:$0xff]
    %v4905 = vld [vmem:[%s4858 + $0x258] sm:$0xff]
    %v4906 = vld [vmem:[%s4858 + $0x260] sm:$0xff]
    %v4907 = vld [vmem:[%s4858 + $0x270] sm:$0xff]
    %v4908 = vld [vmem:[%s4858 + $0x278] sm:$0xff]
    %v4909 = vld [vmem:[%s4858 + $0x288] sm:$0xff]
    %v4910 = vld [vmem:[%s4858 + $0x290] sm:$0xff]
    %v4911 = vld [vmem:[%s4858 + $0x2a0] sm:$0xff]
    %v4912 = vld [vmem:[%s4858 + $0x2a8] sm:$0xff]
    %v4913 = vld [vmem:[%s4858 + $0x2b8] sm:$0xff]
    %v4914 = vld [vmem:[%s4858 + $0x2c0] sm:$0xff]
    %v4915 = vld [vmem:[%s4858 + $0x2d0] sm:$0xff]
    %v4916 = vld [vmem:[%s4858 + $0x2d8] sm:$0xff]
    %v4917 = vld [vmem:[%s4858 + $0x2e8] sm:$0xff]
    %v4918 = vld [vmem:[%s4858 + $0x2f0] sm:$0xff]
    %v4919 = vld [vmem:[%s4858 + $0x300] sm:$0xff]
    %v4920 = vld [vmem:[%s4858 + $0x308] sm:$0xff]
    %v4921 = vld [vmem:[%s4858 + $0x318] sm:$0xff]
    %v4922 = vld [vmem:[%s4858 + $0x320] sm:$0xff]
    %v4923 = vld [vmem:[%s4858 + $0x1] sm:$0xff]
    %v4924 = vld [vmem:[%s4858 + $0x9] sm:$0xff]
    %v4925 = vld [vmem:[%s4858 + $0x19] sm:$0xff]
    %v4926 = vld [vmem:[%s4858 + $0x21] sm:$0xff]
    %v4927 = vld [vmem:[%s4858 + $0x31] sm:$0xff]
    %v4928 = vld [vmem:[%s4858 + $0x39] sm:$0xff]
    %v4929 = vld [vmem:[%s4858 + $0x49] sm:$0xff]
    %v4930 = vld [vmem:[%s4858 + $0x51] sm:$0xff]
    %v4931 = vld [vmem:[%s4858 + $0x61] sm:$0xff]
    %v4932 = vld [vmem:[%s4858 + $0x69] sm:$0xff]
    %v4933 = vld [vmem:[%s4858 + $0x79] sm:$0xff]
    %v4934 = vld [vmem:[%s4858 + $0x81] sm:$0xff]
    %v4935 = vld [vmem:[%s4858 + $0x91] sm:$0xff]
    %v4936 = vld [vmem:[%s4858 + $0x99] sm:$0xff]
    %v4937 = vld [vmem:[%s4858 + $0xa9] sm:$0xff]
    %v4938 = vld [vmem:[%s4858 + $0xb1] sm:$0xff]
    %v4939 = vld [vmem:[%s4858 + $0xc1] sm:$0xff]
    %v4940 = vld [vmem:[%s4858 + $0xc9] sm:$0xff]
    %v4941 = vld [vmem:[%s4858 + $0xd9] sm:$0xff]
    %v4942 = vld [vmem:[%s4858 + $0xe1] sm:$0xff]
    %v4943 = vld [vmem:[%s4858 + $0xf1] sm:$0xff]
    %v4944 = vld [vmem:[%s4858 + $0xf9] sm:$0xff]
    %v4945 = vld [vmem:[%s4858 + $0x109] sm:$0xff]
    %v4946 = vld [vmem:[%s4858 + $0x111] sm:$0xff]
    %v4947 = vld [vmem:[%s4858 + $0x121] sm:$0xff]
    %v4948 = vld [vmem:[%s4858 + $0x129] sm:$0xff]
    %v4949 = vld [vmem:[%s4858 + $0x139] sm:$0xff]
    %v4950 = vld [vmem:[%s4858 + $0x141] sm:$0xff]
    %v4951 = vld [vmem:[%s4858 + $0x151] sm:$0xff]
    %v4952 = vld [vmem:[%s4858 + $0x159] sm:$0xff]
    %v4953 = vld [vmem:[%s4858 + $0x169] sm:$0xff]
    %v4954 = vld [vmem:[%s4858 + $0x171] sm:$0xff]
    %v4955 = vld [vmem:[%s4858 + $0x1b1] sm:$0xff]
    %v4956 = vld [vmem:[%s4858 + $0x1b9] sm:$0xff]
    %v4957 = vld [vmem:[%s4858 + $0x1c9] sm:$0xff]
    %v4958 = vld [vmem:[%s4858 + $0x1d1] sm:$0xff]
    %v4959 = vld [vmem:[%s4858 + $0x1e1] sm:$0xff]
    %v4960 = vld [vmem:[%s4858 + $0x1e9] sm:$0xff]
    %v4961 = vld [vmem:[%s4858 + $0x1f9] sm:$0xff]
    %v4962 = vld [vmem:[%s4858 + $0x201] sm:$0xff]
    %v4963 = vld [vmem:[%s4858 + $0x211] sm:$0xff]
    %v4964 = vld [vmem:[%s4858 + $0x219] sm:$0xff]
    %v4965 = vld [vmem:[%s4858 + $0x229] sm:$0xff]
    %v4966 = vld [vmem:[%s4858 + $0x231] sm:$0xff]
    %v4967 = vld [vmem:[%s4858 + $0x241] sm:$0xff]
    %v4968 = vld [vmem:[%s4858 + $0x249] sm:$0xff]
    %v4969 = vld [vmem:[%s4858 + $0x259] sm:$0xff]
    %v4970 = vld [vmem:[%s4858 + $0x261] sm:$0xff]
    %v4971 = vld [vmem:[%s4858 + $0x271] sm:$0xff]
    %v4972 = vld [vmem:[%s4858 + $0x279] sm:$0xff]
    %v4973 = vld [vmem:[%s4858 + $0x289] sm:$0xff]
    %v4974 = vld [vmem:[%s4858 + $0x291] sm:$0xff]
    %v4975 = vld [vmem:[%s4858 + $0x2a1] sm:$0xff]
    %v4976 = vld [vmem:[%s4858 + $0x2a9] sm:$0xff]
    %v4977 = vld [vmem:[%s4858 + $0x2b9] sm:$0xff]
    %v4978 = vld [vmem:[%s4858 + $0x2c1] sm:$0xff]
    %v4979 = vld [vmem:[%s4858 + $0x2d1] sm:$0xff]
    %v4980 = vld [vmem:[%s4858 + $0x2d9] sm:$0xff]
    %v4981 = vld [vmem:[%s4858 + $0x2e9] sm:$0xff]
    %v4982 = vld [vmem:[%s4858 + $0x2f1] sm:$0xff]
    %v4983 = vld [vmem:[%s4858 + $0x301] sm:$0xff]
    %v4984 = vld [vmem:[%s4858 + $0x309] sm:$0xff]
    %v4985 = vld [vmem:[%s4858 + $0x319] sm:$0xff]
    %v4986 = vld [vmem:[%s4858 + $0x321] sm:$0xff]
    %v4987 = vld [vmem:[%s4858 + $0x2] sm:$0xff]
    %v4988 = vld [vmem:[%s4858 + $0xa] sm:$0xff]
    %v4989 = vld [vmem:[%s4858 + $0x1a] sm:$0xff]
    %v4990 = vld [vmem:[%s4858 + $0x22] sm:$0xff]
    %v4991 = vld [vmem:[%s4858 + $0x32] sm:$0xff]
    %v4992 = vld [vmem:[%s4858 + $0x3a] sm:$0xff]
    %v4993 = vld [vmem:[%s4858 + $0x4a] sm:$0xff]
    %v4994 = vld [vmem:[%s4858 + $0x52] sm:$0xff]
    %v4995 = vld [vmem:[%s4858 + $0x62] sm:$0xff]
    %v4996 = vld [vmem:[%s4858 + $0x6a] sm:$0xff]
    %v4997 = vld [vmem:[%s4858 + $0x7a] sm:$0xff]
    %v4998 = vld [vmem:[%s4858 + $0x82] sm:$0xff]
    %v4999 = vld [vmem:[%s4858 + $0x92] sm:$0xff]
    %v5000 = vld [vmem:[%s4858 + $0x9a] sm:$0xff]
    %v5001 = vld [vmem:[%s4858 + $0xaa] sm:$0xff]
    %v5002 = vld [vmem:[%s4858 + $0xb2] sm:$0xff]
    %v5003 = vld [vmem:[%s4858 + $0xc2] sm:$0xff]
    %v5004 = vld [vmem:[%s4858 + $0xca] sm:$0xff]
    %v5005 = vld [vmem:[%s4858 + $0xda] sm:$0xff]
    %v5006 = vld [vmem:[%s4858 + $0xe2] sm:$0xff]
    %v5007 = vld [vmem:[%s4858 + $0xf2] sm:$0xff]
    %v5008 = vld [vmem:[%s4858 + $0xfa] sm:$0xff]
    %v5009 = vld [vmem:[%s4858 + $0x10a] sm:$0xff]
    %v5010 = vld [vmem:[%s4858 + $0x112] sm:$0xff]
    %v5011 = vld [vmem:[%s4858 + $0x122] sm:$0xff]
    %v5012 = vld [vmem:[%s4858 + $0x12a] sm:$0xff]
    %v5013 = vld [vmem:[%s4858 + $0x13a] sm:$0xff]
    %v5014 = vld [vmem:[%s4858 + $0x142] sm:$0xff]
    %v5015 = vld [vmem:[%s4858 + $0x152] sm:$0xff]
    %v5016 = vld [vmem:[%s4858 + $0x15a] sm:$0xff]
    %v5017 = vld [vmem:[%s4858 + $0x16a] sm:$0xff]
    %v5018 = vld [vmem:[%s4858 + $0x172] sm:$0xff]
    %v5019 = vld [vmem:[%s4858 + $0x1b2] sm:$0xff]
    %v5020 = vld [vmem:[%s4858 + $0x1ba] sm:$0xff]
    %v5021 = vld [vmem:[%s4858 + $0x1ca] sm:$0xff]
    %v5022 = vld [vmem:[%s4858 + $0x1d2] sm:$0xff]
    %v5023 = vld [vmem:[%s4858 + $0x1e2] sm:$0xff]
    %v5024 = vld [vmem:[%s4858 + $0x1ea] sm:$0xff]
    %v5025 = vld [vmem:[%s4858 + $0x1fa] sm:$0xff]
    %v5026 = vld [vmem:[%s4858 + $0x202] sm:$0xff]
    %v5027 = vld [vmem:[%s4858 + $0x212] sm:$0xff]
    %v5028 = vld [vmem:[%s4858 + $0x21a] sm:$0xff]
    %v5029 = vld [vmem:[%s4858 + $0x22a] sm:$0xff]
    %v5030 = vld [vmem:[%s4858 + $0x232] sm:$0xff]
    %v5031 = vld [vmem:[%s4858 + $0x242] sm:$0xff]
    %v5032 = vld [vmem:[%s4858 + $0x24a] sm:$0xff]
    %v5033 = vld [vmem:[%s4858 + $0x25a] sm:$0xff]
    %v5034 = vld [vmem:[%s4858 + $0x262] sm:$0xff]
    %v5035 = vld [vmem:[%s4858 + $0x272] sm:$0xff]
    %v5036 = vld [vmem:[%s4858 + $0x27a] sm:$0xff]
    %v5037 = vld [vmem:[%s4858 + $0x28a] sm:$0xff]
    %v5038 = vld [vmem:[%s4858 + $0x292] sm:$0xff]
    %v5039 = vld [vmem:[%s4858 + $0x2a2] sm:$0xff]
    %v5040 = vld [vmem:[%s4858 + $0x2aa] sm:$0xff]
    %v5041 = vld [vmem:[%s4858 + $0x2ba] sm:$0xff]
    %v5042 = vld [vmem:[%s4858 + $0x2c2] sm:$0xff]
    %v5043 = vld [vmem:[%s4858 + $0x2d2] sm:$0xff]
    %v5044 = vld [vmem:[%s4858 + $0x2da] sm:$0xff]
    %v5045 = vld [vmem:[%s4858 + $0x2ea] sm:$0xff]
    %v5046 = vld [vmem:[%s4858 + $0x2f2] sm:$0xff]
    %v5047 = vld [vmem:[%s4858 + $0x302] sm:$0xff]
    %v5048 = vld [vmem:[%s4858 + $0x30a] sm:$0xff]
    %v5049 = vld [vmem:[%s4858 + $0x31a] sm:$0xff]
    %v5050 = vld [vmem:[%s4858 + $0x322] sm:$0xff]
    %5115 = vrot.lane.b32.xlu0 %v4538, 8
    %v5116 = vpop.permute.xlu0 %5115
    %5117 = vrot.lane.b32.xlu0 %v4539, 8
    %v5118 = vpop.permute.xlu0 %5117
    %5119 = vrot.lane.b32.xlu0 %v4540, 8
    %v5120 = vpop.permute.xlu0 %5119
    %5121 = vrot.lane.b32.xlu0 %v4541, 8
    %v5122 = vpop.permute.xlu0 %5121
    %5123 = vrot.lane.b32.xlu0 %v4542, 8
    %v5124 = vpop.permute.xlu0 %5123
    %5125 = vrot.lane.b32.xlu0 %v4543, 8
    %v5126 = vpop.permute.xlu0 %5125
    %5127 = vrot.lane.b32.xlu0 %v4544, 8
    %v5128 = vpop.permute.xlu0 %5127
    %5129 = vrot.lane.b32.xlu0 %v4545, 8
    %v5130 = vpop.permute.xlu0 %5129
    %5131 = vrot.lane.b32.xlu0 %v4546, 8
    %v5132 = vpop.permute.xlu0 %5131
    %5133 = vrot.lane.b32.xlu0 %v4547, 8
    %v5134 = vpop.permute.xlu0 %5133
    %5135 = vrot.lane.b32.xlu0 %v4548, 8
    %v5136 = vpop.permute.xlu0 %5135
    %5137 = vrot.lane.b32.xlu0 %v4549, 8
    %v5138 = vpop.permute.xlu0 %5137
    %5139 = vrot.lane.b32.xlu0 %v4550, 8
    %v5140 = vpop.permute.xlu0 %5139
    %5141 = vrot.lane.b32.xlu0 %v4551, 8
    %v5142 = vpop.permute.xlu0 %5141
    %5143 = vrot.lane.b32.xlu0 %v4552, 8
    %v5144 = vpop.permute.xlu0 %5143
    %5145 = vrot.lane.b32.xlu0 %v4553, 8
    %v5146 = vpop.permute.xlu0 %5145
    %5147 = vrot.lane.b32.xlu0 %v4554, 8
    %v5148 = vpop.permute.xlu0 %5147
    %5149 = vrot.lane.b32.xlu0 %v4555, 8
    %v5150 = vpop.permute.xlu0 %5149
    %5151 = vrot.lane.b32.xlu0 %v4556, 8
    %v5152 = vpop.permute.xlu0 %5151
    %5153 = vrot.lane.b32.xlu0 %v4557, 8
    %v5154 = vpop.permute.xlu0 %5153
    %5155 = vrot.lane.b32.xlu0 %v4558, 8
    %v5156 = vpop.permute.xlu0 %5155
    %5157 = vrot.lane.b32.xlu0 %v4559, 8
    %v5158 = vpop.permute.xlu0 %5157
    %5159 = vrot.lane.b32.xlu0 %v4560, 8
    %v5160 = vpop.permute.xlu0 %5159
    %5161 = vrot.lane.b32.xlu0 %v4561, 8
    %v5162 = vpop.permute.xlu0 %5161
    %5163 = vrot.lane.b32.xlu0 %v4562, 8
    %v5164 = vpop.permute.xlu0 %5163
    %5165 = vrot.lane.b32.xlu0 %v4563, 8
    %v5166 = vpop.permute.xlu0 %5165
    %5167 = vrot.lane.b32.xlu0 %v4564, 8
    %v5168 = vpop.permute.xlu0 %5167
    %5169 = vrot.lane.b32.xlu0 %v4565, 8
    %v5170 = vpop.permute.xlu0 %5169
    %5171 = vrot.lane.b32.xlu0 %v4566, 8
    %v5172 = vpop.permute.xlu0 %5171
    %5173 = vrot.lane.b32.xlu0 %v4567, 8
    %v5174 = vpop.permute.xlu0 %5173
    %5175 = vrot.lane.b32.xlu0 %v4568, 8
    %v5176 = vpop.permute.xlu0 %5175
    %5177 = vrot.lane.b32.xlu0 %v4569, 8
    %v5178 = vpop.permute.xlu0 %5177
    %5179 = vrot.lane.b32.xlu0 %v4570, 8
    %v5180 = vpop.permute.xlu0 %5179
    %5181 = vrot.lane.b32.xlu0 %v4571, 8
    %v5182 = vpop.permute.xlu0 %5181
    %5183 = vrot.lane.b32.xlu0 %v4572, 8
    %v5184 = vpop.permute.xlu0 %5183
    %5185 = vrot.lane.b32.xlu0 %v4573, 8
    %v5186 = vpop.permute.xlu0 %5185
    %5187 = vrot.lane.b32.xlu0 %v4574, 8
    %v5188 = vpop.permute.xlu0 %5187
    %5189 = vrot.lane.b32.xlu0 %v4575, 8
    %v5190 = vpop.permute.xlu0 %5189
    %5191 = vrot.lane.b32.xlu0 %v4576, 8
    %v5192 = vpop.permute.xlu0 %5191
    %5193 = vrot.lane.b32.xlu0 %v4577, 8
    %v5194 = vpop.permute.xlu0 %5193
    %5195 = vrot.lane.b32.xlu0 %v4578, 8
    %v5196 = vpop.permute.xlu0 %5195
    %5197 = vrot.lane.b32.xlu0 %v4579, 8
    %v5198 = vpop.permute.xlu0 %5197
    %5199 = vrot.lane.b32.xlu0 %v4580, 8
    %v5200 = vpop.permute.xlu0 %5199
    %5201 = vrot.lane.b32.xlu0 %v4581, 8
    %v5202 = vpop.permute.xlu0 %5201
    %5203 = vrot.lane.b32.xlu0 %v4582, 8
    %v5204 = vpop.permute.xlu0 %5203
    %5205 = vrot.lane.b32.xlu0 %v4583, 8
    %v5206 = vpop.permute.xlu0 %5205
    %5207 = vrot.lane.b32.xlu0 %v4584, 8
    %v5208 = vpop.permute.xlu0 %5207
    %5209 = vrot.lane.b32.xlu0 %v4585, 8
    %v5210 = vpop.permute.xlu0 %5209
    %5211 = vrot.lane.b32.xlu0 %v4586, 8
    %v5212 = vpop.permute.xlu0 %5211
    %5213 = vrot.lane.b32.xlu0 %v4587, 8
    %v5214 = vpop.permute.xlu0 %5213
    %5215 = vrot.lane.b32.xlu0 %v4588, 8
    %v5216 = vpop.permute.xlu0 %5215
    %5217 = vrot.lane.b32.xlu0 %v4589, 8
    %v5218 = vpop.permute.xlu0 %5217
    %5219 = vrot.lane.b32.xlu0 %v4590, 8
    %v5220 = vpop.permute.xlu0 %5219
    %5221 = vrot.lane.b32.xlu0 %v4591, 8
    %v5222 = vpop.permute.xlu0 %5221
    %5223 = vrot.lane.b32.xlu0 %v4592, 8
    %v5224 = vpop.permute.xlu0 %5223
    %5225 = vrot.lane.b32.xlu0 %v4593, 8
    %v5226 = vpop.permute.xlu0 %5225
    %5227 = vrot.lane.b32.xlu0 %v4594, 8
    %v5228 = vpop.permute.xlu0 %5227
    %5229 = vrot.lane.b32.xlu0 %v4595, 8
    %v5230 = vpop.permute.xlu0 %5229
    %5231 = vrot.lane.b32.xlu0 %v4596, 8
    %v5232 = vpop.permute.xlu0 %5231
    %5233 = vrot.lane.b32.xlu0 %v4597, 8
    %v5234 = vpop.permute.xlu0 %5233
    %5235 = vrot.lane.b32.xlu0 %v4598, 8
    %v5236 = vpop.permute.xlu0 %5235
    %5237 = vrot.lane.b32.xlu0 %v4599, 8
    %v5238 = vpop.permute.xlu0 %5237
    %5239 = vrot.lane.b32.xlu0 %v4600, 8
    %v5240 = vpop.permute.xlu0 %5239
    %5241 = vrot.lane.b32.xlu0 %v4601, 8
    %v5242 = vpop.permute.xlu0 %5241
    %5371 = vrot.lane.b32.xlu0 %v4602, 16
    %v5372 = vpop.permute.xlu0 %5371
    %5373 = vrot.lane.b32.xlu0 %v4603, 16
    %v5374 = vpop.permute.xlu0 %5373
    %5375 = vrot.lane.b32.xlu0 %v4604, 16
    %v5376 = vpop.permute.xlu0 %5375
    %5377 = vrot.lane.b32.xlu0 %v4605, 16
    %v5378 = vpop.permute.xlu0 %5377
    %5379 = vrot.lane.b32.xlu0 %v4606, 16
    %v5380 = vpop.permute.xlu0 %5379
    %5381 = vrot.lane.b32.xlu0 %v4607, 16
    %v5382 = vpop.permute.xlu0 %5381
    %5383 = vrot.lane.b32.xlu0 %v4608, 16
    %v5384 = vpop.permute.xlu0 %5383
    %5385 = vrot.lane.b32.xlu0 %v4609, 16
    %v5386 = vpop.permute.xlu0 %5385
    %5387 = vrot.lane.b32.xlu0 %v4610, 16
    %v5388 = vpop.permute.xlu0 %5387
    %5389 = vrot.lane.b32.xlu0 %v4611, 16
    %v5390 = vpop.permute.xlu0 %5389
    %5391 = vrot.lane.b32.xlu0 %v4612, 16
    %v5392 = vpop.permute.xlu0 %5391
    %5393 = vrot.lane.b32.xlu0 %v4613, 16
    %v5394 = vpop.permute.xlu0 %5393
    %5395 = vrot.lane.b32.xlu0 %v4614, 16
    %v5396 = vpop.permute.xlu0 %5395
    %5397 = vrot.lane.b32.xlu0 %v4615, 16
    %v5398 = vpop.permute.xlu0 %5397
    %5399 = vrot.lane.b32.xlu0 %v4616, 16
    %v5400 = vpop.permute.xlu0 %5399
    %5401 = vrot.lane.b32.xlu0 %v4617, 16
    %v5402 = vpop.permute.xlu0 %5401
    %5403 = vrot.lane.b32.xlu0 %v4618, 16
    %v5404 = vpop.permute.xlu0 %5403
    %5405 = vrot.lane.b32.xlu0 %v4619, 16
    %v5406 = vpop.permute.xlu0 %5405
    %5407 = vrot.lane.b32.xlu0 %v4620, 16
    %v5408 = vpop.permute.xlu0 %5407
    %5409 = vrot.lane.b32.xlu0 %v4621, 16
    %v5410 = vpop.permute.xlu0 %5409
    %5411 = vrot.lane.b32.xlu0 %v4622, 16
    %v5412 = vpop.permute.xlu0 %5411
    %5413 = vrot.lane.b32.xlu0 %v4623, 16
    %v5414 = vpop.permute.xlu0 %5413
    %5415 = vrot.lane.b32.xlu0 %v4624, 16
    %v5416 = vpop.permute.xlu0 %5415
    %5417 = vrot.lane.b32.xlu0 %v4625, 16
    %v5418 = vpop.permute.xlu0 %5417
    %5419 = vrot.lane.b32.xlu0 %v4626, 16
    %v5420 = vpop.permute.xlu0 %5419
    %5421 = vrot.lane.b32.xlu0 %v4627, 16
    %v5422 = vpop.permute.xlu0 %5421
    %5423 = vrot.lane.b32.xlu0 %v4628, 16
    %v5424 = vpop.permute.xlu0 %5423
    %5425 = vrot.lane.b32.xlu0 %v4629, 16
    %v5426 = vpop.permute.xlu0 %5425
    %5427 = vrot.lane.b32.xlu0 %v4630, 16
    %v5428 = vpop.permute.xlu0 %5427
    %5429 = vrot.lane.b32.xlu0 %v4631, 16
    %v5430 = vpop.permute.xlu0 %5429
    %5431 = vrot.lane.b32.xlu0 %v4632, 16
    %v5432 = vpop.permute.xlu0 %5431
    %5433 = vrot.lane.b32.xlu0 %v4633, 16
    %v5434 = vpop.permute.xlu0 %5433
    %5435 = vrot.lane.b32.xlu0 %v4634, 16
    %v5436 = vpop.permute.xlu0 %5435
    %5437 = vrot.lane.b32.xlu0 %v4635, 16
    %v5438 = vpop.permute.xlu0 %5437
    %5439 = vrot.lane.b32.xlu0 %v4636, 16
    %v5440 = vpop.permute.xlu0 %5439
    %5441 = vrot.lane.b32.xlu0 %v4637, 16
    %v5442 = vpop.permute.xlu0 %5441
    %5443 = vrot.lane.b32.xlu0 %v4638, 16
    %v5444 = vpop.permute.xlu0 %5443
    %5445 = vrot.lane.b32.xlu0 %v4639, 16
    %v5446 = vpop.permute.xlu0 %5445
    %5447 = vrot.lane.b32.xlu0 %v4640, 16
    %v5448 = vpop.permute.xlu0 %5447
    %5449 = vrot.lane.b32.xlu0 %v4641, 16
    %v5450 = vpop.permute.xlu0 %5449
    %5451 = vrot.lane.b32.xlu0 %v4642, 16
    %v5452 = vpop.permute.xlu0 %5451
    %5453 = vrot.lane.b32.xlu0 %v4643, 16
    %v5454 = vpop.permute.xlu0 %5453
    %5455 = vrot.lane.b32.xlu0 %v4644, 16
    %v5456 = vpop.permute.xlu0 %5455
    %5457 = vrot.lane.b32.xlu0 %v4645, 16
    %v5458 = vpop.permute.xlu0 %5457
    %5459 = vrot.lane.b32.xlu0 %v4646, 16
    %v5460 = vpop.permute.xlu0 %5459
    %5461 = vrot.lane.b32.xlu0 %v4647, 16
    %v5462 = vpop.permute.xlu0 %5461
    %5463 = vrot.lane.b32.xlu0 %v4648, 16
    %v5464 = vpop.permute.xlu0 %5463
    %5465 = vrot.lane.b32.xlu0 %v4649, 16
    %v5466 = vpop.permute.xlu0 %5465
    %5467 = vrot.lane.b32.xlu0 %v4650, 16
    %v5468 = vpop.permute.xlu0 %5467
    %5469 = vrot.lane.b32.xlu0 %v4651, 16
    %v5470 = vpop.permute.xlu0 %5469
    %5471 = vrot.lane.b32.xlu0 %v4652, 16
    %v5472 = vpop.permute.xlu0 %5471
    %5473 = vrot.lane.b32.xlu0 %v4653, 16
    %v5474 = vpop.permute.xlu0 %5473
    %5475 = vrot.lane.b32.xlu0 %v4654, 16
    %v5476 = vpop.permute.xlu0 %5475
    %5477 = vrot.lane.b32.xlu0 %v4655, 16
    %v5478 = vpop.permute.xlu0 %5477
    %5479 = vrot.lane.b32.xlu0 %v4656, 16
    %v5480 = vpop.permute.xlu0 %5479
    %5481 = vrot.lane.b32.xlu0 %v4657, 16
    %v5482 = vpop.permute.xlu0 %5481
    %5483 = vrot.lane.b32.xlu0 %v4658, 16
    %v5484 = vpop.permute.xlu0 %5483
    %5485 = vrot.lane.b32.xlu0 %v4659, 16
    %v5486 = vpop.permute.xlu0 %5485
    %5487 = vrot.lane.b32.xlu0 %v4660, 16
    %v5488 = vpop.permute.xlu0 %5487
    %5489 = vrot.lane.b32.xlu0 %v4661, 16
    %v5490 = vpop.permute.xlu0 %5489
    %5491 = vrot.lane.b32.xlu0 %v4662, 16
    %v5492 = vpop.permute.xlu0 %5491
    %5493 = vrot.lane.b32.xlu0 %v4663, 16
    %v5494 = vpop.permute.xlu0 %5493
    %5495 = vrot.lane.b32.xlu0 %v4664, 16
    %v5496 = vpop.permute.xlu0 %5495
    %5497 = vrot.lane.b32.xlu0 %v4665, 16
    %v5498 = vpop.permute.xlu0 %5497
    %5627 = vrot.lane.b32.xlu0 %v4666, 24
    %v5628 = vpop.permute.xlu0 %5627
    %5629 = vrot.lane.b32.xlu0 %v4667, 24
    %v5630 = vpop.permute.xlu0 %5629
    %5631 = vrot.lane.b32.xlu0 %v4668, 24
    %v5632 = vpop.permute.xlu0 %5631
    %5633 = vrot.lane.b32.xlu0 %v4669, 24
    %v5634 = vpop.permute.xlu0 %5633
    %5635 = vrot.lane.b32.xlu0 %v4670, 24
    %v5636 = vpop.permute.xlu0 %5635
    %5637 = vrot.lane.b32.xlu0 %v4671, 24
    %v5638 = vpop.permute.xlu0 %5637
    %5639 = vrot.lane.b32.xlu0 %v4672, 24
    %v5640 = vpop.permute.xlu0 %5639
    %5641 = vrot.lane.b32.xlu0 %v4673, 24
    %v5642 = vpop.permute.xlu0 %5641
    %5643 = vrot.lane.b32.xlu0 %v4674, 24
    %v5644 = vpop.permute.xlu0 %5643
    %5645 = vrot.lane.b32.xlu0 %v4675, 24
    %v5646 = vpop.permute.xlu0 %5645
    %5647 = vrot.lane.b32.xlu0 %v4676, 24
    %v5648 = vpop.permute.xlu0 %5647
    %5649 = vrot.lane.b32.xlu0 %v4677, 24
    %v5650 = vpop.permute.xlu0 %5649
    %5651 = vrot.lane.b32.xlu0 %v4678, 24
    %v5652 = vpop.permute.xlu0 %5651
    %5653 = vrot.lane.b32.xlu0 %v4679, 24
    %v5654 = vpop.permute.xlu0 %5653
    %5655 = vrot.lane.b32.xlu0 %v4680, 24
    %v5656 = vpop.permute.xlu0 %5655
    %5657 = vrot.lane.b32.xlu0 %v4681, 24
    %v5658 = vpop.permute.xlu0 %5657
    %5659 = vrot.lane.b32.xlu0 %v4682, 24
    %v5660 = vpop.permute.xlu0 %5659
    %5661 = vrot.lane.b32.xlu0 %v4683, 24
    %v5662 = vpop.permute.xlu0 %5661
    %5663 = vrot.lane.b32.xlu0 %v4684, 24
    %v5664 = vpop.permute.xlu0 %5663
    %5665 = vrot.lane.b32.xlu0 %v4685, 24
    %v5666 = vpop.permute.xlu0 %5665
    %5667 = vrot.lane.b32.xlu0 %v4686, 24
    %v5668 = vpop.permute.xlu0 %5667
    %5669 = vrot.lane.b32.xlu0 %v4687, 24
    %v5670 = vpop.permute.xlu0 %5669
    %5671 = vrot.lane.b32.xlu0 %v4688, 24
    %v5672 = vpop.permute.xlu0 %5671
    %5673 = vrot.lane.b32.xlu0 %v4689, 24
    %v5674 = vpop.permute.xlu0 %5673
    %5675 = vrot.lane.b32.xlu0 %v4690, 24
    %v5676 = vpop.permute.xlu0 %5675
    %5677 = vrot.lane.b32.xlu0 %v4691, 24
    %v5678 = vpop.permute.xlu0 %5677
    %5679 = vrot.lane.b32.xlu0 %v4692, 24
    %v5680 = vpop.permute.xlu0 %5679
    %5681 = vrot.lane.b32.xlu0 %v4693, 24
    %v5682 = vpop.permute.xlu0 %5681
    %5683 = vrot.lane.b32.xlu0 %v4694, 24
    %v5684 = vpop.permute.xlu0 %5683
    %5685 = vrot.lane.b32.xlu0 %v4695, 24
    %v5686 = vpop.permute.xlu0 %5685
    %5687 = vrot.lane.b32.xlu0 %v4696, 24
    %v5688 = vpop.permute.xlu0 %5687
    %5689 = vrot.lane.b32.xlu0 %v4697, 24
    %v5690 = vpop.permute.xlu0 %5689
    %5691 = vrot.lane.b32.xlu0 %v4698, 24
    %v5692 = vpop.permute.xlu0 %5691
    %5693 = vrot.lane.b32.xlu0 %v4699, 24
    %v5694 = vpop.permute.xlu0 %5693
    %5695 = vrot.lane.b32.xlu0 %v4700, 24
    %v5696 = vpop.permute.xlu0 %5695
    %5697 = vrot.lane.b32.xlu0 %v4701, 24
    %v5698 = vpop.permute.xlu0 %5697
    %5699 = vrot.lane.b32.xlu0 %v4702, 24
    %v5700 = vpop.permute.xlu0 %5699
    %5701 = vrot.lane.b32.xlu0 %v4703, 24
    %v5702 = vpop.permute.xlu0 %5701
    %5703 = vrot.lane.b32.xlu0 %v4704, 24
    %v5704 = vpop.permute.xlu0 %5703
    %5705 = vrot.lane.b32.xlu0 %v4705, 24
    %v5706 = vpop.permute.xlu0 %5705
    %5707 = vrot.lane.b32.xlu0 %v4706, 24
    %v5708 = vpop.permute.xlu0 %5707
    %5709 = vrot.lane.b32.xlu0 %v4707, 24
    %v5710 = vpop.permute.xlu0 %5709
    %5711 = vrot.lane.b32.xlu0 %v4708, 24
    %v5712 = vpop.permute.xlu0 %5711
    %5713 = vrot.lane.b32.xlu0 %v4709, 24
    %v5714 = vpop.permute.xlu0 %5713
    %5715 = vrot.lane.b32.xlu0 %v4710, 24
    %v5716 = vpop.permute.xlu0 %5715
    %5717 = vrot.lane.b32.xlu0 %v4711, 24
    %v5718 = vpop.permute.xlu0 %5717
    %5719 = vrot.lane.b32.xlu0 %v4712, 24
    %v5720 = vpop.permute.xlu0 %5719
    %5721 = vrot.lane.b32.xlu0 %v4713, 24
    %v5722 = vpop.permute.xlu0 %5721
    %5723 = vrot.lane.b32.xlu0 %v4714, 24
    %v5724 = vpop.permute.xlu0 %5723
    %5725 = vrot.lane.b32.xlu0 %v4715, 24
    %v5726 = vpop.permute.xlu0 %5725
    %5727 = vrot.lane.b32.xlu0 %v4716, 24
    %v5728 = vpop.permute.xlu0 %5727
    %5729 = vrot.lane.b32.xlu0 %v4717, 24
    %v5730 = vpop.permute.xlu0 %5729
    %5731 = vrot.lane.b32.xlu0 %v4718, 24
    %v5732 = vpop.permute.xlu0 %5731
    %5733 = vrot.lane.b32.xlu0 %v4719, 24
    %v5734 = vpop.permute.xlu0 %5733
    %5735 = vrot.lane.b32.xlu0 %v4720, 24
    %v5736 = vpop.permute.xlu0 %5735
    %5737 = vrot.lane.b32.xlu0 %v4721, 24
    %v5738 = vpop.permute.xlu0 %5737
    %5739 = vrot.lane.b32.xlu0 %v4722, 24
    %v5740 = vpop.permute.xlu0 %5739
    %5741 = vrot.lane.b32.xlu0 %v4723, 24
    %v5742 = vpop.permute.xlu0 %5741
    %5743 = vrot.lane.b32.xlu0 %v4724, 24
    %v5744 = vpop.permute.xlu0 %5743
    %5745 = vrot.lane.b32.xlu0 %v4725, 24
    %v5746 = vpop.permute.xlu0 %5745
    %5747 = vrot.lane.b32.xlu0 %v4726, 24
    %v5748 = vpop.permute.xlu0 %5747
    %5749 = vrot.lane.b32.xlu0 %v4727, 24
    %v5750 = vpop.permute.xlu0 %5749
    %5751 = vrot.lane.b32.xlu0 %v4728, 24
    %v5752 = vpop.permute.xlu0 %5751
    %5753 = vrot.lane.b32.xlu0 %v4729, 24
    %v5754 = vpop.permute.xlu0 %5753
    %5883 = vrot.lane.b32.xlu0 %v4730, 32
    %v5884 = vpop.permute.xlu0 %5883
    %5885 = vrot.lane.b32.xlu0 %v4731, 32
    %v5886 = vpop.permute.xlu0 %5885
    %5887 = vrot.lane.b32.xlu0 %v4732, 32
    %v5888 = vpop.permute.xlu0 %5887
    %5889 = vrot.lane.b32.xlu0 %v4733, 32
    %v5890 = vpop.permute.xlu0 %5889
    %5891 = vrot.lane.b32.xlu0 %v4734, 32
    %v5892 = vpop.permute.xlu0 %5891
    %5893 = vrot.lane.b32.xlu0 %v4735, 32
    %v5894 = vpop.permute.xlu0 %5893
    %5895 = vrot.lane.b32.xlu0 %v4736, 32
    %v5896 = vpop.permute.xlu0 %5895
    %5897 = vrot.lane.b32.xlu0 %v4737, 32
    %v5898 = vpop.permute.xlu0 %5897
    %5899 = vrot.lane.b32.xlu0 %v4738, 32
    %v5900 = vpop.permute.xlu0 %5899
    %5901 = vrot.lane.b32.xlu0 %v4739, 32
    %v5902 = vpop.permute.xlu0 %5901
    %5903 = vrot.lane.b32.xlu0 %v4740, 32
    %v5904 = vpop.permute.xlu0 %5903
    %5905 = vrot.lane.b32.xlu0 %v4741, 32
    %v5906 = vpop.permute.xlu0 %5905
    %5907 = vrot.lane.b32.xlu0 %v4742, 32
    %v5908 = vpop.permute.xlu0 %5907
    %5909 = vrot.lane.b32.xlu0 %v4743, 32
    %v5910 = vpop.permute.xlu0 %5909
    %5911 = vrot.lane.b32.xlu0 %v4744, 32
    %v5912 = vpop.permute.xlu0 %5911
    %5913 = vrot.lane.b32.xlu0 %v4745, 32
    %v5914 = vpop.permute.xlu0 %5913
    %5915 = vrot.lane.b32.xlu0 %v4746, 32
    %v5916 = vpop.permute.xlu0 %5915
    %5917 = vrot.lane.b32.xlu0 %v4747, 32
    %v5918 = vpop.permute.xlu0 %5917
    %5919 = vrot.lane.b32.xlu0 %v4748, 32
    %v5920 = vpop.permute.xlu0 %5919
    %5921 = vrot.lane.b32.xlu0 %v4749, 32
    %v5922 = vpop.permute.xlu0 %5921
    %5923 = vrot.lane.b32.xlu0 %v4750, 32
    %v5924 = vpop.permute.xlu0 %5923
    %5925 = vrot.lane.b32.xlu0 %v4751, 32
    %v5926 = vpop.permute.xlu0 %5925
    %5927 = vrot.lane.b32.xlu0 %v4752, 32
    %v5928 = vpop.permute.xlu0 %5927
    %5929 = vrot.lane.b32.xlu0 %v4753, 32
    %v5930 = vpop.permute.xlu0 %5929
    %5931 = vrot.lane.b32.xlu0 %v4754, 32
    %v5932 = vpop.permute.xlu0 %5931
    %5933 = vrot.lane.b32.xlu0 %v4755, 32
    %v5934 = vpop.permute.xlu0 %5933
    %5935 = vrot.lane.b32.xlu0 %v4756, 32
    %v5936 = vpop.permute.xlu0 %5935
    %5937 = vrot.lane.b32.xlu0 %v4757, 32
    %v5938 = vpop.permute.xlu0 %5937
    %5939 = vrot.lane.b32.xlu0 %v4758, 32
    %v5940 = vpop.permute.xlu0 %5939
    %5941 = vrot.lane.b32.xlu0 %v4759, 32
    %v5942 = vpop.permute.xlu0 %5941
    %5943 = vrot.lane.b32.xlu0 %v4760, 32
    %v5944 = vpop.permute.xlu0 %5943
    %5945 = vrot.lane.b32.xlu0 %v4761, 32
    %v5946 = vpop.permute.xlu0 %5945
    %5947 = vrot.lane.b32.xlu0 %v4762, 32
    %v5948 = vpop.permute.xlu0 %5947
    %5949 = vrot.lane.b32.xlu0 %v4763, 32
    %v5950 = vpop.permute.xlu0 %5949
    %5951 = vrot.lane.b32.xlu0 %v4764, 32
    %v5952 = vpop.permute.xlu0 %5951
    %5953 = vrot.lane.b32.xlu0 %v4765, 32
    %v5954 = vpop.permute.xlu0 %5953
    %5955 = vrot.lane.b32.xlu0 %v4766, 32
    %v5956 = vpop.permute.xlu0 %5955
    %5957 = vrot.lane.b32.xlu0 %v4767, 32
    %v5958 = vpop.permute.xlu0 %5957
    %5959 = vrot.lane.b32.xlu0 %v4768, 32
    %v5960 = vpop.permute.xlu0 %5959
    %5961 = vrot.lane.b32.xlu0 %v4769, 32
    %v5962 = vpop.permute.xlu0 %5961
    %5963 = vrot.lane.b32.xlu0 %v4770, 32
    %v5964 = vpop.permute.xlu0 %5963
    %5965 = vrot.lane.b32.xlu0 %v4771, 32
    %v5966 = vpop.permute.xlu0 %5965
    %5967 = vrot.lane.b32.xlu0 %v4772, 32
    %v5968 = vpop.permute.xlu0 %5967
    %5969 = vrot.lane.b32.xlu0 %v4773, 32
    %v5970 = vpop.permute.xlu0 %5969
    %5971 = vrot.lane.b32.xlu0 %v4774, 32
    %v5972 = vpop.permute.xlu0 %5971
    %5973 = vrot.lane.b32.xlu0 %v4775, 32
    %v5974 = vpop.permute.xlu0 %5973
    %5975 = vrot.lane.b32.xlu0 %v4776, 32
    %v5976 = vpop.permute.xlu0 %5975
    %5977 = vrot.lane.b32.xlu0 %v4777, 32
    %v5978 = vpop.permute.xlu0 %5977
    %5979 = vrot.lane.b32.xlu0 %v4778, 32
    %v5980 = vpop.permute.xlu0 %5979
    %5981 = vrot.lane.b32.xlu0 %v4779, 32
    %v5982 = vpop.permute.xlu0 %5981
    %5983 = vrot.lane.b32.xlu0 %v4780, 32
    %v5984 = vpop.permute.xlu0 %5983
    %5985 = vrot.lane.b32.xlu0 %v4781, 32
    %v5986 = vpop.permute.xlu0 %5985
    %5987 = vrot.lane.b32.xlu0 %v4782, 32
    %v5988 = vpop.permute.xlu0 %5987
    %5989 = vrot.lane.b32.xlu0 %v4783, 32
    %v5990 = vpop.permute.xlu0 %5989
    %5991 = vrot.lane.b32.xlu0 %v4784, 32
    %v5992 = vpop.permute.xlu0 %5991
    %5993 = vrot.lane.b32.xlu0 %v4785, 32
    %v5994 = vpop.permute.xlu0 %5993
    %5995 = vrot.lane.b32.xlu0 %v4786, 32
    %v5996 = vpop.permute.xlu0 %5995
    %5997 = vrot.lane.b32.xlu0 %v4787, 32
    %v5998 = vpop.permute.xlu0 %5997
    %5999 = vrot.lane.b32.xlu0 %v4788, 32
    %v6000 = vpop.permute.xlu0 %5999
    %6001 = vrot.lane.b32.xlu0 %v4789, 32
    %v6002 = vpop.permute.xlu0 %6001
    %6003 = vrot.lane.b32.xlu0 %v4790, 32
    %v6004 = vpop.permute.xlu0 %6003
    %6005 = vrot.lane.b32.xlu0 %v4791, 32
    %v6006 = vpop.permute.xlu0 %6005
    %6007 = vrot.lane.b32.xlu0 %v4792, 32
    %v6008 = vpop.permute.xlu0 %6007
    %6009 = vrot.lane.b32.xlu0 %v4793, 32
    %v6010 = vpop.permute.xlu0 %6009
    %6139 = vrot.lane.b32.xlu0 %v4794, 40
    %v6140 = vpop.permute.xlu0 %6139
    %6141 = vrot.lane.b32.xlu0 %v4795, 40
    %v6142 = vpop.permute.xlu0 %6141
    %6143 = vrot.lane.b32.xlu0 %v4796, 40
    %v6144 = vpop.permute.xlu0 %6143
    %6145 = vrot.lane.b32.xlu0 %v4797, 40
    %v6146 = vpop.permute.xlu0 %6145
    %6147 = vrot.lane.b32.xlu0 %v4798, 40
    %v6148 = vpop.permute.xlu0 %6147
    %6149 = vrot.lane.b32.xlu0 %v4799, 40
    %v6150 = vpop.permute.xlu0 %6149
    %6151 = vrot.lane.b32.xlu0 %v4800, 40
    %v6152 = vpop.permute.xlu0 %6151
    %6153 = vrot.lane.b32.xlu0 %v4801, 40
    %v6154 = vpop.permute.xlu0 %6153
    %6155 = vrot.lane.b32.xlu0 %v4802, 40
    %v6156 = vpop.permute.xlu0 %6155
    %6157 = vrot.lane.b32.xlu0 %v4803, 40
    %v6158 = vpop.permute.xlu0 %6157
    %6159 = vrot.lane.b32.xlu0 %v4804, 40
    %v6160 = vpop.permute.xlu0 %6159
    %6161 = vrot.lane.b32.xlu0 %v4805, 40
    %v6162 = vpop.permute.xlu0 %6161
    %6163 = vrot.lane.b32.xlu0 %v4806, 40
    %v6164 = vpop.permute.xlu0 %6163
    %6165 = vrot.lane.b32.xlu0 %v4807, 40
    %v6166 = vpop.permute.xlu0 %6165
    %6167 = vrot.lane.b32.xlu0 %v4808, 40
    %v6168 = vpop.permute.xlu0 %6167
    %6169 = vrot.lane.b32.xlu0 %v4809, 40
    %v6170 = vpop.permute.xlu0 %6169
    %6171 = vrot.lane.b32.xlu0 %v4810, 40
    %v6172 = vpop.permute.xlu0 %6171
    %6173 = vrot.lane.b32.xlu0 %v4811, 40
    %v6174 = vpop.permute.xlu0 %6173
    %6175 = vrot.lane.b32.xlu0 %v4812, 40
    %v6176 = vpop.permute.xlu0 %6175
    %6177 = vrot.lane.b32.xlu0 %v4813, 40
    %v6178 = vpop.permute.xlu0 %6177
    %6179 = vrot.lane.b32.xlu0 %v4814, 40
    %v6180 = vpop.permute.xlu0 %6179
    %6181 = vrot.lane.b32.xlu0 %v4815, 40
    %v6182 = vpop.permute.xlu0 %6181
    %6183 = vrot.lane.b32.xlu0 %v4816, 40
    %v6184 = vpop.permute.xlu0 %6183
    %6185 = vrot.lane.b32.xlu0 %v4817, 40
    %v6186 = vpop.permute.xlu0 %6185
    %6187 = vrot.lane.b32.xlu0 %v4818, 40
    %v6188 = vpop.permute.xlu0 %6187
    %6189 = vrot.lane.b32.xlu0 %v4819, 40
    %v6190 = vpop.permute.xlu0 %6189
    %6191 = vrot.lane.b32.xlu0 %v4820, 40
    %v6192 = vpop.permute.xlu0 %6191
    %6193 = vrot.lane.b32.xlu0 %v4821, 40
    %v6194 = vpop.permute.xlu0 %6193
    %6195 = vrot.lane.b32.xlu0 %v4822, 40
    %v6196 = vpop.permute.xlu0 %6195
    %6197 = vrot.lane.b32.xlu0 %v4823, 40
    %v6198 = vpop.permute.xlu0 %6197
    %6199 = vrot.lane.b32.xlu0 %v4824, 40
    %v6200 = vpop.permute.xlu0 %6199
    %6201 = vrot.lane.b32.xlu0 %v4825, 40
    %v6202 = vpop.permute.xlu0 %6201
    %6203 = vrot.lane.b32.xlu0 %v4826, 40
    %v6204 = vpop.permute.xlu0 %6203
    %6205 = vrot.lane.b32.xlu0 %v4827, 40
    %v6206 = vpop.permute.xlu0 %6205
    %6207 = vrot.lane.b32.xlu0 %v4828, 40
    %v6208 = vpop.permute.xlu0 %6207
    %6209 = vrot.lane.b32.xlu0 %v4829, 40
    %v6210 = vpop.permute.xlu0 %6209
    %6211 = vrot.lane.b32.xlu0 %v4830, 40
    %v6212 = vpop.permute.xlu0 %6211
    %6213 = vrot.lane.b32.xlu0 %v4831, 40
    %v6214 = vpop.permute.xlu0 %6213
    %6215 = vrot.lane.b32.xlu0 %v4832, 40
    %v6216 = vpop.permute.xlu0 %6215
    %6217 = vrot.lane.b32.xlu0 %v4833, 40
    %v6218 = vpop.permute.xlu0 %6217
    %6219 = vrot.lane.b32.xlu0 %v4834, 40
    %v6220 = vpop.permute.xlu0 %6219
    %6221 = vrot.lane.b32.xlu0 %v4835, 40
    %v6222 = vpop.permute.xlu0 %6221
    %6223 = vrot.lane.b32.xlu0 %v4836, 40
    %v6224 = vpop.permute.xlu0 %6223
    %6225 = vrot.lane.b32.xlu0 %v4837, 40
    %v6226 = vpop.permute.xlu0 %6225
    %6227 = vrot.lane.b32.xlu0 %v4838, 40
    %v6228 = vpop.permute.xlu0 %6227
    %6229 = vrot.lane.b32.xlu0 %v4839, 40
    %v6230 = vpop.permute.xlu0 %6229
    %6231 = vrot.lane.b32.xlu0 %v4840, 40
    %v6232 = vpop.permute.xlu0 %6231
    %6233 = vrot.lane.b32.xlu0 %v4841, 40
    %v6234 = vpop.permute.xlu0 %6233
    %6235 = vrot.lane.b32.xlu0 %v4842, 40
    %v6236 = vpop.permute.xlu0 %6235
    %6237 = vrot.lane.b32.xlu0 %v4843, 40
    %v6238 = vpop.permute.xlu0 %6237
    %6239 = vrot.lane.b32.xlu0 %v4844, 40
    %v6240 = vpop.permute.xlu0 %6239
    %6241 = vrot.lane.b32.xlu0 %v4845, 40
    %v6242 = vpop.permute.xlu0 %6241
    %6243 = vrot.lane.b32.xlu0 %v4846, 40
    %v6244 = vpop.permute.xlu0 %6243
    %6245 = vrot.lane.b32.xlu0 %v4847, 40
    %v6246 = vpop.permute.xlu0 %6245
    %6247 = vrot.lane.b32.xlu0 %v4848, 40
    %v6248 = vpop.permute.xlu0 %6247
    %6249 = vrot.lane.b32.xlu0 %v4849, 40
    %v6250 = vpop.permute.xlu0 %6249
    %6251 = vrot.lane.b32.xlu0 %v4850, 40
    %v6252 = vpop.permute.xlu0 %6251
    %6253 = vrot.lane.b32.xlu0 %v4851, 40
    %v6254 = vpop.permute.xlu0 %6253
    %6255 = vrot.lane.b32.xlu0 %v4852, 40
    %v6256 = vpop.permute.xlu0 %6255
    %6257 = vrot.lane.b32.xlu0 %v4853, 40
    %v6258 = vpop.permute.xlu0 %6257
    %6259 = vrot.lane.b32.xlu0 %v4854, 40
    %v6260 = vpop.permute.xlu0 %6259
    %6261 = vrot.lane.b32.xlu0 %v4855, 40
    %v6262 = vpop.permute.xlu0 %6261
    %6263 = vrot.lane.b32.xlu0 %v4856, 40
    %v6264 = vpop.permute.xlu0 %6263
    %6265 = vrot.lane.b32.xlu0 %v4857, 40
    %v6266 = vpop.permute.xlu0 %6265
    %6395 = vrot.lane.b32.xlu0 %v4859, 48
    %v6396 = vpop.permute.xlu0 %6395
    %6397 = vrot.lane.b32.xlu0 %v4860, 48
    %v6398 = vpop.permute.xlu0 %6397
    %6399 = vrot.lane.b32.xlu0 %v4861, 48
    %v6400 = vpop.permute.xlu0 %6399
    %6401 = vrot.lane.b32.xlu0 %v4862, 48
    %v6402 = vpop.permute.xlu0 %6401
    %6403 = vrot.lane.b32.xlu0 %v4863, 48
    %v6404 = vpop.permute.xlu0 %6403
    %6405 = vrot.lane.b32.xlu0 %v4864, 48
    %v6406 = vpop.permute.xlu0 %6405
    %6407 = vrot.lane.b32.xlu0 %v4865, 48
    %v6408 = vpop.permute.xlu0 %6407
    %6409 = vrot.lane.b32.xlu0 %v4866, 48
    %v6410 = vpop.permute.xlu0 %6409
    %6411 = vrot.lane.b32.xlu0 %v4867, 48
    %v6412 = vpop.permute.xlu0 %6411
    %6413 = vrot.lane.b32.xlu0 %v4868, 48
    %v6414 = vpop.permute.xlu0 %6413
    %6415 = vrot.lane.b32.xlu0 %v4869, 48
    %v6416 = vpop.permute.xlu0 %6415
    %6417 = vrot.lane.b32.xlu0 %v4870, 48
    %v6418 = vpop.permute.xlu0 %6417
    %6419 = vrot.lane.b32.xlu0 %v4871, 48
    %v6420 = vpop.permute.xlu0 %6419
    %6421 = vrot.lane.b32.xlu0 %v4872, 48
    %v6422 = vpop.permute.xlu0 %6421
    %6423 = vrot.lane.b32.xlu0 %v4873, 48
    %v6424 = vpop.permute.xlu0 %6423
    %6425 = vrot.lane.b32.xlu0 %v4874, 48
    %v6426 = vpop.permute.xlu0 %6425
    %6427 = vrot.lane.b32.xlu0 %v4875, 48
    %v6428 = vpop.permute.xlu0 %6427
    %6429 = vrot.lane.b32.xlu0 %v4876, 48
    %v6430 = vpop.permute.xlu0 %6429
    %6431 = vrot.lane.b32.xlu0 %v4877, 48
    %v6432 = vpop.permute.xlu0 %6431
    %6433 = vrot.lane.b32.xlu0 %v4878, 48
    %v6434 = vpop.permute.xlu0 %6433
    %6435 = vrot.lane.b32.xlu0 %v4879, 48
    %v6436 = vpop.permute.xlu0 %6435
    %6437 = vrot.lane.b32.xlu0 %v4880, 48
    %v6438 = vpop.permute.xlu0 %6437
    %6439 = vrot.lane.b32.xlu0 %v4881, 48
    %v6440 = vpop.permute.xlu0 %6439
    %6441 = vrot.lane.b32.xlu0 %v4882, 48
    %v6442 = vpop.permute.xlu0 %6441
    %6443 = vrot.lane.b32.xlu0 %v4883, 48
    %v6444 = vpop.permute.xlu0 %6443
    %6445 = vrot.lane.b32.xlu0 %v4884, 48
    %v6446 = vpop.permute.xlu0 %6445
    %6447 = vrot.lane.b32.xlu0 %v4885, 48
    %v6448 = vpop.permute.xlu0 %6447
    %6449 = vrot.lane.b32.xlu0 %v4886, 48
    %v6450 = vpop.permute.xlu0 %6449
    %6451 = vrot.lane.b32.xlu0 %v4887, 48
    %v6452 = vpop.permute.xlu0 %6451
    %6453 = vrot.lane.b32.xlu0 %v4888, 48
    %v6454 = vpop.permute.xlu0 %6453
    %6455 = vrot.lane.b32.xlu0 %v4889, 48
    %v6456 = vpop.permute.xlu0 %6455
    %6457 = vrot.lane.b32.xlu0 %v4890, 48
    %v6458 = vpop.permute.xlu0 %6457
    %6459 = vrot.lane.b32.xlu0 %v4891, 48
    %v6460 = vpop.permute.xlu0 %6459
    %6461 = vrot.lane.b32.xlu0 %v4892, 48
    %v6462 = vpop.permute.xlu0 %6461
    %6463 = vrot.lane.b32.xlu0 %v4893, 48
    %v6464 = vpop.permute.xlu0 %6463
    %6465 = vrot.lane.b32.xlu0 %v4894, 48
    %v6466 = vpop.permute.xlu0 %6465
    %6467 = vrot.lane.b32.xlu0 %v4895, 48
    %v6468 = vpop.permute.xlu0 %6467
    %6469 = vrot.lane.b32.xlu0 %v4896, 48
    %v6470 = vpop.permute.xlu0 %6469
    %6471 = vrot.lane.b32.xlu0 %v4897, 48
    %v6472 = vpop.permute.xlu0 %6471
    %6473 = vrot.lane.b32.xlu0 %v4898, 48
    %v6474 = vpop.permute.xlu0 %6473
    %6475 = vrot.lane.b32.xlu0 %v4899, 48
    %v6476 = vpop.permute.xlu0 %6475
    %6477 = vrot.lane.b32.xlu0 %v4900, 48
    %v6478 = vpop.permute.xlu0 %6477
    %6479 = vrot.lane.b32.xlu0 %v4901, 48
    %v6480 = vpop.permute.xlu0 %6479
    %6481 = vrot.lane.b32.xlu0 %v4902, 48
    %v6482 = vpop.permute.xlu0 %6481
    %6483 = vrot.lane.b32.xlu0 %v4903, 48
    %v6484 = vpop.permute.xlu0 %6483
    %6485 = vrot.lane.b32.xlu0 %v4904, 48
    %v6486 = vpop.permute.xlu0 %6485
    %6487 = vrot.lane.b32.xlu0 %v4905, 48
    %v6488 = vpop.permute.xlu0 %6487
    %6489 = vrot.lane.b32.xlu0 %v4906, 48
    %v6490 = vpop.permute.xlu0 %6489
    %6491 = vrot.lane.b32.xlu0 %v4907, 48
    %v6492 = vpop.permute.xlu0 %6491
    %6493 = vrot.lane.b32.xlu0 %v4908, 48
    %v6494 = vpop.permute.xlu0 %6493
    %6495 = vrot.lane.b32.xlu0 %v4909, 48
    %v6496 = vpop.permute.xlu0 %6495
    %6497 = vrot.lane.b32.xlu0 %v4910, 48
    %v6498 = vpop.permute.xlu0 %6497
    %6499 = vrot.lane.b32.xlu0 %v4911, 48
    %v6500 = vpop.permute.xlu0 %6499
    %6501 = vrot.lane.b32.xlu0 %v4912, 48
    %v6502 = vpop.permute.xlu0 %6501
    %6503 = vrot.lane.b32.xlu0 %v4913, 48
    %v6504 = vpop.permute.xlu0 %6503
    %6505 = vrot.lane.b32.xlu0 %v4914, 48
    %v6506 = vpop.permute.xlu0 %6505
    %6507 = vrot.lane.b32.xlu0 %v4915, 48
    %v6508 = vpop.permute.xlu0 %6507
    %6509 = vrot.lane.b32.xlu0 %v4916, 48
    %v6510 = vpop.permute.xlu0 %6509
    %6511 = vrot.lane.b32.xlu0 %v4917, 48
    %v6512 = vpop.permute.xlu0 %6511
    %6513 = vrot.lane.b32.xlu0 %v4918, 48
    %v6514 = vpop.permute.xlu0 %6513
    %6515 = vrot.lane.b32.xlu0 %v4919, 48
    %v6516 = vpop.permute.xlu0 %6515
    %6517 = vrot.lane.b32.xlu0 %v4920, 48
    %v6518 = vpop.permute.xlu0 %6517
    %6519 = vrot.lane.b32.xlu0 %v4921, 48
    %v6520 = vpop.permute.xlu0 %6519
    %6521 = vrot.lane.b32.xlu0 %v4922, 48
    %v6522 = vpop.permute.xlu0 %6521
    %6651 = vrot.lane.b32.xlu0 %v4923, 56
    %v6652 = vpop.permute.xlu0 %6651
    %6653 = vrot.lane.b32.xlu0 %v4924, 56
    %v6654 = vpop.permute.xlu0 %6653
    %6655 = vrot.lane.b32.xlu0 %v4925, 56
    %v6656 = vpop.permute.xlu0 %6655
    %6657 = vrot.lane.b32.xlu0 %v4926, 56
    %v6658 = vpop.permute.xlu0 %6657
    %6659 = vrot.lane.b32.xlu0 %v4927, 56
    %v6660 = vpop.permute.xlu0 %6659
    %6661 = vrot.lane.b32.xlu0 %v4928, 56
    %v6662 = vpop.permute.xlu0 %6661
    %6663 = vrot.lane.b32.xlu0 %v4929, 56
    %v6664 = vpop.permute.xlu0 %6663
    %6665 = vrot.lane.b32.xlu0 %v4930, 56
    %v6666 = vpop.permute.xlu0 %6665
    %6667 = vrot.lane.b32.xlu0 %v4931, 56
    %v6668 = vpop.permute.xlu0 %6667
    %6669 = vrot.lane.b32.xlu0 %v4932, 56
    %v6670 = vpop.permute.xlu0 %6669
    %6671 = vrot.lane.b32.xlu0 %v4933, 56
    %v6672 = vpop.permute.xlu0 %6671
    %6673 = vrot.lane.b32.xlu0 %v4934, 56
    %v6674 = vpop.permute.xlu0 %6673
    %6675 = vrot.lane.b32.xlu0 %v4935, 56
    %v6676 = vpop.permute.xlu0 %6675
    %6677 = vrot.lane.b32.xlu0 %v4936, 56
    %v6678 = vpop.permute.xlu0 %6677
    %6679 = vrot.lane.b32.xlu0 %v4937, 56
    %v6680 = vpop.permute.xlu0 %6679
    %6681 = vrot.lane.b32.xlu0 %v4938, 56
    %v6682 = vpop.permute.xlu0 %6681
    %6683 = vrot.lane.b32.xlu0 %v4939, 56
    %v6684 = vpop.permute.xlu0 %6683
    %6685 = vrot.lane.b32.xlu0 %v4940, 56
    %v6686 = vpop.permute.xlu0 %6685
    %6687 = vrot.lane.b32.xlu0 %v4941, 56
    %v6688 = vpop.permute.xlu0 %6687
    %6689 = vrot.lane.b32.xlu0 %v4942, 56
    %v6690 = vpop.permute.xlu0 %6689
    %6691 = vrot.lane.b32.xlu0 %v4943, 56
    %v6692 = vpop.permute.xlu0 %6691
    %6693 = vrot.lane.b32.xlu0 %v4944, 56
    %v6694 = vpop.permute.xlu0 %6693
    %6695 = vrot.lane.b32.xlu0 %v4945, 56
    %v6696 = vpop.permute.xlu0 %6695
    %6697 = vrot.lane.b32.xlu0 %v4946, 56
    %v6698 = vpop.permute.xlu0 %6697
    %6699 = vrot.lane.b32.xlu0 %v4947, 56
    %v6700 = vpop.permute.xlu0 %6699
    %6701 = vrot.lane.b32.xlu0 %v4948, 56
    %v6702 = vpop.permute.xlu0 %6701
    %6703 = vrot.lane.b32.xlu0 %v4949, 56
    %v6704 = vpop.permute.xlu0 %6703
    %6705 = vrot.lane.b32.xlu0 %v4950, 56
    %v6706 = vpop.permute.xlu0 %6705
    %6707 = vrot.lane.b32.xlu0 %v4951, 56
    %v6708 = vpop.permute.xlu0 %6707
    %6709 = vrot.lane.b32.xlu0 %v4952, 56
    %v6710 = vpop.permute.xlu0 %6709
    %6711 = vrot.lane.b32.xlu0 %v4953, 56
    %v6712 = vpop.permute.xlu0 %6711
    %6713 = vrot.lane.b32.xlu0 %v4954, 56
    %v6714 = vpop.permute.xlu0 %6713
    %6715 = vrot.lane.b32.xlu0 %v4955, 56
    %v6716 = vpop.permute.xlu0 %6715
    %6717 = vrot.lane.b32.xlu0 %v4956, 56
    %v6718 = vpop.permute.xlu0 %6717
    %6719 = vrot.lane.b32.xlu0 %v4957, 56
    %v6720 = vpop.permute.xlu0 %6719
    %6721 = vrot.lane.b32.xlu0 %v4958, 56
    %v6722 = vpop.permute.xlu0 %6721
    %6723 = vrot.lane.b32.xlu0 %v4959, 56
    %v6724 = vpop.permute.xlu0 %6723
    %6725 = vrot.lane.b32.xlu0 %v4960, 56
    %v6726 = vpop.permute.xlu0 %6725
    %6727 = vrot.lane.b32.xlu0 %v4961, 56
    %v6728 = vpop.permute.xlu0 %6727
    %6729 = vrot.lane.b32.xlu0 %v4962, 56
    %v6730 = vpop.permute.xlu0 %6729
    %6731 = vrot.lane.b32.xlu0 %v4963, 56
    %v6732 = vpop.permute.xlu0 %6731
    %6733 = vrot.lane.b32.xlu0 %v4964, 56
    %v6734 = vpop.permute.xlu0 %6733
    %6735 = vrot.lane.b32.xlu0 %v4965, 56
    %v6736 = vpop.permute.xlu0 %6735
    %6737 = vrot.lane.b32.xlu0 %v4966, 56
    %v6738 = vpop.permute.xlu0 %6737
    %6739 = vrot.lane.b32.xlu0 %v4967, 56
    %v6740 = vpop.permute.xlu0 %6739
    %6741 = vrot.lane.b32.xlu0 %v4968, 56
    %v6742 = vpop.permute.xlu0 %6741
    %6743 = vrot.lane.b32.xlu0 %v4969, 56
    %v6744 = vpop.permute.xlu0 %6743
    %6745 = vrot.lane.b32.xlu0 %v4970, 56
    %v6746 = vpop.permute.xlu0 %6745
    %6747 = vrot.lane.b32.xlu0 %v4971, 56
    %v6748 = vpop.permute.xlu0 %6747
    %6749 = vrot.lane.b32.xlu0 %v4972, 56
    %v6750 = vpop.permute.xlu0 %6749
    %6751 = vrot.lane.b32.xlu0 %v4973, 56
    %v6752 = vpop.permute.xlu0 %6751
    %6753 = vrot.lane.b32.xlu0 %v4974, 56
    %v6754 = vpop.permute.xlu0 %6753
    %6755 = vrot.lane.b32.xlu0 %v4975, 56
    %v6756 = vpop.permute.xlu0 %6755
    %6757 = vrot.lane.b32.xlu0 %v4976, 56
    %v6758 = vpop.permute.xlu0 %6757
    %6759 = vrot.lane.b32.xlu0 %v4977, 56
    %v6760 = vpop.permute.xlu0 %6759
    %6761 = vrot.lane.b32.xlu0 %v4978, 56
    %v6762 = vpop.permute.xlu0 %6761
    %6763 = vrot.lane.b32.xlu0 %v4979, 56
    %v6764 = vpop.permute.xlu0 %6763
    %6765 = vrot.lane.b32.xlu0 %v4980, 56
    %v6766 = vpop.permute.xlu0 %6765
    %6767 = vrot.lane.b32.xlu0 %v4981, 56
    %v6768 = vpop.permute.xlu0 %6767
    %6769 = vrot.lane.b32.xlu0 %v4982, 56
    %v6770 = vpop.permute.xlu0 %6769
    %6771 = vrot.lane.b32.xlu0 %v4983, 56
    %v6772 = vpop.permute.xlu0 %6771
    %6773 = vrot.lane.b32.xlu0 %v4984, 56
    %v6774 = vpop.permute.xlu0 %6773
    %6775 = vrot.lane.b32.xlu0 %v4985, 56
    %v6776 = vpop.permute.xlu0 %6775
    %6777 = vrot.lane.b32.xlu0 %v4986, 56
    %v6778 = vpop.permute.xlu0 %6777
    %6907 = vrot.lane.b32.xlu0 %v4987, 64
    %v6908 = vpop.permute.xlu0 %6907
    %6909 = vrot.lane.b32.xlu0 %v4988, 64
    %v6910 = vpop.permute.xlu0 %6909
    %6911 = vrot.lane.b32.xlu0 %v4989, 64
    %v6912 = vpop.permute.xlu0 %6911
    %6913 = vrot.lane.b32.xlu0 %v4990, 64
    %v6914 = vpop.permute.xlu0 %6913
    %6915 = vrot.lane.b32.xlu0 %v4991, 64
    %v6916 = vpop.permute.xlu0 %6915
    %6917 = vrot.lane.b32.xlu0 %v4992, 64
    %v6918 = vpop.permute.xlu0 %6917
    %6919 = vrot.lane.b32.xlu0 %v4993, 64
    %v6920 = vpop.permute.xlu0 %6919
    %6921 = vrot.lane.b32.xlu0 %v4994, 64
    %v6922 = vpop.permute.xlu0 %6921
    %6923 = vrot.lane.b32.xlu0 %v4995, 64
    %v6924 = vpop.permute.xlu0 %6923
    %6925 = vrot.lane.b32.xlu0 %v4996, 64
    %v6926 = vpop.permute.xlu0 %6925
    %6927 = vrot.lane.b32.xlu0 %v4997, 64
    %v6928 = vpop.permute.xlu0 %6927
    %6929 = vrot.lane.b32.xlu0 %v4998, 64
    %v6930 = vpop.permute.xlu0 %6929
    %6931 = vrot.lane.b32.xlu0 %v4999, 64
    %v6932 = vpop.permute.xlu0 %6931
    %6933 = vrot.lane.b32.xlu0 %v5000, 64
    %v6934 = vpop.permute.xlu0 %6933
    %6935 = vrot.lane.b32.xlu0 %v5001, 64
    %v6936 = vpop.permute.xlu0 %6935
    %6937 = vrot.lane.b32.xlu0 %v5002, 64
    %v6938 = vpop.permute.xlu0 %6937
    %6939 = vrot.lane.b32.xlu0 %v5003, 64
    %v6940 = vpop.permute.xlu0 %6939
    %6941 = vrot.lane.b32.xlu0 %v5004, 64
    %v6942 = vpop.permute.xlu0 %6941
    %6943 = vrot.lane.b32.xlu0 %v5005, 64
    %v6944 = vpop.permute.xlu0 %6943
    %6945 = vrot.lane.b32.xlu0 %v5006, 64
    %v6946 = vpop.permute.xlu0 %6945
    %6947 = vrot.lane.b32.xlu0 %v5007, 64
    %v6948 = vpop.permute.xlu0 %6947
    %6949 = vrot.lane.b32.xlu0 %v5008, 64
    %v6950 = vpop.permute.xlu0 %6949
    %6951 = vrot.lane.b32.xlu0 %v5009, 64
    %v6952 = vpop.permute.xlu0 %6951
    %6953 = vrot.lane.b32.xlu0 %v5010, 64
    %v6954 = vpop.permute.xlu0 %6953
    %6955 = vrot.lane.b32.xlu0 %v5011, 64
    %v6956 = vpop.permute.xlu0 %6955
    %6957 = vrot.lane.b32.xlu0 %v5012, 64
    %v6958 = vpop.permute.xlu0 %6957
    %6959 = vrot.lane.b32.xlu0 %v5013, 64
    %v6960 = vpop.permute.xlu0 %6959
    %6961 = vrot.lane.b32.xlu0 %v5014, 64
    %v6962 = vpop.permute.xlu0 %6961
    %6963 = vrot.lane.b32.xlu0 %v5015, 64
    %v6964 = vpop.permute.xlu0 %6963
    %6965 = vrot.lane.b32.xlu0 %v5016, 64
    %v6966 = vpop.permute.xlu0 %6965
    %6967 = vrot.lane.b32.xlu0 %v5017, 64
    %v6968 = vpop.permute.xlu0 %6967
    %6969 = vrot.lane.b32.xlu0 %v5018, 64
    %v6970 = vpop.permute.xlu0 %6969
    %6971 = vrot.lane.b32.xlu0 %v5019, 64
    %v6972 = vpop.permute.xlu0 %6971
    %6973 = vrot.lane.b32.xlu0 %v5020, 64
    %v6974 = vpop.permute.xlu0 %6973
    %6975 = vrot.lane.b32.xlu0 %v5021, 64
    %v6976 = vpop.permute.xlu0 %6975
    %6977 = vrot.lane.b32.xlu0 %v5022, 64
    %v6978 = vpop.permute.xlu0 %6977
    %6979 = vrot.lane.b32.xlu0 %v5023, 64
    %v6980 = vpop.permute.xlu0 %6979
    %6981 = vrot.lane.b32.xlu0 %v5024, 64
    %v6982 = vpop.permute.xlu0 %6981
    %6983 = vrot.lane.b32.xlu0 %v5025, 64
    %v6984 = vpop.permute.xlu0 %6983
    %6985 = vrot.lane.b32.xlu0 %v5026, 64
    %v6986 = vpop.permute.xlu0 %6985
    %6987 = vrot.lane.b32.xlu0 %v5027, 64
    %v6988 = vpop.permute.xlu0 %6987
    %6989 = vrot.lane.b32.xlu0 %v5028, 64
    %v6990 = vpop.permute.xlu0 %6989
    %6991 = vrot.lane.b32.xlu0 %v5029, 64
    %v6992 = vpop.permute.xlu0 %6991
    %6993 = vrot.lane.b32.xlu0 %v5030, 64
    %v6994 = vpop.permute.xlu0 %6993
    %6995 = vrot.lane.b32.xlu0 %v5031, 64
    %v6996 = vpop.permute.xlu0 %6995
    %6997 = vrot.lane.b32.xlu0 %v5032, 64
    %v6998 = vpop.permute.xlu0 %6997
    %6999 = vrot.lane.b32.xlu0 %v5033, 64
    %v7000 = vpop.permute.xlu0 %6999
    %7001 = vrot.lane.b32.xlu0 %v5034, 64
    %v7002 = vpop.permute.xlu0 %7001
    %7003 = vrot.lane.b32.xlu0 %v5035, 64
    %v7004 = vpop.permute.xlu0 %7003
    %7005 = vrot.lane.b32.xlu0 %v5036, 64
    %v7006 = vpop.permute.xlu0 %7005
    %7007 = vrot.lane.b32.xlu0 %v5037, 64
    %v7008 = vpop.permute.xlu0 %7007
    %7009 = vrot.lane.b32.xlu0 %v5038, 64
    %v7010 = vpop.permute.xlu0 %7009
    %7011 = vrot.lane.b32.xlu0 %v5039, 64
    %v7012 = vpop.permute.xlu0 %7011
    %7013 = vrot.lane.b32.xlu0 %v5040, 64
    %v7014 = vpop.permute.xlu0 %7013
    %7015 = vrot.lane.b32.xlu0 %v5041, 64
    %v7016 = vpop.permute.xlu0 %7015
    %7017 = vrot.lane.b32.xlu0 %v5042, 64
    %v7018 = vpop.permute.xlu0 %7017
    %7019 = vrot.lane.b32.xlu0 %v5043, 64
    %v7020 = vpop.permute.xlu0 %7019
    %7021 = vrot.lane.b32.xlu0 %v5044, 64
    %v7022 = vpop.permute.xlu0 %7021
    %7023 = vrot.lane.b32.xlu0 %v5045, 64
    %v7024 = vpop.permute.xlu0 %7023
    %7025 = vrot.lane.b32.xlu0 %v5046, 64
    %v7026 = vpop.permute.xlu0 %7025
    %7027 = vrot.lane.b32.xlu0 %v5047, 64
    %v7028 = vpop.permute.xlu0 %7027
    %7029 = vrot.lane.b32.xlu0 %v5048, 64
    %v7030 = vpop.permute.xlu0 %7029
    %7031 = vrot.lane.b32.xlu0 %v5049, 64
    %v7032 = vpop.permute.xlu0 %7031
    %7033 = vrot.lane.b32.xlu0 %v5050, 64
    %v7034 = vpop.permute.xlu0 %7033
    %v7099 = vsel %vm2712, %v4474, %v5116
    %v7100 = vsel %vm2712, %v4475, %v5118
    %v7101 = vsel %vm2712, %v4476, %v5120
    %v7102 = vsel %vm2712, %v4477, %v5122
    %v7103 = vsel %vm2712, %v4478, %v5124
    %v7104 = vsel %vm2712, %v4479, %v5126
    %v7105 = vsel %vm2712, %v4480, %v5128
    %v7106 = vsel %vm2712, %v4481, %v5130
    %v7107 = vsel %vm2712, %v4482, %v5132
    %v7108 = vsel %vm2712, %v4483, %v5134
    %v7109 = vsel %vm2712, %v4484, %v5136
    %v7110 = vsel %vm2712, %v4485, %v5138
    %v7111 = vsel %vm2712, %v4486, %v5140
    %v7112 = vsel %vm2712, %v4487, %v5142
    %v7113 = vsel %vm2712, %v4488, %v5144
    %v7114 = vsel %vm2712, %v4489, %v5146
    %v7115 = vsel %vm2712, %v4490, %v5148
    %v7116 = vsel %vm2712, %v4491, %v5150
    %v7117 = vsel %vm2712, %v4492, %v5152
    %v7118 = vsel %vm2712, %v4493, %v5154
    %v7119 = vsel %vm2712, %v4494, %v5156
    %v7120 = vsel %vm2712, %v4495, %v5158
    %v7121 = vsel %vm2712, %v4496, %v5160
    %v7122 = vsel %vm2712, %v4497, %v5162
    %v7123 = vsel %vm2712, %v4498, %v5164
    %v7124 = vsel %vm2712, %v4499, %v5166
    %v7125 = vsel %vm2712, %v4500, %v5168
    %v7126 = vsel %vm2712, %v4501, %v5170
    %v7127 = vsel %vm2712, %v4502, %v5172
    %v7128 = vsel %vm2712, %v4503, %v5174
    %v7129 = vsel %vm2712, %v4504, %v5176
    %v7130 = vsel %vm2712, %v4505, %v5178
    %v7131 = vsel %vm2712, %v4506, %v5180
    %v7132 = vsel %vm2712, %v4507, %v5182
    %v7133 = vsel %vm2712, %v4508, %v5184
    %v7134 = vsel %vm2712, %v4509, %v5186
    %v7135 = vsel %vm2712, %v4510, %v5188
    %v7136 = vsel %vm2712, %v4511, %v5190
    %v7137 = vsel %vm2712, %v4512, %v5192
    %v7138 = vsel %vm2712, %v4513, %v5194
    %v7139 = vsel %vm2712, %v4514, %v5196
    %v7140 = vsel %vm2712, %v4515, %v5198
    %v7141 = vsel %vm2712, %v4516, %v5200
    %v7142 = vsel %vm2712, %v4517, %v5202
    %v7143 = vsel %vm2712, %v4518, %v5204
    %v7144 = vsel %vm2712, %v4519, %v5206
    %v7145 = vsel %vm2712, %v4520, %v5208
    %v7146 = vsel %vm2712, %v4521, %v5210
    %v7147 = vsel %vm2712, %v4522, %v5212
    %v7148 = vsel %vm2712, %v4523, %v5214
    %v7149 = vsel %vm2712, %v4524, %v5216
    %v7150 = vsel %vm2712, %v4525, %v5218
    %v7151 = vsel %vm2712, %v4526, %v5220
    %v7152 = vsel %vm2712, %v4527, %v5222
    %v7153 = vsel %vm2712, %v4528, %v5224
    %v7154 = vsel %vm2712, %v4529, %v5226
    %v7155 = vsel %vm2712, %v4530, %v5228
    %v7156 = vsel %vm2712, %v4531, %v5230
    %v7157 = vsel %vm2712, %v4532, %v5232
    %v7158 = vsel %vm2712, %v4533, %v5234
    %v7159 = vsel %vm2712, %v4534, %v5236
    %v7160 = vsel %vm2712, %v4535, %v5238
    %v7161 = vsel %vm2712, %v4536, %v5240
    %v7162 = vsel %vm2712, %v4537, %v5242
    %v7163 = vsel %vm2842, %v7099, %v5372
    %v7164 = vsel %vm2842, %v7100, %v5374
    %v7165 = vsel %vm2842, %v7101, %v5376
    %v7166 = vsel %vm2842, %v7102, %v5378
    %v7167 = vsel %vm2842, %v7103, %v5380
    %v7168 = vsel %vm2842, %v7104, %v5382
    %v7169 = vsel %vm2842, %v7105, %v5384
    %v7170 = vsel %vm2842, %v7106, %v5386
    %v7171 = vsel %vm2842, %v7107, %v5388
    %v7172 = vsel %vm2842, %v7108, %v5390
    %v7173 = vsel %vm2842, %v7109, %v5392
    %v7174 = vsel %vm2842, %v7110, %v5394
    %v7175 = vsel %vm2842, %v7111, %v5396
    %v7176 = vsel %vm2842, %v7112, %v5398
    %v7177 = vsel %vm2842, %v7113, %v5400
    %v7178 = vsel %vm2842, %v7114, %v5402
    %v7179 = vsel %vm2842, %v7115, %v5404
    %v7180 = vsel %vm2842, %v7116, %v5406
    %v7181 = vsel %vm2842, %v7117, %v5408
    %v7182 = vsel %vm2842, %v7118, %v5410
    %v7183 = vsel %vm2842, %v7119, %v5412
    %v7184 = vsel %vm2842, %v7120, %v5414
    %v7185 = vsel %vm2842, %v7121, %v5416
    %v7186 = vsel %vm2842, %v7122, %v5418
    %v7187 = vsel %vm2842, %v7123, %v5420
    %v7188 = vsel %vm2842, %v7124, %v5422
    %v7189 = vsel %vm2842, %v7125, %v5424
    %v7190 = vsel %vm2842, %v7126, %v5426
    %v7191 = vsel %vm2842, %v7127, %v5428
    %v7192 = vsel %vm2842, %v7128, %v5430
    %v7193 = vsel %vm2842, %v7129, %v5432
    %v7194 = vsel %vm2842, %v7130, %v5434
    %v7195 = vsel %vm2842, %v7131, %v5436
    %v7196 = vsel %vm2842, %v7132, %v5438
    %v7197 = vsel %vm2842, %v7133, %v5440
    %v7198 = vsel %vm2842, %v7134, %v5442
    %v7199 = vsel %vm2842, %v7135, %v5444
    %v7200 = vsel %vm2842, %v7136, %v5446
    %v7201 = vsel %vm2842, %v7137, %v5448
    %v7202 = vsel %vm2842, %v7138, %v5450
    %v7203 = vsel %vm2842, %v7139, %v5452
    %v7204 = vsel %vm2842, %v7140, %v5454
    %v7205 = vsel %vm2842, %v7141, %v5456
    %v7206 = vsel %vm2842, %v7142, %v5458
    %v7207 = vsel %vm2842, %v7143, %v5460
    %v7208 = vsel %vm2842, %v7144, %v5462
    %v7209 = vsel %vm2842, %v7145, %v5464
    %v7210 = vsel %vm2842, %v7146, %v5466
    %v7211 = vsel %vm2842, %v7147, %v5468
    %v7212 = vsel %vm2842, %v7148, %v5470
    %v7213 = vsel %vm2842, %v7149, %v5472
    %v7214 = vsel %vm2842, %v7150, %v5474
    %v7215 = vsel %vm2842, %v7151, %v5476
    %v7216 = vsel %vm2842, %v7152, %v5478
    %v7217 = vsel %vm2842, %v7153, %v5480
    %v7218 = vsel %vm2842, %v7154, %v5482
    %v7219 = vsel %vm2842, %v7155, %v5484
    %v7220 = vsel %vm2842, %v7156, %v5486
    %v7221 = vsel %vm2842, %v7157, %v5488
    %v7222 = vsel %vm2842, %v7158, %v5490
    %v7223 = vsel %vm2842, %v7159, %v5492
    %v7224 = vsel %vm2842, %v7160, %v5494
    %v7225 = vsel %vm2842, %v7161, %v5496
    %v7226 = vsel %vm2842, %v7162, %v5498
    %v7227 = vsel %vm2972, %v7163, %v5628
    %v7228 = vsel %vm2972, %v7164, %v5630
    %v7229 = vsel %vm2972, %v7165, %v5632
    %v7230 = vsel %vm2972, %v7166, %v5634
    %v7231 = vsel %vm2972, %v7167, %v5636
    %v7232 = vsel %vm2972, %v7168, %v5638
    %v7233 = vsel %vm2972, %v7169, %v5640
    %v7234 = vsel %vm2972, %v7170, %v5642
    %v7235 = vsel %vm2972, %v7171, %v5644
    %v7236 = vsel %vm2972, %v7172, %v5646
    %v7237 = vsel %vm2972, %v7173, %v5648
    %v7238 = vsel %vm2972, %v7174, %v5650
    %v7239 = vsel %vm2972, %v7175, %v5652
    %v7240 = vsel %vm2972, %v7176, %v5654
    %v7241 = vsel %vm2972, %v7177, %v5656
    %v7242 = vsel %vm2972, %v7178, %v5658
    %v7243 = vsel %vm2972, %v7179, %v5660
    %v7244 = vsel %vm2972, %v7180, %v5662
    %v7245 = vsel %vm2972, %v7181, %v5664
    %v7246 = vsel %vm2972, %v7182, %v5666
    %v7247 = vsel %vm2972, %v7183, %v5668
    %v7248 = vsel %vm2972, %v7184, %v5670
    %v7249 = vsel %vm2972, %v7185, %v5672
    %v7250 = vsel %vm2972, %v7186, %v5674
    %v7251 = vsel %vm2972, %v7187, %v5676
    %v7252 = vsel %vm2972, %v7188, %v5678
    %v7253 = vsel %vm2972, %v7189, %v5680
    %v7254 = vsel %vm2972, %v7190, %v5682
    %v7255 = vsel %vm2972, %v7191, %v5684
    %v7256 = vsel %vm2972, %v7192, %v5686
    %v7257 = vsel %vm2972, %v7193, %v5688
    %v7258 = vsel %vm2972, %v7194, %v5690
    %v7259 = vsel %vm2972, %v7195, %v5692
    %v7260 = vsel %vm2972, %v7196, %v5694
    %v7261 = vsel %vm2972, %v7197, %v5696
    %v7262 = vsel %vm2972, %v7198, %v5698
    %v7263 = vsel %vm2972, %v7199, %v5700
    %v7264 = vsel %vm2972, %v7200, %v5702
    %v7265 = vsel %vm2972, %v7201, %v5704
    %v7266 = vsel %vm2972, %v7202, %v5706
    %v7267 = vsel %vm2972, %v7203, %v5708
    %v7268 = vsel %vm2972, %v7204, %v5710
    %v7269 = vsel %vm2972, %v7205, %v5712
    %v7270 = vsel %vm2972, %v7206, %v5714
    %v7271 = vsel %vm2972, %v7207, %v5716
    %v7272 = vsel %vm2972, %v7208, %v5718
    %v7273 = vsel %vm2972, %v7209, %v5720
    %v7274 = vsel %vm2972, %v7210, %v5722
    %v7275 = vsel %vm2972, %v7211, %v5724
    %v7276 = vsel %vm2972, %v7212, %v5726
    %v7277 = vsel %vm2972, %v7213, %v5728
    %v7278 = vsel %vm2972, %v7214, %v5730
    %v7279 = vsel %vm2972, %v7215, %v5732
    %v7280 = vsel %vm2972, %v7216, %v5734
    %v7281 = vsel %vm2972, %v7217, %v5736
    %v7282 = vsel %vm2972, %v7218, %v5738
    %v7283 = vsel %vm2972, %v7219, %v5740
    %v7284 = vsel %vm2972, %v7220, %v5742
    %v7285 = vsel %vm2972, %v7221, %v5744
    %v7286 = vsel %vm2972, %v7222, %v5746
    %v7287 = vsel %vm2972, %v7223, %v5748
    %v7288 = vsel %vm2972, %v7224, %v5750
    %v7289 = vsel %vm2972, %v7225, %v5752
    %v7290 = vsel %vm2972, %v7226, %v5754
    %v7291 = vsel %vm3102, %v7227, %v5884
    %v7292 = vsel %vm3102, %v7228, %v5886
    %v7293 = vsel %vm3102, %v7229, %v5888
    %v7294 = vsel %vm3102, %v7230, %v5890
    %v7295 = vsel %vm3102, %v7231, %v5892
    %v7296 = vsel %vm3102, %v7232, %v5894
    %v7297 = vsel %vm3102, %v7233, %v5896
    %v7298 = vsel %vm3102, %v7234, %v5898
    %v7299 = vsel %vm3102, %v7235, %v5900
    %v7300 = vsel %vm3102, %v7236, %v5902
    %v7301 = vsel %vm3102, %v7237, %v5904
    %v7302 = vsel %vm3102, %v7238, %v5906
    %v7303 = vsel %vm3102, %v7239, %v5908
    %v7304 = vsel %vm3102, %v7240, %v5910
    %v7305 = vsel %vm3102, %v7241, %v5912
    %v7306 = vsel %vm3102, %v7242, %v5914
    %v7307 = vsel %vm3102, %v7243, %v5916
    %v7308 = vsel %vm3102, %v7244, %v5918
    %v7309 = vsel %vm3102, %v7245, %v5920
    %v7310 = vsel %vm3102, %v7246, %v5922
    %v7311 = vsel %vm3102, %v7247, %v5924
    %v7312 = vsel %vm3102, %v7248, %v5926
    %v7313 = vsel %vm3102, %v7249, %v5928
    %v7314 = vsel %vm3102, %v7250, %v5930
    %v7315 = vsel %vm3102, %v7251, %v5932
    %v7316 = vsel %vm3102, %v7252, %v5934
    %v7317 = vsel %vm3102, %v7253, %v5936
    %v7318 = vsel %vm3102, %v7254, %v5938
    %v7319 = vsel %vm3102, %v7255, %v5940
    %v7320 = vsel %vm3102, %v7256, %v5942
    %v7321 = vsel %vm3102, %v7257, %v5944
    %v7322 = vsel %vm3102, %v7258, %v5946
    %v7323 = vsel %vm3102, %v7259, %v5948
    %v7324 = vsel %vm3102, %v7260, %v5950
    %v7325 = vsel %vm3102, %v7261, %v5952
    %v7326 = vsel %vm3102, %v7262, %v5954
    %v7327 = vsel %vm3102, %v7263, %v5956
    %v7328 = vsel %vm3102, %v7264, %v5958
    %v7329 = vsel %vm3102, %v7265, %v5960
    %v7330 = vsel %vm3102, %v7266, %v5962
    %v7331 = vsel %vm3102, %v7267, %v5964
    %v7332 = vsel %vm3102, %v7268, %v5966
    %v7333 = vsel %vm3102, %v7269, %v5968
    %v7334 = vsel %vm3102, %v7270, %v5970
    %v7335 = vsel %vm3102, %v7271, %v5972
    %v7336 = vsel %vm3102, %v7272, %v5974
    %v7337 = vsel %vm3102, %v7273, %v5976
    %v7338 = vsel %vm3102, %v7274, %v5978
    %v7339 = vsel %vm3102, %v7275, %v5980
    %v7340 = vsel %vm3102, %v7276, %v5982
    %v7341 = vsel %vm3102, %v7277, %v5984
    %v7342 = vsel %vm3102, %v7278, %v5986
    %v7343 = vsel %vm3102, %v7279, %v5988
    %v7344 = vsel %vm3102, %v7280, %v5990
    %v7345 = vsel %vm3102, %v7281, %v5992
    %v7346 = vsel %vm3102, %v7282, %v5994
    %v7347 = vsel %vm3102, %v7283, %v5996
    %v7348 = vsel %vm3102, %v7284, %v5998
    %v7349 = vsel %vm3102, %v7285, %v6000
    %v7350 = vsel %vm3102, %v7286, %v6002
    %v7351 = vsel %vm3102, %v7287, %v6004
    %v7352 = vsel %vm3102, %v7288, %v6006
    %v7353 = vsel %vm3102, %v7289, %v6008
    %v7354 = vsel %vm3102, %v7290, %v6010
    %vm7355 = vcmask 326656
    %v7356 = vsel %vm7355, %v7291, %v6140
    %v7357 = vsel %vm7355, %v7292, %v6142
    %v7358 = vsel %vm7355, %v7293, %v6144
    %v7359 = vsel %vm7355, %v7294, %v6146
    %v7360 = vsel %vm7355, %v7295, %v6148
    %v7361 = vsel %vm7355, %v7296, %v6150
    %v7362 = vsel %vm7355, %v7297, %v6152
    %v7363 = vsel %vm7355, %v7298, %v6154
    %v7364 = vsel %vm7355, %v7299, %v6156
    %v7365 = vsel %vm7355, %v7300, %v6158
    %v7366 = vsel %vm7355, %v7301, %v6160
    %v7367 = vsel %vm7355, %v7302, %v6162
    %v7368 = vsel %vm7355, %v7303, %v6164
    %v7369 = vsel %vm7355, %v7304, %v6166
    %v7370 = vsel %vm7355, %v7305, %v6168
    %v7371 = vsel %vm7355, %v7306, %v6170
    %v7372 = vsel %vm7355, %v7307, %v6172
    %v7373 = vsel %vm7355, %v7308, %v6174
    %v7374 = vsel %vm7355, %v7309, %v6176
    %v7375 = vsel %vm7355, %v7310, %v6178
    %v7376 = vsel %vm7355, %v7311, %v6180
    %v7377 = vsel %vm7355, %v7312, %v6182
    %v7378 = vsel %vm7355, %v7313, %v6184
    %v7379 = vsel %vm7355, %v7314, %v6186
    %v7380 = vsel %vm7355, %v7315, %v6188
    %v7381 = vsel %vm7355, %v7316, %v6190
    %v7382 = vsel %vm7355, %v7317, %v6192
    %v7383 = vsel %vm7355, %v7318, %v6194
    %v7384 = vsel %vm7355, %v7319, %v6196
    %v7385 = vsel %vm7355, %v7320, %v6198
    %v7386 = vsel %vm7355, %v7321, %v6200
    %v7387 = vsel %vm7355, %v7322, %v6202
    %v7388 = vsel %vm7355, %v7323, %v6204
    %v7389 = vsel %vm7355, %v7324, %v6206
    %v7390 = vsel %vm7355, %v7325, %v6208
    %v7391 = vsel %vm7355, %v7326, %v6210
    %v7392 = vsel %vm7355, %v7327, %v6212
    %v7393 = vsel %vm7355, %v7328, %v6214
    %v7394 = vsel %vm7355, %v7329, %v6216
    %v7395 = vsel %vm7355, %v7330, %v6218
    %v7396 = vsel %vm7355, %v7331, %v6220
    %v7397 = vsel %vm7355, %v7332, %v6222
    %v7398 = vsel %vm7355, %v7333, %v6224
    %v7399 = vsel %vm7355, %v7334, %v6226
    %v7400 = vsel %vm7355, %v7335, %v6228
    %v7401 = vsel %vm7355, %v7336, %v6230
    %v7402 = vsel %vm7355, %v7337, %v6232
    %v7403 = vsel %vm7355, %v7338, %v6234
    %v7404 = vsel %vm7355, %v7339, %v6236
    %v7405 = vsel %vm7355, %v7340, %v6238
    %v7406 = vsel %vm7355, %v7341, %v6240
    %v7407 = vsel %vm7355, %v7342, %v6242
    %v7408 = vsel %vm7355, %v7343, %v6244
    %v7409 = vsel %vm7355, %v7344, %v6246
    %v7410 = vsel %vm7355, %v7345, %v6248
    %v7411 = vsel %vm7355, %v7346, %v6250
    %v7412 = vsel %vm7355, %v7347, %v6252
    %v7413 = vsel %vm7355, %v7348, %v6254
    %v7414 = vsel %vm7355, %v7349, %v6256
    %v7415 = vsel %vm7355, %v7350, %v6258
    %v7416 = vsel %vm7355, %v7351, %v6260
    %v7417 = vsel %vm7355, %v7352, %v6262
    %v7418 = vsel %vm7355, %v7353, %v6264
    %v7419 = vsel %vm7355, %v7354, %v6266
    %vm7420 = vcmask 392192
    %v7421 = vsel %vm7420, %v7356, %v6396
    %v7422 = vsel %vm7420, %v7357, %v6398
    %v7423 = vsel %vm7420, %v7358, %v6400
    %v7424 = vsel %vm7420, %v7359, %v6402
    %v7425 = vsel %vm7420, %v7360, %v6404
    %v7426 = vsel %vm7420, %v7361, %v6406
    %v7427 = vsel %vm7420, %v7362, %v6408
    %v7428 = vsel %vm7420, %v7363, %v6410
    %v7429 = vsel %vm7420, %v7364, %v6412
    %v7430 = vsel %vm7420, %v7365, %v6414
    %v7431 = vsel %vm7420, %v7366, %v6416
    %v7432 = vsel %vm7420, %v7367, %v6418
    %v7433 = vsel %vm7420, %v7368, %v6420
    %v7434 = vsel %vm7420, %v7369, %v6422
    %v7435 = vsel %vm7420, %v7370, %v6424
    %v7436 = vsel %vm7420, %v7371, %v6426
    %v7437 = vsel %vm7420, %v7372, %v6428
    %v7438 = vsel %vm7420, %v7373, %v6430
    %v7439 = vsel %vm7420, %v7374, %v6432
    %v7440 = vsel %vm7420, %v7375, %v6434
    %v7441 = vsel %vm7420, %v7376, %v6436
    %v7442 = vsel %vm7420, %v7377, %v6438
    %v7443 = vsel %vm7420, %v7378, %v6440
    %v7444 = vsel %vm7420, %v7379, %v6442
    %v7445 = vsel %vm7420, %v7380, %v6444
    %v7446 = vsel %vm7420, %v7381, %v6446
    %v7447 = vsel %vm7420, %v7382, %v6448
    %v7448 = vsel %vm7420, %v7383, %v6450
    %v7449 = vsel %vm7420, %v7384, %v6452
    %v7450 = vsel %vm7420, %v7385, %v6454
    %v7451 = vsel %vm7420, %v7386, %v6456
    %v7452 = vsel %vm7420, %v7387, %v6458
    %v7453 = vsel %vm7420, %v7388, %v6460
    %v7454 = vsel %vm7420, %v7389, %v6462
    %v7455 = vsel %vm7420, %v7390, %v6464
    %v7456 = vsel %vm7420, %v7391, %v6466
    %v7457 = vsel %vm7420, %v7392, %v6468
    %v7458 = vsel %vm7420, %v7393, %v6470
    %v7459 = vsel %vm7420, %v7394, %v6472
    %v7460 = vsel %vm7420, %v7395, %v6474
    %v7461 = vsel %vm7420, %v7396, %v6476
    %v7462 = vsel %vm7420, %v7397, %v6478
    %v7463 = vsel %vm7420, %v7398, %v6480
    %v7464 = vsel %vm7420, %v7399, %v6482
    %v7465 = vsel %vm7420, %v7400, %v6484
    %v7466 = vsel %vm7420, %v7401, %v6486
    %v7467 = vsel %vm7420, %v7402, %v6488
    %v7468 = vsel %vm7420, %v7403, %v6490
    %v7469 = vsel %vm7420, %v7404, %v6492
    %v7470 = vsel %vm7420, %v7405, %v6494
    %v7471 = vsel %vm7420, %v7406, %v6496
    %v7472 = vsel %vm7420, %v7407, %v6498
    %v7473 = vsel %vm7420, %v7408, %v6500
    %v7474 = vsel %vm7420, %v7409, %v6502
    %v7475 = vsel %vm7420, %v7410, %v6504
    %v7476 = vsel %vm7420, %v7411, %v6506
    %v7477 = vsel %vm7420, %v7412, %v6508
    %v7478 = vsel %vm7420, %v7413, %v6510
    %v7479 = vsel %vm7420, %v7414, %v6512
    %v7480 = vsel %vm7420, %v7415, %v6514
    %v7481 = vsel %vm7420, %v7416, %v6516
    %v7482 = vsel %vm7420, %v7417, %v6518
    %v7483 = vsel %vm7420, %v7418, %v6520
    %v7484 = vsel %vm7420, %v7419, %v6522
    %vm7485 = vcmask 457728
    %v7486 = vsel %vm7485, %v7421, %v6652
    %v7487 = vsel %vm7485, %v7422, %v6654
    %v7488 = vsel %vm7485, %v7423, %v6656
    %v7489 = vsel %vm7485, %v7424, %v6658
    %v7490 = vsel %vm7485, %v7425, %v6660
    %v7491 = vsel %vm7485, %v7426, %v6662
    %v7492 = vsel %vm7485, %v7427, %v6664
    %v7493 = vsel %vm7485, %v7428, %v6666
    %v7494 = vsel %vm7485, %v7429, %v6668
    %v7495 = vsel %vm7485, %v7430, %v6670
    %v7496 = vsel %vm7485, %v7431, %v6672
    %v7497 = vsel %vm7485, %v7432, %v6674
    %v7498 = vsel %vm7485, %v7433, %v6676
    %v7499 = vsel %vm7485, %v7434, %v6678
    %v7500 = vsel %vm7485, %v7435, %v6680
    %v7501 = vsel %vm7485, %v7436, %v6682
    %v7502 = vsel %vm7485, %v7437, %v6684
    %v7503 = vsel %vm7485, %v7438, %v6686
    %v7504 = vsel %vm7485, %v7439, %v6688
    %v7505 = vsel %vm7485, %v7440, %v6690
    %v7506 = vsel %vm7485, %v7441, %v6692
    %v7507 = vsel %vm7485, %v7442, %v6694
    %v7508 = vsel %vm7485, %v7443, %v6696
    %v7509 = vsel %vm7485, %v7444, %v6698
    %v7510 = vsel %vm7485, %v7445, %v6700
    %v7511 = vsel %vm7485, %v7446, %v6702
    %v7512 = vsel %vm7485, %v7447, %v6704
    %v7513 = vsel %vm7485, %v7448, %v6706
    %v7514 = vsel %vm7485, %v7449, %v6708
    %v7515 = vsel %vm7485, %v7450, %v6710
    %v7516 = vsel %vm7485, %v7451, %v6712
    %v7517 = vsel %vm7485, %v7452, %v6714
    %v7518 = vsel %vm7485, %v7453, %v6716
    %v7519 = vsel %vm7485, %v7454, %v6718
    %v7520 = vsel %vm7485, %v7455, %v6720
    %v7521 = vsel %vm7485, %v7456, %v6722
    %v7522 = vsel %vm7485, %v7457, %v6724
    %v7523 = vsel %vm7485, %v7458, %v6726
    %v7524 = vsel %vm7485, %v7459, %v6728
    %v7525 = vsel %vm7485, %v7460, %v6730
    %v7526 = vsel %vm7485, %v7461, %v6732
    %v7527 = vsel %vm7485, %v7462, %v6734
    %v7528 = vsel %vm7485, %v7463, %v6736
    %v7529 = vsel %vm7485, %v7464, %v6738
    %v7530 = vsel %vm7485, %v7465, %v6740
    %v7531 = vsel %vm7485, %v7466, %v6742
    %v7532 = vsel %vm7485, %v7467, %v6744
    %v7533 = vsel %vm7485, %v7468, %v6746
    %v7534 = vsel %vm7485, %v7469, %v6748
    %v7535 = vsel %vm7485, %v7470, %v6750
    %v7536 = vsel %vm7485, %v7471, %v6752
    %v7537 = vsel %vm7485, %v7472, %v6754
    %v7538 = vsel %vm7485, %v7473, %v6756
    %v7539 = vsel %vm7485, %v7474, %v6758
    %v7540 = vsel %vm7485, %v7475, %v6760
    %v7541 = vsel %vm7485, %v7476, %v6762
    %v7542 = vsel %vm7485, %v7477, %v6764
    %v7543 = vsel %vm7485, %v7478, %v6766
    %v7544 = vsel %vm7485, %v7479, %v6768
    %v7545 = vsel %vm7485, %v7480, %v6770
    %v7546 = vsel %vm7485, %v7481, %v6772
    %v7547 = vsel %vm7485, %v7482, %v6774
    %v7548 = vsel %vm7485, %v7483, %v6776
    %v7549 = vsel %vm7485, %v7484, %v6778
    %vm7550 = vcmask 523264
    %v7551 = vsel %vm7550, %v7486, %v6908
    %v7552 = vsel %vm7550, %v7487, %v6910
    %v7553 = vsel %vm7550, %v7488, %v6912
    %v7554 = vsel %vm7550, %v7489, %v6914
    %v7555 = vsel %vm7550, %v7490, %v6916
    %v7556 = vsel %vm7550, %v7491, %v6918
    %v7557 = vsel %vm7550, %v7492, %v6920
    %v7558 = vsel %vm7550, %v7493, %v6922
    %v7559 = vsel %vm7550, %v7494, %v6924
    %v7560 = vsel %vm7550, %v7495, %v6926
    %v7561 = vsel %vm7550, %v7496, %v6928
    %v7562 = vsel %vm7550, %v7497, %v6930
    %v7563 = vsel %vm7550, %v7498, %v6932
    %v7564 = vsel %vm7550, %v7499, %v6934
    %v7565 = vsel %vm7550, %v7500, %v6936
    %v7566 = vsel %vm7550, %v7501, %v6938
    %v7567 = vsel %vm7550, %v7502, %v6940
    %v7568 = vsel %vm7550, %v7503, %v6942
    %v7569 = vsel %vm7550, %v7504, %v6944
    %v7570 = vsel %vm7550, %v7505, %v6946
    %v7571 = vsel %vm7550, %v7506, %v6948
    %v7572 = vsel %vm7550, %v7507, %v6950
    %v7573 = vsel %vm7550, %v7508, %v6952
    %v7574 = vsel %vm7550, %v7509, %v6954
    %v7575 = vsel %vm7550, %v7510, %v6956
    %v7576 = vsel %vm7550, %v7511, %v6958
    %v7577 = vsel %vm7550, %v7512, %v6960
    %v7578 = vsel %vm7550, %v7513, %v6962
    %v7579 = vsel %vm7550, %v7514, %v6964
    %v7580 = vsel %vm7550, %v7515, %v6966
    %v7581 = vsel %vm7550, %v7516, %v6968
    %v7582 = vsel %vm7550, %v7517, %v6970
    %v7583 = vsel %vm7550, %v7518, %v6972
    %v7584 = vsel %vm7550, %v7519, %v6974
    %v7585 = vsel %vm7550, %v7520, %v6976
    %v7586 = vsel %vm7550, %v7521, %v6978
    %v7587 = vsel %vm7550, %v7522, %v6980
    %v7588 = vsel %vm7550, %v7523, %v6982
    %v7589 = vsel %vm7550, %v7524, %v6984
    %v7590 = vsel %vm7550, %v7525, %v6986
    %v7591 = vsel %vm7550, %v7526, %v6988
    %v7592 = vsel %vm7550, %v7527, %v6990
    %v7593 = vsel %vm7550, %v7528, %v6992
    %v7594 = vsel %vm7550, %v7529, %v6994
    %v7595 = vsel %vm7550, %v7530, %v6996
    %v7596 = vsel %vm7550, %v7531, %v6998
    %v7597 = vsel %vm7550, %v7532, %v7000
    %v7598 = vsel %vm7550, %v7533, %v7002
    %v7599 = vsel %vm7550, %v7534, %v7004
    %v7600 = vsel %vm7550, %v7535, %v7006
    %v7601 = vsel %vm7550, %v7536, %v7008
    %v7602 = vsel %vm7550, %v7537, %v7010
    %v7603 = vsel %vm7550, %v7538, %v7012
    %v7604 = vsel %vm7550, %v7539, %v7014
    %v7605 = vsel %vm7550, %v7540, %v7016
    %v7606 = vsel %vm7550, %v7541, %v7018
    %v7607 = vsel %vm7550, %v7542, %v7020
    %v7608 = vsel %vm7550, %v7543, %v7022
    %v7609 = vsel %vm7550, %v7544, %v7024
    %v7610 = vsel %vm7550, %v7545, %v7026
    %v7611 = vsel %vm7550, %v7546, %v7028
    %v7612 = vsel %vm7550, %v7547, %v7030
    %v7613 = vsel %vm7550, %v7548, %v7032
    %v7614 = vsel %vm7550, %v7549, %v7034
    %v7615 = vld [vmem:[%s3] sm:$0xff]
    %v7616 = vld [vmem:[%s3 + $0x8] sm:$0xff]
    %v7617 = vld [vmem:[%s3 + $0x10] sm:$0xff]
    %v7618 = vld [vmem:[%s3 + $0x18] sm:$0xff]
    %v7619 = vld [vmem:[%s3 + $0x20] sm:$0xff]
    %v7620 = vld [vmem:[%s3 + $0x28] sm:$0xff]
    %v7621 = vld [vmem:[%s3 + $0x30] sm:$0xff]
    %v7622 = vld [vmem:[%s3 + $0x38] sm:$0xff]
    %v7623 = vld [vmem:[%s3 + $0x40] sm:$0xff]
    %v7624 = vld [vmem:[%s4] sm:$0x1]
    %v7625 = vlaneseq
    %v7626 = vshrl.u32 %v7625, 7
    %v7627 = vsub.s32 0, %v7626
    %v7628 = vrot.slane %v7624, %v7627
    %vm7629 = vcmask 588800
    %v7631 = vsel %vm7629, %v7551, 0
    %v7634 = vsel %vm7629, %v7552, 0
    %v7637 = vsel %vm7629, %v7553, 0
    %v7640 = vsel %vm7629, %v7554, 0
    %v7643 = vsel %vm7629, %v7555, 0
    %v7646 = vsel %vm7629, %v7556, 0
    %v7649 = vsel %vm7629, %v7557, 0
    %v7652 = vsel %vm7629, %v7558, 0
    %v7655 = vsel %vm7629, %v7559, 0
    %v7658 = vsel %vm7629, %v7560, 0
    %v7661 = vsel %vm7629, %v7561, 0
    %v7664 = vsel %vm7629, %v7562, 0
    %v7667 = vsel %vm7629, %v7563, 0
    %v7670 = vsel %vm7629, %v7564, 0
    %v7673 = vsel %vm7629, %v7565, 0
    %v7676 = vsel %vm7629, %v7566, 0
    %v7679 = vsel %vm7629, %v7567, 0
    %v7682 = vsel %vm7629, %v7568, 0
    %v7685 = vsel %vm7629, %v7569, 0
    %v7688 = vsel %vm7629, %v7570, 0
    %v7691 = vsel %vm7629, %v7571, 0
    %v7694 = vsel %vm7629, %v7572, 0
    %v7697 = vsel %vm7629, %v7573, 0
    %v7700 = vsel %vm7629, %v7574, 0
    %v7703 = vsel %vm7629, %v7575, 0
    %v7706 = vsel %vm7629, %v7576, 0
    %v7709 = vsel %vm7629, %v7577, 0
    %v7712 = vsel %vm7629, %v7578, 0
    %v7715 = vsel %vm7629, %v7579, 0
    %v7718 = vsel %vm7629, %v7580, 0
    %v7721 = vsel %vm7629, %v7581, 0
    %v7724 = vsel %vm7629, %v7582, 0
    %v7727 = vsel %vm7629, %v7583, 0
    %v7730 = vsel %vm7629, %v7584, 0
    %v7733 = vsel %vm7629, %v7585, 0
    %v7736 = vsel %vm7629, %v7586, 0
    %v7739 = vsel %vm7629, %v7587, 0
    %v7742 = vsel %vm7629, %v7588, 0
    %v7745 = vsel %vm7629, %v7589, 0
    %v7748 = vsel %vm7629, %v7590, 0
    %v7751 = vsel %vm7629, %v7591, 0
    %v7754 = vsel %vm7629, %v7592, 0
    %v7757 = vsel %vm7629, %v7593, 0
    %v7760 = vsel %vm7629, %v7594, 0
    %v7763 = vsel %vm7629, %v7595, 0
    %v7766 = vsel %vm7629, %v7596, 0
    %v7769 = vsel %vm7629, %v7597, 0
    %v7772 = vsel %vm7629, %v7598, 0
    %v7775 = vsel %vm7629, %v7599, 0
    %v7778 = vsel %vm7629, %v7600, 0
    %v7781 = vsel %vm7629, %v7601, 0
    %v7784 = vsel %vm7629, %v7602, 0
    %v7787 = vsel %vm7629, %v7603, 0
    %v7790 = vsel %vm7629, %v7604, 0
    %v7793 = vsel %vm7629, %v7605, 0
    %v7796 = vsel %vm7629, %v7606, 0
    %v7799 = vsel %vm7629, %v7607, 0
    %v7802 = vsel %vm7629, %v7608, 0
    %v7805 = vsel %vm7629, %v7609, 0
    %v7808 = vsel %vm7629, %v7610, 0
    %v7811 = vsel %vm7629, %v7611, 0
    %v7814 = vsel %vm7629, %v7612, 0
    %v7817 = vsel %vm7629, %v7613, 0
    %v7820 = vsel %vm7629, %v7614, 0
    %7822 = vmatprep.subr.mxu0 0.0
    %7823 = vmatpush1.msra.mxu0 %v7615
    %7824 = vmatprep.subr.mxu0 0.0
    %7825 = vmatpush1.msra.mxu0 %v7616
    %7826 = vmatprep.subr.mxu0 0.0
    %7827 = vmatpush1.msra.mxu0 %v7617
    %7828 = vmatprep.subr.mxu0 0.0
    %7829 = vmatpush1.msra.mxu0 %v7618
    %7830 = vmatprep.subr.mxu0 0.0
    %7831 = vmatpush1.msra.mxu0 %v7619
    %7832 = vmatprep.subr.mxu0 0.0
    %7833 = vmatpush1.msra.mxu0 %v7620
    %7834 = vmatprep.subr.mxu0 0.0
    %7835 = vmatpush1.msra.mxu0 %v7621
    %7836 = vmatprep.subr.mxu0 0.0
    %7837 = vmatpush1.msra.mxu0 %v7622
    %7838 = vmatprep.subr.mxu0 0.0
    %7839 = vmatpush1.msra.mxu0 %v7623
    %7840 = vmatprep.subr.mxu0 0.0
    %7841 = vmatpush1.msra.mxu0 0.0
    %7842 = vmatprep.subr.mxu0 0.0
    %7843 = vmatpush1.msra.mxu0 0.0
    %7844 = vmatprep.subr.mxu0 0.0
    %7845 = vmatpush1.msra.mxu0 0.0
    %7846 = vmatprep.subr.mxu0 0.0
    %7847 = vmatpush1.msra.mxu0 0.0
    %7848 = vmatprep.subr.mxu0 0.0
    %7849 = vmatpush1.msra.mxu0 0.0
    %7850 = vmatprep.subr.mxu0 0.0
    %7851 = vmatpush1.msra.mxu0 0.0
    %7852 = vmatprep.subr.mxu0 0.0
    %7853 = vmatpush1.msra.mxu0 0.0
    %7854 = vmatprep.subr.mxu0 0.0
    %7855 = vmatpush1.msra.mxu0 0.0
    %7856 = vmatprep.subr.mxu0 0.0
    %7857 = vmatpush1.msra.mxu0 0.0
    %7858 = vmatprep.subr.mxu0 0.0
    %7859 = vmatpush1.msra.mxu0 0.0
    %7860 = vmatprep.subr.mxu0 0.0
    %7861 = vmatpush1.msra.mxu0 0.0
    %7862 = vmatprep.subr.mxu0 0.0
    %7863 = vmatpush1.msra.mxu0 0.0
    %7864 = vmatprep.subr.mxu0 0.0
    %7865 = vmatpush1.msra.mxu0 0.0
    %7866 = vmatprep.subr.mxu0 0.0
    %7867 = vmatpush1.msra.mxu0 0.0
    %7868 = vmatprep.subr.mxu0 0.0
    %7869 = vmatpush1.msra.mxu0 0.0
    %7870 = vmatprep.subr.mxu0 0.0
    %7871 = vmatpush1.msra.mxu0 0.0
    %7872 = vmatprep.subr.mxu0 0.0
    %7873 = vmatpush1.msra.mxu0 0.0
    %7874 = vmatprep.subr.mxu0 0.0
    %7875 = vmatpush1.msra.mxu0 0.0
    %7876 = vmatprep.subr.mxu0 0.0
    %7877 = vmatpush1.msra.mxu0 0.0
    %7878 = vmatprep.subr.mxu0 0.0
    %7879 = vmatpush1.msra.mxu0 0.0
    %7880 = vmatprep.subr.mxu0 0.0
    %7881 = vmatpush1.msra.mxu0 0.0
    %7882 = vmatprep.subr.mxu0 0.0
    %7883 = vmatpush1.msra.mxu0 0.0
    %7884 = vmatprep.subr.mxu0 0.0
    %7885 = vmatpush1.msra.mxu0 0.0
    %7886 = vmatprep.mubr.f32.mxu0 0.0
    %7887 = vmatmul.mubr.f32.gmra.mrb[0].mxu0 %v7631
    %v7888 = vpop.f32.mrb[0].mxu0
    %v7889 = vadd.f32 %v7628, %v7888
    %v7890 = vpop.f32.mrb[0].mxu0
    %7891 = vmatprep.mubr.f32.mxu0 0.0
    %7892 = vmatmul.mubr.f32.gmra.mrb[0].mxu0 %v7634
    %v7893 = vpop.f32.mrb[0].mxu0
    %v7894 = vadd.f32 %v7628, %v7893
    %v7895 = vpop.f32.mrb[0].mxu0
    %7896 = vmatprep.mubr.f32.mxu0 0.0
    %7897 = vmatmul.mubr.f32.gmra.mrb[0].mxu0 %v7637
    %v7898 = vpop.f32.mrb[0].mxu0
    %v7899 = vadd.f32 %v7628, %v7898
    %v7900 = vpop.f32.mrb[0].mxu0
    %7901 = vmatprep.mubr.f32.mxu0 0.0
    %7902 = vmatmul.mubr.f32.gmra.mrb[0].mxu0 %v7640
    %v7903 = vpop.f32.mrb[0].mxu0
    %v7904 = vadd.f32 %v7628, %v7903
    %v7905 = vpop.f32.mrb[0].mxu0
    %7906 = vmatprep.mubr.f32.mxu0 0.0
    %7907 = vmatmul.mubr.f32.gmra.mrb[0].mxu0 %v7643
    %v7908 = vpop.f32.mrb[0].mxu0
    %v7909 = vadd.f32 %v7628, %v7908
    %v7910 = vpop.f32.mrb[0].mxu0
    %7911 = vmatprep.mubr.f32.mxu0 0.0
    %7912 = vmatmul.mubr.f32.gmra.mrb[0].mxu0 %v7646
    %v7913 = vpop.f32.mrb[0].mxu0
    %v7914 = vadd.f32 %v7628, %v7913
    %v7915 = vpop.f32.mrb[0].mxu0
    %7916 = vmatprep.mubr.f32.mxu0 0.0
    %7917 = vmatmul.mubr.f32.gmra.mrb[0].mxu0 %v7649
    %v7918 = vpop.f32.mrb[0].mxu0
    %v7919 = vadd.f32 %v7628, %v7918
    %v7920 = vpop.f32.mrb[0].mxu0
    %7921 = vmatprep.mubr.f32.mxu0 0.0
    %7922 = vmatmul.mubr.f32.gmra.mrb[0].mxu0 %v7652
    %v7923 = vpop.f32.mrb[0].mxu0
    %v7924 = vadd.f32 %v7628, %v7923
    %v7925 = vpop.f32.mrb[0].mxu0
    %7926 = vmatprep.mubr.f32.mxu0 0.0
    %7927 = vmatmul.mubr.f32.gmra.mrb[0].mxu0 %v7655
    %v7928 = vpop.f32.mrb[0].mxu0
    %v7929 = vadd.f32 %v7628, %v7928
    %v7930 = vpop.f32.mrb[0].mxu0
    %7931 = vmatprep.mubr.f32.mxu0 0.0
    %7932 = vmatmul.mubr.f32.gmra.mrb[0].mxu0 %v7658
    %v7933 = vpop.f32.mrb[0].mxu0
    %v7934 = vadd.f32 %v7628, %v7933
    %v7935 = vpop.f32.mrb[0].mxu0
    %7936 = vmatprep.mubr.f32.mxu0 0.0
    %7937 = vmatmul.mubr.f32.gmra.mrb[0].mxu0 %v7661
    %v7938 = vpop.f32.mrb[0].mxu0
    %v7939 = vadd.f32 %v7628, %v7938
    %v7940 = vpop.f32.mrb[0].mxu0
    %7941 = vmatprep.mubr.f32.mxu0 0.0
    %7942 = vmatmul.mubr.f32.gmra.mrb[0].mxu0 %v7664
    %v7943 = vpop.f32.mrb[0].mxu0
    %v7944 = vadd.f32 %v7628, %v7943
    %v7945 = vpop.f32.mrb[0].mxu0
    %7946 = vmatprep.mubr.f32.mxu0 0.0
    %7947 = vmatmul.mubr.f32.gmra.mrb[0].mxu0 %v7667
    %v7948 = vpop.f32.mrb[0].mxu0
    %v7949 = vadd.f32 %v7628, %v7948
    %v7950 = vpop.f32.mrb[0].mxu0
    %7951 = vmatprep.mubr.f32.mxu0 0.0
    %7952 = vmatmul.mubr.f32.gmra.mrb[0].mxu0 %v7670
    %v7953 = vpop.f32.mrb[0].mxu0
    %v7954 = vadd.f32 %v7628, %v7953
    %v7955 = vpop.f32.mrb[0].mxu0
    %7956 = vmatprep.mubr.f32.mxu0 0.0
    %7957 = vmatmul.mubr.f32.gmra.mrb[0].mxu0 %v7673
    %v7958 = vpop.f32.mrb[0].mxu0
    %v7959 = vadd.f32 %v7628, %v7958
    %v7960 = vpop.f32.mrb[0].mxu0
    %7961 = vmatprep.mubr.f32.mxu0 0.0
    %7962 = vmatmul.mubr.f32.gmra.mrb[0].mxu0 %v7676
    %v7963 = vpop.f32.mrb[0].mxu0
    %v7964 = vadd.f32 %v7628, %v7963
    %v7965 = vpop.f32.mrb[0].mxu0
    %7966 = vmatprep.mubr.f32.mxu0 0.0
    %7967 = vmatmul.mubr.f32.gmra.mrb[0].mxu0 %v7679
    %v7968 = vpop.f32.mrb[0].mxu0
    %v7969 = vadd.f32 %v7628, %v7968
    %v7970 = vpop.f32.mrb[0].mxu0
    %7971 = vmatprep.mubr.f32.mxu0 0.0
    %7972 = vmatmul.mubr.f32.gmra.mrb[0].mxu0 %v7682
    %v7973 = vpop.f32.mrb[0].mxu0
    %v7974 = vadd.f32 %v7628, %v7973
    %v7975 = vpop.f32.mrb[0].mxu0
    %7976 = vmatprep.mubr.f32.mxu0 0.0
    %7977 = vmatmul.mubr.f32.gmra.mrb[0].mxu0 %v7685
    %v7978 = vpop.f32.mrb[0].mxu0
    %v7979 = vadd.f32 %v7628, %v7978
    %v7980 = vpop.f32.mrb[0].mxu0
    %7981 = vmatprep.mubr.f32.mxu0 0.0
    %7982 = vmatmul.mubr.f32.gmra.mrb[0].mxu0 %v7688
    %v7983 = vpop.f32.mrb[0].mxu0
    %v7984 = vadd.f32 %v7628, %v7983
    %v7985 = vpop.f32.mrb[0].mxu0
    %7986 = vmatprep.mubr.f32.mxu0 0.0
    %7987 = vmatmul.mubr.f32.gmra.mrb[0].mxu0 %v7691
    %v7988 = vpop.f32.mrb[0].mxu0
    %v7989 = vadd.f32 %v7628, %v7988
    %v7990 = vpop.f32.mrb[0].mxu0
    %7991 = vmatprep.mubr.f32.mxu0 0.0
    %7992 = vmatmul.mubr.f32.gmra.mrb[0].mxu0 %v7694
    %v7993 = vpop.f32.mrb[0].mxu0
    %v7994 = vadd.f32 %v7628, %v7993
    %v7995 = vpop.f32.mrb[0].mxu0
    %7996 = vmatprep.mubr.f32.mxu0 0.0
    %7997 = vmatmul.mubr.f32.gmra.mrb[0].mxu0 %v7697
    %v7998 = vpop.f32.mrb[0].mxu0
    %v7999 = vadd.f32 %v7628, %v7998
    %v8000 = vpop.f32.mrb[0].mxu0
    %8001 = vmatprep.mubr.f32.mxu0 0.0
    %8002 = vmatmul.mubr.f32.gmra.mrb[0].mxu0 %v7700
    %v8003 = vpop.f32.mrb[0].mxu0
    %v8004 = vadd.f32 %v7628, %v8003
    %v8005 = vpop.f32.mrb[0].mxu0
    %8006 = vmatprep.mubr.f32.mxu0 0.0
    %8007 = vmatmul.mubr.f32.gmra.mrb[0].mxu0 %v7703
    %v8008 = vpop.f32.mrb[0].mxu0
    %v8009 = vadd.f32 %v7628, %v8008
    %v8010 = vpop.f32.mrb[0].mxu0
    %8011 = vmatprep.mubr.f32.mxu0 0.0
    %8012 = vmatmul.mubr.f32.gmra.mrb[0].mxu0 %v7706
    %v8013 = vpop.f32.mrb[0].mxu0
    %v8014 = vadd.f32 %v7628, %v8013
    %v8015 = vpop.f32.mrb[0].mxu0
    %8016 = vmatprep.mubr.f32.mxu0 0.0
    %8017 = vmatmul.mubr.f32.gmra.mrb[0].mxu0 %v7709
    %v8018 = vpop.f32.mrb[0].mxu0
    %v8019 = vadd.f32 %v7628, %v8018
    %v8020 = vpop.f32.mrb[0].mxu0
    %8021 = vmatprep.mubr.f32.mxu0 0.0
    %8022 = vmatmul.mubr.f32.gmra.mrb[0].mxu0 %v7712
    %v8023 = vpop.f32.mrb[0].mxu0
    %v8024 = vadd.f32 %v7628, %v8023
    %v8025 = vpop.f32.mrb[0].mxu0
    %8026 = vmatprep.mubr.f32.mxu0 0.0
    %8027 = vmatmul.mubr.f32.gmra.mrb[0].mxu0 %v7715
    %v8028 = vpop.f32.mrb[0].mxu0
    %v8029 = vadd.f32 %v7628, %v8028
    %v8030 = vpop.f32.mrb[0].mxu0
    %8031 = vmatprep.mubr.f32.mxu0 0.0
    %8032 = vmatmul.mubr.f32.gmra.mrb[0].mxu0 %v7718
    %v8033 = vpop.f32.mrb[0].mxu0
    %v8034 = vadd.f32 %v7628, %v8033
    %v8035 = vpop.f32.mrb[0].mxu0
    %8036 = vmatprep.mubr.f32.mxu0 0.0
    %8037 = vmatmul.mubr.f32.gmra.mrb[0].mxu0 %v7721
    %v8038 = vpop.f32.mrb[0].mxu0
    %v8039 = vadd.f32 %v7628, %v8038
    %v8040 = vpop.f32.mrb[0].mxu0
    %8041 = vmatprep.mubr.f32.mxu0 0.0
    %8042 = vmatmul.mubr.f32.gmra.mrb[0].mxu0 %v7724
    %v8043 = vpop.f32.mrb[0].mxu0
    %v8044 = vadd.f32 %v7628, %v8043
    %v8045 = vpop.f32.mrb[0].mxu0
    %8046 = vmatprep.mubr.f32.mxu0 0.0
    %8047 = vmatmul.mubr.f32.gmra.mrb[0].mxu0 %v7727
    %v8048 = vpop.f32.mrb[0].mxu0
    %v8049 = vadd.f32 %v7628, %v8048
    %v8050 = vpop.f32.mrb[0].mxu0
    %8051 = vmatprep.mubr.f32.mxu0 0.0
    %8052 = vmatmul.mubr.f32.gmra.mrb[0].mxu0 %v7730
    %v8053 = vpop.f32.mrb[0].mxu0
    %v8054 = vadd.f32 %v7628, %v8053
    %v8055 = vpop.f32.mrb[0].mxu0
    %8056 = vmatprep.mubr.f32.mxu0 0.0
    %8057 = vmatmul.mubr.f32.gmra.mrb[0].mxu0 %v7733
    %v8058 = vpop.f32.mrb[0].mxu0
    %v8059 = vadd.f32 %v7628, %v8058
    %v8060 = vpop.f32.mrb[0].mxu0
    %8061 = vmatprep.mubr.f32.mxu0 0.0
    %8062 = vmatmul.mubr.f32.gmra.mrb[0].mxu0 %v7736
    %v8063 = vpop.f32.mrb[0].mxu0
    %v8064 = vadd.f32 %v7628, %v8063
    %v8065 = vpop.f32.mrb[0].mxu0
    %8066 = vmatprep.mubr.f32.mxu0 0.0
    %8067 = vmatmul.mubr.f32.gmra.mrb[0].mxu0 %v7739
    %v8068 = vpop.f32.mrb[0].mxu0
    %v8069 = vadd.f32 %v7628, %v8068
    %v8070 = vpop.f32.mrb[0].mxu0
    %8071 = vmatprep.mubr.f32.mxu0 0.0
    %8072 = vmatmul.mubr.f32.gmra.mrb[0].mxu0 %v7742
    %v8073 = vpop.f32.mrb[0].mxu0
    %v8074 = vadd.f32 %v7628, %v8073
    %v8075 = vpop.f32.mrb[0].mxu0
    %8076 = vmatprep.mubr.f32.mxu0 0.0
    %8077 = vmatmul.mubr.f32.gmra.mrb[0].mxu0 %v7745
    %v8078 = vpop.f32.mrb[0].mxu0
    %v8079 = vadd.f32 %v7628, %v8078
    %v8080 = vpop.f32.mrb[0].mxu0
    %8081 = vmatprep.mubr.f32.mxu0 0.0
    %8082 = vmatmul.mubr.f32.gmra.mrb[0].mxu0 %v7748
    %v8083 = vpop.f32.mrb[0].mxu0
    %v8084 = vadd.f32 %v7628, %v8083
    %v8085 = vpop.f32.mrb[0].mxu0
    %8086 = vmatprep.mubr.f32.mxu0 0.0
    %8087 = vmatmul.mubr.f32.gmra.mrb[0].mxu0 %v7751
    %v8088 = vpop.f32.mrb[0].mxu0
    %v8089 = vadd.f32 %v7628, %v8088
    %v8090 = vpop.f32.mrb[0].mxu0
    %8091 = vmatprep.mubr.f32.mxu0 0.0
    %8092 = vmatmul.mubr.f32.gmra.mrb[0].mxu0 %v7754
    %v8093 = vpop.f32.mrb[0].mxu0
    %v8094 = vadd.f32 %v7628, %v8093
    %v8095 = vpop.f32.mrb[0].mxu0
    %8096 = vmatprep.mubr.f32.mxu0 0.0
    %8097 = vmatmul.mubr.f32.gmra.mrb[0].mxu0 %v7757
    %v8098 = vpop.f32.mrb[0].mxu0
    %v8099 = vadd.f32 %v7628, %v8098
    %v8100 = vpop.f32.mrb[0].mxu0
    %8101 = vmatprep.mubr.f32.mxu0 0.0
    %8102 = vmatmul.mubr.f32.gmra.mrb[0].mxu0 %v7760
    %v8103 = vpop.f32.mrb[0].mxu0
    %v8104 = vadd.f32 %v7628, %v8103
    %v8105 = vpop.f32.mrb[0].mxu0
    %8106 = vmatprep.mubr.f32.mxu0 0.0
    %8107 = vmatmul.mubr.f32.gmra.mrb[0].mxu0 %v7763
    %v8108 = vpop.f32.mrb[0].mxu0
    %v8109 = vadd.f32 %v7628, %v8108
    %v8110 = vpop.f32.mrb[0].mxu0
    %8111 = vmatprep.mubr.f32.mxu0 0.0
    %8112 = vmatmul.mubr.f32.gmra.mrb[0].mxu0 %v7766
    %v8113 = vpop.f32.mrb[0].mxu0
    %v8114 = vadd.f32 %v7628, %v8113
    %v8115 = vpop.f32.mrb[0].mxu0
    %8116 = vmatprep.mubr.f32.mxu0 0.0
    %8117 = vmatmul.mubr.f32.gmra.mrb[0].mxu0 %v7769
    %v8118 = vpop.f32.mrb[0].mxu0
    %v8119 = vadd.f32 %v7628, %v8118
    %v8120 = vpop.f32.mrb[0].mxu0
    %8121 = vmatprep.mubr.f32.mxu0 0.0
    %8122 = vmatmul.mubr.f32.gmra.mrb[0].mxu0 %v7772
    %v8123 = vpop.f32.mrb[0].mxu0
    %v8124 = vadd.f32 %v7628, %v8123
    %v8125 = vpop.f32.mrb[0].mxu0
    %8126 = vmatprep.mubr.f32.mxu0 0.0
    %8127 = vmatmul.mubr.f32.gmra.mrb[0].mxu0 %v7775
    %v8128 = vpop.f32.mrb[0].mxu0
    %v8129 = vadd.f32 %v7628, %v8128
    %v8130 = vpop.f32.mrb[0].mxu0
    %8131 = vmatprep.mubr.f32.mxu0 0.0
    %8132 = vmatmul.mubr.f32.gmra.mrb[0].mxu0 %v7778
    %v8133 = vpop.f32.mrb[0].mxu0
    %v8134 = vadd.f32 %v7628, %v8133
    %v8135 = vpop.f32.mrb[0].mxu0
    %8136 = vmatprep.mubr.f32.mxu0 0.0
    %8137 = vmatmul.mubr.f32.gmra.mrb[0].mxu0 %v7781
    %v8138 = vpop.f32.mrb[0].mxu0
    %v8139 = vadd.f32 %v7628, %v8138
    %v8140 = vpop.f32.mrb[0].mxu0
    %8141 = vmatprep.mubr.f32.mxu0 0.0
    %8142 = vmatmul.mubr.f32.gmra.mrb[0].mxu0 %v7784
    %v8143 = vpop.f32.mrb[0].mxu0
    %v8144 = vadd.f32 %v7628, %v8143
    %v8145 = vpop.f32.mrb[0].mxu0
    %8146 = vmatprep.mubr.f32.mxu0 0.0
    %8147 = vmatmul.mubr.f32.gmra.mrb[0].mxu0 %v7787
    %v8148 = vpop.f32.mrb[0].mxu0
    %v8149 = vadd.f32 %v7628, %v8148
    %v8150 = vpop.f32.mrb[0].mxu0
    %8151 = vmatprep.mubr.f32.mxu0 0.0
    %8152 = vmatmul.mubr.f32.gmra.mrb[0].mxu0 %v7790
    %v8153 = vpop.f32.mrb[0].mxu0
    %v8154 = vadd.f32 %v7628, %v8153
    %v8155 = vpop.f32.mrb[0].mxu0
    %8156 = vmatprep.mubr.f32.mxu0 0.0
    %8157 = vmatmul.mubr.f32.gmra.mrb[0].mxu0 %v7793
    %v8158 = vpop.f32.mrb[0].mxu0
    %v8159 = vadd.f32 %v7628, %v8158
    %v8160 = vpop.f32.mrb[0].mxu0
    %8161 = vmatprep.mubr.f32.mxu0 0.0
    %8162 = vmatmul.mubr.f32.gmra.mrb[0].mxu0 %v7796
    %v8163 = vpop.f32.mrb[0].mxu0
    %v8164 = vadd.f32 %v7628, %v8163
    %v8165 = vpop.f32.mrb[0].mxu0
    %8166 = vmatprep.mubr.f32.mxu0 0.0
    %8167 = vmatmul.mubr.f32.gmra.mrb[0].mxu0 %v7799
    %v8168 = vpop.f32.mrb[0].mxu0
    %v8169 = vadd.f32 %v7628, %v8168
    %v8170 = vpop.f32.mrb[0].mxu0
    %8171 = vmatprep.mubr.f32.mxu0 0.0
    %8172 = vmatmul.mubr.f32.gmra.mrb[0].mxu0 %v7802
    %v8173 = vpop.f32.mrb[0].mxu0
    %v8174 = vadd.f32 %v7628, %v8173
    %v8175 = vpop.f32.mrb[0].mxu0
    %8176 = vmatprep.mubr.f32.mxu0 0.0
    %8177 = vmatmul.mubr.f32.gmra.mrb[0].mxu0 %v7805
    %v8178 = vpop.f32.mrb[0].mxu0
    %v8179 = vadd.f32 %v7628, %v8178
    %v8180 = vpop.f32.mrb[0].mxu0
    %8181 = vmatprep.mubr.f32.mxu0 0.0
    %8182 = vmatmul.mubr.f32.gmra.mrb[0].mxu0 %v7808
    %v8183 = vpop.f32.mrb[0].mxu0
    %v8184 = vadd.f32 %v7628, %v8183
    %v8185 = vpop.f32.mrb[0].mxu0
    %8186 = vmatprep.mubr.f32.mxu0 0.0
    %8187 = vmatmul.mubr.f32.gmra.mrb[0].mxu0 %v7811
    %v8188 = vpop.f32.mrb[0].mxu0
    %v8189 = vadd.f32 %v7628, %v8188
    %v8190 = vpop.f32.mrb[0].mxu0
    %8191 = vmatprep.mubr.f32.mxu0 0.0
    %8192 = vmatmul.mubr.f32.gmra.mrb[0].mxu0 %v7814
    %v8193 = vpop.f32.mrb[0].mxu0
    %v8194 = vadd.f32 %v7628, %v8193
    %v8195 = vpop.f32.mrb[0].mxu0
    %8196 = vmatprep.mubr.f32.mxu0 0.0
    %8197 = vmatmul.mubr.f32.gmra.mrb[0].mxu0 %v7817
    %v8198 = vpop.f32.mrb[0].mxu0
    %v8199 = vadd.f32 %v7628, %v8198
    %v8200 = vpop.f32.mrb[0].mxu0
    %8201 = vmatprep.mubr.f32.mxu0 0.0
    %8202 = vmatmul.mubr.f32.gmra.mrb[0].mxu0 %v7820
    %v8203 = vpop.f32.mrb[0].mxu0
    %v8204 = vadd.f32 %v7628, %v8203
    %v8205 = vpop.f32.mrb[0].mxu0
    %8206 = vdwg.mxu0
    %v8207 = vmax.f32 %v7889, 0.0
    %v8208 = vmax.f32 %v7894, 0.0
    %v8209 = vmax.f32 %v7899, 0.0
    %v8210 = vmax.f32 %v7904, 0.0
    %v8211 = vmax.f32 %v7909, 0.0
    %v8212 = vmax.f32 %v7914, 0.0
    %v8213 = vmax.f32 %v7919, 0.0
    %v8214 = vmax.f32 %v7924, 0.0
    %v8215 = vmax.f32 %v7929, 0.0
    %v8216 = vmax.f32 %v7934, 0.0
    %v8217 = vmax.f32 %v7939, 0.0
    %v8218 = vmax.f32 %v7944, 0.0
    %v8219 = vmax.f32 %v7949, 0.0
    %v8220 = vmax.f32 %v7954, 0.0
    %v8221 = vmax.f32 %v7959, 0.0
    %v8222 = vmax.f32 %v7964, 0.0
    %v8223 = vmax.f32 %v7969, 0.0
    %v8224 = vmax.f32 %v7974, 0.0
    %v8225 = vmax.f32 %v7979, 0.0
    %v8226 = vmax.f32 %v7984, 0.0
    %v8227 = vmax.f32 %v7989, 0.0
    %v8228 = vmax.f32 %v7994, 0.0
    %v8229 = vmax.f32 %v7999, 0.0
    %v8230 = vmax.f32 %v8004, 0.0
    %v8231 = vmax.f32 %v8009, 0.0
    %v8232 = vmax.f32 %v8014, 0.0
    %v8233 = vmax.f32 %v8019, 0.0
    %v8234 = vmax.f32 %v8024, 0.0
    %v8235 = vmax.f32 %v8029, 0.0
    %v8236 = vmax.f32 %v8034, 0.0
    %v8237 = vmax.f32 %v8039, 0.0
    %v8238 = vmax.f32 %v8044, 0.0
    %v8239 = vmax.f32 %v8049, 0.0
    %v8240 = vmax.f32 %v8054, 0.0
    %v8241 = vmax.f32 %v8059, 0.0
    %v8242 = vmax.f32 %v8064, 0.0
    %v8243 = vmax.f32 %v8069, 0.0
    %v8244 = vmax.f32 %v8074, 0.0
    %v8245 = vmax.f32 %v8079, 0.0
    %v8246 = vmax.f32 %v8084, 0.0
    %v8247 = vmax.f32 %v8089, 0.0
    %v8248 = vmax.f32 %v8094, 0.0
    %v8249 = vmax.f32 %v8099, 0.0
    %v8250 = vmax.f32 %v8104, 0.0
    %v8251 = vmax.f32 %v8109, 0.0
    %v8252 = vmax.f32 %v8114, 0.0
    %v8253 = vmax.f32 %v8119, 0.0
    %v8254 = vmax.f32 %v8124, 0.0
    %v8255 = vmax.f32 %v8129, 0.0
    %v8256 = vmax.f32 %v8134, 0.0
    %v8257 = vmax.f32 %v8139, 0.0
    %v8258 = vmax.f32 %v8144, 0.0
    %v8259 = vmax.f32 %v8149, 0.0
    %v8260 = vmax.f32 %v8154, 0.0
    %v8261 = vmax.f32 %v8159, 0.0
    %v8262 = vmax.f32 %v8164, 0.0
    %v8263 = vmax.f32 %v8169, 0.0
    %v8264 = vmax.f32 %v8174, 0.0
    %v8265 = vmax.f32 %v8179, 0.0
    %v8266 = vmax.f32 %v8184, 0.0
    %v8267 = vmax.f32 %v8189, 0.0
    %v8268 = vmax.f32 %v8194, 0.0
    %v8269 = vmax.f32 %v8199, 0.0
    %v8270 = vmax.f32 %v8204, 0.0
    %v8271 = vsel %vm2712, %v8207, 0.0
    %v8272 = vsel %vm2712, %v8208, 0.0
    %v8273 = vadd.f32 %v8271, %v8272
    %v8274 = vsel %vm2712, %v8209, 0.0
    %v8275 = vadd.f32 %v8273, %v8274
    %v8276 = vsel %vm2712, %v8210, 0.0
    %v8277 = vadd.f32 %v8275, %v8276
    %v8278 = vsel %vm2712, %v8211, 0.0
    %v8279 = vadd.f32 %v8277, %v8278
    %v8280 = vsel %vm2712, %v8212, 0.0
    %v8281 = vadd.f32 %v8279, %v8280
    %v8282 = vsel %vm2712, %v8213, 0.0
    %v8283 = vadd.f32 %v8281, %v8282
    %v8284 = vsel %vm2712, %v8214, 0.0
    %v8285 = vadd.f32 %v8283, %v8284
    %v8286 = vsel %vm2712, %v8215, 0.0
    %v8287 = vadd.f32 %v8285, %v8286
    %v8288 = vsel %vm2712, %v8216, 0.0
    %v8289 = vadd.f32 %v8287, %v8288
    %v8290 = vsel %vm2712, %v8217, 0.0
    %v8291 = vadd.f32 %v8289, %v8290
    %v8292 = vsel %vm2712, %v8218, 0.0
    %v8293 = vadd.f32 %v8291, %v8292
    %v8294 = vsel %vm2712, %v8219, 0.0
    %v8295 = vadd.f32 %v8293, %v8294
    %v8296 = vsel %vm2712, %v8220, 0.0
    %v8297 = vadd.f32 %v8295, %v8296
    %v8298 = vsel %vm2712, %v8221, 0.0
    %v8299 = vadd.f32 %v8297, %v8298
    %v8300 = vsel %vm2712, %v8222, 0.0
    %v8301 = vadd.f32 %v8299, %v8300
    %v8302 = vsel %vm2712, %v8223, 0.0
    %v8303 = vadd.f32 %v8301, %v8302
    %v8304 = vsel %vm2712, %v8224, 0.0
    %v8305 = vadd.f32 %v8303, %v8304
    %v8306 = vsel %vm2712, %v8225, 0.0
    %v8307 = vadd.f32 %v8305, %v8306
    %v8308 = vsel %vm2712, %v8226, 0.0
    %v8309 = vadd.f32 %v8307, %v8308
    %v8310 = vsel %vm2712, %v8227, 0.0
    %v8311 = vadd.f32 %v8309, %v8310
    %v8312 = vsel %vm2712, %v8228, 0.0
    %v8313 = vadd.f32 %v8311, %v8312
    %v8314 = vsel %vm2712, %v8229, 0.0
    %v8315 = vadd.f32 %v8313, %v8314
    %v8316 = vsel %vm2712, %v8230, 0.0
    %v8317 = vadd.f32 %v8315, %v8316
    %v8318 = vsel %vm2712, %v8231, 0.0
    %v8319 = vadd.f32 %v8317, %v8318
    %v8320 = vsel %vm2712, %v8232, 0.0
    %v8321 = vadd.f32 %v8319, %v8320
    %v8322 = vsel %vm2712, %v8233, 0.0
    %v8323 = vadd.f32 %v8321, %v8322
    %v8324 = vsel %vm2712, %v8234, 0.0
    %v8325 = vadd.f32 %v8323, %v8324
    %v8326 = vsel %vm2712, %v8235, 0.0
    %v8327 = vadd.f32 %v8325, %v8326
    %v8328 = vsel %vm2712, %v8236, 0.0
    %v8329 = vadd.f32 %v8327, %v8328
    %v8330 = vsel %vm2712, %v8237, 0.0
    %v8331 = vadd.f32 %v8329, %v8330
    %v8332 = vsel %vm2712, %v8238, 0.0
    %v8333 = vadd.f32 %v8331, %v8332
    %v8334 = vsel %vm2712, %v8239, 0.0
    %v8335 = vadd.f32 %v8333, %v8334
    %v8336 = vsel %vm2712, %v8240, 0.0
    %v8337 = vadd.f32 %v8335, %v8336
    %v8338 = vsel %vm2712, %v8241, 0.0
    %v8339 = vadd.f32 %v8337, %v8338
    %v8340 = vsel %vm2712, %v8242, 0.0
    %v8341 = vadd.f32 %v8339, %v8340
    %v8342 = vsel %vm2712, %v8243, 0.0
    %v8343 = vadd.f32 %v8341, %v8342
    %v8344 = vsel %vm2712, %v8244, 0.0
    %v8345 = vadd.f32 %v8343, %v8344
    %v8346 = vsel %vm2712, %v8245, 0.0
    %v8347 = vadd.f32 %v8345, %v8346
    %v8348 = vsel %vm2712, %v8246, 0.0
    %v8349 = vadd.f32 %v8347, %v8348
    %v8350 = vsel %vm2712, %v8247, 0.0
    %v8351 = vadd.f32 %v8349, %v8350
    %v8352 = vsel %vm2712, %v8248, 0.0
    %v8353 = vadd.f32 %v8351, %v8352
    %v8354 = vsel %vm2712, %v8249, 0.0
    %v8355 = vadd.f32 %v8353, %v8354
    %v8356 = vsel %vm2712, %v8250, 0.0
    %v8357 = vadd.f32 %v8355, %v8356
    %v8358 = vsel %vm2712, %v8251, 0.0
    %v8359 = vadd.f32 %v8357, %v8358
    %v8360 = vsel %vm2712, %v8252, 0.0
    %v8361 = vadd.f32 %v8359, %v8360
    %v8362 = vsel %vm2712, %v8253, 0.0
    %v8363 = vadd.f32 %v8361, %v8362
    %v8364 = vsel %vm2712, %v8254, 0.0
    %v8365 = vadd.f32 %v8363, %v8364
    %v8366 = vsel %vm2712, %v8255, 0.0
    %v8367 = vadd.f32 %v8365, %v8366
    %v8368 = vsel %vm2712, %v8256, 0.0
    %v8369 = vadd.f32 %v8367, %v8368
    %v8370 = vsel %vm2712, %v8257, 0.0
    %v8371 = vadd.f32 %v8369, %v8370
    %v8372 = vsel %vm2712, %v8258, 0.0
    %v8373 = vadd.f32 %v8371, %v8372
    %v8374 = vsel %vm2712, %v8259, 0.0
    %v8375 = vadd.f32 %v8373, %v8374
    %v8376 = vsel %vm2712, %v8260, 0.0
    %v8377 = vadd.f32 %v8375, %v8376
    %v8378 = vsel %vm2712, %v8261, 0.0
    %v8379 = vadd.f32 %v8377, %v8378
    %v8380 = vsel %vm2712, %v8262, 0.0
    %v8381 = vadd.f32 %v8379, %v8380
    %v8382 = vsel %vm2712, %v8263, 0.0
    %v8383 = vadd.f32 %v8381, %v8382
    %v8384 = vsel %vm2712, %v8264, 0.0
    %v8385 = vadd.f32 %v8383, %v8384
    %v8386 = vsel %vm2712, %v8265, 0.0
    %v8387 = vadd.f32 %v8385, %v8386
    %v8388 = vsel %vm2712, %v8266, 0.0
    %v8389 = vadd.f32 %v8387, %v8388
    %v8390 = vsel %vm2712, %v8267, 0.0
    %v8391 = vadd.f32 %v8389, %v8390
    %v8392 = vsel %vm2712, %v8268, 0.0
    %v8393 = vadd.f32 %v8391, %v8392
    %v8394 = vsel %vm2712, %v8269, 0.0
    %v8395 = vadd.f32 %v8393, %v8394
    %v8396 = vsel %vm2712, %v8270, 0.0
    %v8397 = vadd.f32 %v8395, %v8396
    %v8398 = vrot.slane %v8397, 4
    %v8399 = vadd.f32 %v8397, %v8398
    %v8400 = vrot.slane %v8399, 2
    %v8401 = vadd.f32 %v8399, %v8400
    %v8402 = vrot.slane %v8401, 1
    %v8403 = vadd.f32 %v8401, %v8402
    %v8404 = vmul.f32 %v8207, %v8207
    %v8405 = vmul.f32 %v8208, %v8208
    %v8406 = vmul.f32 %v8209, %v8209
    %v8407 = vmul.f32 %v8210, %v8210
    %v8408 = vmul.f32 %v8211, %v8211
    %v8409 = vmul.f32 %v8212, %v8212
    %v8410 = vmul.f32 %v8213, %v8213
    %v8411 = vmul.f32 %v8214, %v8214
    %v8412 = vmul.f32 %v8215, %v8215
    %v8413 = vmul.f32 %v8216, %v8216
    %v8414 = vmul.f32 %v8217, %v8217
    %v8415 = vmul.f32 %v8218, %v8218
    %v8416 = vmul.f32 %v8219, %v8219
    %v8417 = vmul.f32 %v8220, %v8220
    %v8418 = vmul.f32 %v8221, %v8221
    %v8419 = vmul.f32 %v8222, %v8222
    %v8420 = vmul.f32 %v8223, %v8223
    %v8421 = vmul.f32 %v8224, %v8224
    %v8422 = vmul.f32 %v8225, %v8225
    %v8423 = vmul.f32 %v8226, %v8226
    %v8424 = vmul.f32 %v8227, %v8227
    %v8425 = vmul.f32 %v8228, %v8228
    %v8426 = vmul.f32 %v8229, %v8229
    %v8427 = vmul.f32 %v8230, %v8230
    %v8428 = vmul.f32 %v8231, %v8231
    %v8429 = vmul.f32 %v8232, %v8232
    %v8430 = vmul.f32 %v8233, %v8233
    %v8431 = vmul.f32 %v8234, %v8234
    %v8432 = vmul.f32 %v8235, %v8235
    %v8433 = vmul.f32 %v8236, %v8236
    %v8434 = vmul.f32 %v8237, %v8237
    %v8435 = vmul.f32 %v8238, %v8238
    %v8436 = vmul.f32 %v8239, %v8239
    %v8437 = vmul.f32 %v8240, %v8240
    %v8438 = vmul.f32 %v8241, %v8241
    %v8439 = vmul.f32 %v8242, %v8242
    %v8440 = vmul.f32 %v8243, %v8243
    %v8441 = vmul.f32 %v8244, %v8244
    %v8442 = vmul.f32 %v8245, %v8245
    %v8443 = vmul.f32 %v8246, %v8246
    %v8444 = vmul.f32 %v8247, %v8247
    %v8445 = vmul.f32 %v8248, %v8248
    %v8446 = vmul.f32 %v8249, %v8249
    %v8447 = vmul.f32 %v8250, %v8250
    %v8448 = vmul.f32 %v8251, %v8251
    %v8449 = vmul.f32 %v8252, %v8252
    %v8450 = vmul.f32 %v8253, %v8253
    %v8451 = vmul.f32 %v8254, %v8254
    %v8452 = vmul.f32 %v8255, %v8255
    %v8453 = vmul.f32 %v8256, %v8256
    %v8454 = vmul.f32 %v8257, %v8257
    %v8455 = vmul.f32 %v8258, %v8258
    %v8456 = vmul.f32 %v8259, %v8259
    %v8457 = vmul.f32 %v8260, %v8260
    %v8458 = vmul.f32 %v8261, %v8261
    %v8459 = vmul.f32 %v8262, %v8262
    %v8460 = vmul.f32 %v8263, %v8263
    %v8461 = vmul.f32 %v8264, %v8264
    %v8462 = vmul.f32 %v8265, %v8265
    %v8463 = vmul.f32 %v8266, %v8266
    %v8464 = vmul.f32 %v8267, %v8267
    %v8465 = vmul.f32 %v8268, %v8268
    %v8466 = vmul.f32 %v8269, %v8269
    %v8467 = vmul.f32 %v8270, %v8270
    %v8468 = vsel %vm2712, %v8404, 0.0
    %v8469 = vsel %vm2712, %v8405, 0.0
    %v8470 = vadd.f32 %v8468, %v8469
    %v8471 = vsel %vm2712, %v8406, 0.0
    %v8472 = vadd.f32 %v8470, %v8471
    %v8473 = vsel %vm2712, %v8407, 0.0
    %v8474 = vadd.f32 %v8472, %v8473
    %v8475 = vsel %vm2712, %v8408, 0.0
    %v8476 = vadd.f32 %v8474, %v8475
    %v8477 = vsel %vm2712, %v8409, 0.0
    %v8478 = vadd.f32 %v8476, %v8477
    %v8479 = vsel %vm2712, %v8410, 0.0
    %v8480 = vadd.f32 %v8478, %v8479
    %v8481 = vsel %vm2712, %v8411, 0.0
    %v8482 = vadd.f32 %v8480, %v8481
    %v8483 = vsel %vm2712, %v8412, 0.0
    %v8484 = vadd.f32 %v8482, %v8483
    %v8485 = vsel %vm2712, %v8413, 0.0
    %v8486 = vadd.f32 %v8484, %v8485
    %v8487 = vsel %vm2712, %v8414, 0.0
    %v8488 = vadd.f32 %v8486, %v8487
    %v8489 = vsel %vm2712, %v8415, 0.0
    %v8490 = vadd.f32 %v8488, %v8489
    %v8491 = vsel %vm2712, %v8416, 0.0
    %v8492 = vadd.f32 %v8490, %v8491
    %v8493 = vsel %vm2712, %v8417, 0.0
    %v8494 = vadd.f32 %v8492, %v8493
    %v8495 = vsel %vm2712, %v8418, 0.0
    %v8496 = vadd.f32 %v8494, %v8495
    %v8497 = vsel %vm2712, %v8419, 0.0
    %v8498 = vadd.f32 %v8496, %v8497
    %v8499 = vsel %vm2712, %v8420, 0.0
    %v8500 = vadd.f32 %v8498, %v8499
    %v8501 = vsel %vm2712, %v8421, 0.0
    %v8502 = vadd.f32 %v8500, %v8501
    %v8503 = vsel %vm2712, %v8422, 0.0
    %v8504 = vadd.f32 %v8502, %v8503
    %v8505 = vsel %vm2712, %v8423, 0.0
    %v8506 = vadd.f32 %v8504, %v8505
    %v8507 = vsel %vm2712, %v8424, 0.0
    %v8508 = vadd.f32 %v8506, %v8507
    %v8509 = vsel %vm2712, %v8425, 0.0
    %v8510 = vadd.f32 %v8508, %v8509
    %v8511 = vsel %vm2712, %v8426, 0.0
    %v8512 = vadd.f32 %v8510, %v8511
    %v8513 = vsel %vm2712, %v8427, 0.0
    %v8514 = vadd.f32 %v8512, %v8513
    %v8515 = vsel %vm2712, %v8428, 0.0
    %v8516 = vadd.f32 %v8514, %v8515
    %v8517 = vsel %vm2712, %v8429, 0.0
    %v8518 = vadd.f32 %v8516, %v8517
    %v8519 = vsel %vm2712, %v8430, 0.0
    %v8520 = vadd.f32 %v8518, %v8519
    %v8521 = vsel %vm2712, %v8431, 0.0
    %v8522 = vadd.f32 %v8520, %v8521
    %v8523 = vsel %vm2712, %v8432, 0.0
    %v8524 = vadd.f32 %v8522, %v8523
    %v8525 = vsel %vm2712, %v8433, 0.0
    %v8526 = vadd.f32 %v8524, %v8525
    %v8527 = vsel %vm2712, %v8434, 0.0
    %v8528 = vadd.f32 %v8526, %v8527
    %v8529 = vsel %vm2712, %v8435, 0.0
    %v8530 = vadd.f32 %v8528, %v8529
    %v8531 = vsel %vm2712, %v8436, 0.0
    %v8532 = vadd.f32 %v8530, %v8531
    %v8533 = vsel %vm2712, %v8437, 0.0
    %v8534 = vadd.f32 %v8532, %v8533
    %v8535 = vsel %vm2712, %v8438, 0.0
    %v8536 = vadd.f32 %v8534, %v8535
    %v8537 = vsel %vm2712, %v8439, 0.0
    %v8538 = vadd.f32 %v8536, %v8537
    %v8539 = vsel %vm2712, %v8440, 0.0
    %v8540 = vadd.f32 %v8538, %v8539
    %v8541 = vsel %vm2712, %v8441, 0.0
    %v8542 = vadd.f32 %v8540, %v8541
    %v8543 = vsel %vm2712, %v8442, 0.0
    %v8544 = vadd.f32 %v8542, %v8543
    %v8545 = vsel %vm2712, %v8443, 0.0
    %v8546 = vadd.f32 %v8544, %v8545
    %v8547 = vsel %vm2712, %v8444, 0.0
    %v8548 = vadd.f32 %v8546, %v8547
    %v8549 = vsel %vm2712, %v8445, 0.0
    %v8550 = vadd.f32 %v8548, %v8549
    %v8551 = vsel %vm2712, %v8446, 0.0
    %v8552 = vadd.f32 %v8550, %v8551
    %v8553 = vsel %vm2712, %v8447, 0.0
    %v8554 = vadd.f32 %v8552, %v8553
    %v8555 = vsel %vm2712, %v8448, 0.0
    %v8556 = vadd.f32 %v8554, %v8555
    %v8557 = vsel %vm2712, %v8449, 0.0
    %v8558 = vadd.f32 %v8556, %v8557
    %v8559 = vsel %vm2712, %v8450, 0.0
    %v8560 = vadd.f32 %v8558, %v8559
    %v8561 = vsel %vm2712, %v8451, 0.0
    %v8562 = vadd.f32 %v8560, %v8561
    %v8563 = vsel %vm2712, %v8452, 0.0
    %v8564 = vadd.f32 %v8562, %v8563
    %v8565 = vsel %vm2712, %v8453, 0.0
    %v8566 = vadd.f32 %v8564, %v8565
    %v8567 = vsel %vm2712, %v8454, 0.0
    %v8568 = vadd.f32 %v8566, %v8567
    %v8569 = vsel %vm2712, %v8455, 0.0
    %v8570 = vadd.f32 %v8568, %v8569
    %v8571 = vsel %vm2712, %v8456, 0.0
    %v8572 = vadd.f32 %v8570, %v8571
    %v8573 = vsel %vm2712, %v8457, 0.0
    %v8574 = vadd.f32 %v8572, %v8573
    %v8575 = vsel %vm2712, %v8458, 0.0
    %v8576 = vadd.f32 %v8574, %v8575
    %v8577 = vsel %vm2712, %v8459, 0.0
    %v8578 = vadd.f32 %v8576, %v8577
    %v8579 = vsel %vm2712, %v8460, 0.0
    %v8580 = vadd.f32 %v8578, %v8579
    %v8581 = vsel %vm2712, %v8461, 0.0
    %v8582 = vadd.f32 %v8580, %v8581
    %v8583 = vsel %vm2712, %v8462, 0.0
    %v8584 = vadd.f32 %v8582, %v8583
    %v8585 = vsel %vm2712, %v8463, 0.0
    %v8586 = vadd.f32 %v8584, %v8585
    %v8587 = vsel %vm2712, %v8464, 0.0
    %v8588 = vadd.f32 %v8586, %v8587
    %v8589 = vsel %vm2712, %v8465, 0.0
    %v8590 = vadd.f32 %v8588, %v8589
    %v8591 = vsel %vm2712, %v8466, 0.0
    %v8592 = vadd.f32 %v8590, %v8591
    %v8593 = vsel %vm2712, %v8467, 0.0
    %v8594 = vadd.f32 %v8592, %v8593
    %v8595 = vrot.slane %v8594, 4
    %v8596 = vadd.f32 %v8594, %v8595
    %v8597 = vrot.slane %v8596, 2
    %v8598 = vadd.f32 %v8596, %v8597
    %v8599 = vrot.slane %v8598, 1
    %v8600 = vadd.f32 %v8598, %v8599
    %v8601 = vmul.f32 %v8403, 0.001953125
    %v8602 = vmul.f32 %v8600, 0.001953125
    %v8603 = vmul.f32 %v8601, %v8601
    %v8604 = vsub.f32 %v8602, %v8603
    %v8605 = vld [vmem:[%s4 + $0x1] sm:$0x1]
    %v8606 = vadd.f32 %v8604, 1e-05
    %v8607 = vrsqrt.pop %v8606
    %v8608 = vmul.f32 %v8605, %v8607
    %v8609 = vld [vmem:[%s4 + $0x2] sm:$0x1]
    %v8610 = vmul.f32 %v8601, %v8608
    %v8611 = vsub.f32 %v8609, %v8610
    %v8612 = vlaneseq
    %v8613 = vshrl.u32 %v8612, 7
    %v8614 = vsub.s32 0, %v8613
    %v8615 = vrot.slane %v8608, %v8614
    %v8616 = vmul.f32 %v8207, %v8615
    %v8617 = vmul.f32 %v8208, %v8615
    %v8618 = vmul.f32 %v8209, %v8615
    %v8619 = vmul.f32 %v8210, %v8615
    %v8620 = vmul.f32 %v8211, %v8615
    %v8621 = vmul.f32 %v8212, %v8615
    %v8622 = vmul.f32 %v8213, %v8615
    %v8623 = vmul.f32 %v8214, %v8615
    %v8624 = vmul.f32 %v8215, %v8615
    %v8625 = vmul.f32 %v8216, %v8615
    %v8626 = vmul.f32 %v8217, %v8615
    %v8627 = vmul.f32 %v8218, %v8615
    %v8628 = vmul.f32 %v8219, %v8615
    %v8629 = vmul.f32 %v8220, %v8615
    %v8630 = vmul.f32 %v8221, %v8615
    %v8631 = vmul.f32 %v8222, %v8615
    %v8632 = vmul.f32 %v8223, %v8615
    %v8633 = vmul.f32 %v8224, %v8615
    %v8634 = vmul.f32 %v8225, %v8615
    %v8635 = vmul.f32 %v8226, %v8615
    %v8636 = vmul.f32 %v8227, %v8615
    %v8637 = vmul.f32 %v8228, %v8615
    %v8638 = vmul.f32 %v8229, %v8615
    %v8639 = vmul.f32 %v8230, %v8615
    %v8640 = vmul.f32 %v8231, %v8615
    %v8641 = vmul.f32 %v8232, %v8615
    %v8642 = vmul.f32 %v8233, %v8615
    %v8643 = vmul.f32 %v8234, %v8615
    %v8644 = vmul.f32 %v8235, %v8615
    %v8645 = vmul.f32 %v8236, %v8615
    %v8646 = vmul.f32 %v8237, %v8615
    %v8647 = vmul.f32 %v8238, %v8615
    %v8648 = vmul.f32 %v8239, %v8615
    %v8649 = vmul.f32 %v8240, %v8615
    %v8650 = vmul.f32 %v8241, %v8615
    %v8651 = vmul.f32 %v8242, %v8615
    %v8652 = vmul.f32 %v8243, %v8615
    %v8653 = vmul.f32 %v8244, %v8615
    %v8654 = vmul.f32 %v8245, %v8615
    %v8655 = vmul.f32 %v8246, %v8615
    %v8656 = vmul.f32 %v8247, %v8615
    %v8657 = vmul.f32 %v8248, %v8615
    %v8658 = vmul.f32 %v8249, %v8615
    %v8659 = vmul.f32 %v8250, %v8615
    %v8660 = vmul.f32 %v8251, %v8615
    %v8661 = vmul.f32 %v8252, %v8615
    %v8662 = vmul.f32 %v8253, %v8615
    %v8663 = vmul.f32 %v8254, %v8615
    %v8664 = vmul.f32 %v8255, %v8615
    %v8665 = vmul.f32 %v8256, %v8615
    %v8666 = vmul.f32 %v8257, %v8615
    %v8667 = vmul.f32 %v8258, %v8615
    %v8668 = vmul.f32 %v8259, %v8615
    %v8669 = vmul.f32 %v8260, %v8615
    %v8670 = vmul.f32 %v8261, %v8615
    %v8671 = vmul.f32 %v8262, %v8615
    %v8672 = vmul.f32 %v8263, %v8615
    %v8673 = vmul.f32 %v8264, %v8615
    %v8674 = vmul.f32 %v8265, %v8615
    %v8675 = vmul.f32 %v8266, %v8615
    %v8676 = vmul.f32 %v8267, %v8615
    %v8677 = vmul.f32 %v8268, %v8615
    %v8678 = vmul.f32 %v8269, %v8615
    %v8679 = vmul.f32 %v8270, %v8615
    %v8680 = vlaneseq
    %v8681 = vshrl.u32 %v8680, 7
    %v8682 = vsub.s32 0, %v8681
    %v8683 = vrot.slane %v8611, %v8682
    %v8684 = vadd.f32 %v8616, %v8683
    %v8685 = vadd.f32 %v8617, %v8683
    %v8686 = vadd.f32 %v8618, %v8683
    %v8687 = vadd.f32 %v8619, %v8683
    %v8688 = vadd.f32 %v8620, %v8683
    %v8689 = vadd.f32 %v8621, %v8683
    %v8690 = vadd.f32 %v8622, %v8683
    %v8691 = vadd.f32 %v8623, %v8683
    %v8692 = vadd.f32 %v8624, %v8683
    %v8693 = vadd.f32 %v8625, %v8683
    %v8694 = vadd.f32 %v8626, %v8683
    %v8695 = vadd.f32 %v8627, %v8683
    %v8696 = vadd.f32 %v8628, %v8683
    %v8697 = vadd.f32 %v8629, %v8683
    %v8698 = vadd.f32 %v8630, %v8683
    %v8699 = vadd.f32 %v8631, %v8683
    %v8700 = vadd.f32 %v8632, %v8683
    %v8701 = vadd.f32 %v8633, %v8683
    %v8702 = vadd.f32 %v8634, %v8683
    %v8703 = vadd.f32 %v8635, %v8683
    %v8704 = vadd.f32 %v8636, %v8683
    %v8705 = vadd.f32 %v8637, %v8683
    %v8706 = vadd.f32 %v8638, %v8683
    %v8707 = vadd.f32 %v8639, %v8683
    %v8708 = vadd.f32 %v8640, %v8683
    %v8709 = vadd.f32 %v8641, %v8683
    %v8710 = vadd.f32 %v8642, %v8683
    %v8711 = vadd.f32 %v8643, %v8683
    %v8712 = vadd.f32 %v8644, %v8683
    %v8713 = vadd.f32 %v8645, %v8683
    %v8714 = vadd.f32 %v8646, %v8683
    %v8715 = vadd.f32 %v8647, %v8683
    %v8716 = vadd.f32 %v8648, %v8683
    %v8717 = vadd.f32 %v8649, %v8683
    %v8718 = vadd.f32 %v8650, %v8683
    %v8719 = vadd.f32 %v8651, %v8683
    %v8720 = vadd.f32 %v8652, %v8683
    %v8721 = vadd.f32 %v8653, %v8683
    %v8722 = vadd.f32 %v8654, %v8683
    %v8723 = vadd.f32 %v8655, %v8683
    %v8724 = vadd.f32 %v8656, %v8683
    %v8725 = vadd.f32 %v8657, %v8683
    %v8726 = vadd.f32 %v8658, %v8683
    %v8727 = vadd.f32 %v8659, %v8683
    %v8728 = vadd.f32 %v8660, %v8683
    %v8729 = vadd.f32 %v8661, %v8683
    %v8730 = vadd.f32 %v8662, %v8683
    %v8731 = vadd.f32 %v8663, %v8683
    %v8732 = vadd.f32 %v8664, %v8683
    %v8733 = vadd.f32 %v8665, %v8683
    %v8734 = vadd.f32 %v8666, %v8683
    %v8735 = vadd.f32 %v8667, %v8683
    %v8736 = vadd.f32 %v8668, %v8683
    %v8737 = vadd.f32 %v8669, %v8683
    %v8738 = vadd.f32 %v8670, %v8683
    %v8739 = vadd.f32 %v8671, %v8683
    %v8740 = vadd.f32 %v8672, %v8683
    %v8741 = vadd.f32 %v8673, %v8683
    %v8742 = vadd.f32 %v8674, %v8683
    %v8743 = vadd.f32 %v8675, %v8683
    %v8744 = vadd.f32 %v8676, %v8683
    %v8745 = vadd.f32 %v8677, %v8683
    %v8746 = vadd.f32 %v8678, %v8683
    %v8747 = vadd.f32 %v8679, %v8683
    %8748 = vxpose.xlu0.b32.start [1/16] %v8684, 128
    %8749 = vxpose.xlu0.b32.cont [2/16] %v8685, 128
    %8750 = vxpose.xlu0.b32.cont [3/16] %v8686, 128
    %8751 = vxpose.xlu0.b32.cont [4/16] %v8687, 128
    %8752 = vxpose.xlu0.b32.cont [5/16] %v8688, 128
    %8753 = vxpose.xlu0.b32.cont [6/16] %v8689, 128
    %8754 = vxpose.xlu0.b32.cont [7/16] %v8690, 128
    %8755 = vxpose.xlu0.b32.cont [8/16] %v8691, 128
    %8756 = vxpose.xlu0.b32.cont [9/16] %v8692, 128
    %8757 = vxpose.xlu0.b32.cont [10/16] %v8693, 128
    %8758 = vxpose.xlu0.b32.cont [11/16] %v8694, 128
    %8759 = vxpose.xlu0.b32.cont [12/16] %v8695, 128
    %8760 = vxpose.xlu0.b32.cont [13/16] %v8696, 128
    %8761 = vxpose.xlu0.b32.cont [14/16] %v8697, 128
    %8762 = vxpose.xlu0.b32.cont [15/16] %v8698, 128
    %8763 = vxpose.xlu0.b32.end [16/16] %v8699, 128
    %v8764 = vpop.trf.xlu0
    %v8765 = vpop.trf.xlu0
    %v8766 = vpop.trf.xlu0
    %v8767 = vpop.trf.xlu0
    %v8768 = vpop.trf.xlu0
    %v8769 = vpop.trf.xlu0
    %v8770 = vpop.trf.xlu0
    %v8771 = vpop.trf.xlu0
    %v8772 = vpop.trf.xlu0
    %v8773 = vpop.trf.xlu0
    %v8774 = vpop.trf.xlu0
    %v8775 = vpop.trf.xlu0
    %v8776 = vpop.trf.xlu0
    %v8777 = vpop.trf.xlu0
    %v8778 = vpop.trf.xlu0
    %v8779 = vpop.trf.xlu0
    %8780 = vxpose.xlu0.b32.start [1/16] %v8700, 128
    %8781 = vxpose.xlu0.b32.cont [2/16] %v8701, 128
    %8782 = vxpose.xlu0.b32.cont [3/16] %v8702, 128
    %8783 = vxpose.xlu0.b32.cont [4/16] %v8703, 128
    %8784 = vxpose.xlu0.b32.cont [5/16] %v8704, 128
    %8785 = vxpose.xlu0.b32.cont [6/16] %v8705, 128
    %8786 = vxpose.xlu0.b32.cont [7/16] %v8706, 128
    %8787 = vxpose.xlu0.b32.cont [8/16] %v8707, 128
    %8788 = vxpose.xlu0.b32.cont [9/16] %v8708, 128
    %8789 = vxpose.xlu0.b32.cont [10/16] %v8709, 128
    %8790 = vxpose.xlu0.b32.cont [11/16] %v8710, 128
    %8791 = vxpose.xlu0.b32.cont [12/16] %v8711, 128
    %8792 = vxpose.xlu0.b32.cont [13/16] %v8712, 128
    %8793 = vxpose.xlu0.b32.cont [14/16] %v8713, 128
    %8794 = vxpose.xlu0.b32.cont [15/16] %v8714, 128
    %8795 = vxpose.xlu0.b32.end [16/16] %v8715, 128
    %v8796 = vpop.trf.xlu0
    %v8797 = vpop.trf.xlu0
    %v8798 = vpop.trf.xlu0
    %v8799 = vpop.trf.xlu0
    %v8800 = vpop.trf.xlu0
    %v8801 = vpop.trf.xlu0
    %v8802 = vpop.trf.xlu0
    %v8803 = vpop.trf.xlu0
    %v8804 = vpop.trf.xlu0
    %v8805 = vpop.trf.xlu0
    %v8806 = vpop.trf.xlu0
    %v8807 = vpop.trf.xlu0
    %v8808 = vpop.trf.xlu0
    %v8809 = vpop.trf.xlu0
    %v8810 = vpop.trf.xlu0
    %v8811 = vpop.trf.xlu0
    %8812 = vst [vmem:[#allocation3] sm:$0xff] %v8764
    %8813 = vst [vmem:[#allocation3 + $0x8] sm:$0xff] %v8796
    %8814 = vxpose.xlu0.b32.start [1/16] %v8716, 128
    %8815 = vxpose.xlu0.b32.cont [2/16] %v8717, 128
    %8816 = vxpose.xlu0.b32.cont [3/16] %v8718, 128
    %8817 = vxpose.xlu0.b32.cont [4/16] %v8719, 128
    %8818 = vxpose.xlu0.b32.cont [5/16] %v8720, 128
    %8819 = vxpose.xlu0.b32.cont [6/16] %v8721, 128
    %8820 = vxpose.xlu0.b32.cont [7/16] %v8722, 128
    %8821 = vxpose.xlu0.b32.cont [8/16] %v8723, 128
    %8822 = vxpose.xlu0.b32.cont [9/16] %v8724, 128
    %8823 = vxpose.xlu0.b32.cont [10/16] %v8725, 128
    %8824 = vxpose.xlu0.b32.cont [11/16] %v8726, 128
    %8825 = vxpose.xlu0.b32.cont [12/16] %v8727, 128
    %8826 = vxpose.xlu0.b32.cont [13/16] %v8728, 128
    %8827 = vxpose.xlu0.b32.cont [14/16] %v8729, 128
    %8828 = vxpose.xlu0.b32.cont [15/16] %v8730, 128
    %8829 = vxpose.xlu0.b32.end [16/16] %v8731, 128
    %v8830 = vpop.trf.xlu0
    %v8831 = vpop.trf.xlu0
    %v8832 = vpop.trf.xlu0
    %v8833 = vpop.trf.xlu0
    %v8834 = vpop.trf.xlu0
    %v8835 = vpop.trf.xlu0
    %v8836 = vpop.trf.xlu0
    %v8837 = vpop.trf.xlu0
    %v8838 = vpop.trf.xlu0
    %v8839 = vpop.trf.xlu0
    %v8840 = vpop.trf.xlu0
    %v8841 = vpop.trf.xlu0
    %v8842 = vpop.trf.xlu0
    %v8843 = vpop.trf.xlu0
    %v8844 = vpop.trf.xlu0
    %v8845 = vpop.trf.xlu0
    %8846 = vxpose.xlu0.b32.start [1/16] %v8732, 128
    %8847 = vxpose.xlu0.b32.cont [2/16] %v8733, 128
    %8848 = vxpose.xlu0.b32.cont [3/16] %v8734, 128
    %8849 = vxpose.xlu0.b32.cont [4/16] %v8735, 128
    %8850 = vxpose.xlu0.b32.cont [5/16] %v8736, 128
    %8851 = vxpose.xlu0.b32.cont [6/16] %v8737, 128
    %8852 = vxpose.xlu0.b32.cont [7/16] %v8738, 128
    %8853 = vxpose.xlu0.b32.cont [8/16] %v8739, 128
    %8854 = vxpose.xlu0.b32.cont [9/16] %v8740, 128
    %8855 = vxpose.xlu0.b32.cont [10/16] %v8741, 128
    %8856 = vxpose.xlu0.b32.cont [11/16] %v8742, 128
    %8857 = vxpose.xlu0.b32.cont [12/16] %v8743, 128
    %8858 = vxpose.xlu0.b32.cont [13/16] %v8744, 128
    %8859 = vxpose.xlu0.b32.cont [14/16] %v8745, 128
    %8860 = vxpose.xlu0.b32.cont [15/16] %v8746, 128
    %8861 = vxpose.xlu0.b32.end [16/16] %v8747, 128
    %v8862 = vpop.trf.xlu0
    %v8863 = vpop.trf.xlu0
    %v8864 = vpop.trf.xlu0
    %v8865 = vpop.trf.xlu0
    %v8866 = vpop.trf.xlu0
    %v8867 = vpop.trf.xlu0
    %v8868 = vpop.trf.xlu0
    %v8869 = vpop.trf.xlu0
    %v8870 = vpop.trf.xlu0
    %v8871 = vpop.trf.xlu0
    %v8872 = vpop.trf.xlu0
    %v8873 = vpop.trf.xlu0
    %v8874 = vpop.trf.xlu0
    %v8875 = vpop.trf.xlu0
    %v8876 = vpop.trf.xlu0
    %v8877 = vpop.trf.xlu0
    %s8878 = scalar_lea.vmem [#allocation3], 16
    %8879 = vst [vmem:[%s8878] sm:$0xff] %v8830
    %8880 = vst [vmem:[%s8878 + $0x8] sm:$0xff] %v8862
    // Predicated region
    $region22: #{tpu_custom_call.1} parent=1 // pred_check
      _
    $region23: #{tpu_custom_call.1} parent=1 // pred_check_branch
      %8882 = sbr.rel (0) target = $region25
    $region24: #{tpu_custom_call.1} parent=1 // pred_region
      %s8884 = ssub.s32 512, 512
      %8885 = vsyncadd [#allocation4], %s8884
      %s8886 = sshll.u32 [#allocation3], 4
      %s8887 = int_to_ptr.vmem [resolvable:$true] %s8886
      %8892 = dma.vmem_to_hbm [thread:$0]  %s8887, 512, %s5, [#allocation4], 256, 256, 16
    $region25: #{tpu_custom_call.1} parent=1 // pred_fallthru
      _
    // Predicated region
    $region26: #{tpu_custom_call.1} parent=1 // pred_check
      _
    $region27: #{tpu_custom_call.1} parent=1 // pred_check_branch
      %8894 = sbr.rel (0) target = $region29
    $region28: #{tpu_custom_call.1} parent=1 // pred_region
      %8895 = dma.done [#allocation4], 512
    $region29: #{tpu_custom_call.1} parent=1 // pred_fallthru
      _
    %8896 = vsyncpa [#allocation4], 1

</llo_original>
